<compile_context>
chip_gen: v7x
topology: tpu7x:2x2x1
jax: 0.10.0
libtpu: 0.0.40
codegen_flags: <defaults>
</compile_context>

<pallas_src>
import functools

import jax
import jax.numpy as jnp
from jax.experimental import pallas as pl
from jax.experimental.pallas import tpu as pltpu

DIM_H = 128          # dim_h from the reference script
N_Z = 8              # n_z from the reference script
HIDDEN = DIM_H * 4   # 512


def _discriminator_kernel(x_ref,
                          w1_ref, b1_ref,
                          w2_ref, b2_ref,
                          w3_ref, b3_ref,
                          w4_ref, b4_ref,
                          w5_ref, b5_ref,
                          o_ref):
    """Fused 5-layer MLP + sigmoid on one batch tile.

    Matmuls run on the MXU with bf16 inputs and f32 accumulation.  The bias-add / ReLU
    epilogue runs in the *bias dtype* (bf16 on v6e/v7x, f32 on v5e -- chosen by the
    wrapper), the 512->1 head is a VPU multiply + XLU lane reduction, and the sigmoid
    uses the EUP.
    """

    def hidden_layer(h_in, w_ref, b_ref):
        acc = jnp.dot(h_in, w_ref[...], preferred_element_type=jnp.float32)
        # Epilogue in the bias dtype; re-cast to bf16 for the next MXU matmul
        # (a no-op when the epilogue is already bf16).
        h = jnp.maximum(acc.astype(b_ref.dtype) + b_ref[...], 0.0)
        return h.astype(jnp.bfloat16)

    # Layer 1: (tile_b, 8) @ (8, 512).  K=8 is a tiny MXU contraction but only ~1.6% of
    # the useful FLOPs; only move it to the VPU if profiling shows the kernel MXU-bound.
    h = hidden_layer(x_ref[...], w1_ref, b1_ref)
    # Layers 2-4: (tile_b, 512) @ (512, 512)
    h = hidden_layer(h, w2_ref, b2_ref)
    h = hidden_layer(h, w3_ref, b3_ref)
    h = hidden_layer(h, w4_ref, b4_ref)

    # Head (512 -> 1): VPU broadcast-multiply + lane reduction in f32 instead of an
    # N=1 MXU matmul that would waste 255/256 of the systolic array.
    logits = jnp.sum(h.astype(jnp.float32) * w5_ref[...], axis=-1, keepdims=True)
    logits = logits + b5_ref[...]
    o_ref[...] = jax.nn.sigmoid(logits).astype(o_ref.dtype)


def _round_up(v, m):
    return ((v + m - 1) // m) * m


def _choose_tile_b(batch):
    """Adaptive batch tile.

    Small batches collapse to a single grid step (minimal padding, no per-step
    overhead).  Large batches use <=1024-row tiles with an even number of grid steps so
    ("parallel",) batch tiles shard across both v7x TensorCores.
    """
    b = max(8, _round_up(batch, 8))
    if b <= 512:
        return _round_up(b, 128)
    steps = -(-b // 1024)          # minimum number of <=1024-row steps
    if steps % 2:
        steps += 1                 # keep the grid even for v7x megacore
    return _round_up(-(-b // steps), 128)


@functools.lru_cache(maxsize=None)
def _epilogue_dtype():
    """bf16 epilogue only where the VPU has bf16 ALUs (v6e / v7x); f32 elsewhere."""
    try:
        kind = jax.devices()[0].device_kind.lower()
    except Exception:
        return jnp.float32
    if any(tag in kind for tag in ("v6", "v7", "7x")):
        return jnp.bfloat16
    return jnp.float32


@jax.jit
def discriminator_forward(x, params):
    """Run the Discriminator forward pass with a fused Pallas TPU kernel.

    x: (B, N_Z) float32.  B is padded internally to a multiple of the adaptive tile.
    params: dict of f32 weights stored as (in_features, out_features) -- transposed
            relative to PyTorch's (out, in) -- and biases of shape (1, out_features).
    Returns: (B, 1) float32 in (0, 1).
    """
    B, nz = x.shape
    assert nz == N_Z

    tile_b = _choose_tile_b(B)
    B_pad = _round_up(B, tile_b)
    grid = (B_pad // tile_b,)
    ep_dt = _epilogue_dtype()

    # bf16 matmul inputs (MXU peak on v6e/v7x; halves weight DMA).  Hidden-layer biases
    # in the generation-dependent epilogue dtype; the head (w5, b5) stays f32.
    x_bf = x.astype(jnp.bfloat16)
    if B_pad != B:
        x_bf = jnp.pad(x_bf, ((0, B_pad - B), (0, 0)))

    w1 = params["w1"].astype(jnp.bfloat16)
    w2 = params["w2"].astype(jnp.bfloat16)
    w3 = params["w3"].astype(jnp.bfloat16)
    w4 = params["w4"].astype(jnp.bfloat16)
    b1 = params["b1"].astype(ep_dt)
    b2 = params["b2"].astype(ep_dt)
    b3 = params["b3"].astype(ep_dt)
    b4 = params["b4"].astype(ep_dt)
    w5 = params["w5"].reshape(1, HIDDEN).astype(jnp.float32)
    b5 = params["b5"].reshape(1, 1).astype(jnp.float32)

    # Weights/biases live fully in VMEM and are revisited every grid step
    # (constant index_map -> no re-DMA across steps).
    rep2 = lambda i: (0, 0)

    in_specs = [
        pl.BlockSpec((tile_b, N_Z), lambda i: (i, 0)),          # x tile
        pl.BlockSpec(w1.shape, rep2), pl.BlockSpec(b1.shape, rep2),
        pl.BlockSpec(w2.shape, rep2), pl.BlockSpec(b2.shape, rep2),
        pl.BlockSpec(w3.shape, rep2), pl.BlockSpec(b3.shape, rep2),
        pl.BlockSpec(w4.shape, rep2), pl.BlockSpec(b4.shape, rep2),
        pl.BlockSpec(w5.shape, rep2), pl.BlockSpec(b5.shape, rep2),
    ]
    # (tile_b, 1) output column: output traffic is 1 f32 per 512-wide matmul row, so the
    # masked-store tax is negligible and we avoid the in-kernel sublane->lane relayout a
    # lane-dense (1, tile_b) block would require.
    out_specs = pl.BlockSpec((tile_b, 1), lambda i: (i, 0))

    # Advisory cost hint for XLA scheduling around the custom call.
    flops = 2 * B_pad * (N_Z * HIDDEN + 3 * HIDDEN * HIDDEN + HIDDEN)
    bytes_accessed = (int(x_bf.size) * 2
                      + sum(int(w.size) * 2 for w in (w1, w2, w3, w4))
                      + sum(int(b.size) * b.dtype.itemsize for b in (b1, b2, b3, b4))
                      + int(w5.size) * 4 + int(b5.size) * 4
                      + B_pad * 4)
    cost = pl.CostEstimate(flops=flops, transcendentals=B_pad,
                           bytes_accessed=bytes_accessed)

    out = pl.pallas_call(
        _discriminator_kernel,
        out_shape=jax.ShapeDtypeStruct((B_pad, 1), jnp.float32),
        grid_spec=pltpu.PrefetchScalarGridSpec(
            num_scalar_prefetch=0,
            grid=grid,
            in_specs=in_specs,
            out_specs=out_specs,
        ),
        compiler_params=pltpu.CompilerParams(
            dimension_semantics=("parallel",),     # batch tiles shard across TCs (megacore)
            vmem_limit_bytes=32 * 1024 * 1024,     # headroom for 1024-row tiles on v5e
        ),
        cost_estimate=cost,
    )(x_bf, w1, b1, w2, b2, w3, b3, w4, b4, w5, b5)

    return out[:B]


def init_params(key):
    """Deterministic init matching PyTorch nn.Linear default (U[-1/sqrt(fan_in), 1/sqrt(fan_in)]).

    Weights are stored as (in_features, out_features) -- transposed relative to
    PyTorch's (out, in) -- so the kernel can use x @ W directly.
    """
    dims = [(N_Z, HIDDEN), (HIDDEN, HIDDEN), (HIDDEN, HIDDEN),
            (HIDDEN, HIDDEN), (HIDDEN, 1)]
    params = {}
    for idx, (fan_in, fan_out) in enumerate(dims, start=1):
        key, kw, kb = jax.random.split(key, 3)
        bound = 1.0 / jnp.sqrt(jnp.float32(fan_in))
        params[f"w{idx}"] = jax.random.uniform(
            kw, (fan_in, fan_out), jnp.float32, -bound, bound)
        params[f"b{idx}"] = jax.random.uniform(
            kb, (1, fan_out), jnp.float32, -bound, bound)
    return params


def reference_forward(x, params):
    """Pure-JAX f32 reference for correctness checking."""
    h = x
    for idx in range(1, 5):
        h = jnp.maximum(h @ params[f"w{idx}"] + params[f"b{idx}"], 0.0)
    return jax.nn.sigmoid(h @ params["w5"] + params["b5"])


if __name__ == "__main__":
    key = jax.random.PRNGKey(0)
    key, kx_small, kx_large = jax.random.split(key, 3)
    params = init_params(key)

    # batch=300: not tile-aligned -> exercises padding + the single-step small-batch path.
    # batch=1500: exercises the large-batch path (even grid of 768-row tiles).
    for batch, kx in ((300, kx_small), (1500, kx_large)):
        x = jax.random.normal(kx, (batch, N_Z), jnp.float32)
        out = jax.block_until_ready(discriminator_forward(x, params))
        ref = reference_forward(x, params)

        assert out.shape == (batch, 1)
        assert bool(jnp.all(out > 0.0)) and bool(jnp.all(out < 1.0))
        max_err = float(jnp.max(jnp.abs(out - ref)))
        # bf16 matmul inputs (+ bf16 epilogue on v6e/v7x) with f32 accumulation:
        # sigmoid outputs agree with the f32 reference to well under 4e-2.
        assert max_err < 4e-2, f"batch={batch}: max abs err {max_err} vs f32 reference"

    print("KERNEL_OK")
</pallas_src>

<mosaic_0001>
module attributes {stable_mosaic.version = 11 : i64} {
  func.func @_discriminator_kernel(%arg0: i32, %arg1: memref<384x8xbf16, #tpu.memory_space<vmem>>, %arg2: memref<8x512xbf16, #tpu.memory_space<vmem>>, %arg3: memref<1x512xf32, #tpu.memory_space<vmem>>, %arg4: memref<512x512xbf16, #tpu.memory_space<vmem>>, %arg5: memref<1x512xf32, #tpu.memory_space<vmem>>, %arg6: memref<512x512xbf16, #tpu.memory_space<vmem>>, %arg7: memref<1x512xf32, #tpu.memory_space<vmem>>, %arg8: memref<512x512xbf16, #tpu.memory_space<vmem>>, %arg9: memref<1x512xf32, #tpu.memory_space<vmem>>, %arg10: memref<1x512xf32, #tpu.memory_space<vmem>>, %arg11: memref<1x1xf32, #tpu.memory_space<vmem>>, %arg12: memref<384x1xf32, #tpu.memory_space<vmem>>) attributes {dimension_semantics = [#tpu.dimension_semantics<parallel>], iteration_bounds = array<i64: 1>, scalar_prefetch = 0 : i64, scratch_operands = 0 : i64, tpu.core_type = #tpu.core_type<tc>, window_params = [{transform_indices = @transform_0, window_bounds = array<i64: 384, 8>}, {pipeline_mode = #tpu.pipeline_mode<synchronous>, transform_indices = @transform_1, window_bounds = array<i64: 8, 512>}, {pipeline_mode = #tpu.pipeline_mode<synchronous>, transform_indices = @transform_2, window_bounds = array<i64: 1, 512>}, {pipeline_mode = #tpu.pipeline_mode<synchronous>, transform_indices = @transform_3, window_bounds = array<i64: 512, 512>}, {pipeline_mode = #tpu.pipeline_mode<synchronous>, transform_indices = @transform_4, window_bounds = array<i64: 1, 512>}, {pipeline_mode = #tpu.pipeline_mode<synchronous>, transform_indices = @transform_5, window_bounds = array<i64: 512, 512>}, {pipeline_mode = #tpu.pipeline_mode<synchronous>, transform_indices = @transform_6, window_bounds = array<i64: 1, 512>}, {pipeline_mode = #tpu.pipeline_mode<synchronous>, transform_indices = @transform_7, window_bounds = array<i64: 512, 512>}, {pipeline_mode = #tpu.pipeline_mode<synchronous>, transform_indices = @transform_8, window_bounds = array<i64: 1, 512>}, {pipeline_mode = #tpu.pipeline_mode<synchronous>, transform_indices = @transform_9, window_bounds = array<i64: 1, 512>}, {pipeline_mode = #tpu.pipeline_mode<synchronous>, transform_indices = @transform_10, window_bounds = array<i64: 1, 1>}, {transform_indices = @transform_11, window_bounds = array<i64: 384, 1>}]} {
    %c0 = arith.constant 0 : index
    %c0_0 = arith.constant 0 : index
    %0 = vector.load %arg1[%c0, %c0_0] : memref<384x8xbf16, #tpu.memory_space<vmem>>, vector<384x8xbf16>
    %c0_1 = arith.constant 0 : index
    %c0_2 = arith.constant 0 : index
    %1 = vector.load %arg2[%c0_1, %c0_2] : memref<8x512xbf16, #tpu.memory_space<vmem>>, vector<8x512xbf16>
    %cst = arith.constant dense<0.000000e+00> : vector<384x512xf32>
    %2 = tpu.matmul %0, %1, %cst {dimension_numbers = #tpu.dot_dimension_numbers<[1], [0], [0], [1], [0, 0, 1, 1], [], []>} : vector<384x8xbf16>, vector<8x512xbf16>, vector<384x512xf32> -> vector<384x512xf32>
    %c0_3 = arith.constant 0 : index
    %c0_4 = arith.constant 0 : index
    %3 = vector.load %arg3[%c0_3, %c0_4] : memref<1x512xf32, #tpu.memory_space<vmem>>, vector<1x512xf32>
    %4 = vector.broadcast %3 : vector<1x512xf32> to vector<384x512xf32>
    %5 = arith.addf %2, %4 : vector<384x512xf32>
    %cst_5 = arith.constant 0.000000e+00 : f32
    %6 = vector.broadcast %cst_5 : f32 to vector<384x512xf32>
    %7 = arith.maximumf %5, %6 : vector<384x512xf32>
    %8 = arith.truncf %7 : vector<384x512xf32> to vector<384x512xbf16>
    %c0_6 = arith.constant 0 : index
    %c0_7 = arith.constant 0 : index
    %9 = vector.load %arg4[%c0_6, %c0_7] : memref<512x512xbf16, #tpu.memory_space<vmem>>, vector<512x512xbf16>
    %cst_8 = arith.constant dense<0.000000e+00> : vector<384x512xf32>
    %10 = tpu.matmul %8, %9, %cst_8 {dimension_numbers = #tpu.dot_dimension_numbers<[1], [0], [0], [1], [0, 0, 1, 1], [], []>} : vector<384x512xbf16>, vector<512x512xbf16>, vector<384x512xf32> -> vector<384x512xf32>
    %c0_9 = arith.constant 0 : index
    %c0_10 = arith.constant 0 : index
    %11 = vector.load %arg5[%c0_9, %c0_10] : memref<1x512xf32, #tpu.memory_space<vmem>>, vector<1x512xf32>
    %12 = vector.broadcast %11 : vector<1x512xf32> to vector<384x512xf32>
    %13 = arith.addf %10, %12 : vector<384x512xf32>
    %cst_11 = arith.constant 0.000000e+00 : f32
    %14 = vector.broadcast %cst_11 : f32 to vector<384x512xf32>
    %15 = arith.maximumf %13, %14 : vector<384x512xf32>
    %16 = arith.truncf %15 : vector<384x512xf32> to vector<384x512xbf16>
    %c0_12 = arith.constant 0 : index
    %c0_13 = arith.constant 0 : index
    %17 = vector.load %arg6[%c0_12, %c0_13] : memref<512x512xbf16, #tpu.memory_space<vmem>>, vector<512x512xbf16>
    %cst_14 = arith.constant dense<0.000000e+00> : vector<384x512xf32>
    %18 = tpu.matmul %16, %17, %cst_14 {dimension_numbers = #tpu.dot_dimension_numbers<[1], [0], [0], [1], [0, 0, 1, 1], [], []>} : vector<384x512xbf16>, vector<512x512xbf16>, vector<384x512xf32> -> vector<384x512xf32>
    %c0_15 = arith.constant 0 : index
    %c0_16 = arith.constant 0 : index
    %19 = vector.load %arg7[%c0_15, %c0_16] : memref<1x512xf32, #tpu.memory_space<vmem>>, vector<1x512xf32>
    %20 = vector.broadcast %19 : vector<1x512xf32> to vector<384x512xf32>
    %21 = arith.addf %18, %20 : vector<384x512xf32>
    %cst_17 = arith.constant 0.000000e+00 : f32
    %22 = vector.broadcast %cst_17 : f32 to vector<384x512xf32>
    %23 = arith.maximumf %21, %22 : vector<384x512xf32>
    %24 = arith.truncf %23 : vector<384x512xf32> to vector<384x512xbf16>
    %c0_18 = arith.constant 0 : index
    %c0_19 = arith.constant 0 : index
    %25 = vector.load %arg8[%c0_18, %c0_19] : memref<512x512xbf16, #tpu.memory_space<vmem>>, vector<512x512xbf16>
    %cst_20 = arith.constant dense<0.000000e+00> : vector<384x512xf32>
    %26 = tpu.matmul %24, %25, %cst_20 {dimension_numbers = #tpu.dot_dimension_numbers<[1], [0], [0], [1], [0, 0, 1, 1], [], []>} : vector<384x512xbf16>, vector<512x512xbf16>, vector<384x512xf32> -> vector<384x512xf32>
    %c0_21 = arith.constant 0 : index
    %c0_22 = arith.constant 0 : index
    %27 = vector.load %arg9[%c0_21, %c0_22] : memref<1x512xf32, #tpu.memory_space<vmem>>, vector<1x512xf32>
    %28 = vector.broadcast %27 : vector<1x512xf32> to vector<384x512xf32>
    %29 = arith.addf %26, %28 : vector<384x512xf32>
    %cst_23 = arith.constant 0.000000e+00 : f32
    %30 = vector.broadcast %cst_23 : f32 to vector<384x512xf32>
    %31 = arith.maximumf %29, %30 : vector<384x512xf32>
    %32 = arith.truncf %31 : vector<384x512xf32> to vector<384x512xbf16>
    %33 = arith.extf %32 : vector<384x512xbf16> to vector<384x512xf32>
    %c0_24 = arith.constant 0 : index
    %c0_25 = arith.constant 0 : index
    %34 = vector.load %arg10[%c0_24, %c0_25] : memref<1x512xf32, #tpu.memory_space<vmem>>, vector<1x512xf32>
    %35 = vector.broadcast %34 : vector<1x512xf32> to vector<384x512xf32>
    %36 = arith.mulf %33, %35 : vector<384x512xf32>
    %cst_26 = arith.constant dense<0.000000e+00> : vector<384xf32>
    %37 = vector.multi_reduction <add>, %36, %cst_26 [1] : vector<384x512xf32> to vector<384xf32>
    %38 = vector.shape_cast %37 : vector<384xf32> to vector<384x1xf32>
    %c0_27 = arith.constant 0 : index
    %c0_28 = arith.constant 0 : index
    %39 = vector.load %arg11[%c0_27, %c0_28] : memref<1x1xf32, #tpu.memory_space<vmem>>, vector<1x1xf32>
    %40 = vector.broadcast %39 : vector<1x1xf32> to vector<384x1xf32>
    %41 = arith.addf %38, %40 : vector<384x1xf32>
    %42 = arith.negf %41 : vector<384x1xf32>
    %43 = math.exp %42 : vector<384x1xf32>
    %cst_29 = arith.constant 1.000000e+00 : f32
    %44 = vector.broadcast %cst_29 : f32 to vector<384x1xf32>
    %45 = arith.addf %44, %43 : vector<384x1xf32>
    %46 = arith.divf %44, %45 : vector<384x1xf32>
    %c0_30 = arith.constant 0 : index
    %c0_31 = arith.constant 0 : index
    %47 = vector.load %arg12[%c0_30, %c0_31] : memref<384x1xf32, #tpu.memory_space<vmem>>, vector<384x1xf32>
    tpu.vector_store %arg12[%c0_30, %c0_31], %46 {strides = array<i32>} : memref<384x1xf32, #tpu.memory_space<vmem>>, vector<384x1xf32>,
    return
  }
  func.func @transform_0(%arg0: i32) -> (i32, i32) {
    %c0_i32 = arith.constant 0 : i32
    %c0_i32_0 = arith.constant 0 : i32
    return %arg0, %c0_i32 : i32, i32
  }
  func.func @transform_1(%arg0: i32) -> (i32, i32) {
    %c0_i32 = arith.constant 0 : i32
    %c0_i32_0 = arith.constant 0 : i32
    %c0_i32_1 = arith.constant 0 : i32
    return %c0_i32, %c0_i32_0 : i32, i32
  }
  func.func @transform_2(%arg0: i32) -> (i32, i32) {
    %c0_i32 = arith.constant 0 : i32
    %c0_i32_0 = arith.constant 0 : i32
    %c0_i32_1 = arith.constant 0 : i32
    return %c0_i32, %c0_i32_0 : i32, i32
  }
  func.func @transform_3(%arg0: i32) -> (i32, i32) {
    %c0_i32 = arith.constant 0 : i32
    %c0_i32_0 = arith.constant 0 : i32
    %c0_i32_1 = arith.constant 0 : i32
    return %c0_i32, %c0_i32_0 : i32, i32
  }
  func.func @transform_4(%arg0: i32) -> (i32, i32) {
    %c0_i32 = arith.constant 0 : i32
    %c0_i32_0 = arith.constant 0 : i32
    %c0_i32_1 = arith.constant 0 : i32
    return %c0_i32, %c0_i32_0 : i32, i32
  }
  func.func @transform_5(%arg0: i32) -> (i32, i32) {
    %c0_i32 = arith.constant 0 : i32
    %c0_i32_0 = arith.constant 0 : i32
    %c0_i32_1 = arith.constant 0 : i32
    return %c0_i32, %c0_i32_0 : i32, i32
  }
  func.func @transform_6(%arg0: i32) -> (i32, i32) {
    %c0_i32 = arith.constant 0 : i32
    %c0_i32_0 = arith.constant 0 : i32
    %c0_i32_1 = arith.constant 0 : i32
    return %c0_i32, %c0_i32_0 : i32, i32
  }
  func.func @transform_7(%arg0: i32) -> (i32, i32) {
    %c0_i32 = arith.constant 0 : i32
    %c0_i32_0 = arith.constant 0 : i32
    %c0_i32_1 = arith.constant 0 : i32
    return %c0_i32, %c0_i32_0 : i32, i32
  }
  func.func @transform_8(%arg0: i32) -> (i32, i32) {
    %c0_i32 = arith.constant 0 : i32
    %c0_i32_0 = arith.constant 0 : i32
    %c0_i32_1 = arith.constant 0 : i32
    return %c0_i32, %c0_i32_0 : i32, i32
  }
  func.func @transform_9(%arg0: i32) -> (i32, i32) {
    %c0_i32 = arith.constant 0 : i32
    %c0_i32_0 = arith.constant 0 : i32
    %c0_i32_1 = arith.constant 0 : i32
    return %c0_i32, %c0_i32_0 : i32, i32
  }
  func.func @transform_10(%arg0: i32) -> (i32, i32) {
    %c0_i32 = arith.constant 0 : i32
    %c0_i32_0 = arith.constant 0 : i32
    %c0_i32_1 = arith.constant 0 : i32
    return %c0_i32, %c0_i32_0 : i32, i32
  }
  func.func @transform_11(%arg0: i32) -> (i32, i32) {
    %c0_i32 = arith.constant 0 : i32
    %c0_i32_0 = arith.constant 0 : i32
    return %arg0, %c0_i32 : i32, i32
  }
}

</mosaic_0001>

<llo_original>
// kernel: discriminator_forward.1
$region0: #{discriminator_forward.1}
  #allocation0 [shape = 'u32[]', space=smem, size = 0x4, offset = 0x4, fixed_abs, tag = 'smem constant byte address 0x4 - core index']
  #allocation1 [shape = 'u32[144,128]{1,0:T(1,128)}', space=vmem, size = 0x12000, scoped, tag = 'internal scratch']
  #allocation2 [shape = 'f32[1,1]{1,0:T(1,128)S(1)}', space=vmem, size = 0x200, scoped, tag = 'scoped memory for discriminator_forward.1']
  %s0 = inlined_call_operand.vmem [shape: bf16[384,8], index: 0, kind: input, shape index: {}]
  %s1 = inlined_call_operand.vmem [shape: bf16[8,512], index: 1, kind: input, shape index: {}]
  %s2 = inlined_call_operand.vmem [shape: f32[1,512], index: 2, kind: input, shape index: {}]
  %s3 = inlined_call_operand.vmem [shape: bf16[512,512], index: 3, kind: input, shape index: {}]
  %s4 = inlined_call_operand.vmem [shape: f32[1,512], index: 4, kind: input, shape index: {}]
  %s5 = inlined_call_operand.vmem [shape: bf16[512,512], index: 5, kind: input, shape index: {}]
  %s6 = inlined_call_operand.vmem [shape: f32[1,512], index: 6, kind: input, shape index: {}]
  %s7 = inlined_call_operand.vmem [shape: bf16[512,512], index: 7, kind: input, shape index: {}]
  %s8 = inlined_call_operand.vmem [shape: f32[1,512], index: 8, kind: input, shape index: {}]
  %s9 = inlined_call_operand.vmem [shape: f32[1,512], index: 9, kind: input, shape index: {}]
  %s10 = inlined_call_operand.<no memory space> [shape: f32[1,1], index: 10, kind: input, shape index: {}]
  %s11 = inlined_call_operand.vmem [shape: f32[384,1], index: 11, kind: output, shape index: {}]
  %s12 = sld [smem:[#allocation0]]
  $region54: #{discriminator_forward.1} parent=0
    _
  %s14 = ssub.s32 1, %s12
  %s15 = scalar_select 0, %s14, %s12
  %v16 = vstv %s10
  %17 = vst [vmem:[#allocation2] sm:$0x1] %v16
  // Predicated region
  $region2: #{discriminator_forward.1} parent=0 // pred_check
    _
  $region3: #{discriminator_forward.1} parent=0 // pred_check_branch
    %19 = sbr.rel (0) target = $region5
  $region4: #{discriminator_forward.1} parent=0 // pred_region
    _
  $region5: #{discriminator_forward.1} parent=0 // pred_fallthru
    _
  // Predicated region
  $region6: #{discriminator_forward.1} parent=0 // pred_check
    _
  $region7: #{discriminator_forward.1} parent=0 // pred_check_branch
    %21 = sbr.rel (0) target = $region9
  $region8: #{discriminator_forward.1} parent=0 // pred_region
    _
  $region9: #{discriminator_forward.1} parent=0 // pred_fallthru
    _
  // Predicated region
  $region10: #{discriminator_forward.1} parent=0 // pred_check
    _
  $region11: #{discriminator_forward.1} parent=0 // pred_check_branch
    %23 = sbr.rel (0) target = $region13
  $region12: #{discriminator_forward.1} parent=0 // pred_region
    _
  $region13: #{discriminator_forward.1} parent=0 // pred_fallthru
    _
  // Predicated region
  $region14: #{discriminator_forward.1} parent=0 // pred_check
    _
  $region15: #{discriminator_forward.1} parent=0 // pred_check_branch
    %25 = sbr.rel (0) target = $region17
  $region16: #{discriminator_forward.1} parent=0 // pred_region
    _
  $region17: #{discriminator_forward.1} parent=0 // pred_fallthru
    _
  // Predicated region
  $region18: #{discriminator_forward.1} parent=0 // pred_check
    _
  $region19: #{discriminator_forward.1} parent=0 // pred_check_branch
    %27 = sbr.rel (0) target = $region21
  $region20: #{discriminator_forward.1} parent=0 // pred_region
    _
  $region21: #{discriminator_forward.1} parent=0 // pred_fallthru
    _
  // Predicated region
  $region22: #{discriminator_forward.1} parent=0 // pred_check
    _
  $region23: #{discriminator_forward.1} parent=0 // pred_check_branch
    %29 = sbr.rel (0) target = $region25
  $region24: #{discriminator_forward.1} parent=0 // pred_region
    _
  $region25: #{discriminator_forward.1} parent=0 // pred_fallthru
    _
  // Predicated region
  $region26: #{discriminator_forward.1} parent=0 // pred_check
    _
  $region27: #{discriminator_forward.1} parent=0 // pred_check_branch
    %31 = sbr.rel (0) target = $region29
  $region28: #{discriminator_forward.1} parent=0 // pred_region
    _
  $region29: #{discriminator_forward.1} parent=0 // pred_fallthru
    _
  // Predicated region
  $region30: #{discriminator_forward.1} parent=0 // pred_check
    _
  $region31: #{discriminator_forward.1} parent=0 // pred_check_branch
    %33 = sbr.rel (0) target = $region33
  $region32: #{discriminator_forward.1} parent=0 // pred_region
    _
  $region33: #{discriminator_forward.1} parent=0 // pred_fallthru
    _
  // Predicated region
  $region34: #{discriminator_forward.1} parent=0 // pred_check
    _
  $region35: #{discriminator_forward.1} parent=0 // pred_check_branch
    %35 = sbr.rel (0) target = $region37
  $region36: #{discriminator_forward.1} parent=0 // pred_region
    _
  $region37: #{discriminator_forward.1} parent=0 // pred_fallthru
    _
  // Predicated region
  $region38: #{discriminator_forward.1} parent=0 // pred_check
    _
  $region39: #{discriminator_forward.1} parent=0 // pred_check_branch
    %37 = sbr.rel (0) target = $region41
  $region40: #{discriminator_forward.1} parent=0 // pred_region
    _
  $region41: #{discriminator_forward.1} parent=0 // pred_fallthru
    _
  // Predicated region
  $region42: #{discriminator_forward.1} parent=0 // pred_check
    _
  $region43: #{discriminator_forward.1} parent=0 // pred_check_branch
    %39 = sbr.rel (0) target = $region45
  $region44: #{discriminator_forward.1} parent=0 // pred_region
    _
  $region45: #{discriminator_forward.1} parent=0 // pred_fallthru
    _
  %v41 = vld [vmem:[%s0] sm:$0xf]
  %v42 = vld [vmem:[%s0 + $0x4] sm:$0xf]
  %v43 = vld [vmem:[%s0 + $0x8] sm:$0xf]
  %v44 = vld [vmem:[%s0 + $0xc] sm:$0xf]
  %v45 = vld [vmem:[%s0 + $0x10] sm:$0xf]
  %v46 = vld [vmem:[%s0 + $0x14] sm:$0xf]
  %v47 = vld [vmem:[%s0 + $0x18] sm:$0xf]
  %v48 = vld [vmem:[%s0 + $0x1c] sm:$0xf]
  %v49 = vld [vmem:[%s0 + $0x20] sm:$0xf]
  %v50 = vld [vmem:[%s0 + $0x24] sm:$0xf]
  %v51 = vld [vmem:[%s0 + $0x28] sm:$0xf]
  %v52 = vld [vmem:[%s0 + $0x2c] sm:$0xf]
  %v53 = vld [vmem:[%s0 + $0x30] sm:$0xf]
  %v54 = vld [vmem:[%s0 + $0x34] sm:$0xf]
  %v55 = vld [vmem:[%s0 + $0x38] sm:$0xf]
  %v56 = vld [vmem:[%s0 + $0x3c] sm:$0xf]
  %v57 = vld [vmem:[%s0 + $0x40] sm:$0xf]
  %v58 = vld [vmem:[%s0 + $0x44] sm:$0xf]
  %v59 = vld [vmem:[%s0 + $0x48] sm:$0xf]
  %v60 = vld [vmem:[%s0 + $0x4c] sm:$0xf]
  %v61 = vld [vmem:[%s0 + $0x50] sm:$0xf]
  %v62 = vld [vmem:[%s0 + $0x54] sm:$0xf]
  %v63 = vld [vmem:[%s0 + $0x58] sm:$0xf]
  %v64 = vld [vmem:[%s0 + $0x5c] sm:$0xf]
  %v65 = vld [vmem:[%s0 + $0x60] sm:$0xf]
  %v66 = vld [vmem:[%s0 + $0x64] sm:$0xf]
  %v67 = vld [vmem:[%s0 + $0x68] sm:$0xf]
  %v68 = vld [vmem:[%s0 + $0x6c] sm:$0xf]
  %v69 = vld [vmem:[%s0 + $0x70] sm:$0xf]
  %v70 = vld [vmem:[%s0 + $0x74] sm:$0xf]
  %v71 = vld [vmem:[%s0 + $0x78] sm:$0xf]
  %v72 = vld [vmem:[%s0 + $0x7c] sm:$0xf]
  %v73 = vld [vmem:[%s0 + $0x80] sm:$0xf]
  %v74 = vld [vmem:[%s0 + $0x84] sm:$0xf]
  %v75 = vld [vmem:[%s0 + $0x88] sm:$0xf]
  %v76 = vld [vmem:[%s0 + $0x8c] sm:$0xf]
  %v77 = vld [vmem:[%s0 + $0x90] sm:$0xf]
  %v78 = vld [vmem:[%s0 + $0x94] sm:$0xf]
  %v79 = vld [vmem:[%s0 + $0x98] sm:$0xf]
  %v80 = vld [vmem:[%s0 + $0x9c] sm:$0xf]
  %v81 = vld [vmem:[%s0 + $0xa0] sm:$0xf]
  %v82 = vld [vmem:[%s0 + $0xa4] sm:$0xf]
  %v83 = vld [vmem:[%s0 + $0xa8] sm:$0xf]
  %v84 = vld [vmem:[%s0 + $0xac] sm:$0xf]
  %v85 = vld [vmem:[%s0 + $0xb0] sm:$0xf]
  %v86 = vld [vmem:[%s0 + $0xb4] sm:$0xf]
  %v87 = vld [vmem:[%s0 + $0xb8] sm:$0xf]
  %v88 = vld [vmem:[%s0 + $0xbc] sm:$0xf]
  %v89 = vld [vmem:[%s1] sm:$0xff]
  %v90 = vld [vmem:[%s1 + $0x8] sm:$0xff]
  %v91 = vld [vmem:[%s2] sm:$0xf]
  %v93 = vlaneseq
  %v94 = vshrl.u32 %v93, 7
  %v95 = vsub.s32 0, %v94
  %v96 = vrot.slane %v91, %v95
  %v97 = vlaneseq
  %v98 = vshrl.u32 %v97, 7
  %v99 = vsub.s32 1, %v98
  %v100 = vrot.slane %v91, %v99
  %v101 = vlaneseq
  %v102 = vshrl.u32 %v101, 7
  %v103 = vsub.s32 2, %v102
  %v104 = vrot.slane %v91, %v103
  %v105 = vlaneseq
  %v106 = vshrl.u32 %v105, 7
  %v107 = vsub.s32 3, %v106
  %v108 = vrot.slane %v91, %v107
  %v161 = vunpack.c.l.b16 %v41
  %v162 = vunpack.c.l.b16 %v42
  %v163 = vunpack.c.l.b16 %v43
  %v164 = vunpack.c.l.b16 %v44
  %v165 = vunpack.c.l.b16 %v45
  %v166 = vunpack.c.l.b16 %v46
  %v167 = vunpack.c.l.b16 %v47
  %v168 = vunpack.c.l.b16 %v48
  %v169 = vunpack.c.l.b16 %v49
  %v170 = vunpack.c.l.b16 %v50
  %v171 = vunpack.c.l.b16 %v51
  %v172 = vunpack.c.l.b16 %v52
  %v173 = vunpack.c.l.b16 %v53
  %v174 = vunpack.c.l.b16 %v54
  %v175 = vunpack.c.l.b16 %v55
  %v176 = vunpack.c.l.b16 %v56
  %v177 = vunpack.c.l.b16 %v57
  %v178 = vunpack.c.l.b16 %v58
  %v179 = vunpack.c.l.b16 %v59
  %v180 = vunpack.c.l.b16 %v60
  %v181 = vunpack.c.l.b16 %v61
  %v182 = vunpack.c.l.b16 %v62
  %v183 = vunpack.c.l.b16 %v63
  %v184 = vunpack.c.l.b16 %v64
  %v185 = vunpack.c.l.b16 %v65
  %v186 = vunpack.c.l.b16 %v66
  %v187 = vunpack.c.l.b16 %v67
  %v188 = vunpack.c.l.b16 %v68
  %v189 = vunpack.c.l.b16 %v69
  %v190 = vunpack.c.l.b16 %v70
  %v191 = vunpack.c.l.b16 %v71
  %v192 = vunpack.c.l.b16 %v72
  %v193 = vunpack.c.l.b16 %v73
  %v194 = vunpack.c.l.b16 %v74
  %v195 = vunpack.c.l.b16 %v75
  %v196 = vunpack.c.l.b16 %v76
  %v197 = vunpack.c.l.b16 %v77
  %v198 = vunpack.c.l.b16 %v78
  %v199 = vunpack.c.l.b16 %v79
  %v200 = vunpack.c.l.b16 %v80
  %v201 = vunpack.c.l.b16 %v81
  %v202 = vunpack.c.l.b16 %v82
  %v203 = vunpack.c.l.b16 %v83
  %v204 = vunpack.c.l.b16 %v84
  %v205 = vunpack.c.l.b16 %v85
  %v206 = vunpack.c.l.b16 %v86
  %v207 = vunpack.c.l.b16 %v87
  %v208 = vunpack.c.l.b16 %v88
  %v209 = vpack.c.b16 %v162, %v161
  %v210 = vpack.c.b16 %v164, %v163
  %v211 = vpack.c.b16 %v166, %v165
  %v212 = vpack.c.b16 %v168, %v167
  %v213 = vpack.c.b16 %v170, %v169
  %v214 = vpack.c.b16 %v172, %v171
  %v215 = vpack.c.b16 %v174, %v173
  %v216 = vpack.c.b16 %v176, %v175
  %v217 = vpack.c.b16 %v178, %v177
  %v218 = vpack.c.b16 %v180, %v179
  %v219 = vpack.c.b16 %v182, %v181
  %v220 = vpack.c.b16 %v184, %v183
  %v221 = vpack.c.b16 %v186, %v185
  %v222 = vpack.c.b16 %v188, %v187
  %v223 = vpack.c.b16 %v190, %v189
  %v224 = vpack.c.b16 %v192, %v191
  %v225 = vpack.c.b16 %v194, %v193
  %v226 = vpack.c.b16 %v196, %v195
  %v227 = vpack.c.b16 %v198, %v197
  %v228 = vpack.c.b16 %v200, %v199
  %v229 = vpack.c.b16 %v202, %v201
  %v230 = vpack.c.b16 %v204, %v203
  %v231 = vpack.c.b16 %v206, %v205
  %v232 = vpack.c.b16 %v208, %v207
  %v235 = vunpack.c.l.b16 %v89
  %v236 = vunpack.c.h.b16 %v89
  %v237 = vunpack.c.l.b16 %v90
  %v238 = vunpack.c.h.b16 %v90
  %v239 = vpack.c.b16 %v235, %v235
  %v240 = vpack.c.b16 %v236, %v236
  %v241 = vpack.c.b16 %v237, %v237
  %v242 = vpack.c.b16 %v238, %v238
  %vm243 = vcmask 64512
  %v245 = vsel %vm243, %v209, 0
  %v248 = vsel %vm243, %v210, 0
  %v251 = vsel %vm243, %v211, 0
  %v254 = vsel %vm243, %v212, 0
  %v257 = vsel %vm243, %v213, 0
  %v260 = vsel %vm243, %v214, 0
  %v263 = vsel %vm243, %v215, 0
  %v266 = vsel %vm243, %v216, 0
  %v269 = vsel %vm243, %v217, 0
  %v272 = vsel %vm243, %v218, 0
  %v275 = vsel %vm243, %v219, 0
  %v278 = vsel %vm243, %v220, 0
  %v281 = vsel %vm243, %v221, 0
  %v284 = vsel %vm243, %v222, 0
  %v287 = vsel %vm243, %v223, 0
  %v290 = vsel %vm243, %v224, 0
  %v293 = vsel %vm243, %v225, 0
  %v296 = vsel %vm243, %v226, 0
  %v299 = vsel %vm243, %v227, 0
  %v302 = vsel %vm243, %v228, 0
  %v305 = vsel %vm243, %v229, 0
  %v308 = vsel %vm243, %v230, 0
  %v311 = vsel %vm243, %v231, 0
  %v314 = vsel %vm243, %v232, 0
  %vm316 = vcmask 1043456
  %v318 = vsel %vm316, %v239, 0
  %v321 = vsel %vm316, %v240, 0
  %v324 = vsel %vm316, %v241, 0
  %v327 = vsel %vm316, %v242, 0
  %329 = vmatprep.subr.bf16.mxu0 %v321
  %330 = vmatpush1.bf16.msra.mxu0 %v318
  %331 = vmatprep.subr.bf16.mxu0 0
  %332 = vmatpush1.bf16.msra.mxu0 0
  %333 = vmatprep.subr.bf16.mxu0 0
  %334 = vmatpush1.bf16.msra.mxu0 0
  %335 = vmatprep.subr.bf16.mxu0 0
  %336 = vmatpush1.bf16.msra.mxu0 0
  %337 = vmatprep.subr.bf16.mxu0 0
  %338 = vmatpush1.bf16.msra.mxu0 0
  %339 = vmatprep.subr.bf16.mxu0 0
  %340 = vmatpush1.bf16.msra.mxu0 0
  %341 = vmatprep.subr.bf16.mxu0 0
  %342 = vmatpush1.bf16.msra.mxu0 0
  %343 = vmatprep.subr.bf16.mxu0 0
  %344 = vmatpush1.bf16.msra.mxu0 0
  %345 = vmatprep.subr.bf16.mxu0 0
  %346 = vmatpush1.bf16.msra.mxu0 0
  %347 = vmatprep.subr.bf16.mxu0 0
  %348 = vmatpush1.bf16.msra.mxu0 0
  %349 = vmatprep.subr.bf16.mxu0 0
  %350 = vmatpush1.bf16.msra.mxu0 0
  %351 = vmatprep.subr.bf16.mxu0 0
  %352 = vmatpush1.bf16.msra.mxu0 0
  %353 = vmatprep.subr.bf16.mxu0 0
  %354 = vmatpush1.bf16.msra.mxu0 0
  %355 = vmatprep.subr.bf16.mxu0 0
  %356 = vmatpush1.bf16.msra.mxu0 0
  %357 = vmatprep.subr.bf16.mxu0 0
  %358 = vmatpush1.bf16.msra.mxu0 0
  %359 = vmatprep.subr.bf16.mxu0 0
  %360 = vmatpush1.bf16.msra.mxu0 0
  %361 = vmatprep.mubr.bf16.mxu0 0
  %362 = vmatmul.mubr.bf16.gmra.mrb[0].mxu0 %v245
  %v363 = vpop.f32.mrb[0].mxu0
  %v364 = vadd.f32 %v96, %v363
  %v365 = vpop.f32.mrb[0].mxu0
  %v366 = vadd.f32 %v100, %v365
  %v367 = vpop.f32.mrb[0].mxu0
  %v368 = vadd.f32 %v96, %v367
  %v369 = vpop.f32.mrb[0].mxu0
  %v370 = vadd.f32 %v100, %v369
  %371 = vmatprep.mubr.bf16.mxu0 0
  %372 = vmatmul.mubr.bf16.gmra.mrb[0].mxu0 %v248
  %v373 = vpop.f32.mrb[0].mxu0
  %v374 = vadd.f32 %v96, %v373
  %v375 = vpop.f32.mrb[0].mxu0
  %v376 = vadd.f32 %v100, %v375
  %v377 = vpop.f32.mrb[0].mxu0
  %v378 = vadd.f32 %v96, %v377
  %v379 = vpop.f32.mrb[0].mxu0
  %v380 = vadd.f32 %v100, %v379
  %381 = vmatprep.mubr.bf16.mxu0 0
  %382 = vmatmul.mubr.bf16.gmra.mrb[0].mxu0 %v251
  %v383 = vpop.f32.mrb[0].mxu0
  %v384 = vadd.f32 %v96, %v383
  %v385 = vpop.f32.mrb[0].mxu0
  %v386 = vadd.f32 %v100, %v385
  %v387 = vpop.f32.mrb[0].mxu0
  %v388 = vadd.f32 %v96, %v387
  %v389 = vpop.f32.mrb[0].mxu0
  %v390 = vadd.f32 %v100, %v389
  %391 = vmatprep.mubr.bf16.mxu0 0
  %392 = vmatmul.mubr.bf16.gmra.mrb[0].mxu0 %v254
  %v393 = vpop.f32.mrb[0].mxu0
  %v394 = vadd.f32 %v96, %v393
  %v395 = vpop.f32.mrb[0].mxu0
  %v396 = vadd.f32 %v100, %v395
  %v397 = vpop.f32.mrb[0].mxu0
  %v398 = vadd.f32 %v96, %v397
  %v399 = vpop.f32.mrb[0].mxu0
  %v400 = vadd.f32 %v100, %v399
  %401 = vmatprep.mubr.bf16.mxu0 0
  %402 = vmatmul.mubr.bf16.gmra.mrb[0].mxu0 %v257
  %v403 = vpop.f32.mrb[0].mxu0
  %v404 = vadd.f32 %v96, %v403
  %v405 = vpop.f32.mrb[0].mxu0
  %v406 = vadd.f32 %v100, %v405
  %v407 = vpop.f32.mrb[0].mxu0
  %v408 = vadd.f32 %v96, %v407
  %v409 = vpop.f32.mrb[0].mxu0
  %v410 = vadd.f32 %v100, %v409
  %411 = vmatprep.mubr.bf16.mxu0 0
  %412 = vmatmul.mubr.bf16.gmra.mrb[0].mxu0 %v260
  %v413 = vpop.f32.mrb[0].mxu0
  %v414 = vadd.f32 %v96, %v413
  %v415 = vpop.f32.mrb[0].mxu0
  %v416 = vadd.f32 %v100, %v415
  %v417 = vpop.f32.mrb[0].mxu0
  %v418 = vadd.f32 %v96, %v417
  %v419 = vpop.f32.mrb[0].mxu0
  %v420 = vadd.f32 %v100, %v419
  %421 = vmatprep.mubr.bf16.mxu0 0
  %422 = vmatmul.mubr.bf16.gmra.mrb[0].mxu0 %v263
  %v423 = vpop.f32.mrb[0].mxu0
  %v424 = vadd.f32 %v96, %v423
  %v425 = vpop.f32.mrb[0].mxu0
  %v426 = vadd.f32 %v100, %v425
  %v427 = vpop.f32.mrb[0].mxu0
  %v428 = vadd.f32 %v96, %v427
  %v429 = vpop.f32.mrb[0].mxu0
  %v430 = vadd.f32 %v100, %v429
  %431 = vmatprep.mubr.bf16.mxu0 0
  %432 = vmatmul.mubr.bf16.gmra.mrb[0].mxu0 %v266
  %v433 = vpop.f32.mrb[0].mxu0
  %v434 = vadd.f32 %v96, %v433
  %v435 = vpop.f32.mrb[0].mxu0
  %v436 = vadd.f32 %v100, %v435
  %v437 = vpop.f32.mrb[0].mxu0
  %v438 = vadd.f32 %v96, %v437
  %v439 = vpop.f32.mrb[0].mxu0
  %v440 = vadd.f32 %v100, %v439
  %441 = vmatprep.mubr.bf16.mxu0 0
  %442 = vmatmul.mubr.bf16.gmra.mrb[0].mxu0 %v269
  %v443 = vpop.f32.mrb[0].mxu0
  %v444 = vadd.f32 %v96, %v443
  %v445 = vpop.f32.mrb[0].mxu0
  %v446 = vadd.f32 %v100, %v445
  %v447 = vpop.f32.mrb[0].mxu0
  %v448 = vadd.f32 %v96, %v447
  %v449 = vpop.f32.mrb[0].mxu0
  %v450 = vadd.f32 %v100, %v449
  %451 = vmatprep.mubr.bf16.mxu0 0
  %452 = vmatmul.mubr.bf16.gmra.mrb[0].mxu0 %v272
  %v453 = vpop.f32.mrb[0].mxu0
  %v454 = vadd.f32 %v96, %v453
  %v455 = vpop.f32.mrb[0].mxu0
  %v456 = vadd.f32 %v100, %v455
  %v457 = vpop.f32.mrb[0].mxu0
  %v458 = vadd.f32 %v96, %v457
  %v459 = vpop.f32.mrb[0].mxu0
  %v460 = vadd.f32 %v100, %v459
  %461 = vmatprep.mubr.bf16.mxu0 0
  %462 = vmatmul.mubr.bf16.gmra.mrb[0].mxu0 %v275
  %v463 = vpop.f32.mrb[0].mxu0
  %v464 = vadd.f32 %v96, %v463
  %v465 = vpop.f32.mrb[0].mxu0
  %v466 = vadd.f32 %v100, %v465
  %v467 = vpop.f32.mrb[0].mxu0
  %v468 = vadd.f32 %v96, %v467
  %v469 = vpop.f32.mrb[0].mxu0
  %v470 = vadd.f32 %v100, %v469
  %471 = vmatprep.mubr.bf16.mxu0 0
  %472 = vmatmul.mubr.bf16.gmra.mrb[0].mxu0 %v278
  %v473 = vpop.f32.mrb[0].mxu0
  %v474 = vadd.f32 %v96, %v473
  %v475 = vpop.f32.mrb[0].mxu0
  %v476 = vadd.f32 %v100, %v475
  %v477 = vpop.f32.mrb[0].mxu0
  %v478 = vadd.f32 %v96, %v477
  %v479 = vpop.f32.mrb[0].mxu0
  %v480 = vadd.f32 %v100, %v479
  %481 = vmatprep.mubr.bf16.mxu0 0
  %482 = vmatmul.mubr.bf16.gmra.mrb[0].mxu0 %v281
  %v483 = vpop.f32.mrb[0].mxu0
  %v484 = vadd.f32 %v96, %v483
  %v485 = vpop.f32.mrb[0].mxu0
  %v486 = vadd.f32 %v100, %v485
  %v487 = vpop.f32.mrb[0].mxu0
  %v488 = vadd.f32 %v96, %v487
  %v489 = vpop.f32.mrb[0].mxu0
  %v490 = vadd.f32 %v100, %v489
  %491 = vmatprep.mubr.bf16.mxu0 0
  %492 = vmatmul.mubr.bf16.gmra.mrb[0].mxu0 %v284
  %v493 = vpop.f32.mrb[0].mxu0
  %v494 = vadd.f32 %v96, %v493
  %v495 = vpop.f32.mrb[0].mxu0
  %v496 = vadd.f32 %v100, %v495
  %v497 = vpop.f32.mrb[0].mxu0
  %v498 = vadd.f32 %v96, %v497
  %v499 = vpop.f32.mrb[0].mxu0
  %v500 = vadd.f32 %v100, %v499
  %501 = vmatprep.mubr.bf16.mxu0 0
  %502 = vmatmul.mubr.bf16.gmra.mrb[0].mxu0 %v287
  %v503 = vpop.f32.mrb[0].mxu0
  %v504 = vadd.f32 %v96, %v503
  %v505 = vpop.f32.mrb[0].mxu0
  %v506 = vadd.f32 %v100, %v505
  %v507 = vpop.f32.mrb[0].mxu0
  %v508 = vadd.f32 %v96, %v507
  %v509 = vpop.f32.mrb[0].mxu0
  %v510 = vadd.f32 %v100, %v509
  %511 = vmatprep.mubr.bf16.mxu0 0
  %512 = vmatmul.mubr.bf16.gmra.mrb[0].mxu0 %v290
  %v513 = vpop.f32.mrb[0].mxu0
  %v514 = vadd.f32 %v96, %v513
  %v515 = vpop.f32.mrb[0].mxu0
  %v516 = vadd.f32 %v100, %v515
  %v517 = vpop.f32.mrb[0].mxu0
  %v518 = vadd.f32 %v96, %v517
  %v519 = vpop.f32.mrb[0].mxu0
  %v520 = vadd.f32 %v100, %v519
  %521 = vmatprep.mubr.bf16.mxu0 0
  %522 = vmatmul.mubr.bf16.gmra.mrb[0].mxu0 %v293
  %v523 = vpop.f32.mrb[0].mxu0
  %v524 = vadd.f32 %v96, %v523
  %v525 = vpop.f32.mrb[0].mxu0
  %v526 = vadd.f32 %v100, %v525
  %v527 = vpop.f32.mrb[0].mxu0
  %v528 = vadd.f32 %v96, %v527
  %v529 = vpop.f32.mrb[0].mxu0
  %v530 = vadd.f32 %v100, %v529
  %531 = vmatprep.mubr.bf16.mxu0 0
  %532 = vmatmul.mubr.bf16.gmra.mrb[0].mxu0 %v296
  %v533 = vpop.f32.mrb[0].mxu0
  %v534 = vadd.f32 %v96, %v533
  %v535 = vpop.f32.mrb[0].mxu0
  %v536 = vadd.f32 %v100, %v535
  %v537 = vpop.f32.mrb[0].mxu0
  %v538 = vadd.f32 %v96, %v537
  %v539 = vpop.f32.mrb[0].mxu0
  %v540 = vadd.f32 %v100, %v539
  %541 = vmatprep.mubr.bf16.mxu0 0
  %542 = vmatmul.mubr.bf16.gmra.mrb[0].mxu0 %v299
  %v543 = vpop.f32.mrb[0].mxu0
  %v544 = vadd.f32 %v96, %v543
  %v545 = vpop.f32.mrb[0].mxu0
  %v546 = vadd.f32 %v100, %v545
  %v547 = vpop.f32.mrb[0].mxu0
  %v548 = vadd.f32 %v96, %v547
  %v549 = vpop.f32.mrb[0].mxu0
  %v550 = vadd.f32 %v100, %v549
  %551 = vmatprep.mubr.bf16.mxu0 0
  %552 = vmatmul.mubr.bf16.gmra.mrb[0].mxu0 %v302
  %v553 = vpop.f32.mrb[0].mxu0
  %v554 = vadd.f32 %v96, %v553
  %v555 = vpop.f32.mrb[0].mxu0
  %v556 = vadd.f32 %v100, %v555
  %v557 = vpop.f32.mrb[0].mxu0
  %v558 = vadd.f32 %v96, %v557
  %v559 = vpop.f32.mrb[0].mxu0
  %v560 = vadd.f32 %v100, %v559
  %561 = vmatprep.mubr.bf16.mxu0 0
  %562 = vmatmul.mubr.bf16.gmra.mrb[0].mxu0 %v305
  %v563 = vpop.f32.mrb[0].mxu0
  %v564 = vadd.f32 %v96, %v563
  %v565 = vpop.f32.mrb[0].mxu0
  %v566 = vadd.f32 %v100, %v565
  %v567 = vpop.f32.mrb[0].mxu0
  %v568 = vadd.f32 %v96, %v567
  %v569 = vpop.f32.mrb[0].mxu0
  %v570 = vadd.f32 %v100, %v569
  %571 = vmatprep.mubr.bf16.mxu0 0
  %572 = vmatmul.mubr.bf16.gmra.mrb[0].mxu0 %v308
  %v573 = vpop.f32.mrb[0].mxu0
  %v574 = vadd.f32 %v96, %v573
  %v575 = vpop.f32.mrb[0].mxu0
  %v576 = vadd.f32 %v100, %v575
  %v577 = vpop.f32.mrb[0].mxu0
  %v578 = vadd.f32 %v96, %v577
  %v579 = vpop.f32.mrb[0].mxu0
  %v580 = vadd.f32 %v100, %v579
  %581 = vmatprep.mubr.bf16.mxu0 0
  %582 = vmatmul.mubr.bf16.gmra.mrb[0].mxu0 %v311
  %v583 = vpop.f32.mrb[0].mxu0
  %v584 = vadd.f32 %v96, %v583
  %v585 = vpop.f32.mrb[0].mxu0
  %v586 = vadd.f32 %v100, %v585
  %v587 = vpop.f32.mrb[0].mxu0
  %v588 = vadd.f32 %v96, %v587
  %v589 = vpop.f32.mrb[0].mxu0
  %v590 = vadd.f32 %v100, %v589
  %591 = vmatprep.mubr.bf16.mxu0 0
  %592 = vmatmul.mubr.bf16.gmra.mrb[0].mxu0 %v314
  %v593 = vpop.f32.mrb[0].mxu0
  %v594 = vadd.f32 %v96, %v593
  %v595 = vpop.f32.mrb[0].mxu0
  %v596 = vadd.f32 %v100, %v595
  %v597 = vpop.f32.mrb[0].mxu0
  %v598 = vadd.f32 %v96, %v597
  %v599 = vpop.f32.mrb[0].mxu0
  %v600 = vadd.f32 %v100, %v599
  %601 = vdwg.mxu0
  %602 = vmatprep.subr.bf16.mxu0 %v327
  %603 = vmatpush1.bf16.msra.mxu0 %v324
  %604 = vmatprep.subr.bf16.mxu0 0
  %605 = vmatpush1.bf16.msra.mxu0 0
  %606 = vmatprep.subr.bf16.mxu0 0
  %607 = vmatpush1.bf16.msra.mxu0 0
  %608 = vmatprep.subr.bf16.mxu0 0
  %609 = vmatpush1.bf16.msra.mxu0 0
  %610 = vmatprep.subr.bf16.mxu0 0
  %611 = vmatpush1.bf16.msra.mxu0 0
  %612 = vmatprep.subr.bf16.mxu0 0
  %613 = vmatpush1.bf16.msra.mxu0 0
  %614 = vmatprep.subr.bf16.mxu0 0
  %615 = vmatpush1.bf16.msra.mxu0 0
  %616 = vmatprep.subr.bf16.mxu0 0
  %617 = vmatpush1.bf16.msra.mxu0 0
  %618 = vmatprep.subr.bf16.mxu0 0
  %619 = vmatpush1.bf16.msra.mxu0 0
  %620 = vmatprep.subr.bf16.mxu0 0
  %621 = vmatpush1.bf16.msra.mxu0 0
  %622 = vmatprep.subr.bf16.mxu0 0
  %623 = vmatpush1.bf16.msra.mxu0 0
  %624 = vmatprep.subr.bf16.mxu0 0
  %625 = vmatpush1.bf16.msra.mxu0 0
  %626 = vmatprep.subr.bf16.mxu0 0
  %627 = vmatpush1.bf16.msra.mxu0 0
  %628 = vmatprep.subr.bf16.mxu0 0
  %629 = vmatpush1.bf16.msra.mxu0 0
  %630 = vmatprep.subr.bf16.mxu0 0
  %631 = vmatpush1.bf16.msra.mxu0 0
  %632 = vmatprep.subr.bf16.mxu0 0
  %633 = vmatpush1.bf16.msra.mxu0 0
  %634 = vmatprep.mubr.bf16.mxu0 0
  %635 = vmatmul.mubr.bf16.gmra.mrb[0].mxu0 %v245
  %v636 = vpop.f32.mrb[0].mxu0
  %v637 = vadd.f32 %v104, %v636
  %v638 = vpop.f32.mrb[0].mxu0
  %v639 = vadd.f32 %v108, %v638
  %v640 = vpop.f32.mrb[0].mxu0
  %v641 = vadd.f32 %v104, %v640
  %v642 = vpop.f32.mrb[0].mxu0
  %v643 = vadd.f32 %v108, %v642
  %644 = vmatprep.mubr.bf16.mxu0 0
  %645 = vmatmul.mubr.bf16.gmra.mrb[0].mxu0 %v248
  %v646 = vpop.f32.mrb[0].mxu0
  %v647 = vadd.f32 %v104, %v646
  %v648 = vpop.f32.mrb[0].mxu0
  %v649 = vadd.f32 %v108, %v648
  %v650 = vpop.f32.mrb[0].mxu0
  %v651 = vadd.f32 %v104, %v650
  %v652 = vpop.f32.mrb[0].mxu0
  %v653 = vadd.f32 %v108, %v652
  %654 = vmatprep.mubr.bf16.mxu0 0
  %655 = vmatmul.mubr.bf16.gmra.mrb[0].mxu0 %v251
  %v656 = vpop.f32.mrb[0].mxu0
  %v657 = vadd.f32 %v104, %v656
  %v658 = vpop.f32.mrb[0].mxu0
  %v659 = vadd.f32 %v108, %v658
  %v660 = vpop.f32.mrb[0].mxu0
  %v661 = vadd.f32 %v104, %v660
  %v662 = vpop.f32.mrb[0].mxu0
  %v663 = vadd.f32 %v108, %v662
  %664 = vmatprep.mubr.bf16.mxu0 0
  %665 = vmatmul.mubr.bf16.gmra.mrb[0].mxu0 %v254
  %v666 = vpop.f32.mrb[0].mxu0
  %v667 = vadd.f32 %v104, %v666
  %v668 = vpop.f32.mrb[0].mxu0
  %v669 = vadd.f32 %v108, %v668
  %v670 = vpop.f32.mrb[0].mxu0
  %v671 = vadd.f32 %v104, %v670
  %v672 = vpop.f32.mrb[0].mxu0
  %v673 = vadd.f32 %v108, %v672
  %674 = vmatprep.mubr.bf16.mxu0 0
  %675 = vmatmul.mubr.bf16.gmra.mrb[0].mxu0 %v257
  %v676 = vpop.f32.mrb[0].mxu0
  %v677 = vadd.f32 %v104, %v676
  %v678 = vpop.f32.mrb[0].mxu0
  %v679 = vadd.f32 %v108, %v678
  %v680 = vpop.f32.mrb[0].mxu0
  %v681 = vadd.f32 %v104, %v680
  %v682 = vpop.f32.mrb[0].mxu0
  %v683 = vadd.f32 %v108, %v682
  %684 = vmatprep.mubr.bf16.mxu0 0
  %685 = vmatmul.mubr.bf16.gmra.mrb[0].mxu0 %v260
  %v686 = vpop.f32.mrb[0].mxu0
  %v687 = vadd.f32 %v104, %v686
  %v688 = vpop.f32.mrb[0].mxu0
  %v689 = vadd.f32 %v108, %v688
  %v690 = vpop.f32.mrb[0].mxu0
  %v691 = vadd.f32 %v104, %v690
  %v692 = vpop.f32.mrb[0].mxu0
  %v693 = vadd.f32 %v108, %v692
  %694 = vmatprep.mubr.bf16.mxu0 0
  %695 = vmatmul.mubr.bf16.gmra.mrb[0].mxu0 %v263
  %v696 = vpop.f32.mrb[0].mxu0
  %v697 = vadd.f32 %v104, %v696
  %v698 = vpop.f32.mrb[0].mxu0
  %v699 = vadd.f32 %v108, %v698
  %v700 = vpop.f32.mrb[0].mxu0
  %v701 = vadd.f32 %v104, %v700
  %v702 = vpop.f32.mrb[0].mxu0
  %v703 = vadd.f32 %v108, %v702
  %704 = vmatprep.mubr.bf16.mxu0 0
  %705 = vmatmul.mubr.bf16.gmra.mrb[0].mxu0 %v266
  %v706 = vpop.f32.mrb[0].mxu0
  %v707 = vadd.f32 %v104, %v706
  %v708 = vpop.f32.mrb[0].mxu0
  %v709 = vadd.f32 %v108, %v708
  %v710 = vpop.f32.mrb[0].mxu0
  %v711 = vadd.f32 %v104, %v710
  %v712 = vpop.f32.mrb[0].mxu0
  %v713 = vadd.f32 %v108, %v712
  %714 = vmatprep.mubr.bf16.mxu0 0
  %715 = vmatmul.mubr.bf16.gmra.mrb[0].mxu0 %v269
  %v716 = vpop.f32.mrb[0].mxu0
  %v717 = vadd.f32 %v104, %v716
  %v718 = vpop.f32.mrb[0].mxu0
  %v719 = vadd.f32 %v108, %v718
  %v720 = vpop.f32.mrb[0].mxu0
  %v721 = vadd.f32 %v104, %v720
  %v722 = vpop.f32.mrb[0].mxu0
  %v723 = vadd.f32 %v108, %v722
  %724 = vmatprep.mubr.bf16.mxu0 0
  %725 = vmatmul.mubr.bf16.gmra.mrb[0].mxu0 %v272
  %v726 = vpop.f32.mrb[0].mxu0
  %v727 = vadd.f32 %v104, %v726
  %v728 = vpop.f32.mrb[0].mxu0
  %v729 = vadd.f32 %v108, %v728
  %v730 = vpop.f32.mrb[0].mxu0
  %v731 = vadd.f32 %v104, %v730
  %v732 = vpop.f32.mrb[0].mxu0
  %v733 = vadd.f32 %v108, %v732
  %734 = vmatprep.mubr.bf16.mxu0 0
  %735 = vmatmul.mubr.bf16.gmra.mrb[0].mxu0 %v275
  %v736 = vpop.f32.mrb[0].mxu0
  %v737 = vadd.f32 %v104, %v736
  %v738 = vpop.f32.mrb[0].mxu0
  %v739 = vadd.f32 %v108, %v738
  %v740 = vpop.f32.mrb[0].mxu0
  %v741 = vadd.f32 %v104, %v740
  %v742 = vpop.f32.mrb[0].mxu0
  %v743 = vadd.f32 %v108, %v742
  %744 = vmatprep.mubr.bf16.mxu0 0
  %745 = vmatmul.mubr.bf16.gmra.mrb[0].mxu0 %v278
  %v746 = vpop.f32.mrb[0].mxu0
  %v747 = vadd.f32 %v104, %v746
  %v748 = vpop.f32.mrb[0].mxu0
  %v749 = vadd.f32 %v108, %v748
  %v750 = vpop.f32.mrb[0].mxu0
  %v751 = vadd.f32 %v104, %v750
  %v752 = vpop.f32.mrb[0].mxu0
  %v753 = vadd.f32 %v108, %v752
  %754 = vmatprep.mubr.bf16.mxu0 0
  %755 = vmatmul.mubr.bf16.gmra.mrb[0].mxu0 %v281
  %v756 = vpop.f32.mrb[0].mxu0
  %v757 = vadd.f32 %v104, %v756
  %v758 = vpop.f32.mrb[0].mxu0
  %v759 = vadd.f32 %v108, %v758
  %v760 = vpop.f32.mrb[0].mxu0
  %v761 = vadd.f32 %v104, %v760
  %v762 = vpop.f32.mrb[0].mxu0
  %v763 = vadd.f32 %v108, %v762
  %764 = vmatprep.mubr.bf16.mxu0 0
  %765 = vmatmul.mubr.bf16.gmra.mrb[0].mxu0 %v284
  %v766 = vpop.f32.mrb[0].mxu0
  %v767 = vadd.f32 %v104, %v766
  %v768 = vpop.f32.mrb[0].mxu0
  %v769 = vadd.f32 %v108, %v768
  %v770 = vpop.f32.mrb[0].mxu0
  %v771 = vadd.f32 %v104, %v770
  %v772 = vpop.f32.mrb[0].mxu0
  %v773 = vadd.f32 %v108, %v772
  %774 = vmatprep.mubr.bf16.mxu0 0
  %775 = vmatmul.mubr.bf16.gmra.mrb[0].mxu0 %v287
  %v776 = vpop.f32.mrb[0].mxu0
  %v777 = vadd.f32 %v104, %v776
  %v778 = vpop.f32.mrb[0].mxu0
  %v779 = vadd.f32 %v108, %v778
  %v780 = vpop.f32.mrb[0].mxu0
  %v781 = vadd.f32 %v104, %v780
  %v782 = vpop.f32.mrb[0].mxu0
  %v783 = vadd.f32 %v108, %v782
  %784 = vmatprep.mubr.bf16.mxu0 0
  %785 = vmatmul.mubr.bf16.gmra.mrb[0].mxu0 %v290
  %v786 = vpop.f32.mrb[0].mxu0
  %v787 = vadd.f32 %v104, %v786
  %v788 = vpop.f32.mrb[0].mxu0
  %v789 = vadd.f32 %v108, %v788
  %v790 = vpop.f32.mrb[0].mxu0
  %v791 = vadd.f32 %v104, %v790
  %v792 = vpop.f32.mrb[0].mxu0
  %v793 = vadd.f32 %v108, %v792
  %794 = vmatprep.mubr.bf16.mxu0 0
  %795 = vmatmul.mubr.bf16.gmra.mrb[0].mxu0 %v293
  %v796 = vpop.f32.mrb[0].mxu0
  %v797 = vadd.f32 %v104, %v796
  %v798 = vpop.f32.mrb[0].mxu0
  %v799 = vadd.f32 %v108, %v798
  %v800 = vpop.f32.mrb[0].mxu0
  %v801 = vadd.f32 %v104, %v800
  %v802 = vpop.f32.mrb[0].mxu0
  %v803 = vadd.f32 %v108, %v802
  %804 = vmatprep.mubr.bf16.mxu0 0
  %805 = vmatmul.mubr.bf16.gmra.mrb[0].mxu0 %v296
  %v806 = vpop.f32.mrb[0].mxu0
  %v807 = vadd.f32 %v104, %v806
  %v808 = vpop.f32.mrb[0].mxu0
  %v809 = vadd.f32 %v108, %v808
  %v810 = vpop.f32.mrb[0].mxu0
  %v811 = vadd.f32 %v104, %v810
  %v812 = vpop.f32.mrb[0].mxu0
  %v813 = vadd.f32 %v108, %v812
  %814 = vmatprep.mubr.bf16.mxu0 0
  %815 = vmatmul.mubr.bf16.gmra.mrb[0].mxu0 %v299
  %v816 = vpop.f32.mrb[0].mxu0
  %v817 = vadd.f32 %v104, %v816
  %v818 = vpop.f32.mrb[0].mxu0
  %v819 = vadd.f32 %v108, %v818
  %v820 = vpop.f32.mrb[0].mxu0
  %v821 = vadd.f32 %v104, %v820
  %v822 = vpop.f32.mrb[0].mxu0
  %v823 = vadd.f32 %v108, %v822
  %824 = vmatprep.mubr.bf16.mxu0 0
  %825 = vmatmul.mubr.bf16.gmra.mrb[0].mxu0 %v302
  %v826 = vpop.f32.mrb[0].mxu0
  %v827 = vadd.f32 %v104, %v826
  %v828 = vpop.f32.mrb[0].mxu0
  %v829 = vadd.f32 %v108, %v828
  %v830 = vpop.f32.mrb[0].mxu0
  %v831 = vadd.f32 %v104, %v830
  %v832 = vpop.f32.mrb[0].mxu0
  %v833 = vadd.f32 %v108, %v832
  %834 = vmatprep.mubr.bf16.mxu0 0
  %835 = vmatmul.mubr.bf16.gmra.mrb[0].mxu0 %v305
  %v836 = vpop.f32.mrb[0].mxu0
  %v837 = vadd.f32 %v104, %v836
  %v838 = vpop.f32.mrb[0].mxu0
  %v839 = vadd.f32 %v108, %v838
  %v840 = vpop.f32.mrb[0].mxu0
  %v841 = vadd.f32 %v104, %v840
  %v842 = vpop.f32.mrb[0].mxu0
  %v843 = vadd.f32 %v108, %v842
  %844 = vmatprep.mubr.bf16.mxu0 0
  %845 = vmatmul.mubr.bf16.gmra.mrb[0].mxu0 %v308
  %v846 = vpop.f32.mrb[0].mxu0
  %v847 = vadd.f32 %v104, %v846
  %v848 = vpop.f32.mrb[0].mxu0
  %v849 = vadd.f32 %v108, %v848
  %v850 = vpop.f32.mrb[0].mxu0
  %v851 = vadd.f32 %v104, %v850
  %v852 = vpop.f32.mrb[0].mxu0
  %v853 = vadd.f32 %v108, %v852
  %854 = vmatprep.mubr.bf16.mxu0 0
  %855 = vmatmul.mubr.bf16.gmra.mrb[0].mxu0 %v311
  %v856 = vpop.f32.mrb[0].mxu0
  %v857 = vadd.f32 %v104, %v856
  %v858 = vpop.f32.mrb[0].mxu0
  %v859 = vadd.f32 %v108, %v858
  %v860 = vpop.f32.mrb[0].mxu0
  %v861 = vadd.f32 %v104, %v860
  %v862 = vpop.f32.mrb[0].mxu0
  %v863 = vadd.f32 %v108, %v862
  %864 = vmatprep.mubr.bf16.mxu0 0
  %865 = vmatmul.mubr.bf16.gmra.mrb[0].mxu0 %v314
  %v866 = vpop.f32.mrb[0].mxu0
  %v867 = vadd.f32 %v104, %v866
  %v868 = vpop.f32.mrb[0].mxu0
  %v869 = vadd.f32 %v108, %v868
  %v870 = vpop.f32.mrb[0].mxu0
  %v871 = vadd.f32 %v104, %v870
  %v872 = vpop.f32.mrb[0].mxu0
  %v873 = vadd.f32 %v108, %v872
  %874 = vdwg.mxu0
  %v875 = vmax.f32 %v364, 0.0
  %v876 = vmax.f32 %v366, 0.0
  %v877 = vmax.f32 %v637, 0.0
  %v878 = vmax.f32 %v639, 0.0
  %v879 = vmax.f32 %v368, 0.0
  %v880 = vmax.f32 %v370, 0.0
  %v881 = vmax.f32 %v641, 0.0
  %v882 = vmax.f32 %v643, 0.0
  %v883 = vmax.f32 %v374, 0.0
  %v884 = vmax.f32 %v376, 0.0
  %v885 = vmax.f32 %v647, 0.0
  %v886 = vmax.f32 %v649, 0.0
  %v887 = vmax.f32 %v378, 0.0
  %v888 = vmax.f32 %v380, 0.0
  %v889 = vmax.f32 %v651, 0.0
  %v890 = vmax.f32 %v653, 0.0
  %v891 = vmax.f32 %v384, 0.0
  %v892 = vmax.f32 %v386, 0.0
  %v893 = vmax.f32 %v657, 0.0
  %v894 = vmax.f32 %v659, 0.0
  %v895 = vmax.f32 %v388, 0.0
  %v896 = vmax.f32 %v390, 0.0
  %v897 = vmax.f32 %v661, 0.0
  %v898 = vmax.f32 %v663, 0.0
  %v899 = vmax.f32 %v394, 0.0
  %v900 = vmax.f32 %v396, 0.0
  %v901 = vmax.f32 %v667, 0.0
  %v902 = vmax.f32 %v669, 0.0
  %v903 = vmax.f32 %v398, 0.0
  %v904 = vmax.f32 %v400, 0.0
  %v905 = vmax.f32 %v671, 0.0
  %v906 = vmax.f32 %v673, 0.0
  %v907 = vmax.f32 %v404, 0.0
  %v908 = vmax.f32 %v406, 0.0
  %v909 = vmax.f32 %v677, 0.0
  %v910 = vmax.f32 %v679, 0.0
  %v911 = vmax.f32 %v408, 0.0
  %v912 = vmax.f32 %v410, 0.0
  %v913 = vmax.f32 %v681, 0.0
  %v914 = vmax.f32 %v683, 0.0
  %v915 = vmax.f32 %v414, 0.0
  %v916 = vmax.f32 %v416, 0.0
  %v917 = vmax.f32 %v687, 0.0
  %v918 = vmax.f32 %v689, 0.0
  %v919 = vmax.f32 %v418, 0.0
  %v920 = vmax.f32 %v420, 0.0
  %v921 = vmax.f32 %v691, 0.0
  %v922 = vmax.f32 %v693, 0.0
  %v923 = vmax.f32 %v424, 0.0
  %v924 = vmax.f32 %v426, 0.0
  %v925 = vmax.f32 %v697, 0.0
  %v926 = vmax.f32 %v699, 0.0
  %v927 = vmax.f32 %v428, 0.0
  %v928 = vmax.f32 %v430, 0.0
  %v929 = vmax.f32 %v701, 0.0
  %v930 = vmax.f32 %v703, 0.0
  %v931 = vmax.f32 %v434, 0.0
  %v932 = vmax.f32 %v436, 0.0
  %v933 = vmax.f32 %v707, 0.0
  %v934 = vmax.f32 %v709, 0.0
  %v935 = vmax.f32 %v438, 0.0
  %v936 = vmax.f32 %v440, 0.0
  %v937 = vmax.f32 %v711, 0.0
  %v938 = vmax.f32 %v713, 0.0
  %v939 = vmax.f32 %v444, 0.0
  %v940 = vmax.f32 %v446, 0.0
  %v941 = vmax.f32 %v717, 0.0
  %v942 = vmax.f32 %v719, 0.0
  %v943 = vmax.f32 %v448, 0.0
  %v944 = vmax.f32 %v450, 0.0
  %v945 = vmax.f32 %v721, 0.0
  %v946 = vmax.f32 %v723, 0.0
  %v947 = vmax.f32 %v454, 0.0
  %v948 = vmax.f32 %v456, 0.0
  %v949 = vmax.f32 %v727, 0.0
  %v950 = vmax.f32 %v729, 0.0
  %v951 = vmax.f32 %v458, 0.0
  %v952 = vmax.f32 %v460, 0.0
  %v953 = vmax.f32 %v731, 0.0
  %v954 = vmax.f32 %v733, 0.0
  %v955 = vmax.f32 %v464, 0.0
  %v956 = vmax.f32 %v466, 0.0
  %v957 = vmax.f32 %v737, 0.0
  %v958 = vmax.f32 %v739, 0.0
  %v959 = vmax.f32 %v468, 0.0
  %v960 = vmax.f32 %v470, 0.0
  %v961 = vmax.f32 %v741, 0.0
  %v962 = vmax.f32 %v743, 0.0
  %v963 = vmax.f32 %v474, 0.0
  %v964 = vmax.f32 %v476, 0.0
  %v965 = vmax.f32 %v747, 0.0
  %v966 = vmax.f32 %v749, 0.0
  %v967 = vmax.f32 %v478, 0.0
  %v968 = vmax.f32 %v480, 0.0
  %v969 = vmax.f32 %v751, 0.0
  %v970 = vmax.f32 %v753, 0.0
  %v971 = vmax.f32 %v484, 0.0
  %v972 = vmax.f32 %v486, 0.0
  %v973 = vmax.f32 %v757, 0.0
  %v974 = vmax.f32 %v759, 0.0
  %v975 = vmax.f32 %v488, 0.0
  %v976 = vmax.f32 %v490, 0.0
  %v977 = vmax.f32 %v761, 0.0
  %v978 = vmax.f32 %v763, 0.0
  %v979 = vmax.f32 %v494, 0.0
  %v980 = vmax.f32 %v496, 0.0
  %v981 = vmax.f32 %v767, 0.0
  %v982 = vmax.f32 %v769, 0.0
  %v983 = vmax.f32 %v498, 0.0
  %v984 = vmax.f32 %v500, 0.0
  %v985 = vmax.f32 %v771, 0.0
  %v986 = vmax.f32 %v773, 0.0
  %v987 = vmax.f32 %v504, 0.0
  %v988 = vmax.f32 %v506, 0.0
  %v989 = vmax.f32 %v777, 0.0
  %v990 = vmax.f32 %v779, 0.0
  %v991 = vmax.f32 %v508, 0.0
  %v992 = vmax.f32 %v510, 0.0
  %v993 = vmax.f32 %v781, 0.0
  %v994 = vmax.f32 %v783, 0.0
  %v995 = vmax.f32 %v514, 0.0
  %v996 = vmax.f32 %v516, 0.0
  %v997 = vmax.f32 %v787, 0.0
  %v998 = vmax.f32 %v789, 0.0
  %v999 = vmax.f32 %v518, 0.0
  %v1000 = vmax.f32 %v520, 0.0
  %v1001 = vmax.f32 %v791, 0.0
  %v1002 = vmax.f32 %v793, 0.0
  %v1003 = vmax.f32 %v524, 0.0
  %v1004 = vmax.f32 %v526, 0.0
  %v1005 = vmax.f32 %v797, 0.0
  %v1006 = vmax.f32 %v799, 0.0
  %v1007 = vmax.f32 %v528, 0.0
  %v1008 = vmax.f32 %v530, 0.0
  %v1009 = vmax.f32 %v801, 0.0
  %v1010 = vmax.f32 %v803, 0.0
  %v1011 = vmax.f32 %v534, 0.0
  %v1012 = vmax.f32 %v536, 0.0
  %v1013 = vmax.f32 %v807, 0.0
  %v1014 = vmax.f32 %v809, 0.0
  %v1015 = vmax.f32 %v538, 0.0
  %v1016 = vmax.f32 %v540, 0.0
  %v1017 = vmax.f32 %v811, 0.0
  %v1018 = vmax.f32 %v813, 0.0
  %v1019 = vmax.f32 %v544, 0.0
  %v1020 = vmax.f32 %v546, 0.0
  %v1021 = vmax.f32 %v817, 0.0
  %v1022 = vmax.f32 %v819, 0.0
  %v1023 = vmax.f32 %v548, 0.0
  %v1024 = vmax.f32 %v550, 0.0
  %v1025 = vmax.f32 %v821, 0.0
  %v1026 = vmax.f32 %v823, 0.0
  %v1027 = vmax.f32 %v554, 0.0
  %v1028 = vmax.f32 %v556, 0.0
  %v1029 = vmax.f32 %v827, 0.0
  %v1030 = vmax.f32 %v829, 0.0
  %v1031 = vmax.f32 %v558, 0.0
  %v1032 = vmax.f32 %v560, 0.0
  %v1033 = vmax.f32 %v831, 0.0
  %v1034 = vmax.f32 %v833, 0.0
  %v1035 = vmax.f32 %v564, 0.0
  %v1036 = vmax.f32 %v566, 0.0
  %v1037 = vmax.f32 %v837, 0.0
  %v1038 = vmax.f32 %v839, 0.0
  %v1039 = vmax.f32 %v568, 0.0
  %v1040 = vmax.f32 %v570, 0.0
  %v1041 = vmax.f32 %v841, 0.0
  %v1042 = vmax.f32 %v843, 0.0
  %v1043 = vmax.f32 %v574, 0.0
  %v1044 = vmax.f32 %v576, 0.0
  %v1045 = vmax.f32 %v847, 0.0
  %v1046 = vmax.f32 %v849, 0.0
  %v1047 = vmax.f32 %v578, 0.0
  %v1048 = vmax.f32 %v580, 0.0
  %v1049 = vmax.f32 %v851, 0.0
  %v1050 = vmax.f32 %v853, 0.0
  %v1051 = vmax.f32 %v584, 0.0
  %v1052 = vmax.f32 %v586, 0.0
  %v1053 = vmax.f32 %v857, 0.0
  %v1054 = vmax.f32 %v859, 0.0
  %v1055 = vmax.f32 %v588, 0.0
  %v1056 = vmax.f32 %v590, 0.0
  %v1057 = vmax.f32 %v861, 0.0
  %v1058 = vmax.f32 %v863, 0.0
  %v1059 = vmax.f32 %v594, 0.0
  %v1060 = vmax.f32 %v596, 0.0
  %v1061 = vmax.f32 %v867, 0.0
  %v1062 = vmax.f32 %v869, 0.0
  %v1063 = vmax.f32 %v598, 0.0
  %v1064 = vmax.f32 %v600, 0.0
  %v1065 = vmax.f32 %v871, 0.0
  %v1066 = vmax.f32 %v873, 0.0
  %v1067 = vpack.c.bf16 %v879, %v875
  %v1068 = vpack.c.bf16 %v880, %v876
  %v1069 = vpack.c.bf16 %v881, %v877
  %v1070 = vpack.c.bf16 %v882, %v878
  %v1071 = vpack.c.bf16 %v887, %v883
  %v1072 = vpack.c.bf16 %v888, %v884
  %v1073 = vpack.c.bf16 %v889, %v885
  %v1074 = vpack.c.bf16 %v890, %v886
  %v1075 = vpack.c.bf16 %v895, %v891
  %v1076 = vpack.c.bf16 %v896, %v892
  %v1077 = vpack.c.bf16 %v897, %v893
  %v1078 = vpack.c.bf16 %v898, %v894
  %v1079 = vpack.c.bf16 %v903, %v899
  %v1080 = vpack.c.bf16 %v904, %v900
  %v1081 = vpack.c.bf16 %v905, %v901
  %v1082 = vpack.c.bf16 %v906, %v902
  %v1083 = vpack.c.bf16 %v911, %v907
  %v1084 = vpack.c.bf16 %v912, %v908
  %v1085 = vpack.c.bf16 %v913, %v909
  %v1086 = vpack.c.bf16 %v914, %v910
  %v1087 = vpack.c.bf16 %v919, %v915
  %v1088 = vpack.c.bf16 %v920, %v916
  %v1089 = vpack.c.bf16 %v921, %v917
  %v1090 = vpack.c.bf16 %v922, %v918
  %v1091 = vpack.c.bf16 %v927, %v923
  %v1092 = vpack.c.bf16 %v928, %v924
  %v1093 = vpack.c.bf16 %v929, %v925
  %v1094 = vpack.c.bf16 %v930, %v926
  %v1095 = vpack.c.bf16 %v935, %v931
  %v1096 = vpack.c.bf16 %v936, %v932
  %v1097 = vpack.c.bf16 %v937, %v933
  %v1098 = vpack.c.bf16 %v938, %v934
  %v1099 = vpack.c.bf16 %v943, %v939
  %v1100 = vpack.c.bf16 %v944, %v940
  %v1101 = vpack.c.bf16 %v945, %v941
  %v1102 = vpack.c.bf16 %v946, %v942
  %v1103 = vpack.c.bf16 %v951, %v947
  %v1104 = vpack.c.bf16 %v952, %v948
  %v1105 = vpack.c.bf16 %v953, %v949
  %v1106 = vpack.c.bf16 %v954, %v950
  %v1107 = vpack.c.bf16 %v959, %v955
  %v1108 = vpack.c.bf16 %v960, %v956
  %v1109 = vpack.c.bf16 %v961, %v957
  %v1110 = vpack.c.bf16 %v962, %v958
  %v1111 = vpack.c.bf16 %v967, %v963
  %v1112 = vpack.c.bf16 %v968, %v964
  %v1113 = vpack.c.bf16 %v969, %v965
  %v1114 = vpack.c.bf16 %v970, %v966
  %v1115 = vpack.c.bf16 %v975, %v971
  %v1116 = vpack.c.bf16 %v976, %v972
  %v1117 = vpack.c.bf16 %v977, %v973
  %v1118 = vpack.c.bf16 %v978, %v974
  %v1119 = vpack.c.bf16 %v983, %v979
  %v1120 = vpack.c.bf16 %v984, %v980
  %v1121 = vpack.c.bf16 %v985, %v981
  %v1122 = vpack.c.bf16 %v986, %v982
  %v1123 = vpack.c.bf16 %v991, %v987
  %v1124 = vpack.c.bf16 %v992, %v988
  %v1125 = vpack.c.bf16 %v993, %v989
  %v1126 = vpack.c.bf16 %v994, %v990
  %v1127 = vpack.c.bf16 %v999, %v995
  %v1128 = vpack.c.bf16 %v1000, %v996
  %v1129 = vpack.c.bf16 %v1001, %v997
  %v1130 = vpack.c.bf16 %v1002, %v998
  %v1131 = vpack.c.bf16 %v1007, %v1003
  %v1132 = vpack.c.bf16 %v1008, %v1004
  %v1133 = vpack.c.bf16 %v1009, %v1005
  %v1134 = vpack.c.bf16 %v1010, %v1006
  %v1135 = vpack.c.bf16 %v1015, %v1011
  %v1136 = vpack.c.bf16 %v1016, %v1012
  %v1137 = vpack.c.bf16 %v1017, %v1013
  %v1138 = vpack.c.bf16 %v1018, %v1014
  %v1139 = vpack.c.bf16 %v1023, %v1019
  %v1140 = vpack.c.bf16 %v1024, %v1020
  %v1141 = vpack.c.bf16 %v1025, %v1021
  %v1142 = vpack.c.bf16 %v1026, %v1022
  %v1143 = vpack.c.bf16 %v1031, %v1027
  %v1144 = vpack.c.bf16 %v1032, %v1028
  %v1145 = vpack.c.bf16 %v1033, %v1029
  %v1146 = vpack.c.bf16 %v1034, %v1030
  %v1147 = vpack.c.bf16 %v1039, %v1035
  %v1148 = vpack.c.bf16 %v1040, %v1036
  %v1149 = vpack.c.bf16 %v1041, %v1037
  %v1150 = vpack.c.bf16 %v1042, %v1038
  %v1151 = vpack.c.bf16 %v1047, %v1043
  %v1152 = vpack.c.bf16 %v1048, %v1044
  %v1153 = vpack.c.bf16 %v1049, %v1045
  %v1154 = vpack.c.bf16 %v1050, %v1046
  %v1155 = vpack.c.bf16 %v1055, %v1051
  %v1156 = vpack.c.bf16 %v1056, %v1052
  %v1157 = vpack.c.bf16 %v1057, %v1053
  %v1158 = vpack.c.bf16 %v1058, %v1054
  %v1159 = vpack.c.bf16 %v1063, %v1059
  %v1160 = vpack.c.bf16 %v1064, %v1060
  %v1161 = vpack.c.bf16 %v1065, %v1061
  %v1162 = vpack.c.bf16 %v1066, %v1062
  %v1163 = vld [vmem:[%s3] sm:$0xff]
  %v1164 = vld [vmem:[%s3 + $0x8] sm:$0xff]
  %v1165 = vld [vmem:[%s3 + $0x10] sm:$0xff]
  %v1166 = vld [vmem:[%s3 + $0x18] sm:$0xff]
  %v1167 = vld [vmem:[%s3 + $0x20] sm:$0xff]
  %v1168 = vld [vmem:[%s3 + $0x28] sm:$0xff]
  %v1169 = vld [vmem:[%s3 + $0x30] sm:$0xff]
  %v1170 = vld [vmem:[%s3 + $0x38] sm:$0xff]
  %v1171 = vld [vmem:[%s3 + $0x40] sm:$0xff]
  %v1172 = vld [vmem:[%s3 + $0x48] sm:$0xff]
  %v1173 = vld [vmem:[%s3 + $0x50] sm:$0xff]
  %v1174 = vld [vmem:[%s3 + $0x58] sm:$0xff]
  %v1175 = vld [vmem:[%s3 + $0x60] sm:$0xff]
  %v1176 = vld [vmem:[%s3 + $0x68] sm:$0xff]
  %v1177 = vld [vmem:[%s3 + $0x70] sm:$0xff]
  %v1178 = vld [vmem:[%s3 + $0x78] sm:$0xff]
  %v1179 = vld [vmem:[%s3 + $0x80] sm:$0xff]
  %v1180 = vld [vmem:[%s3 + $0x88] sm:$0xff]
  %v1181 = vld [vmem:[%s3 + $0x90] sm:$0xff]
  %v1182 = vld [vmem:[%s3 + $0x98] sm:$0xff]
  %v1183 = vld [vmem:[%s3 + $0xa0] sm:$0xff]
  %v1184 = vld [vmem:[%s3 + $0xa8] sm:$0xff]
  %v1185 = vld [vmem:[%s3 + $0xb0] sm:$0xff]
  %v1186 = vld [vmem:[%s3 + $0xb8] sm:$0xff]
  %v1187 = vld [vmem:[%s3 + $0xc0] sm:$0xff]
  %v1188 = vld [vmem:[%s3 + $0xc8] sm:$0xff]
  %v1189 = vld [vmem:[%s3 + $0xd0] sm:$0xff]
  %v1190 = vld [vmem:[%s3 + $0xd8] sm:$0xff]
  %v1191 = vld [vmem:[%s3 + $0xe0] sm:$0xff]
  %v1192 = vld [vmem:[%s3 + $0xe8] sm:$0xff]
  %v1193 = vld [vmem:[%s3 + $0xf0] sm:$0xff]
  %v1194 = vld [vmem:[%s3 + $0xf8] sm:$0xff]
  %v1195 = vld [vmem:[%s3 + $0x100] sm:$0xff]
  %v1196 = vld [vmem:[%s3 + $0x108] sm:$0xff]
  %v1197 = vld [vmem:[%s3 + $0x110] sm:$0xff]
  %v1198 = vld [vmem:[%s3 + $0x118] sm:$0xff]
  %v1199 = vld [vmem:[%s3 + $0x120] sm:$0xff]
  %v1200 = vld [vmem:[%s3 + $0x128] sm:$0xff]
  %v1201 = vld [vmem:[%s3 + $0x130] sm:$0xff]
  %v1202 = vld [vmem:[%s3 + $0x138] sm:$0xff]
  %v1203 = vld [vmem:[%s3 + $0x140] sm:$0xff]
  %v1204 = vld [vmem:[%s3 + $0x148] sm:$0xff]
  %v1205 = vld [vmem:[%s3 + $0x150] sm:$0xff]
  %v1206 = vld [vmem:[%s3 + $0x158] sm:$0xff]
  %v1207 = vld [vmem:[%s3 + $0x160] sm:$0xff]
  %v1208 = vld [vmem:[%s3 + $0x168] sm:$0xff]
  %v1209 = vld [vmem:[%s3 + $0x170] sm:$0xff]
  %v1210 = vld [vmem:[%s3 + $0x178] sm:$0xff]
  %v1211 = vld [vmem:[%s3 + $0x180] sm:$0xff]
  %v1212 = vld [vmem:[%s3 + $0x188] sm:$0xff]
  %v1213 = vld [vmem:[%s3 + $0x190] sm:$0xff]
  %v1214 = vld [vmem:[%s3 + $0x198] sm:$0xff]
  %v1215 = vld [vmem:[%s3 + $0x1a0] sm:$0xff]
  %v1216 = vld [vmem:[%s3 + $0x1a8] sm:$0xff]
  %v1217 = vld [vmem:[%s3 + $0x1b0] sm:$0xff]
  %v1218 = vld [vmem:[%s3 + $0x1b8] sm:$0xff]
  %v1219 = vld [vmem:[%s3 + $0x1c0] sm:$0xff]
  %v1220 = vld [vmem:[%s3 + $0x1c8] sm:$0xff]
  %v1221 = vld [vmem:[%s3 + $0x1d0] sm:$0xff]
  %v1222 = vld [vmem:[%s3 + $0x1d8] sm:$0xff]
  %v1223 = vld [vmem:[%s3 + $0x1e0] sm:$0xff]
  %v1224 = vld [vmem:[%s3 + $0x1e8] sm:$0xff]
  %v1225 = vld [vmem:[%s3 + $0x1f0] sm:$0xff]
  %v1226 = vld [vmem:[%s3 + $0x1f8] sm:$0xff]
  %v1227 = vld [vmem:[%s3 + $0x200] sm:$0xff]
  %v1228 = vld [vmem:[%s3 + $0x208] sm:$0xff]
  %v1229 = vld [vmem:[%s3 + $0x210] sm:$0xff]
  %v1230 = vld [vmem:[%s3 + $0x218] sm:$0xff]
  %v1231 = vld [vmem:[%s3 + $0x220] sm:$0xff]
  %v1232 = vld [vmem:[%s3 + $0x228] sm:$0xff]
  %v1233 = vld [vmem:[%s3 + $0x230] sm:$0xff]
  %v1234 = vld [vmem:[%s3 + $0x238] sm:$0xff]
  %v1235 = vld [vmem:[%s3 + $0x240] sm:$0xff]
  %v1236 = vld [vmem:[%s3 + $0x248] sm:$0xff]
  %v1237 = vld [vmem:[%s3 + $0x250] sm:$0xff]
  %v1238 = vld [vmem:[%s3 + $0x258] sm:$0xff]
  %v1239 = vld [vmem:[%s3 + $0x260] sm:$0xff]
  %v1240 = vld [vmem:[%s3 + $0x268] sm:$0xff]
  %v1241 = vld [vmem:[%s3 + $0x270] sm:$0xff]
  %v1242 = vld [vmem:[%s3 + $0x278] sm:$0xff]
  %v1243 = vld [vmem:[%s3 + $0x280] sm:$0xff]
  %v1244 = vld [vmem:[%s3 + $0x288] sm:$0xff]
  %v1245 = vld [vmem:[%s3 + $0x290] sm:$0xff]
  %v1246 = vld [vmem:[%s3 + $0x298] sm:$0xff]
  %v1247 = vld [vmem:[%s3 + $0x2a0] sm:$0xff]
  %v1248 = vld [vmem:[%s3 + $0x2a8] sm:$0xff]
  %v1249 = vld [vmem:[%s3 + $0x2b0] sm:$0xff]
  %v1250 = vld [vmem:[%s3 + $0x2b8] sm:$0xff]
  %v1251 = vld [vmem:[%s3 + $0x2c0] sm:$0xff]
  %v1252 = vld [vmem:[%s3 + $0x2c8] sm:$0xff]
  %v1253 = vld [vmem:[%s3 + $0x2d0] sm:$0xff]
  %v1254 = vld [vmem:[%s3 + $0x2d8] sm:$0xff]
  %v1255 = vld [vmem:[%s3 + $0x2e0] sm:$0xff]
  %v1256 = vld [vmem:[%s3 + $0x2e8] sm:$0xff]
  %v1257 = vld [vmem:[%s3 + $0x2f0] sm:$0xff]
  %v1258 = vld [vmem:[%s3 + $0x2f8] sm:$0xff]
  %v1259 = vld [vmem:[%s3 + $0x300] sm:$0xff]
  %v1260 = vld [vmem:[%s3 + $0x308] sm:$0xff]
  %v1261 = vld [vmem:[%s3 + $0x310] sm:$0xff]
  %v1262 = vld [vmem:[%s3 + $0x318] sm:$0xff]
  %v1263 = vld [vmem:[%s3 + $0x320] sm:$0xff]
  %v1264 = vld [vmem:[%s3 + $0x328] sm:$0xff]
  %v1265 = vld [vmem:[%s3 + $0x330] sm:$0xff]
  %v1266 = vld [vmem:[%s3 + $0x338] sm:$0xff]
  %v1267 = vld [vmem:[%s3 + $0x340] sm:$0xff]
  %v1268 = vld [vmem:[%s3 + $0x348] sm:$0xff]
  %v1269 = vld [vmem:[%s3 + $0x350] sm:$0xff]
  %v1270 = vld [vmem:[%s3 + $0x358] sm:$0xff]
  %v1271 = vld [vmem:[%s3 + $0x360] sm:$0xff]
  %v1272 = vld [vmem:[%s3 + $0x368] sm:$0xff]
  %v1273 = vld [vmem:[%s3 + $0x370] sm:$0xff]
  %v1274 = vld [vmem:[%s3 + $0x378] sm:$0xff]
  %v1275 = vld [vmem:[%s3 + $0x380] sm:$0xff]
  %v1276 = vld [vmem:[%s3 + $0x388] sm:$0xff]
  %v1277 = vld [vmem:[%s3 + $0x390] sm:$0xff]
  %v1278 = vld [vmem:[%s3 + $0x398] sm:$0xff]
  %v1279 = vld [vmem:[%s3 + $0x3a0] sm:$0xff]
  %v1280 = vld [vmem:[%s3 + $0x3a8] sm:$0xff]
  %v1281 = vld [vmem:[%s3 + $0x3b0] sm:$0xff]
  %v1282 = vld [vmem:[%s3 + $0x3b8] sm:$0xff]
  %v1283 = vld [vmem:[%s3 + $0x3c0] sm:$0xff]
  %v1284 = vld [vmem:[%s3 + $0x3c8] sm:$0xff]
  %v1285 = vld [vmem:[%s3 + $0x3d0] sm:$0xff]
  %v1286 = vld [vmem:[%s3 + $0x3d8] sm:$0xff]
  %v1287 = vld [vmem:[%s3 + $0x3e0] sm:$0xff]
  %v1288 = vld [vmem:[%s3 + $0x3e8] sm:$0xff]
  %v1289 = vld [vmem:[%s3 + $0x3f0] sm:$0xff]
  %v1290 = vld [vmem:[%s3 + $0x3f8] sm:$0xff]
  %v1291 = vld [vmem:[%s4] sm:$0xf]
  %v1293 = vlaneseq
  %v1294 = vshrl.u32 %v1293, 7
  %v1295 = vsub.s32 0, %v1294
  %v1296 = vrot.slane %v1291, %v1295
  %v1297 = vlaneseq
  %v1298 = vshrl.u32 %v1297, 7
  %v1299 = vsub.s32 1, %v1298
  %v1300 = vrot.slane %v1291, %v1299
  %v1301 = vlaneseq
  %v1302 = vshrl.u32 %v1301, 7
  %v1303 = vsub.s32 2, %v1302
  %v1304 = vrot.slane %v1291, %v1303
  %v1305 = vlaneseq
  %v1306 = vshrl.u32 %v1305, 7
  %v1307 = vsub.s32 3, %v1306
  %v1308 = vrot.slane %v1291, %v1307
  %v1441 = vunpack.c.l.b16 %v1163
  %v1442 = vunpack.c.h.b16 %v1163
  %v1443 = vunpack.c.l.b16 %v1164
  %v1444 = vunpack.c.h.b16 %v1164
  %v1445 = vunpack.c.l.b16 %v1165
  %v1446 = vunpack.c.h.b16 %v1165
  %v1447 = vunpack.c.l.b16 %v1166
  %v1448 = vunpack.c.h.b16 %v1166
  %v1449 = vunpack.c.l.b16 %v1167
  %v1450 = vunpack.c.h.b16 %v1167
  %v1451 = vunpack.c.l.b16 %v1168
  %v1452 = vunpack.c.h.b16 %v1168
  %v1453 = vunpack.c.l.b16 %v1169
  %v1454 = vunpack.c.h.b16 %v1169
  %v1455 = vunpack.c.l.b16 %v1170
  %v1456 = vunpack.c.h.b16 %v1170
  %v1457 = vunpack.c.l.b16 %v1171
  %v1458 = vunpack.c.h.b16 %v1171
  %v1459 = vunpack.c.l.b16 %v1172
  %v1460 = vunpack.c.h.b16 %v1172
  %v1461 = vunpack.c.l.b16 %v1173
  %v1462 = vunpack.c.h.b16 %v1173
  %v1463 = vunpack.c.l.b16 %v1174
  %v1464 = vunpack.c.h.b16 %v1174
  %v1465 = vunpack.c.l.b16 %v1175
  %v1466 = vunpack.c.h.b16 %v1175
  %v1467 = vunpack.c.l.b16 %v1176
  %v1468 = vunpack.c.h.b16 %v1176
  %v1469 = vunpack.c.l.b16 %v1177
  %v1470 = vunpack.c.h.b16 %v1177
  %v1471 = vunpack.c.l.b16 %v1178
  %v1472 = vunpack.c.h.b16 %v1178
  %v1473 = vunpack.c.l.b16 %v1179
  %v1474 = vunpack.c.h.b16 %v1179
  %v1475 = vunpack.c.l.b16 %v1180
  %v1476 = vunpack.c.h.b16 %v1180
  %v1477 = vunpack.c.l.b16 %v1181
  %v1478 = vunpack.c.h.b16 %v1181
  %v1479 = vunpack.c.l.b16 %v1182
  %v1480 = vunpack.c.h.b16 %v1182
  %v1481 = vunpack.c.l.b16 %v1183
  %v1482 = vunpack.c.h.b16 %v1183
  %v1483 = vunpack.c.l.b16 %v1184
  %v1484 = vunpack.c.h.b16 %v1184
  %v1485 = vunpack.c.l.b16 %v1185
  %v1486 = vunpack.c.h.b16 %v1185
  %v1487 = vunpack.c.l.b16 %v1186
  %v1488 = vunpack.c.h.b16 %v1186
  %v1489 = vunpack.c.l.b16 %v1187
  %v1490 = vunpack.c.h.b16 %v1187
  %v1491 = vunpack.c.l.b16 %v1188
  %v1492 = vunpack.c.h.b16 %v1188
  %v1493 = vunpack.c.l.b16 %v1189
  %v1494 = vunpack.c.h.b16 %v1189
  %v1495 = vunpack.c.l.b16 %v1190
  %v1496 = vunpack.c.h.b16 %v1190
  %v1497 = vunpack.c.l.b16 %v1191
  %v1498 = vunpack.c.h.b16 %v1191
  %v1499 = vunpack.c.l.b16 %v1192
  %v1500 = vunpack.c.h.b16 %v1192
  %v1501 = vunpack.c.l.b16 %v1193
  %v1502 = vunpack.c.h.b16 %v1193
  %v1503 = vunpack.c.l.b16 %v1194
  %v1504 = vunpack.c.h.b16 %v1194
  %v1505 = vunpack.c.l.b16 %v1195
  %v1506 = vunpack.c.h.b16 %v1195
  %v1507 = vunpack.c.l.b16 %v1196
  %v1508 = vunpack.c.h.b16 %v1196
  %v1509 = vunpack.c.l.b16 %v1197
  %v1510 = vunpack.c.h.b16 %v1197
  %v1511 = vunpack.c.l.b16 %v1198
  %v1512 = vunpack.c.h.b16 %v1198
  %v1513 = vunpack.c.l.b16 %v1199
  %v1514 = vunpack.c.h.b16 %v1199
  %v1515 = vunpack.c.l.b16 %v1200
  %v1516 = vunpack.c.h.b16 %v1200
  %v1517 = vunpack.c.l.b16 %v1201
  %v1518 = vunpack.c.h.b16 %v1201
  %v1519 = vunpack.c.l.b16 %v1202
  %v1520 = vunpack.c.h.b16 %v1202
  %v1521 = vunpack.c.l.b16 %v1203
  %v1522 = vunpack.c.h.b16 %v1203
  %v1523 = vunpack.c.l.b16 %v1204
  %v1524 = vunpack.c.h.b16 %v1204
  %v1525 = vunpack.c.l.b16 %v1205
  %v1526 = vunpack.c.h.b16 %v1205
  %v1527 = vunpack.c.l.b16 %v1206
  %v1528 = vunpack.c.h.b16 %v1206
  %v1529 = vunpack.c.l.b16 %v1207
  %v1530 = vunpack.c.h.b16 %v1207
  %v1531 = vunpack.c.l.b16 %v1208
  %v1532 = vunpack.c.h.b16 %v1208
  %v1533 = vunpack.c.l.b16 %v1209
  %v1534 = vunpack.c.h.b16 %v1209
  %v1535 = vunpack.c.l.b16 %v1210
  %v1536 = vunpack.c.h.b16 %v1210
  %v1537 = vunpack.c.l.b16 %v1211
  %v1538 = vunpack.c.h.b16 %v1211
  %v1539 = vunpack.c.l.b16 %v1212
  %v1540 = vunpack.c.h.b16 %v1212
  %v1541 = vunpack.c.l.b16 %v1213
  %v1542 = vunpack.c.h.b16 %v1213
  %v1543 = vunpack.c.l.b16 %v1214
  %v1544 = vunpack.c.h.b16 %v1214
  %v1545 = vunpack.c.l.b16 %v1215
  %v1546 = vunpack.c.h.b16 %v1215
  %v1547 = vunpack.c.l.b16 %v1216
  %v1548 = vunpack.c.h.b16 %v1216
  %v1549 = vunpack.c.l.b16 %v1217
  %v1550 = vunpack.c.h.b16 %v1217
  %v1551 = vunpack.c.l.b16 %v1218
  %v1552 = vunpack.c.h.b16 %v1218
  %v1553 = vunpack.c.l.b16 %v1219
  %v1554 = vunpack.c.h.b16 %v1219
  %v1555 = vunpack.c.l.b16 %v1220
  %v1556 = vunpack.c.h.b16 %v1220
  %v1557 = vunpack.c.l.b16 %v1221
  %v1558 = vunpack.c.h.b16 %v1221
  %v1559 = vunpack.c.l.b16 %v1222
  %v1560 = vunpack.c.h.b16 %v1222
  %v1561 = vunpack.c.l.b16 %v1223
  %v1562 = vunpack.c.h.b16 %v1223
  %v1563 = vunpack.c.l.b16 %v1224
  %v1564 = vunpack.c.h.b16 %v1224
  %v1565 = vunpack.c.l.b16 %v1225
  %v1566 = vunpack.c.h.b16 %v1225
  %v1567 = vunpack.c.l.b16 %v1226
  %v1568 = vunpack.c.h.b16 %v1226
  %v1569 = vunpack.c.l.b16 %v1227
  %v1570 = vunpack.c.h.b16 %v1227
  %v1571 = vunpack.c.l.b16 %v1228
  %v1572 = vunpack.c.h.b16 %v1228
  %v1573 = vunpack.c.l.b16 %v1229
  %v1574 = vunpack.c.h.b16 %v1229
  %v1575 = vunpack.c.l.b16 %v1230
  %v1576 = vunpack.c.h.b16 %v1230
  %v1577 = vunpack.c.l.b16 %v1231
  %v1578 = vunpack.c.h.b16 %v1231
  %v1579 = vunpack.c.l.b16 %v1232
  %v1580 = vunpack.c.h.b16 %v1232
  %v1581 = vunpack.c.l.b16 %v1233
  %v1582 = vunpack.c.h.b16 %v1233
  %v1583 = vunpack.c.l.b16 %v1234
  %v1584 = vunpack.c.h.b16 %v1234
  %v1585 = vunpack.c.l.b16 %v1235
  %v1586 = vunpack.c.h.b16 %v1235
  %v1587 = vunpack.c.l.b16 %v1236
  %v1588 = vunpack.c.h.b16 %v1236
  %v1589 = vunpack.c.l.b16 %v1237
  %v1590 = vunpack.c.h.b16 %v1237
  %v1591 = vunpack.c.l.b16 %v1238
  %v1592 = vunpack.c.h.b16 %v1238
  %v1593 = vunpack.c.l.b16 %v1239
  %v1594 = vunpack.c.h.b16 %v1239
  %v1595 = vunpack.c.l.b16 %v1240
  %v1596 = vunpack.c.h.b16 %v1240
  %v1597 = vunpack.c.l.b16 %v1241
  %v1598 = vunpack.c.h.b16 %v1241
  %v1599 = vunpack.c.l.b16 %v1242
  %v1600 = vunpack.c.h.b16 %v1242
  %v1601 = vunpack.c.l.b16 %v1243
  %v1602 = vunpack.c.h.b16 %v1243
  %v1603 = vunpack.c.l.b16 %v1244
  %v1604 = vunpack.c.h.b16 %v1244
  %v1605 = vunpack.c.l.b16 %v1245
  %v1606 = vunpack.c.h.b16 %v1245
  %v1607 = vunpack.c.l.b16 %v1246
  %v1608 = vunpack.c.h.b16 %v1246
  %v1609 = vunpack.c.l.b16 %v1247
  %v1610 = vunpack.c.h.b16 %v1247
  %v1611 = vunpack.c.l.b16 %v1248
  %v1612 = vunpack.c.h.b16 %v1248
  %v1613 = vunpack.c.l.b16 %v1249
  %v1614 = vunpack.c.h.b16 %v1249
  %v1615 = vunpack.c.l.b16 %v1250
  %v1616 = vunpack.c.h.b16 %v1250
  %v1617 = vunpack.c.l.b16 %v1251
  %v1618 = vunpack.c.h.b16 %v1251
  %v1619 = vunpack.c.l.b16 %v1252
  %v1620 = vunpack.c.h.b16 %v1252
  %v1621 = vunpack.c.l.b16 %v1253
  %v1622 = vunpack.c.h.b16 %v1253
  %v1623 = vunpack.c.l.b16 %v1254
  %v1624 = vunpack.c.h.b16 %v1254
  %v1625 = vunpack.c.l.b16 %v1255
  %v1626 = vunpack.c.h.b16 %v1255
  %v1627 = vunpack.c.l.b16 %v1256
  %v1628 = vunpack.c.h.b16 %v1256
  %v1629 = vunpack.c.l.b16 %v1257
  %v1630 = vunpack.c.h.b16 %v1257
  %v1631 = vunpack.c.l.b16 %v1258
  %v1632 = vunpack.c.h.b16 %v1258
  %v1633 = vunpack.c.l.b16 %v1259
  %v1634 = vunpack.c.h.b16 %v1259
  %v1635 = vunpack.c.l.b16 %v1260
  %v1636 = vunpack.c.h.b16 %v1260
  %v1637 = vunpack.c.l.b16 %v1261
  %v1638 = vunpack.c.h.b16 %v1261
  %v1639 = vunpack.c.l.b16 %v1262
  %v1640 = vunpack.c.h.b16 %v1262
  %v1641 = vunpack.c.l.b16 %v1263
  %v1642 = vunpack.c.h.b16 %v1263
  %v1643 = vunpack.c.l.b16 %v1264
  %v1644 = vunpack.c.h.b16 %v1264
  %v1645 = vunpack.c.l.b16 %v1265
  %v1646 = vunpack.c.h.b16 %v1265
  %v1647 = vunpack.c.l.b16 %v1266
  %v1648 = vunpack.c.h.b16 %v1266
  %v1649 = vunpack.c.l.b16 %v1267
  %v1650 = vunpack.c.h.b16 %v1267
  %v1651 = vunpack.c.l.b16 %v1268
  %v1652 = vunpack.c.h.b16 %v1268
  %v1653 = vunpack.c.l.b16 %v1269
  %v1654 = vunpack.c.h.b16 %v1269
  %v1655 = vunpack.c.l.b16 %v1270
  %v1656 = vunpack.c.h.b16 %v1270
  %v1657 = vunpack.c.l.b16 %v1271
  %v1658 = vunpack.c.h.b16 %v1271
  %v1659 = vunpack.c.l.b16 %v1272
  %v1660 = vunpack.c.h.b16 %v1272
  %v1661 = vunpack.c.l.b16 %v1273
  %v1662 = vunpack.c.h.b16 %v1273
  %v1663 = vunpack.c.l.b16 %v1274
  %v1664 = vunpack.c.h.b16 %v1274
  %v1665 = vunpack.c.l.b16 %v1275
  %v1666 = vunpack.c.h.b16 %v1275
  %v1667 = vunpack.c.l.b16 %v1276
  %v1668 = vunpack.c.h.b16 %v1276
  %v1669 = vunpack.c.l.b16 %v1277
  %v1670 = vunpack.c.h.b16 %v1277
  %v1671 = vunpack.c.l.b16 %v1278
  %v1672 = vunpack.c.h.b16 %v1278
  %v1673 = vunpack.c.l.b16 %v1279
  %v1674 = vunpack.c.h.b16 %v1279
  %v1675 = vunpack.c.l.b16 %v1280
  %v1676 = vunpack.c.h.b16 %v1280
  %v1677 = vunpack.c.l.b16 %v1281
  %v1678 = vunpack.c.h.b16 %v1281
  %v1679 = vunpack.c.l.b16 %v1282
  %v1680 = vunpack.c.h.b16 %v1282
  %v1681 = vunpack.c.l.b16 %v1283
  %v1682 = vunpack.c.h.b16 %v1283
  %v1683 = vunpack.c.l.b16 %v1284
  %v1684 = vunpack.c.h.b16 %v1284
  %v1685 = vunpack.c.l.b16 %v1285
  %v1686 = vunpack.c.h.b16 %v1285
  %v1687 = vunpack.c.l.b16 %v1286
  %v1688 = vunpack.c.h.b16 %v1286
  %v1689 = vunpack.c.l.b16 %v1287
  %v1690 = vunpack.c.h.b16 %v1287
  %v1691 = vunpack.c.l.b16 %v1288
  %v1692 = vunpack.c.h.b16 %v1288
  %v1693 = vunpack.c.l.b16 %v1289
  %v1694 = vunpack.c.h.b16 %v1289
  %v1695 = vunpack.c.l.b16 %v1290
  %v1696 = vunpack.c.h.b16 %v1290
  %v1697 = vpack.c.b16 %v1445, %v1441
  %v1698 = vpack.c.b16 %v1446, %v1442
  %v1699 = vpack.c.b16 %v1447, %v1443
  %v1700 = vpack.c.b16 %v1448, %v1444
  %v1701 = vpack.c.b16 %v1453, %v1449
  %v1702 = vpack.c.b16 %v1454, %v1450
  %v1703 = vpack.c.b16 %v1455, %v1451
  %v1704 = vpack.c.b16 %v1456, %v1452
  %v1705 = vpack.c.b16 %v1461, %v1457
  %v1706 = vpack.c.b16 %v1462, %v1458
  %v1707 = vpack.c.b16 %v1463, %v1459
  %v1708 = vpack.c.b16 %v1464, %v1460
  %v1709 = vpack.c.b16 %v1469, %v1465
  %v1710 = vpack.c.b16 %v1470, %v1466
  %v1711 = vpack.c.b16 %v1471, %v1467
  %v1712 = vpack.c.b16 %v1472, %v1468
  %v1713 = vpack.c.b16 %v1477, %v1473
  %v1714 = vpack.c.b16 %v1478, %v1474
  %v1715 = vpack.c.b16 %v1479, %v1475
  %v1716 = vpack.c.b16 %v1480, %v1476
  %v1717 = vpack.c.b16 %v1485, %v1481
  %v1718 = vpack.c.b16 %v1486, %v1482
  %v1719 = vpack.c.b16 %v1487, %v1483
  %v1720 = vpack.c.b16 %v1488, %v1484
  %v1721 = vpack.c.b16 %v1493, %v1489
  %v1722 = vpack.c.b16 %v1494, %v1490
  %v1723 = vpack.c.b16 %v1495, %v1491
  %v1724 = vpack.c.b16 %v1496, %v1492
  %v1725 = vpack.c.b16 %v1501, %v1497
  %v1726 = vpack.c.b16 %v1502, %v1498
  %v1727 = vpack.c.b16 %v1503, %v1499
  %v1728 = vpack.c.b16 %v1504, %v1500
  %v1729 = vpack.c.b16 %v1509, %v1505
  %v1730 = vpack.c.b16 %v1510, %v1506
  %v1731 = vpack.c.b16 %v1511, %v1507
  %v1732 = vpack.c.b16 %v1512, %v1508
  %v1733 = vpack.c.b16 %v1517, %v1513
  %v1734 = vpack.c.b16 %v1518, %v1514
  %v1735 = vpack.c.b16 %v1519, %v1515
  %v1736 = vpack.c.b16 %v1520, %v1516
  %v1737 = vpack.c.b16 %v1525, %v1521
  %v1738 = vpack.c.b16 %v1526, %v1522
  %v1739 = vpack.c.b16 %v1527, %v1523
  %v1740 = vpack.c.b16 %v1528, %v1524
  %v1741 = vpack.c.b16 %v1533, %v1529
  %v1742 = vpack.c.b16 %v1534, %v1530
  %v1743 = vpack.c.b16 %v1535, %v1531
  %v1744 = vpack.c.b16 %v1536, %v1532
  %v1745 = vpack.c.b16 %v1541, %v1537
  %v1746 = vpack.c.b16 %v1542, %v1538
  %v1747 = vpack.c.b16 %v1543, %v1539
  %v1748 = vpack.c.b16 %v1544, %v1540
  %v1749 = vpack.c.b16 %v1549, %v1545
  %v1750 = vpack.c.b16 %v1550, %v1546
  %v1751 = vpack.c.b16 %v1551, %v1547
  %v1752 = vpack.c.b16 %v1552, %v1548
  %v1753 = vpack.c.b16 %v1557, %v1553
  %v1754 = vpack.c.b16 %v1558, %v1554
  %v1755 = vpack.c.b16 %v1559, %v1555
  %v1756 = vpack.c.b16 %v1560, %v1556
  %v1757 = vpack.c.b16 %v1565, %v1561
  %v1758 = vpack.c.b16 %v1566, %v1562
  %v1759 = vpack.c.b16 %v1567, %v1563
  %v1760 = vpack.c.b16 %v1568, %v1564
  %v1761 = vpack.c.b16 %v1573, %v1569
  %v1762 = vpack.c.b16 %v1574, %v1570
  %v1763 = vpack.c.b16 %v1575, %v1571
  %v1764 = vpack.c.b16 %v1576, %v1572
  %v1765 = vpack.c.b16 %v1581, %v1577
  %v1766 = vpack.c.b16 %v1582, %v1578
  %v1767 = vpack.c.b16 %v1583, %v1579
  %v1768 = vpack.c.b16 %v1584, %v1580
  %v1769 = vpack.c.b16 %v1589, %v1585
  %v1770 = vpack.c.b16 %v1590, %v1586
  %v1771 = vpack.c.b16 %v1591, %v1587
  %v1772 = vpack.c.b16 %v1592, %v1588
  %v1773 = vpack.c.b16 %v1597, %v1593
  %v1774 = vpack.c.b16 %v1598, %v1594
  %v1775 = vpack.c.b16 %v1599, %v1595
  %v1776 = vpack.c.b16 %v1600, %v1596
  %v1777 = vpack.c.b16 %v1605, %v1601
  %v1778 = vpack.c.b16 %v1606, %v1602
  %v1779 = vpack.c.b16 %v1607, %v1603
  %v1780 = vpack.c.b16 %v1608, %v1604
  %v1781 = vpack.c.b16 %v1613, %v1609
  %v1782 = vpack.c.b16 %v1614, %v1610
  %v1783 = vpack.c.b16 %v1615, %v1611
  %v1784 = vpack.c.b16 %v1616, %v1612
  %v1785 = vpack.c.b16 %v1621, %v1617
  %v1786 = vpack.c.b16 %v1622, %v1618
  %v1787 = vpack.c.b16 %v1623, %v1619
  %v1788 = vpack.c.b16 %v1624, %v1620
  %v1789 = vpack.c.b16 %v1629, %v1625
  %v1790 = vpack.c.b16 %v1630, %v1626
  %v1791 = vpack.c.b16 %v1631, %v1627
  %v1792 = vpack.c.b16 %v1632, %v1628
  %v1793 = vpack.c.b16 %v1637, %v1633
  %v1794 = vpack.c.b16 %v1638, %v1634
  %v1795 = vpack.c.b16 %v1639, %v1635
  %v1796 = vpack.c.b16 %v1640, %v1636
  %v1797 = vpack.c.b16 %v1645, %v1641
  %v1798 = vpack.c.b16 %v1646, %v1642
  %v1799 = vpack.c.b16 %v1647, %v1643
  %v1800 = vpack.c.b16 %v1648, %v1644
  %v1801 = vpack.c.b16 %v1653, %v1649
  %v1802 = vpack.c.b16 %v1654, %v1650
  %v1803 = vpack.c.b16 %v1655, %v1651
  %v1804 = vpack.c.b16 %v1656, %v1652
  %v1805 = vpack.c.b16 %v1661, %v1657
  %v1806 = vpack.c.b16 %v1662, %v1658
  %v1807 = vpack.c.b16 %v1663, %v1659
  %v1808 = vpack.c.b16 %v1664, %v1660
  %v1809 = vpack.c.b16 %v1669, %v1665
  %v1810 = vpack.c.b16 %v1670, %v1666
  %v1811 = vpack.c.b16 %v1671, %v1667
  %v1812 = vpack.c.b16 %v1672, %v1668
  %v1813 = vpack.c.b16 %v1677, %v1673
  %v1814 = vpack.c.b16 %v1678, %v1674
  %v1815 = vpack.c.b16 %v1679, %v1675
  %v1816 = vpack.c.b16 %v1680, %v1676
  %v1817 = vpack.c.b16 %v1685, %v1681
  %v1818 = vpack.c.b16 %v1686, %v1682
  %v1819 = vpack.c.b16 %v1687, %v1683
  %v1820 = vpack.c.b16 %v1688, %v1684
  %v1821 = vpack.c.b16 %v1693, %v1689
  %v1822 = vpack.c.b16 %v1694, %v1690
  %v1823 = vpack.c.b16 %v1695, %v1691
  %v1824 = vpack.c.b16 %v1696, %v1692
  %1953 = vmatprep.subr.bf16.mxu0 %v1698
  %1954 = vmatpush1.bf16.msra.mxu0 %v1697
  %1955 = vmatprep.subr.bf16.mxu0 %v1702
  %1956 = vmatpush1.bf16.msra.mxu0 %v1701
  %1957 = vmatprep.subr.bf16.mxu0 %v1706
  %1958 = vmatpush1.bf16.msra.mxu0 %v1705
  %1959 = vmatprep.subr.bf16.mxu0 %v1710
  %1960 = vmatpush1.bf16.msra.mxu0 %v1709
  %1961 = vmatprep.subr.bf16.mxu0 %v1714
  %1962 = vmatpush1.bf16.msra.mxu0 %v1713
  %1963 = vmatprep.subr.bf16.mxu0 %v1718
  %1964 = vmatpush1.bf16.msra.mxu0 %v1717
  %1965 = vmatprep.subr.bf16.mxu0 %v1722
  %1966 = vmatpush1.bf16.msra.mxu0 %v1721
  %1967 = vmatprep.subr.bf16.mxu0 %v1726
  %1968 = vmatpush1.bf16.msra.mxu0 %v1725
  %1969 = vmatprep.subr.bf16.mxu0 %v1730
  %1970 = vmatpush1.bf16.msra.mxu0 %v1729
  %1971 = vmatprep.subr.bf16.mxu0 %v1734
  %1972 = vmatpush1.bf16.msra.mxu0 %v1733
  %1973 = vmatprep.subr.bf16.mxu0 %v1738
  %1974 = vmatpush1.bf16.msra.mxu0 %v1737
  %1975 = vmatprep.subr.bf16.mxu0 %v1742
  %1976 = vmatpush1.bf16.msra.mxu0 %v1741
  %1977 = vmatprep.subr.bf16.mxu0 %v1746
  %1978 = vmatpush1.bf16.msra.mxu0 %v1745
  %1979 = vmatprep.subr.bf16.mxu0 %v1750
  %1980 = vmatpush1.bf16.msra.mxu0 %v1749
  %1981 = vmatprep.subr.bf16.mxu0 %v1754
  %1982 = vmatpush1.bf16.msra.mxu0 %v1753
  %1983 = vmatprep.subr.bf16.mxu0 %v1758
  %1984 = vmatpush1.bf16.msra.mxu0 %v1757
  %1985 = vmatprep.mubr.bf16.mxu0 %v1068
  %1986 = vmatmul.mubr.bf16.gmra.mrb[0].mxu0 %v1067
  %v1987 = vpop.f32.mrb[0].mxu0
  %v1988 = vadd.f32 %v1296, %v1987
  %v1989 = vpop.f32.mrb[0].mxu0
  %v1990 = vadd.f32 %v1300, %v1989
  %v1991 = vpop.f32.mrb[0].mxu0
  %v1992 = vadd.f32 %v1296, %v1991
  %v1993 = vpop.f32.mrb[0].mxu0
  %v1994 = vadd.f32 %v1300, %v1993
  %1995 = vmatprep.mubr.bf16.mxu0 %v1072
  %1996 = vmatmul.mubr.bf16.gmra.mrb[0].mxu0 %v1071
  %v1997 = vpop.f32.mrb[0].mxu0
  %v1998 = vadd.f32 %v1296, %v1997
  %v1999 = vpop.f32.mrb[0].mxu0
  %v2000 = vadd.f32 %v1300, %v1999
  %v2001 = vpop.f32.mrb[0].mxu0
  %v2002 = vadd.f32 %v1296, %v2001
  %v2003 = vpop.f32.mrb[0].mxu0
  %v2004 = vadd.f32 %v1300, %v2003
  %2005 = vmatprep.mubr.bf16.mxu0 %v1076
  %2006 = vmatmul.mubr.bf16.gmra.mrb[0].mxu0 %v1075
  %v2007 = vpop.f32.mrb[0].mxu0
  %v2008 = vadd.f32 %v1296, %v2007
  %v2009 = vpop.f32.mrb[0].mxu0
  %v2010 = vadd.f32 %v1300, %v2009
  %v2011 = vpop.f32.mrb[0].mxu0
  %v2012 = vadd.f32 %v1296, %v2011
  %v2013 = vpop.f32.mrb[0].mxu0
  %v2014 = vadd.f32 %v1300, %v2013
  %2015 = vmatprep.mubr.bf16.mxu0 %v1080
  %2016 = vmatmul.mubr.bf16.gmra.mrb[0].mxu0 %v1079
  %v2017 = vpop.f32.mrb[0].mxu0
  %v2018 = vadd.f32 %v1296, %v2017
  %v2019 = vpop.f32.mrb[0].mxu0
  %v2020 = vadd.f32 %v1300, %v2019
  %v2021 = vpop.f32.mrb[0].mxu0
  %v2022 = vadd.f32 %v1296, %v2021
  %v2023 = vpop.f32.mrb[0].mxu0
  %v2024 = vadd.f32 %v1300, %v2023
  %2025 = vmatprep.mubr.bf16.mxu0 %v1084
  %2026 = vmatmul.mubr.bf16.gmra.mrb[0].mxu0 %v1083
  %v2027 = vpop.f32.mrb[0].mxu0
  %v2028 = vadd.f32 %v1296, %v2027
  %v2029 = vpop.f32.mrb[0].mxu0
  %v2030 = vadd.f32 %v1300, %v2029
  %v2031 = vpop.f32.mrb[0].mxu0
  %v2032 = vadd.f32 %v1296, %v2031
  %v2033 = vpop.f32.mrb[0].mxu0
  %v2034 = vadd.f32 %v1300, %v2033
  %2035 = vmatprep.mubr.bf16.mxu0 %v1088
  %2036 = vmatmul.mubr.bf16.gmra.mrb[0].mxu0 %v1087
  %v2037 = vpop.f32.mrb[0].mxu0
  %v2038 = vadd.f32 %v1296, %v2037
  %v2039 = vpop.f32.mrb[0].mxu0
  %v2040 = vadd.f32 %v1300, %v2039
  %v2041 = vpop.f32.mrb[0].mxu0
  %v2042 = vadd.f32 %v1296, %v2041
  %v2043 = vpop.f32.mrb[0].mxu0
  %v2044 = vadd.f32 %v1300, %v2043
  %2045 = vmatprep.mubr.bf16.mxu0 %v1092
  %2046 = vmatmul.mubr.bf16.gmra.mrb[0].mxu0 %v1091
  %v2047 = vpop.f32.mrb[0].mxu0
  %v2048 = vadd.f32 %v1296, %v2047
  %v2049 = vpop.f32.mrb[0].mxu0
  %v2050 = vadd.f32 %v1300, %v2049
  %v2051 = vpop.f32.mrb[0].mxu0
  %v2052 = vadd.f32 %v1296, %v2051
  %v2053 = vpop.f32.mrb[0].mxu0
  %v2054 = vadd.f32 %v1300, %v2053
  %2055 = vmatprep.mubr.bf16.mxu0 %v1096
  %2056 = vmatmul.mubr.bf16.gmra.mrb[0].mxu0 %v1095
  %v2057 = vpop.f32.mrb[0].mxu0
  %v2058 = vadd.f32 %v1296, %v2057
  %v2059 = vpop.f32.mrb[0].mxu0
  %v2060 = vadd.f32 %v1300, %v2059
  %v2061 = vpop.f32.mrb[0].mxu0
  %v2062 = vadd.f32 %v1296, %v2061
  %v2063 = vpop.f32.mrb[0].mxu0
  %v2064 = vadd.f32 %v1300, %v2063
  %2065 = vmatprep.mubr.bf16.mxu0 %v1100
  %2066 = vmatmul.mubr.bf16.gmra.mrb[0].mxu0 %v1099
  %v2067 = vpop.f32.mrb[0].mxu0
  %v2068 = vadd.f32 %v1296, %v2067
  %v2069 = vpop.f32.mrb[0].mxu0
  %v2070 = vadd.f32 %v1300, %v2069
  %v2071 = vpop.f32.mrb[0].mxu0
  %v2072 = vadd.f32 %v1296, %v2071
  %v2073 = vpop.f32.mrb[0].mxu0
  %v2074 = vadd.f32 %v1300, %v2073
  %2075 = vmatprep.mubr.bf16.mxu0 %v1104
  %2076 = vmatmul.mubr.bf16.gmra.mrb[0].mxu0 %v1103
  %v2077 = vpop.f32.mrb[0].mxu0
  %v2078 = vadd.f32 %v1296, %v2077
  %v2079 = vpop.f32.mrb[0].mxu0
  %v2080 = vadd.f32 %v1300, %v2079
  %v2081 = vpop.f32.mrb[0].mxu0
  %v2082 = vadd.f32 %v1296, %v2081
  %v2083 = vpop.f32.mrb[0].mxu0
  %v2084 = vadd.f32 %v1300, %v2083
  %2085 = vmatprep.mubr.bf16.mxu0 %v1108
  %2086 = vmatmul.mubr.bf16.gmra.mrb[0].mxu0 %v1107
  %v2087 = vpop.f32.mrb[0].mxu0
  %v2088 = vadd.f32 %v1296, %v2087
  %v2089 = vpop.f32.mrb[0].mxu0
  %v2090 = vadd.f32 %v1300, %v2089
  %v2091 = vpop.f32.mrb[0].mxu0
  %v2092 = vadd.f32 %v1296, %v2091
  %v2093 = vpop.f32.mrb[0].mxu0
  %v2094 = vadd.f32 %v1300, %v2093
  %2095 = vmatprep.mubr.bf16.mxu0 %v1112
  %2096 = vmatmul.mubr.bf16.gmra.mrb[0].mxu0 %v1111
  %v2097 = vpop.f32.mrb[0].mxu0
  %v2098 = vadd.f32 %v1296, %v2097
  %v2099 = vpop.f32.mrb[0].mxu0
  %v2100 = vadd.f32 %v1300, %v2099
  %v2101 = vpop.f32.mrb[0].mxu0
  %v2102 = vadd.f32 %v1296, %v2101
  %v2103 = vpop.f32.mrb[0].mxu0
  %v2104 = vadd.f32 %v1300, %v2103
  %2105 = vmatprep.mubr.bf16.mxu0 %v1116
  %2106 = vmatmul.mubr.bf16.gmra.mrb[0].mxu0 %v1115
  %v2107 = vpop.f32.mrb[0].mxu0
  %v2108 = vadd.f32 %v1296, %v2107
  %v2109 = vpop.f32.mrb[0].mxu0
  %v2110 = vadd.f32 %v1300, %v2109
  %v2111 = vpop.f32.mrb[0].mxu0
  %v2112 = vadd.f32 %v1296, %v2111
  %v2113 = vpop.f32.mrb[0].mxu0
  %v2114 = vadd.f32 %v1300, %v2113
  %2115 = vmatprep.mubr.bf16.mxu0 %v1120
  %2116 = vmatmul.mubr.bf16.gmra.mrb[0].mxu0 %v1119
  %v2117 = vpop.f32.mrb[0].mxu0
  %v2118 = vadd.f32 %v1296, %v2117
  %v2119 = vpop.f32.mrb[0].mxu0
  %v2120 = vadd.f32 %v1300, %v2119
  %v2121 = vpop.f32.mrb[0].mxu0
  %v2122 = vadd.f32 %v1296, %v2121
  %v2123 = vpop.f32.mrb[0].mxu0
  %v2124 = vadd.f32 %v1300, %v2123
  %2125 = vmatprep.mubr.bf16.mxu0 %v1124
  %2126 = vmatmul.mubr.bf16.gmra.mrb[0].mxu0 %v1123
  %v2127 = vpop.f32.mrb[0].mxu0
  %v2128 = vadd.f32 %v1296, %v2127
  %v2129 = vpop.f32.mrb[0].mxu0
  %v2130 = vadd.f32 %v1300, %v2129
  %v2131 = vpop.f32.mrb[0].mxu0
  %v2132 = vadd.f32 %v1296, %v2131
  %v2133 = vpop.f32.mrb[0].mxu0
  %v2134 = vadd.f32 %v1300, %v2133
  %2135 = vmatprep.mubr.bf16.mxu0 %v1128
  %2136 = vmatmul.mubr.bf16.gmra.mrb[0].mxu0 %v1127
  %v2137 = vpop.f32.mrb[0].mxu0
  %v2138 = vadd.f32 %v1296, %v2137
  %v2139 = vpop.f32.mrb[0].mxu0
  %v2140 = vadd.f32 %v1300, %v2139
  %v2141 = vpop.f32.mrb[0].mxu0
  %v2142 = vadd.f32 %v1296, %v2141
  %v2143 = vpop.f32.mrb[0].mxu0
  %v2144 = vadd.f32 %v1300, %v2143
  %2145 = vmatprep.mubr.bf16.mxu0 %v1132
  %2146 = vmatmul.mubr.bf16.gmra.mrb[0].mxu0 %v1131
  %v2147 = vpop.f32.mrb[0].mxu0
  %v2148 = vadd.f32 %v1296, %v2147
  %v2149 = vpop.f32.mrb[0].mxu0
  %v2150 = vadd.f32 %v1300, %v2149
  %v2151 = vpop.f32.mrb[0].mxu0
  %v2152 = vadd.f32 %v1296, %v2151
  %v2153 = vpop.f32.mrb[0].mxu0
  %v2154 = vadd.f32 %v1300, %v2153
  %2155 = vmatprep.mubr.bf16.mxu0 %v1136
  %2156 = vmatmul.mubr.bf16.gmra.mrb[0].mxu0 %v1135
  %v2157 = vpop.f32.mrb[0].mxu0
  %v2158 = vadd.f32 %v1296, %v2157
  %v2159 = vpop.f32.mrb[0].mxu0
  %v2160 = vadd.f32 %v1300, %v2159
  %v2161 = vpop.f32.mrb[0].mxu0
  %v2162 = vadd.f32 %v1296, %v2161
  %v2163 = vpop.f32.mrb[0].mxu0
  %v2164 = vadd.f32 %v1300, %v2163
  %2165 = vmatprep.mubr.bf16.mxu0 %v1140
  %2166 = vmatmul.mubr.bf16.gmra.mrb[0].mxu0 %v1139
  %v2167 = vpop.f32.mrb[0].mxu0
  %v2168 = vadd.f32 %v1296, %v2167
  %v2169 = vpop.f32.mrb[0].mxu0
  %v2170 = vadd.f32 %v1300, %v2169
  %v2171 = vpop.f32.mrb[0].mxu0
  %v2172 = vadd.f32 %v1296, %v2171
  %v2173 = vpop.f32.mrb[0].mxu0
  %v2174 = vadd.f32 %v1300, %v2173
  %2175 = vmatprep.mubr.bf16.mxu0 %v1144
  %2176 = vmatmul.mubr.bf16.gmra.mrb[0].mxu0 %v1143
  %v2177 = vpop.f32.mrb[0].mxu0
  %v2178 = vadd.f32 %v1296, %v2177
  %v2179 = vpop.f32.mrb[0].mxu0
  %v2180 = vadd.f32 %v1300, %v2179
  %v2181 = vpop.f32.mrb[0].mxu0
  %v2182 = vadd.f32 %v1296, %v2181
  %v2183 = vpop.f32.mrb[0].mxu0
  %v2184 = vadd.f32 %v1300, %v2183
  %2185 = vmatprep.mubr.bf16.mxu0 %v1148
  %2186 = vmatmul.mubr.bf16.gmra.mrb[0].mxu0 %v1147
  %v2187 = vpop.f32.mrb[0].mxu0
  %v2188 = vadd.f32 %v1296, %v2187
  %v2189 = vpop.f32.mrb[0].mxu0
  %v2190 = vadd.f32 %v1300, %v2189
  %v2191 = vpop.f32.mrb[0].mxu0
  %v2192 = vadd.f32 %v1296, %v2191
  %v2193 = vpop.f32.mrb[0].mxu0
  %v2194 = vadd.f32 %v1300, %v2193
  %2195 = vmatprep.mubr.bf16.mxu0 %v1152
  %2196 = vmatmul.mubr.bf16.gmra.mrb[0].mxu0 %v1151
  %v2197 = vpop.f32.mrb[0].mxu0
  %v2198 = vadd.f32 %v1296, %v2197
  %v2199 = vpop.f32.mrb[0].mxu0
  %v2200 = vadd.f32 %v1300, %v2199
  %v2201 = vpop.f32.mrb[0].mxu0
  %v2202 = vadd.f32 %v1296, %v2201
  %v2203 = vpop.f32.mrb[0].mxu0
  %v2204 = vadd.f32 %v1300, %v2203
  %2205 = vmatprep.mubr.bf16.mxu0 %v1156
  %2206 = vmatmul.mubr.bf16.gmra.mrb[0].mxu0 %v1155
  %v2207 = vpop.f32.mrb[0].mxu0
  %v2208 = vadd.f32 %v1296, %v2207
  %v2209 = vpop.f32.mrb[0].mxu0
  %v2210 = vadd.f32 %v1300, %v2209
  %v2211 = vpop.f32.mrb[0].mxu0
  %v2212 = vadd.f32 %v1296, %v2211
  %v2213 = vpop.f32.mrb[0].mxu0
  %v2214 = vadd.f32 %v1300, %v2213
  %2215 = vmatprep.mubr.bf16.mxu0 %v1160
  %2216 = vmatmul.mubr.bf16.gmra.mrb[0].mxu0 %v1159
  %v2217 = vpop.f32.mrb[0].mxu0
  %v2218 = vadd.f32 %v1296, %v2217
  %v2219 = vpop.f32.mrb[0].mxu0
  %v2220 = vadd.f32 %v1300, %v2219
  %v2221 = vpop.f32.mrb[0].mxu0
  %v2222 = vadd.f32 %v1296, %v2221
  %v2223 = vpop.f32.mrb[0].mxu0
  %v2224 = vadd.f32 %v1300, %v2223
  %2225 = vdwg.mxu0
  %2226 = vmatprep.subr.bf16.mxu0 %v1762
  %2227 = vmatpush1.bf16.msra.mxu0 %v1761
  %2228 = vmatprep.subr.bf16.mxu0 %v1766
  %2229 = vmatpush1.bf16.msra.mxu0 %v1765
  %2230 = vmatprep.subr.bf16.mxu0 %v1770
  %2231 = vmatpush1.bf16.msra.mxu0 %v1769
  %2232 = vmatprep.subr.bf16.mxu0 %v1774
  %2233 = vmatpush1.bf16.msra.mxu0 %v1773
  %2234 = vmatprep.subr.bf16.mxu0 %v1778
  %2235 = vmatpush1.bf16.msra.mxu0 %v1777
  %2236 = vmatprep.subr.bf16.mxu0 %v1782
  %2237 = vmatpush1.bf16.msra.mxu0 %v1781
  %2238 = vmatprep.subr.bf16.mxu0 %v1786
  %2239 = vmatpush1.bf16.msra.mxu0 %v1785
  %2240 = vmatprep.subr.bf16.mxu0 %v1790
  %2241 = vmatpush1.bf16.msra.mxu0 %v1789
  %2242 = vmatprep.subr.bf16.mxu0 %v1794
  %2243 = vmatpush1.bf16.msra.mxu0 %v1793
  %2244 = vmatprep.subr.bf16.mxu0 %v1798
  %2245 = vmatpush1.bf16.msra.mxu0 %v1797
  %2246 = vmatprep.subr.bf16.mxu0 %v1802
  %2247 = vmatpush1.bf16.msra.mxu0 %v1801
  %2248 = vmatprep.subr.bf16.mxu0 %v1806
  %2249 = vmatpush1.bf16.msra.mxu0 %v1805
  %2250 = vmatprep.subr.bf16.mxu0 %v1810
  %2251 = vmatpush1.bf16.msra.mxu0 %v1809
  %2252 = vmatprep.subr.bf16.mxu0 %v1814
  %2253 = vmatpush1.bf16.msra.mxu0 %v1813
  %2254 = vmatprep.subr.bf16.mxu0 %v1818
  %2255 = vmatpush1.bf16.msra.mxu0 %v1817
  %2256 = vmatprep.subr.bf16.mxu0 %v1822
  %2257 = vmatpush1.bf16.msra.mxu0 %v1821
  %2258 = vmatprep.mubr.bf16.mxu0 %v1070
  %2259 = vmatmul.mubr.bf16.gmra.mrb[0].mxu0 %v1069
  %v2260 = vpop.f32.mrb[0].mxu0
  %v2261 = vadd.f32 %v1988, %v2260
  %v2262 = vpop.f32.mrb[0].mxu0
  %v2263 = vadd.f32 %v1990, %v2262
  %v2264 = vpop.f32.mrb[0].mxu0
  %v2265 = vadd.f32 %v1992, %v2264
  %v2266 = vpop.f32.mrb[0].mxu0
  %v2267 = vadd.f32 %v1994, %v2266
  %2268 = vmatprep.mubr.bf16.mxu0 %v1074
  %2269 = vmatmul.mubr.bf16.gmra.mrb[0].mxu0 %v1073
  %v2270 = vpop.f32.mrb[0].mxu0
  %v2271 = vadd.f32 %v1998, %v2270
  %v2272 = vpop.f32.mrb[0].mxu0
  %v2273 = vadd.f32 %v2000, %v2272
  %v2274 = vpop.f32.mrb[0].mxu0
  %v2275 = vadd.f32 %v2002, %v2274
  %v2276 = vpop.f32.mrb[0].mxu0
  %v2277 = vadd.f32 %v2004, %v2276
  %2278 = vmatprep.mubr.bf16.mxu0 %v1078
  %2279 = vmatmul.mubr.bf16.gmra.mrb[0].mxu0 %v1077
  %v2280 = vpop.f32.mrb[0].mxu0
  %v2281 = vadd.f32 %v2008, %v2280
  %v2282 = vpop.f32.mrb[0].mxu0
  %v2283 = vadd.f32 %v2010, %v2282
  %v2284 = vpop.f32.mrb[0].mxu0
  %v2285 = vadd.f32 %v2012, %v2284
  %v2286 = vpop.f32.mrb[0].mxu0
  %v2287 = vadd.f32 %v2014, %v2286
  %2288 = vmatprep.mubr.bf16.mxu0 %v1082
  %2289 = vmatmul.mubr.bf16.gmra.mrb[0].mxu0 %v1081
  %v2290 = vpop.f32.mrb[0].mxu0
  %v2291 = vadd.f32 %v2018, %v2290
  %v2292 = vpop.f32.mrb[0].mxu0
  %v2293 = vadd.f32 %v2020, %v2292
  %v2294 = vpop.f32.mrb[0].mxu0
  %v2295 = vadd.f32 %v2022, %v2294
  %v2296 = vpop.f32.mrb[0].mxu0
  %v2297 = vadd.f32 %v2024, %v2296
  %2298 = vmatprep.mubr.bf16.mxu0 %v1086
  %2299 = vmatmul.mubr.bf16.gmra.mrb[0].mxu0 %v1085
  %v2300 = vpop.f32.mrb[0].mxu0
  %v2301 = vadd.f32 %v2028, %v2300
  %v2302 = vpop.f32.mrb[0].mxu0
  %v2303 = vadd.f32 %v2030, %v2302
  %v2304 = vpop.f32.mrb[0].mxu0
  %v2305 = vadd.f32 %v2032, %v2304
  %v2306 = vpop.f32.mrb[0].mxu0
  %v2307 = vadd.f32 %v2034, %v2306
  %2308 = vmatprep.mubr.bf16.mxu0 %v1090
  %2309 = vmatmul.mubr.bf16.gmra.mrb[0].mxu0 %v1089
  %v2310 = vpop.f32.mrb[0].mxu0
  %v2311 = vadd.f32 %v2038, %v2310
  %v2312 = vpop.f32.mrb[0].mxu0
  %v2313 = vadd.f32 %v2040, %v2312
  %v2314 = vpop.f32.mrb[0].mxu0
  %v2315 = vadd.f32 %v2042, %v2314
  %v2316 = vpop.f32.mrb[0].mxu0
  %v2317 = vadd.f32 %v2044, %v2316
  %2318 = vmatprep.mubr.bf16.mxu0 %v1094
  %2319 = vmatmul.mubr.bf16.gmra.mrb[0].mxu0 %v1093
  %v2320 = vpop.f32.mrb[0].mxu0
  %v2321 = vadd.f32 %v2048, %v2320
  %v2322 = vpop.f32.mrb[0].mxu0
  %v2323 = vadd.f32 %v2050, %v2322
  %v2324 = vpop.f32.mrb[0].mxu0
  %v2325 = vadd.f32 %v2052, %v2324
  %v2326 = vpop.f32.mrb[0].mxu0
  %v2327 = vadd.f32 %v2054, %v2326
  %2328 = vmatprep.mubr.bf16.mxu0 %v1098
  %2329 = vmatmul.mubr.bf16.gmra.mrb[0].mxu0 %v1097
  %v2330 = vpop.f32.mrb[0].mxu0
  %v2331 = vadd.f32 %v2058, %v2330
  %v2332 = vpop.f32.mrb[0].mxu0
  %v2333 = vadd.f32 %v2060, %v2332
  %v2334 = vpop.f32.mrb[0].mxu0
  %v2335 = vadd.f32 %v2062, %v2334
  %v2336 = vpop.f32.mrb[0].mxu0
  %v2337 = vadd.f32 %v2064, %v2336
  %2338 = vmatprep.mubr.bf16.mxu0 %v1102
  %2339 = vmatmul.mubr.bf16.gmra.mrb[0].mxu0 %v1101
  %v2340 = vpop.f32.mrb[0].mxu0
  %v2341 = vadd.f32 %v2068, %v2340
  %v2342 = vpop.f32.mrb[0].mxu0
  %v2343 = vadd.f32 %v2070, %v2342
  %v2344 = vpop.f32.mrb[0].mxu0
  %v2345 = vadd.f32 %v2072, %v2344
  %v2346 = vpop.f32.mrb[0].mxu0
  %v2347 = vadd.f32 %v2074, %v2346
  %2348 = vmatprep.mubr.bf16.mxu0 %v1106
  %2349 = vmatmul.mubr.bf16.gmra.mrb[0].mxu0 %v1105
  %v2350 = vpop.f32.mrb[0].mxu0
  %v2351 = vadd.f32 %v2078, %v2350
  %v2352 = vpop.f32.mrb[0].mxu0
  %v2353 = vadd.f32 %v2080, %v2352
  %v2354 = vpop.f32.mrb[0].mxu0
  %v2355 = vadd.f32 %v2082, %v2354
  %v2356 = vpop.f32.mrb[0].mxu0
  %v2357 = vadd.f32 %v2084, %v2356
  %2358 = vmatprep.mubr.bf16.mxu0 %v1110
  %2359 = vmatmul.mubr.bf16.gmra.mrb[0].mxu0 %v1109
  %v2360 = vpop.f32.mrb[0].mxu0
  %v2361 = vadd.f32 %v2088, %v2360
  %v2362 = vpop.f32.mrb[0].mxu0
  %v2363 = vadd.f32 %v2090, %v2362
  %v2364 = vpop.f32.mrb[0].mxu0
  %v2365 = vadd.f32 %v2092, %v2364
  %v2366 = vpop.f32.mrb[0].mxu0
  %v2367 = vadd.f32 %v2094, %v2366
  %2368 = vmatprep.mubr.bf16.mxu0 %v1114
  %2369 = vmatmul.mubr.bf16.gmra.mrb[0].mxu0 %v1113
  %v2370 = vpop.f32.mrb[0].mxu0
  %v2371 = vadd.f32 %v2098, %v2370
  %v2372 = vpop.f32.mrb[0].mxu0
  %v2373 = vadd.f32 %v2100, %v2372
  %v2374 = vpop.f32.mrb[0].mxu0
  %v2375 = vadd.f32 %v2102, %v2374
  %v2376 = vpop.f32.mrb[0].mxu0
  %v2377 = vadd.f32 %v2104, %v2376
  %2378 = vmatprep.mubr.bf16.mxu0 %v1118
  %2379 = vmatmul.mubr.bf16.gmra.mrb[0].mxu0 %v1117
  %v2380 = vpop.f32.mrb[0].mxu0
  %v2381 = vadd.f32 %v2108, %v2380
  %v2382 = vpop.f32.mrb[0].mxu0
  %v2383 = vadd.f32 %v2110, %v2382
  %v2384 = vpop.f32.mrb[0].mxu0
  %v2385 = vadd.f32 %v2112, %v2384
  %v2386 = vpop.f32.mrb[0].mxu0
  %v2387 = vadd.f32 %v2114, %v2386
  %2388 = vmatprep.mubr.bf16.mxu0 %v1122
  %2389 = vmatmul.mubr.bf16.gmra.mrb[0].mxu0 %v1121
  %v2390 = vpop.f32.mrb[0].mxu0
  %v2391 = vadd.f32 %v2118, %v2390
  %v2392 = vpop.f32.mrb[0].mxu0
  %v2393 = vadd.f32 %v2120, %v2392
  %v2394 = vpop.f32.mrb[0].mxu0
  %v2395 = vadd.f32 %v2122, %v2394
  %v2396 = vpop.f32.mrb[0].mxu0
  %v2397 = vadd.f32 %v2124, %v2396
  %2398 = vmatprep.mubr.bf16.mxu0 %v1126
  %2399 = vmatmul.mubr.bf16.gmra.mrb[0].mxu0 %v1125
  %v2400 = vpop.f32.mrb[0].mxu0
  %v2401 = vadd.f32 %v2128, %v2400
  %v2402 = vpop.f32.mrb[0].mxu0
  %v2403 = vadd.f32 %v2130, %v2402
  %v2404 = vpop.f32.mrb[0].mxu0
  %v2405 = vadd.f32 %v2132, %v2404
  %v2406 = vpop.f32.mrb[0].mxu0
  %v2407 = vadd.f32 %v2134, %v2406
  %2408 = vmatprep.mubr.bf16.mxu0 %v1130
  %2409 = vmatmul.mubr.bf16.gmra.mrb[0].mxu0 %v1129
  %v2410 = vpop.f32.mrb[0].mxu0
  %v2411 = vadd.f32 %v2138, %v2410
  %v2412 = vpop.f32.mrb[0].mxu0
  %v2413 = vadd.f32 %v2140, %v2412
  %v2414 = vpop.f32.mrb[0].mxu0
  %v2415 = vadd.f32 %v2142, %v2414
  %v2416 = vpop.f32.mrb[0].mxu0
  %v2417 = vadd.f32 %v2144, %v2416
  %2418 = vmatprep.mubr.bf16.mxu0 %v1134
  %2419 = vmatmul.mubr.bf16.gmra.mrb[0].mxu0 %v1133
  %v2420 = vpop.f32.mrb[0].mxu0
  %v2421 = vadd.f32 %v2148, %v2420
  %v2422 = vpop.f32.mrb[0].mxu0
  %v2423 = vadd.f32 %v2150, %v2422
  %v2424 = vpop.f32.mrb[0].mxu0
  %v2425 = vadd.f32 %v2152, %v2424
  %v2426 = vpop.f32.mrb[0].mxu0
  %v2427 = vadd.f32 %v2154, %v2426
  %2428 = vmatprep.mubr.bf16.mxu0 %v1138
  %2429 = vmatmul.mubr.bf16.gmra.mrb[0].mxu0 %v1137
  %v2430 = vpop.f32.mrb[0].mxu0
  %v2431 = vadd.f32 %v2158, %v2430
  %v2432 = vpop.f32.mrb[0].mxu0
  %v2433 = vadd.f32 %v2160, %v2432
  %v2434 = vpop.f32.mrb[0].mxu0
  %v2435 = vadd.f32 %v2162, %v2434
  %v2436 = vpop.f32.mrb[0].mxu0
  %v2437 = vadd.f32 %v2164, %v2436
  %2438 = vmatprep.mubr.bf16.mxu0 %v1142
  %2439 = vmatmul.mubr.bf16.gmra.mrb[0].mxu0 %v1141
  %v2440 = vpop.f32.mrb[0].mxu0
  %v2441 = vadd.f32 %v2168, %v2440
  %v2442 = vpop.f32.mrb[0].mxu0
  %v2443 = vadd.f32 %v2170, %v2442
  %v2444 = vpop.f32.mrb[0].mxu0
  %v2445 = vadd.f32 %v2172, %v2444
  %v2446 = vpop.f32.mrb[0].mxu0
  %v2447 = vadd.f32 %v2174, %v2446
  %2448 = vmatprep.mubr.bf16.mxu0 %v1146
  %2449 = vmatmul.mubr.bf16.gmra.mrb[0].mxu0 %v1145
  %v2450 = vpop.f32.mrb[0].mxu0
  %v2451 = vadd.f32 %v2178, %v2450
  %v2452 = vpop.f32.mrb[0].mxu0
  %v2453 = vadd.f32 %v2180, %v2452
  %v2454 = vpop.f32.mrb[0].mxu0
  %v2455 = vadd.f32 %v2182, %v2454
  %v2456 = vpop.f32.mrb[0].mxu0
  %v2457 = vadd.f32 %v2184, %v2456
  %2458 = vmatprep.mubr.bf16.mxu0 %v1150
  %2459 = vmatmul.mubr.bf16.gmra.mrb[0].mxu0 %v1149
  %v2460 = vpop.f32.mrb[0].mxu0
  %v2461 = vadd.f32 %v2188, %v2460
  %v2462 = vpop.f32.mrb[0].mxu0
  %v2463 = vadd.f32 %v2190, %v2462
  %v2464 = vpop.f32.mrb[0].mxu0
  %v2465 = vadd.f32 %v2192, %v2464
  %v2466 = vpop.f32.mrb[0].mxu0
  %v2467 = vadd.f32 %v2194, %v2466
  %2468 = vmatprep.mubr.bf16.mxu0 %v1154
  %2469 = vmatmul.mubr.bf16.gmra.mrb[0].mxu0 %v1153
  %v2470 = vpop.f32.mrb[0].mxu0
  %v2471 = vadd.f32 %v2198, %v2470
  %v2472 = vpop.f32.mrb[0].mxu0
  %v2473 = vadd.f32 %v2200, %v2472
  %v2474 = vpop.f32.mrb[0].mxu0
  %v2475 = vadd.f32 %v2202, %v2474
  %v2476 = vpop.f32.mrb[0].mxu0
  %v2477 = vadd.f32 %v2204, %v2476
  %2478 = vmatprep.mubr.bf16.mxu0 %v1158
  %2479 = vmatmul.mubr.bf16.gmra.mrb[0].mxu0 %v1157
  %v2480 = vpop.f32.mrb[0].mxu0
  %v2481 = vadd.f32 %v2208, %v2480
  %v2482 = vpop.f32.mrb[0].mxu0
  %v2483 = vadd.f32 %v2210, %v2482
  %v2484 = vpop.f32.mrb[0].mxu0
  %v2485 = vadd.f32 %v2212, %v2484
  %v2486 = vpop.f32.mrb[0].mxu0
  %v2487 = vadd.f32 %v2214, %v2486
  %2488 = vmatprep.mubr.bf16.mxu0 %v1162
  %2489 = vmatmul.mubr.bf16.gmra.mrb[0].mxu0 %v1161
  %v2490 = vpop.f32.mrb[0].mxu0
  %v2491 = vadd.f32 %v2218, %v2490
  %v2492 = vpop.f32.mrb[0].mxu0
  %v2493 = vadd.f32 %v2220, %v2492
  %v2494 = vpop.f32.mrb[0].mxu0
  %v2495 = vadd.f32 %v2222, %v2494
  %v2496 = vpop.f32.mrb[0].mxu0
  %v2497 = vadd.f32 %v2224, %v2496
  %2498 = vdwg.mxu0
  %2499 = vmatprep.subr.bf16.mxu0 %v1700
  %2500 = vmatpush1.bf16.msra.mxu0 %v1699
  %2501 = vmatprep.subr.bf16.mxu0 %v1704
  %2502 = vmatpush1.bf16.msra.mxu0 %v1703
  %2503 = vmatprep.subr.bf16.mxu0 %v1708
  %2504 = vmatpush1.bf16.msra.mxu0 %v1707
  %2505 = vmatprep.subr.bf16.mxu0 %v1712
  %2506 = vmatpush1.bf16.msra.mxu0 %v1711
  %2507 = vmatprep.subr.bf16.mxu0 %v1716
  %2508 = vmatpush1.bf16.msra.mxu0 %v1715
  %2509 = vmatprep.subr.bf16.mxu0 %v1720
  %2510 = vmatpush1.bf16.msra.mxu0 %v1719
  %2511 = vmatprep.subr.bf16.mxu0 %v1724
  %2512 = vmatpush1.bf16.msra.mxu0 %v1723
  %2513 = vmatprep.subr.bf16.mxu0 %v1728
  %2514 = vmatpush1.bf16.msra.mxu0 %v1727
  %2515 = vmatprep.subr.bf16.mxu0 %v1732
  %2516 = vmatpush1.bf16.msra.mxu0 %v1731
  %2517 = vmatprep.subr.bf16.mxu0 %v1736
  %2518 = vmatpush1.bf16.msra.mxu0 %v1735
  %2519 = vmatprep.subr.bf16.mxu0 %v1740
  %2520 = vmatpush1.bf16.msra.mxu0 %v1739
  %2521 = vmatprep.subr.bf16.mxu0 %v1744
  %2522 = vmatpush1.bf16.msra.mxu0 %v1743
  %2523 = vmatprep.subr.bf16.mxu0 %v1748
  %2524 = vmatpush1.bf16.msra.mxu0 %v1747
  %2525 = vmatprep.subr.bf16.mxu0 %v1752
  %2526 = vmatpush1.bf16.msra.mxu0 %v1751
  %2527 = vmatprep.subr.bf16.mxu0 %v1756
  %2528 = vmatpush1.bf16.msra.mxu0 %v1755
  %2529 = vmatprep.subr.bf16.mxu0 %v1760
  %2530 = vmatpush1.bf16.msra.mxu0 %v1759
  %2531 = vmatprep.mubr.bf16.mxu0 %v1068
  %2532 = vmatmul.mubr.bf16.gmra.mrb[0].mxu0 %v1067
  %v2533 = vpop.f32.mrb[0].mxu0
  %v2534 = vadd.f32 %v1304, %v2533
  %v2535 = vpop.f32.mrb[0].mxu0
  %v2536 = vadd.f32 %v1308, %v2535
  %v2537 = vpop.f32.mrb[0].mxu0
  %v2538 = vadd.f32 %v1304, %v2537
  %v2539 = vpop.f32.mrb[0].mxu0
  %v2540 = vadd.f32 %v1308, %v2539
  %2541 = vmatprep.mubr.bf16.mxu0 %v1072
  %2542 = vmatmul.mubr.bf16.gmra.mrb[0].mxu0 %v1071
  %v2543 = vpop.f32.mrb[0].mxu0
  %v2544 = vadd.f32 %v1304, %v2543
  %v2545 = vpop.f32.mrb[0].mxu0
  %v2546 = vadd.f32 %v1308, %v2545
  %v2547 = vpop.f32.mrb[0].mxu0
  %v2548 = vadd.f32 %v1304, %v2547
  %v2549 = vpop.f32.mrb[0].mxu0
  %v2550 = vadd.f32 %v1308, %v2549
  %2551 = vmatprep.mubr.bf16.mxu0 %v1076
  %2552 = vmatmul.mubr.bf16.gmra.mrb[0].mxu0 %v1075
  %v2553 = vpop.f32.mrb[0].mxu0
  %v2554 = vadd.f32 %v1304, %v2553
  %v2555 = vpop.f32.mrb[0].mxu0
  %v2556 = vadd.f32 %v1308, %v2555
  %v2557 = vpop.f32.mrb[0].mxu0
  %v2558 = vadd.f32 %v1304, %v2557
  %v2559 = vpop.f32.mrb[0].mxu0
  %v2560 = vadd.f32 %v1308, %v2559
  %2561 = vmatprep.mubr.bf16.mxu0 %v1080
  %2562 = vmatmul.mubr.bf16.gmra.mrb[0].mxu0 %v1079
  %v2563 = vpop.f32.mrb[0].mxu0
  %v2564 = vadd.f32 %v1304, %v2563
  %v2565 = vpop.f32.mrb[0].mxu0
  %v2566 = vadd.f32 %v1308, %v2565
  %v2567 = vpop.f32.mrb[0].mxu0
  %v2568 = vadd.f32 %v1304, %v2567
  %v2569 = vpop.f32.mrb[0].mxu0
  %v2570 = vadd.f32 %v1308, %v2569
  %2571 = vmatprep.mubr.bf16.mxu0 %v1084
  %2572 = vmatmul.mubr.bf16.gmra.mrb[0].mxu0 %v1083
  %v2573 = vpop.f32.mrb[0].mxu0
  %v2574 = vadd.f32 %v1304, %v2573
  %v2575 = vpop.f32.mrb[0].mxu0
  %v2576 = vadd.f32 %v1308, %v2575
  %v2577 = vpop.f32.mrb[0].mxu0
  %v2578 = vadd.f32 %v1304, %v2577
  %v2579 = vpop.f32.mrb[0].mxu0
  %v2580 = vadd.f32 %v1308, %v2579
  %2581 = vmatprep.mubr.bf16.mxu0 %v1088
  %2582 = vmatmul.mubr.bf16.gmra.mrb[0].mxu0 %v1087
  %v2583 = vpop.f32.mrb[0].mxu0
  %v2584 = vadd.f32 %v1304, %v2583
  %v2585 = vpop.f32.mrb[0].mxu0
  %v2586 = vadd.f32 %v1308, %v2585
  %v2587 = vpop.f32.mrb[0].mxu0
  %v2588 = vadd.f32 %v1304, %v2587
  %v2589 = vpop.f32.mrb[0].mxu0
  %v2590 = vadd.f32 %v1308, %v2589
  %2591 = vmatprep.mubr.bf16.mxu0 %v1092
  %2592 = vmatmul.mubr.bf16.gmra.mrb[0].mxu0 %v1091
  %v2593 = vpop.f32.mrb[0].mxu0
  %v2594 = vadd.f32 %v1304, %v2593
  %v2595 = vpop.f32.mrb[0].mxu0
  %v2596 = vadd.f32 %v1308, %v2595
  %v2597 = vpop.f32.mrb[0].mxu0
  %v2598 = vadd.f32 %v1304, %v2597
  %v2599 = vpop.f32.mrb[0].mxu0
  %v2600 = vadd.f32 %v1308, %v2599
  %2601 = vmatprep.mubr.bf16.mxu0 %v1096
  %2602 = vmatmul.mubr.bf16.gmra.mrb[0].mxu0 %v1095
  %v2603 = vpop.f32.mrb[0].mxu0
  %v2604 = vadd.f32 %v1304, %v2603
  %v2605 = vpop.f32.mrb[0].mxu0
  %v2606 = vadd.f32 %v1308, %v2605
  %v2607 = vpop.f32.mrb[0].mxu0
  %v2608 = vadd.f32 %v1304, %v2607
  %v2609 = vpop.f32.mrb[0].mxu0
  %v2610 = vadd.f32 %v1308, %v2609
  %2611 = vmatprep.mubr.bf16.mxu0 %v1100
  %2612 = vmatmul.mubr.bf16.gmra.mrb[0].mxu0 %v1099
  %v2613 = vpop.f32.mrb[0].mxu0
  %v2614 = vadd.f32 %v1304, %v2613
  %v2615 = vpop.f32.mrb[0].mxu0
  %v2616 = vadd.f32 %v1308, %v2615
  %v2617 = vpop.f32.mrb[0].mxu0
  %v2618 = vadd.f32 %v1304, %v2617
  %v2619 = vpop.f32.mrb[0].mxu0
  %v2620 = vadd.f32 %v1308, %v2619
  %2621 = vmatprep.mubr.bf16.mxu0 %v1104
  %2622 = vmatmul.mubr.bf16.gmra.mrb[0].mxu0 %v1103
  %v2623 = vpop.f32.mrb[0].mxu0
  %v2624 = vadd.f32 %v1304, %v2623
  %v2625 = vpop.f32.mrb[0].mxu0
  %v2626 = vadd.f32 %v1308, %v2625
  %v2627 = vpop.f32.mrb[0].mxu0
  %v2628 = vadd.f32 %v1304, %v2627
  %v2629 = vpop.f32.mrb[0].mxu0
  %v2630 = vadd.f32 %v1308, %v2629
  %2631 = vmatprep.mubr.bf16.mxu0 %v1108
  %2632 = vmatmul.mubr.bf16.gmra.mrb[0].mxu0 %v1107
  %v2633 = vpop.f32.mrb[0].mxu0
  %v2634 = vadd.f32 %v1304, %v2633
  %v2635 = vpop.f32.mrb[0].mxu0
  %v2636 = vadd.f32 %v1308, %v2635
  %v2637 = vpop.f32.mrb[0].mxu0
  %v2638 = vadd.f32 %v1304, %v2637
  %v2639 = vpop.f32.mrb[0].mxu0
  %v2640 = vadd.f32 %v1308, %v2639
  %2641 = vmatprep.mubr.bf16.mxu0 %v1112
  %2642 = vmatmul.mubr.bf16.gmra.mrb[0].mxu0 %v1111
  %v2643 = vpop.f32.mrb[0].mxu0
  %v2644 = vadd.f32 %v1304, %v2643
  %v2645 = vpop.f32.mrb[0].mxu0
  %v2646 = vadd.f32 %v1308, %v2645
  %v2647 = vpop.f32.mrb[0].mxu0
  %v2648 = vadd.f32 %v1304, %v2647
  %v2649 = vpop.f32.mrb[0].mxu0
  %v2650 = vadd.f32 %v1308, %v2649
  %2651 = vmatprep.mubr.bf16.mxu0 %v1116
  %2652 = vmatmul.mubr.bf16.gmra.mrb[0].mxu0 %v1115
  %v2653 = vpop.f32.mrb[0].mxu0
  %v2654 = vadd.f32 %v1304, %v2653
  %v2655 = vpop.f32.mrb[0].mxu0
  %v2656 = vadd.f32 %v1308, %v2655
  %v2657 = vpop.f32.mrb[0].mxu0
  %v2658 = vadd.f32 %v1304, %v2657
  %v2659 = vpop.f32.mrb[0].mxu0
  %v2660 = vadd.f32 %v1308, %v2659
  %2661 = vmatprep.mubr.bf16.mxu0 %v1120
  %2662 = vmatmul.mubr.bf16.gmra.mrb[0].mxu0 %v1119
  %v2663 = vpop.f32.mrb[0].mxu0
  %v2664 = vadd.f32 %v1304, %v2663
  %v2665 = vpop.f32.mrb[0].mxu0
  %v2666 = vadd.f32 %v1308, %v2665
  %v2667 = vpop.f32.mrb[0].mxu0
  %v2668 = vadd.f32 %v1304, %v2667
  %v2669 = vpop.f32.mrb[0].mxu0
  %v2670 = vadd.f32 %v1308, %v2669
  %2671 = vmatprep.mubr.bf16.mxu0 %v1124
  %2672 = vmatmul.mubr.bf16.gmra.mrb[0].mxu0 %v1123
  %v2673 = vpop.f32.mrb[0].mxu0
  %v2674 = vadd.f32 %v1304, %v2673
  %v2675 = vpop.f32.mrb[0].mxu0
  %v2676 = vadd.f32 %v1308, %v2675
  %v2677 = vpop.f32.mrb[0].mxu0
  %v2678 = vadd.f32 %v1304, %v2677
  %v2679 = vpop.f32.mrb[0].mxu0
  %v2680 = vadd.f32 %v1308, %v2679
  %2681 = vmatprep.mubr.bf16.mxu0 %v1128
  %2682 = vmatmul.mubr.bf16.gmra.mrb[0].mxu0 %v1127
  %v2683 = vpop.f32.mrb[0].mxu0
  %v2684 = vadd.f32 %v1304, %v2683
  %v2685 = vpop.f32.mrb[0].mxu0
  %v2686 = vadd.f32 %v1308, %v2685
  %v2687 = vpop.f32.mrb[0].mxu0
  %v2688 = vadd.f32 %v1304, %v2687
  %v2689 = vpop.f32.mrb[0].mxu0
  %v2690 = vadd.f32 %v1308, %v2689
  %2691 = vmatprep.mubr.bf16.mxu0 %v1132
  %2692 = vmatmul.mubr.bf16.gmra.mrb[0].mxu0 %v1131
  %v2693 = vpop.f32.mrb[0].mxu0
  %v2694 = vadd.f32 %v1304, %v2693
  %v2695 = vpop.f32.mrb[0].mxu0
  %v2696 = vadd.f32 %v1308, %v2695
  %v2697 = vpop.f32.mrb[0].mxu0
  %v2698 = vadd.f32 %v1304, %v2697
  %v2699 = vpop.f32.mrb[0].mxu0
  %v2700 = vadd.f32 %v1308, %v2699
  %2701 = vmatprep.mubr.bf16.mxu0 %v1136
  %2702 = vmatmul.mubr.bf16.gmra.mrb[0].mxu0 %v1135
  %v2703 = vpop.f32.mrb[0].mxu0
  %v2704 = vadd.f32 %v1304, %v2703
  %v2705 = vpop.f32.mrb[0].mxu0
  %v2706 = vadd.f32 %v1308, %v2705
  %v2707 = vpop.f32.mrb[0].mxu0
  %v2708 = vadd.f32 %v1304, %v2707
  %v2709 = vpop.f32.mrb[0].mxu0
  %v2710 = vadd.f32 %v1308, %v2709
  %2711 = vmatprep.mubr.bf16.mxu0 %v1140
  %2712 = vmatmul.mubr.bf16.gmra.mrb[0].mxu0 %v1139
  %v2713 = vpop.f32.mrb[0].mxu0
  %v2714 = vadd.f32 %v1304, %v2713
  %v2715 = vpop.f32.mrb[0].mxu0
  %v2716 = vadd.f32 %v1308, %v2715
  %v2717 = vpop.f32.mrb[0].mxu0
  %v2718 = vadd.f32 %v1304, %v2717
  %v2719 = vpop.f32.mrb[0].mxu0
  %v2720 = vadd.f32 %v1308, %v2719
  %2721 = vmatprep.mubr.bf16.mxu0 %v1144
  %2722 = vmatmul.mubr.bf16.gmra.mrb[0].mxu0 %v1143
  %v2723 = vpop.f32.mrb[0].mxu0
  %v2724 = vadd.f32 %v1304, %v2723
  %v2725 = vpop.f32.mrb[0].mxu0
  %v2726 = vadd.f32 %v1308, %v2725
  %v2727 = vpop.f32.mrb[0].mxu0
  %v2728 = vadd.f32 %v1304, %v2727
  %v2729 = vpop.f32.mrb[0].mxu0
  %v2730 = vadd.f32 %v1308, %v2729
  %2731 = vmatprep.mubr.bf16.mxu0 %v1148
  %2732 = vmatmul.mubr.bf16.gmra.mrb[0].mxu0 %v1147
  %v2733 = vpop.f32.mrb[0].mxu0
  %v2734 = vadd.f32 %v1304, %v2733
  %v2735 = vpop.f32.mrb[0].mxu0
  %v2736 = vadd.f32 %v1308, %v2735
  %v2737 = vpop.f32.mrb[0].mxu0
  %v2738 = vadd.f32 %v1304, %v2737
  %v2739 = vpop.f32.mrb[0].mxu0
  %v2740 = vadd.f32 %v1308, %v2739
  %2741 = vmatprep.mubr.bf16.mxu0 %v1152
  %2742 = vmatmul.mubr.bf16.gmra.mrb[0].mxu0 %v1151
  %v2743 = vpop.f32.mrb[0].mxu0
  %v2744 = vadd.f32 %v1304, %v2743
  %v2745 = vpop.f32.mrb[0].mxu0
  %v2746 = vadd.f32 %v1308, %v2745
  %v2747 = vpop.f32.mrb[0].mxu0
  %v2748 = vadd.f32 %v1304, %v2747
  %v2749 = vpop.f32.mrb[0].mxu0
  %v2750 = vadd.f32 %v1308, %v2749
  %2751 = vmatprep.mubr.bf16.mxu0 %v1156
  %2752 = vmatmul.mubr.bf16.gmra.mrb[0].mxu0 %v1155
  %v2753 = vpop.f32.mrb[0].mxu0
  %v2754 = vadd.f32 %v1304, %v2753
  %v2755 = vpop.f32.mrb[0].mxu0
  %v2756 = vadd.f32 %v1308, %v2755
  %v2757 = vpop.f32.mrb[0].mxu0
  %v2758 = vadd.f32 %v1304, %v2757
  %v2759 = vpop.f32.mrb[0].mxu0
  %v2760 = vadd.f32 %v1308, %v2759
  %2761 = vmatprep.mubr.bf16.mxu0 %v1160
  %2762 = vmatmul.mubr.bf16.gmra.mrb[0].mxu0 %v1159
  %v2763 = vpop.f32.mrb[0].mxu0
  %v2764 = vadd.f32 %v1304, %v2763
  %v2765 = vpop.f32.mrb[0].mxu0
  %v2766 = vadd.f32 %v1308, %v2765
  %v2767 = vpop.f32.mrb[0].mxu0
  %v2768 = vadd.f32 %v1304, %v2767
  %v2769 = vpop.f32.mrb[0].mxu0
  %v2770 = vadd.f32 %v1308, %v2769
  %2771 = vdwg.mxu0
  %2772 = vmatprep.subr.bf16.mxu0 %v1764
  %2773 = vmatpush1.bf16.msra.mxu0 %v1763
  %2774 = vmatprep.subr.bf16.mxu0 %v1768
  %2775 = vmatpush1.bf16.msra.mxu0 %v1767
  %2776 = vmatprep.subr.bf16.mxu0 %v1772
  %2777 = vmatpush1.bf16.msra.mxu0 %v1771
  %2778 = vmatprep.subr.bf16.mxu0 %v1776
  %2779 = vmatpush1.bf16.msra.mxu0 %v1775
  %2780 = vmatprep.subr.bf16.mxu0 %v1780
  %2781 = vmatpush1.bf16.msra.mxu0 %v1779
  %2782 = vmatprep.subr.bf16.mxu0 %v1784
  %2783 = vmatpush1.bf16.msra.mxu0 %v1783
  %2784 = vmatprep.subr.bf16.mxu0 %v1788
  %2785 = vmatpush1.bf16.msra.mxu0 %v1787
  %2786 = vmatprep.subr.bf16.mxu0 %v1792
  %2787 = vmatpush1.bf16.msra.mxu0 %v1791
  %2788 = vmatprep.subr.bf16.mxu0 %v1796
  %2789 = vmatpush1.bf16.msra.mxu0 %v1795
  %2790 = vmatprep.subr.bf16.mxu0 %v1800
  %2791 = vmatpush1.bf16.msra.mxu0 %v1799
  %2792 = vmatprep.subr.bf16.mxu0 %v1804
  %2793 = vmatpush1.bf16.msra.mxu0 %v1803
  %2794 = vmatprep.subr.bf16.mxu0 %v1808
  %2795 = vmatpush1.bf16.msra.mxu0 %v1807
  %2796 = vmatprep.subr.bf16.mxu0 %v1812
  %2797 = vmatpush1.bf16.msra.mxu0 %v1811
  %2798 = vmatprep.subr.bf16.mxu0 %v1816
  %2799 = vmatpush1.bf16.msra.mxu0 %v1815
  %2800 = vmatprep.subr.bf16.mxu0 %v1820
  %2801 = vmatpush1.bf16.msra.mxu0 %v1819
  %2802 = vmatprep.subr.bf16.mxu0 %v1824
  %2803 = vmatpush1.bf16.msra.mxu0 %v1823
  %2804 = vmatprep.mubr.bf16.mxu0 %v1070
  %2805 = vmatmul.mubr.bf16.gmra.mrb[0].mxu0 %v1069
  %v2806 = vpop.f32.mrb[0].mxu0
  %v2807 = vadd.f32 %v2534, %v2806
  %v2808 = vpop.f32.mrb[0].mxu0
  %v2809 = vadd.f32 %v2536, %v2808
  %v2810 = vpop.f32.mrb[0].mxu0
  %v2811 = vadd.f32 %v2538, %v2810
  %v2812 = vpop.f32.mrb[0].mxu0
  %v2813 = vadd.f32 %v2540, %v2812
  %2814 = vmatprep.mubr.bf16.mxu0 %v1074
  %2815 = vmatmul.mubr.bf16.gmra.mrb[0].mxu0 %v1073
  %v2816 = vpop.f32.mrb[0].mxu0
  %v2817 = vadd.f32 %v2544, %v2816
  %v2818 = vpop.f32.mrb[0].mxu0
  %v2819 = vadd.f32 %v2546, %v2818
  %v2820 = vpop.f32.mrb[0].mxu0
  %v2821 = vadd.f32 %v2548, %v2820
  %v2822 = vpop.f32.mrb[0].mxu0
  %v2823 = vadd.f32 %v2550, %v2822
  %2824 = vmatprep.mubr.bf16.mxu0 %v1078
  %2825 = vmatmul.mubr.bf16.gmra.mrb[0].mxu0 %v1077
  %v2826 = vpop.f32.mrb[0].mxu0
  %v2827 = vadd.f32 %v2554, %v2826
  %v2828 = vpop.f32.mrb[0].mxu0
  %v2829 = vadd.f32 %v2556, %v2828
  %v2830 = vpop.f32.mrb[0].mxu0
  %v2831 = vadd.f32 %v2558, %v2830
  %v2832 = vpop.f32.mrb[0].mxu0
  %v2833 = vadd.f32 %v2560, %v2832
  %2834 = vmatprep.mubr.bf16.mxu0 %v1082
  %2835 = vmatmul.mubr.bf16.gmra.mrb[0].mxu0 %v1081
  %v2836 = vpop.f32.mrb[0].mxu0
  %v2837 = vadd.f32 %v2564, %v2836
  %v2838 = vpop.f32.mrb[0].mxu0
  %v2839 = vadd.f32 %v2566, %v2838
  %v2840 = vpop.f32.mrb[0].mxu0
  %v2841 = vadd.f32 %v2568, %v2840
  %v2842 = vpop.f32.mrb[0].mxu0
  %v2843 = vadd.f32 %v2570, %v2842
  %2844 = vmatprep.mubr.bf16.mxu0 %v1086
  %2845 = vmatmul.mubr.bf16.gmra.mrb[0].mxu0 %v1085
  %v2846 = vpop.f32.mrb[0].mxu0
  %v2847 = vadd.f32 %v2574, %v2846
  %v2848 = vpop.f32.mrb[0].mxu0
  %v2849 = vadd.f32 %v2576, %v2848
  %v2850 = vpop.f32.mrb[0].mxu0
  %v2851 = vadd.f32 %v2578, %v2850
  %v2852 = vpop.f32.mrb[0].mxu0
  %v2853 = vadd.f32 %v2580, %v2852
  %2854 = vmatprep.mubr.bf16.mxu0 %v1090
  %2855 = vmatmul.mubr.bf16.gmra.mrb[0].mxu0 %v1089
  %v2856 = vpop.f32.mrb[0].mxu0
  %v2857 = vadd.f32 %v2584, %v2856
  %v2858 = vpop.f32.mrb[0].mxu0
  %v2859 = vadd.f32 %v2586, %v2858
  %v2860 = vpop.f32.mrb[0].mxu0
  %v2861 = vadd.f32 %v2588, %v2860
  %v2862 = vpop.f32.mrb[0].mxu0
  %v2863 = vadd.f32 %v2590, %v2862
  %2864 = vmatprep.mubr.bf16.mxu0 %v1094
  %2865 = vmatmul.mubr.bf16.gmra.mrb[0].mxu0 %v1093
  %v2866 = vpop.f32.mrb[0].mxu0
  %v2867 = vadd.f32 %v2594, %v2866
  %v2868 = vpop.f32.mrb[0].mxu0
  %v2869 = vadd.f32 %v2596, %v2868
  %v2870 = vpop.f32.mrb[0].mxu0
  %v2871 = vadd.f32 %v2598, %v2870
  %v2872 = vpop.f32.mrb[0].mxu0
  %v2873 = vadd.f32 %v2600, %v2872
  %2874 = vmatprep.mubr.bf16.mxu0 %v1098
  %2875 = vmatmul.mubr.bf16.gmra.mrb[0].mxu0 %v1097
  %v2876 = vpop.f32.mrb[0].mxu0
  %v2877 = vadd.f32 %v2604, %v2876
  %v2878 = vpop.f32.mrb[0].mxu0
  %v2879 = vadd.f32 %v2606, %v2878
  %v2880 = vpop.f32.mrb[0].mxu0
  %v2881 = vadd.f32 %v2608, %v2880
  %v2882 = vpop.f32.mrb[0].mxu0
  %v2883 = vadd.f32 %v2610, %v2882
  %2884 = vmatprep.mubr.bf16.mxu0 %v1102
  %2885 = vmatmul.mubr.bf16.gmra.mrb[0].mxu0 %v1101
  %v2886 = vpop.f32.mrb[0].mxu0
  %v2887 = vadd.f32 %v2614, %v2886
  %v2888 = vpop.f32.mrb[0].mxu0
  %v2889 = vadd.f32 %v2616, %v2888
  %v2890 = vpop.f32.mrb[0].mxu0
  %v2891 = vadd.f32 %v2618, %v2890
  %v2892 = vpop.f32.mrb[0].mxu0
  %v2893 = vadd.f32 %v2620, %v2892
  %2894 = vmatprep.mubr.bf16.mxu0 %v1106
  %2895 = vmatmul.mubr.bf16.gmra.mrb[0].mxu0 %v1105
  %v2896 = vpop.f32.mrb[0].mxu0
  %v2897 = vadd.f32 %v2624, %v2896
  %v2898 = vpop.f32.mrb[0].mxu0
  %v2899 = vadd.f32 %v2626, %v2898
  %v2900 = vpop.f32.mrb[0].mxu0
  %v2901 = vadd.f32 %v2628, %v2900
  %v2902 = vpop.f32.mrb[0].mxu0
  %v2903 = vadd.f32 %v2630, %v2902
  %2904 = vmatprep.mubr.bf16.mxu0 %v1110
  %2905 = vmatmul.mubr.bf16.gmra.mrb[0].mxu0 %v1109
  %v2906 = vpop.f32.mrb[0].mxu0
  %v2907 = vadd.f32 %v2634, %v2906
  %v2908 = vpop.f32.mrb[0].mxu0
  %v2909 = vadd.f32 %v2636, %v2908
  %v2910 = vpop.f32.mrb[0].mxu0
  %v2911 = vadd.f32 %v2638, %v2910
  %v2912 = vpop.f32.mrb[0].mxu0
  %v2913 = vadd.f32 %v2640, %v2912
  %2914 = vmatprep.mubr.bf16.mxu0 %v1114
  %2915 = vmatmul.mubr.bf16.gmra.mrb[0].mxu0 %v1113
  %v2916 = vpop.f32.mrb[0].mxu0
  %v2917 = vadd.f32 %v2644, %v2916
  %v2918 = vpop.f32.mrb[0].mxu0
  %v2919 = vadd.f32 %v2646, %v2918
  %v2920 = vpop.f32.mrb[0].mxu0
  %v2921 = vadd.f32 %v2648, %v2920
  %v2922 = vpop.f32.mrb[0].mxu0
  %v2923 = vadd.f32 %v2650, %v2922
  %2924 = vmatprep.mubr.bf16.mxu0 %v1118
  %2925 = vmatmul.mubr.bf16.gmra.mrb[0].mxu0 %v1117
  %v2926 = vpop.f32.mrb[0].mxu0
  %v2927 = vadd.f32 %v2654, %v2926
  %v2928 = vpop.f32.mrb[0].mxu0
  %v2929 = vadd.f32 %v2656, %v2928
  %v2930 = vpop.f32.mrb[0].mxu0
  %v2931 = vadd.f32 %v2658, %v2930
  %v2932 = vpop.f32.mrb[0].mxu0
  %v2933 = vadd.f32 %v2660, %v2932
  %2934 = vmatprep.mubr.bf16.mxu0 %v1122
  %2935 = vmatmul.mubr.bf16.gmra.mrb[0].mxu0 %v1121
  %v2936 = vpop.f32.mrb[0].mxu0
  %v2937 = vadd.f32 %v2664, %v2936
  %v2938 = vpop.f32.mrb[0].mxu0
  %v2939 = vadd.f32 %v2666, %v2938
  %v2940 = vpop.f32.mrb[0].mxu0
  %v2941 = vadd.f32 %v2668, %v2940
  %v2942 = vpop.f32.mrb[0].mxu0
  %v2943 = vadd.f32 %v2670, %v2942
  %2944 = vmatprep.mubr.bf16.mxu0 %v1126
  %2945 = vmatmul.mubr.bf16.gmra.mrb[0].mxu0 %v1125
  %v2946 = vpop.f32.mrb[0].mxu0
  %v2947 = vadd.f32 %v2674, %v2946
  %v2948 = vpop.f32.mrb[0].mxu0
  %v2949 = vadd.f32 %v2676, %v2948
  %v2950 = vpop.f32.mrb[0].mxu0
  %v2951 = vadd.f32 %v2678, %v2950
  %v2952 = vpop.f32.mrb[0].mxu0
  %v2953 = vadd.f32 %v2680, %v2952
  %2954 = vmatprep.mubr.bf16.mxu0 %v1130
  %2955 = vmatmul.mubr.bf16.gmra.mrb[0].mxu0 %v1129
  %v2956 = vpop.f32.mrb[0].mxu0
  %v2957 = vadd.f32 %v2684, %v2956
  %v2958 = vpop.f32.mrb[0].mxu0
  %v2959 = vadd.f32 %v2686, %v2958
  %v2960 = vpop.f32.mrb[0].mxu0
  %v2961 = vadd.f32 %v2688, %v2960
  %v2962 = vpop.f32.mrb[0].mxu0
  %v2963 = vadd.f32 %v2690, %v2962
  %2964 = vmatprep.mubr.bf16.mxu0 %v1134
  %2965 = vmatmul.mubr.bf16.gmra.mrb[0].mxu0 %v1133
  %v2966 = vpop.f32.mrb[0].mxu0
  %v2967 = vadd.f32 %v2694, %v2966
  %v2968 = vpop.f32.mrb[0].mxu0
  %v2969 = vadd.f32 %v2696, %v2968
  %v2970 = vpop.f32.mrb[0].mxu0
  %v2971 = vadd.f32 %v2698, %v2970
  %v2972 = vpop.f32.mrb[0].mxu0
  %v2973 = vadd.f32 %v2700, %v2972
  %2974 = vmatprep.mubr.bf16.mxu0 %v1138
  %2975 = vmatmul.mubr.bf16.gmra.mrb[0].mxu0 %v1137
  %v2976 = vpop.f32.mrb[0].mxu0
  %v2977 = vadd.f32 %v2704, %v2976
  %v2978 = vpop.f32.mrb[0].mxu0
  %v2979 = vadd.f32 %v2706, %v2978
  %v2980 = vpop.f32.mrb[0].mxu0
  %v2981 = vadd.f32 %v2708, %v2980
  %v2982 = vpop.f32.mrb[0].mxu0
  %v2983 = vadd.f32 %v2710, %v2982
  %2984 = vmatprep.mubr.bf16.mxu0 %v1142
  %2985 = vmatmul.mubr.bf16.gmra.mrb[0].mxu0 %v1141
  %v2986 = vpop.f32.mrb[0].mxu0
  %v2987 = vadd.f32 %v2714, %v2986
  %v2988 = vpop.f32.mrb[0].mxu0
  %v2989 = vadd.f32 %v2716, %v2988
  %v2990 = vpop.f32.mrb[0].mxu0
  %v2991 = vadd.f32 %v2718, %v2990
  %v2992 = vpop.f32.mrb[0].mxu0
  %v2993 = vadd.f32 %v2720, %v2992
  %2994 = vmatprep.mubr.bf16.mxu0 %v1146
  %2995 = vmatmul.mubr.bf16.gmra.mrb[0].mxu0 %v1145
  %v2996 = vpop.f32.mrb[0].mxu0
  %v2997 = vadd.f32 %v2724, %v2996
  %v2998 = vpop.f32.mrb[0].mxu0
  %v2999 = vadd.f32 %v2726, %v2998
  %v3000 = vpop.f32.mrb[0].mxu0
  %v3001 = vadd.f32 %v2728, %v3000
  %v3002 = vpop.f32.mrb[0].mxu0
  %v3003 = vadd.f32 %v2730, %v3002
  %3004 = vmatprep.mubr.bf16.mxu0 %v1150
  %3005 = vmatmul.mubr.bf16.gmra.mrb[0].mxu0 %v1149
  %v3006 = vpop.f32.mrb[0].mxu0
  %v3007 = vadd.f32 %v2734, %v3006
  %v3008 = vpop.f32.mrb[0].mxu0
  %v3009 = vadd.f32 %v2736, %v3008
  %v3010 = vpop.f32.mrb[0].mxu0
  %v3011 = vadd.f32 %v2738, %v3010
  %v3012 = vpop.f32.mrb[0].mxu0
  %v3013 = vadd.f32 %v2740, %v3012
  %3014 = vmatprep.mubr.bf16.mxu0 %v1154
  %3015 = vmatmul.mubr.bf16.gmra.mrb[0].mxu0 %v1153
  %v3016 = vpop.f32.mrb[0].mxu0
  %v3017 = vadd.f32 %v2744, %v3016
  %v3018 = vpop.f32.mrb[0].mxu0
  %v3019 = vadd.f32 %v2746, %v3018
  %v3020 = vpop.f32.mrb[0].mxu0
  %v3021 = vadd.f32 %v2748, %v3020
  %v3022 = vpop.f32.mrb[0].mxu0
  %v3023 = vadd.f32 %v2750, %v3022
  %3024 = vmatprep.mubr.bf16.mxu0 %v1158
  %3025 = vmatmul.mubr.bf16.gmra.mrb[0].mxu0 %v1157
  %v3026 = vpop.f32.mrb[0].mxu0
  %v3027 = vadd.f32 %v2754, %v3026
  %v3028 = vpop.f32.mrb[0].mxu0
  %v3029 = vadd.f32 %v2756, %v3028
  %v3030 = vpop.f32.mrb[0].mxu0
  %v3031 = vadd.f32 %v2758, %v3030
  %v3032 = vpop.f32.mrb[0].mxu0
  %v3033 = vadd.f32 %v2760, %v3032
  %3034 = vmatprep.mubr.bf16.mxu0 %v1162
  %3035 = vmatmul.mubr.bf16.gmra.mrb[0].mxu0 %v1161
  %v3036 = vpop.f32.mrb[0].mxu0
  %v3037 = vadd.f32 %v2764, %v3036
  %v3038 = vpop.f32.mrb[0].mxu0
  %v3039 = vadd.f32 %v2766, %v3038
  %v3040 = vpop.f32.mrb[0].mxu0
  %v3041 = vadd.f32 %v2768, %v3040
  %v3042 = vpop.f32.mrb[0].mxu0
  %v3043 = vadd.f32 %v2770, %v3042
  %3044 = vdwg.mxu0
  %v3045 = vmax.f32 %v2261, 0.0
  %v3046 = vmax.f32 %v2263, 0.0
  %v3047 = vmax.f32 %v2807, 0.0
  %v3048 = vmax.f32 %v2809, 0.0
  %v3049 = vmax.f32 %v2265, 0.0
  %v3050 = vmax.f32 %v2267, 0.0
  %v3051 = vmax.f32 %v2811, 0.0
  %v3052 = vmax.f32 %v2813, 0.0
  %v3053 = vmax.f32 %v2271, 0.0
  %v3054 = vmax.f32 %v2273, 0.0
  %v3055 = vmax.f32 %v2817, 0.0
  %v3056 = vmax.f32 %v2819, 0.0
  %v3057 = vmax.f32 %v2275, 0.0
  %v3058 = vmax.f32 %v2277, 0.0
  %v3059 = vmax.f32 %v2821, 0.0
  %v3060 = vmax.f32 %v2823, 0.0
  %v3061 = vmax.f32 %v2281, 0.0
  %v3062 = vmax.f32 %v2283, 0.0
  %v3063 = vmax.f32 %v2827, 0.0
  %v3064 = vmax.f32 %v2829, 0.0
  %v3065 = vmax.f32 %v2285, 0.0
  %v3066 = vmax.f32 %v2287, 0.0
  %v3067 = vmax.f32 %v2831, 0.0
  %v3068 = vmax.f32 %v2833, 0.0
  %v3069 = vmax.f32 %v2291, 0.0
  %v3070 = vmax.f32 %v2293, 0.0
  %v3071 = vmax.f32 %v2837, 0.0
  %v3072 = vmax.f32 %v2839, 0.0
  %v3073 = vmax.f32 %v2295, 0.0
  %v3074 = vmax.f32 %v2297, 0.0
  %v3075 = vmax.f32 %v2841, 0.0
  %v3076 = vmax.f32 %v2843, 0.0
  %v3077 = vmax.f32 %v2301, 0.0
  %v3078 = vmax.f32 %v2303, 0.0
  %v3079 = vmax.f32 %v2847, 0.0
  %v3080 = vmax.f32 %v2849, 0.0
  %v3081 = vmax.f32 %v2305, 0.0
  %v3082 = vmax.f32 %v2307, 0.0
  %v3083 = vmax.f32 %v2851, 0.0
  %v3084 = vmax.f32 %v2853, 0.0
  %v3085 = vmax.f32 %v2311, 0.0
  %v3086 = vmax.f32 %v2313, 0.0
  %v3087 = vmax.f32 %v2857, 0.0
  %v3088 = vmax.f32 %v2859, 0.0
  %v3089 = vmax.f32 %v2315, 0.0
  %v3090 = vmax.f32 %v2317, 0.0
  %v3091 = vmax.f32 %v2861, 0.0
  %v3092 = vmax.f32 %v2863, 0.0
  %v3093 = vmax.f32 %v2321, 0.0
  %v3094 = vmax.f32 %v2323, 0.0
  %v3095 = vmax.f32 %v2867, 0.0
  %v3096 = vmax.f32 %v2869, 0.0
  %v3097 = vmax.f32 %v2325, 0.0
  %v3098 = vmax.f32 %v2327, 0.0
  %v3099 = vmax.f32 %v2871, 0.0
  %v3100 = vmax.f32 %v2873, 0.0
  %v3101 = vmax.f32 %v2331, 0.0
  %v3102 = vmax.f32 %v2333, 0.0
  %v3103 = vmax.f32 %v2877, 0.0
  %v3104 = vmax.f32 %v2879, 0.0
  %v3105 = vmax.f32 %v2335, 0.0
  %v3106 = vmax.f32 %v2337, 0.0
  %v3107 = vmax.f32 %v2881, 0.0
  %v3108 = vmax.f32 %v2883, 0.0
  %v3109 = vmax.f32 %v2341, 0.0
  %v3110 = vmax.f32 %v2343, 0.0
  %v3111 = vmax.f32 %v2887, 0.0
  %v3112 = vmax.f32 %v2889, 0.0
  %v3113 = vmax.f32 %v2345, 0.0
  %v3114 = vmax.f32 %v2347, 0.0
  %v3115 = vmax.f32 %v2891, 0.0
  %v3116 = vmax.f32 %v2893, 0.0
  %v3117 = vmax.f32 %v2351, 0.0
  %v3118 = vmax.f32 %v2353, 0.0
  %v3119 = vmax.f32 %v2897, 0.0
  %v3120 = vmax.f32 %v2899, 0.0
  %v3121 = vmax.f32 %v2355, 0.0
  %v3122 = vmax.f32 %v2357, 0.0
  %v3123 = vmax.f32 %v2901, 0.0
  %v3124 = vmax.f32 %v2903, 0.0
  %v3125 = vmax.f32 %v2361, 0.0
  %v3126 = vmax.f32 %v2363, 0.0
  %v3127 = vmax.f32 %v2907, 0.0
  %v3128 = vmax.f32 %v2909, 0.0
  %v3129 = vmax.f32 %v2365, 0.0
  %v3130 = vmax.f32 %v2367, 0.0
  %v3131 = vmax.f32 %v2911, 0.0
  %v3132 = vmax.f32 %v2913, 0.0
  %v3133 = vmax.f32 %v2371, 0.0
  %v3134 = vmax.f32 %v2373, 0.0
  %v3135 = vmax.f32 %v2917, 0.0
  %v3136 = vmax.f32 %v2919, 0.0
  %v3137 = vmax.f32 %v2375, 0.0
  %v3138 = vmax.f32 %v2377, 0.0
  %v3139 = vmax.f32 %v2921, 0.0
  %v3140 = vmax.f32 %v2923, 0.0
  %v3141 = vmax.f32 %v2381, 0.0
  %v3142 = vmax.f32 %v2383, 0.0
  %v3143 = vmax.f32 %v2927, 0.0
  %v3144 = vmax.f32 %v2929, 0.0
  %v3145 = vmax.f32 %v2385, 0.0
  %v3146 = vmax.f32 %v2387, 0.0
  %v3147 = vmax.f32 %v2931, 0.0
  %v3148 = vmax.f32 %v2933, 0.0
  %v3149 = vmax.f32 %v2391, 0.0
  %v3150 = vmax.f32 %v2393, 0.0
  %v3151 = vmax.f32 %v2937, 0.0
  %v3152 = vmax.f32 %v2939, 0.0
  %v3153 = vmax.f32 %v2395, 0.0
  %v3154 = vmax.f32 %v2397, 0.0
  %v3155 = vmax.f32 %v2941, 0.0
  %v3156 = vmax.f32 %v2943, 0.0
  %v3157 = vmax.f32 %v2401, 0.0
  %v3158 = vmax.f32 %v2403, 0.0
  %v3159 = vmax.f32 %v2947, 0.0
  %v3160 = vmax.f32 %v2949, 0.0
  %v3161 = vmax.f32 %v2405, 0.0
  %v3162 = vmax.f32 %v2407, 0.0
  %v3163 = vmax.f32 %v2951, 0.0
  %v3164 = vmax.f32 %v2953, 0.0
  %v3165 = vmax.f32 %v2411, 0.0
  %v3166 = vmax.f32 %v2413, 0.0
  %v3167 = vmax.f32 %v2957, 0.0
  %v3168 = vmax.f32 %v2959, 0.0
  %v3169 = vmax.f32 %v2415, 0.0
  %v3170 = vmax.f32 %v2417, 0.0
  %v3171 = vmax.f32 %v2961, 0.0
  %v3172 = vmax.f32 %v2963, 0.0
  %v3173 = vmax.f32 %v2421, 0.0
  %v3174 = vmax.f32 %v2423, 0.0
  %v3175 = vmax.f32 %v2967, 0.0
  %v3176 = vmax.f32 %v2969, 0.0
  %v3177 = vmax.f32 %v2425, 0.0
  %v3178 = vmax.f32 %v2427, 0.0
  %v3179 = vmax.f32 %v2971, 0.0
  %v3180 = vmax.f32 %v2973, 0.0
  %v3181 = vmax.f32 %v2431, 0.0
  %v3182 = vmax.f32 %v2433, 0.0
  %v3183 = vmax.f32 %v2977, 0.0
  %v3184 = vmax.f32 %v2979, 0.0
  %v3185 = vmax.f32 %v2435, 0.0
  %v3186 = vmax.f32 %v2437, 0.0
  %v3187 = vmax.f32 %v2981, 0.0
  %v3188 = vmax.f32 %v2983, 0.0
  %v3189 = vmax.f32 %v2441, 0.0
  %v3190 = vmax.f32 %v2443, 0.0
  %v3191 = vmax.f32 %v2987, 0.0
  %v3192 = vmax.f32 %v2989, 0.0
  %v3193 = vmax.f32 %v2445, 0.0
  %v3194 = vmax.f32 %v2447, 0.0
  %v3195 = vmax.f32 %v2991, 0.0
  %v3196 = vmax.f32 %v2993, 0.0
  %v3197 = vmax.f32 %v2451, 0.0
  %v3198 = vmax.f32 %v2453, 0.0
  %v3199 = vmax.f32 %v2997, 0.0
  %v3200 = vmax.f32 %v2999, 0.0
  %v3201 = vmax.f32 %v2455, 0.0
  %v3202 = vmax.f32 %v2457, 0.0
  %v3203 = vmax.f32 %v3001, 0.0
  %v3204 = vmax.f32 %v3003, 0.0
  %v3205 = vmax.f32 %v2461, 0.0
  %v3206 = vmax.f32 %v2463, 0.0
  %v3207 = vmax.f32 %v3007, 0.0
  %v3208 = vmax.f32 %v3009, 0.0
  %v3209 = vmax.f32 %v2465, 0.0
  %v3210 = vmax.f32 %v2467, 0.0
  %v3211 = vmax.f32 %v3011, 0.0
  %v3212 = vmax.f32 %v3013, 0.0
  %v3213 = vmax.f32 %v2471, 0.0
  %v3214 = vmax.f32 %v2473, 0.0
  %v3215 = vmax.f32 %v3017, 0.0
  %v3216 = vmax.f32 %v3019, 0.0
  %v3217 = vmax.f32 %v2475, 0.0
  %v3218 = vmax.f32 %v2477, 0.0
  %v3219 = vmax.f32 %v3021, 0.0
  %v3220 = vmax.f32 %v3023, 0.0
  %v3221 = vmax.f32 %v2481, 0.0
  %v3222 = vmax.f32 %v2483, 0.0
  %v3223 = vmax.f32 %v3027, 0.0
  %v3224 = vmax.f32 %v3029, 0.0
  %v3225 = vmax.f32 %v2485, 0.0
  %v3226 = vmax.f32 %v2487, 0.0
  %v3227 = vmax.f32 %v3031, 0.0
  %v3228 = vmax.f32 %v3033, 0.0
  %v3229 = vmax.f32 %v2491, 0.0
  %v3230 = vmax.f32 %v2493, 0.0
  %v3231 = vmax.f32 %v3037, 0.0
  %v3232 = vmax.f32 %v3039, 0.0
  %v3233 = vmax.f32 %v2495, 0.0
  %v3234 = vmax.f32 %v2497, 0.0
  %v3235 = vmax.f32 %v3041, 0.0
  %v3236 = vmax.f32 %v3043, 0.0
  %v3237 = vpack.c.bf16 %v3049, %v3045
  %v3238 = vpack.c.bf16 %v3050, %v3046
  %v3239 = vpack.c.bf16 %v3051, %v3047
  %v3240 = vpack.c.bf16 %v3052, %v3048
  %v3241 = vpack.c.bf16 %v3057, %v3053
  %v3242 = vpack.c.bf16 %v3058, %v3054
  %v3243 = vpack.c.bf16 %v3059, %v3055
  %v3244 = vpack.c.bf16 %v3060, %v3056
  %v3245 = vpack.c.bf16 %v3065, %v3061
  %v3246 = vpack.c.bf16 %v3066, %v3062
  %v3247 = vpack.c.bf16 %v3067, %v3063
  %v3248 = vpack.c.bf16 %v3068, %v3064
  %v3249 = vpack.c.bf16 %v3073, %v3069
  %v3250 = vpack.c.bf16 %v3074, %v3070
  %v3251 = vpack.c.bf16 %v3075, %v3071
  %v3252 = vpack.c.bf16 %v3076, %v3072
  %v3253 = vpack.c.bf16 %v3081, %v3077
  %v3254 = vpack.c.bf16 %v3082, %v3078
  %v3255 = vpack.c.bf16 %v3083, %v3079
  %v3256 = vpack.c.bf16 %v3084, %v3080
  %v3257 = vpack.c.bf16 %v3089, %v3085
  %v3258 = vpack.c.bf16 %v3090, %v3086
  %v3259 = vpack.c.bf16 %v3091, %v3087
  %v3260 = vpack.c.bf16 %v3092, %v3088
  %v3261 = vpack.c.bf16 %v3097, %v3093
  %v3262 = vpack.c.bf16 %v3098, %v3094
  %v3263 = vpack.c.bf16 %v3099, %v3095
  %v3264 = vpack.c.bf16 %v3100, %v3096
  %v3265 = vpack.c.bf16 %v3105, %v3101
  %v3266 = vpack.c.bf16 %v3106, %v3102
  %v3267 = vpack.c.bf16 %v3107, %v3103
  %v3268 = vpack.c.bf16 %v3108, %v3104
  %v3269 = vpack.c.bf16 %v3113, %v3109
  %v3270 = vpack.c.bf16 %v3114, %v3110
  %v3271 = vpack.c.bf16 %v3115, %v3111
  %v3272 = vpack.c.bf16 %v3116, %v3112
  %v3273 = vpack.c.bf16 %v3121, %v3117
  %v3274 = vpack.c.bf16 %v3122, %v3118
  %v3275 = vpack.c.bf16 %v3123, %v3119
  %v3276 = vpack.c.bf16 %v3124, %v3120
  %v3277 = vpack.c.bf16 %v3129, %v3125
  %v3278 = vpack.c.bf16 %v3130, %v3126
  %v3279 = vpack.c.bf16 %v3131, %v3127
  %v3280 = vpack.c.bf16 %v3132, %v3128
  %v3281 = vpack.c.bf16 %v3137, %v3133
  %v3282 = vpack.c.bf16 %v3138, %v3134
  %v3283 = vpack.c.bf16 %v3139, %v3135
  %v3284 = vpack.c.bf16 %v3140, %v3136
  %v3285 = vpack.c.bf16 %v3145, %v3141
  %v3286 = vpack.c.bf16 %v3146, %v3142
  %v3287 = vpack.c.bf16 %v3147, %v3143
  %v3288 = vpack.c.bf16 %v3148, %v3144
  %v3289 = vpack.c.bf16 %v3153, %v3149
  %v3290 = vpack.c.bf16 %v3154, %v3150
  %v3291 = vpack.c.bf16 %v3155, %v3151
  %v3292 = vpack.c.bf16 %v3156, %v3152
  %v3293 = vpack.c.bf16 %v3161, %v3157
  %v3294 = vpack.c.bf16 %v3162, %v3158
  %v3295 = vpack.c.bf16 %v3163, %v3159
  %v3296 = vpack.c.bf16 %v3164, %v3160
  %v3297 = vpack.c.bf16 %v3169, %v3165
  %v3298 = vpack.c.bf16 %v3170, %v3166
  %v3299 = vpack.c.bf16 %v3171, %v3167
  %v3300 = vpack.c.bf16 %v3172, %v3168
  %v3301 = vpack.c.bf16 %v3177, %v3173
  %v3302 = vpack.c.bf16 %v3178, %v3174
  %v3303 = vpack.c.bf16 %v3179, %v3175
  %v3304 = vpack.c.bf16 %v3180, %v3176
  %v3305 = vpack.c.bf16 %v3185, %v3181
  %v3306 = vpack.c.bf16 %v3186, %v3182
  %v3307 = vpack.c.bf16 %v3187, %v3183
  %v3308 = vpack.c.bf16 %v3188, %v3184
  %v3309 = vpack.c.bf16 %v3193, %v3189
  %v3310 = vpack.c.bf16 %v3194, %v3190
  %v3311 = vpack.c.bf16 %v3195, %v3191
  %v3312 = vpack.c.bf16 %v3196, %v3192
  %v3313 = vpack.c.bf16 %v3201, %v3197
  %v3314 = vpack.c.bf16 %v3202, %v3198
  %v3315 = vpack.c.bf16 %v3203, %v3199
  %v3316 = vpack.c.bf16 %v3204, %v3200
  %v3317 = vpack.c.bf16 %v3209, %v3205
  %v3318 = vpack.c.bf16 %v3210, %v3206
  %v3319 = vpack.c.bf16 %v3211, %v3207
  %v3320 = vpack.c.bf16 %v3212, %v3208
  %v3321 = vpack.c.bf16 %v3217, %v3213
  %v3322 = vpack.c.bf16 %v3218, %v3214
  %v3323 = vpack.c.bf16 %v3219, %v3215
  %v3324 = vpack.c.bf16 %v3220, %v3216
  %v3325 = vpack.c.bf16 %v3225, %v3221
  %v3326 = vpack.c.bf16 %v3226, %v3222
  %v3327 = vpack.c.bf16 %v3227, %v3223
  %v3328 = vpack.c.bf16 %v3228, %v3224
  %v3329 = vpack.c.bf16 %v3233, %v3229
  %v3330 = vpack.c.bf16 %v3234, %v3230
  %v3331 = vpack.c.bf16 %v3235, %v3231
  %v3332 = vpack.c.bf16 %v3236, %v3232
  %v3333 = vld [vmem:[%s5] sm:$0xff]
  %v3334 = vld [vmem:[%s5 + $0x8] sm:$0xff]
  %v3335 = vld [vmem:[%s5 + $0x10] sm:$0xff]
  %v3336 = vld [vmem:[%s5 + $0x18] sm:$0xff]
  %v3337 = vld [vmem:[%s5 + $0x20] sm:$0xff]
  %v3338 = vld [vmem:[%s5 + $0x28] sm:$0xff]
  %v3339 = vld [vmem:[%s5 + $0x30] sm:$0xff]
  %v3340 = vld [vmem:[%s5 + $0x38] sm:$0xff]
  %v3341 = vld [vmem:[%s5 + $0x40] sm:$0xff]
  %v3342 = vld [vmem:[%s5 + $0x48] sm:$0xff]
  %v3343 = vld [vmem:[%s5 + $0x50] sm:$0xff]
  %v3344 = vld [vmem:[%s5 + $0x58] sm:$0xff]
  %v3345 = vld [vmem:[%s5 + $0x60] sm:$0xff]
  %v3346 = vld [vmem:[%s5 + $0x68] sm:$0xff]
  %v3347 = vld [vmem:[%s5 + $0x70] sm:$0xff]
  %v3348 = vld [vmem:[%s5 + $0x78] sm:$0xff]
  %v3349 = vld [vmem:[%s5 + $0x80] sm:$0xff]
  %v3350 = vld [vmem:[%s5 + $0x88] sm:$0xff]
  %v3351 = vld [vmem:[%s5 + $0x90] sm:$0xff]
  %v3352 = vld [vmem:[%s5 + $0x98] sm:$0xff]
  %v3353 = vld [vmem:[%s5 + $0xa0] sm:$0xff]
  %v3354 = vld [vmem:[%s5 + $0xa8] sm:$0xff]
  %v3355 = vld [vmem:[%s5 + $0xb0] sm:$0xff]
  %v3356 = vld [vmem:[%s5 + $0xb8] sm:$0xff]
  %v3357 = vld [vmem:[%s5 + $0xc0] sm:$0xff]
  %v3358 = vld [vmem:[%s5 + $0xc8] sm:$0xff]
  %v3359 = vld [vmem:[%s5 + $0xd0] sm:$0xff]
  %v3360 = vld [vmem:[%s5 + $0xd8] sm:$0xff]
  %v3361 = vld [vmem:[%s5 + $0xe0] sm:$0xff]
  %v3362 = vld [vmem:[%s5 + $0xe8] sm:$0xff]
  %v3363 = vld [vmem:[%s5 + $0xf0] sm:$0xff]
  %v3364 = vld [vmem:[%s5 + $0xf8] sm:$0xff]
  %v3365 = vld [vmem:[%s5 + $0x100] sm:$0xff]
  %v3366 = vld [vmem:[%s5 + $0x108] sm:$0xff]
  %v3367 = vld [vmem:[%s5 + $0x110] sm:$0xff]
  %v3368 = vld [vmem:[%s5 + $0x118] sm:$0xff]
  %v3369 = vld [vmem:[%s5 + $0x120] sm:$0xff]
  %v3370 = vld [vmem:[%s5 + $0x128] sm:$0xff]
  %v3371 = vld [vmem:[%s5 + $0x130] sm:$0xff]
  %v3372 = vld [vmem:[%s5 + $0x138] sm:$0xff]
  %v3373 = vld [vmem:[%s5 + $0x140] sm:$0xff]
  %v3374 = vld [vmem:[%s5 + $0x148] sm:$0xff]
  %v3375 = vld [vmem:[%s5 + $0x150] sm:$0xff]
  %v3376 = vld [vmem:[%s5 + $0x158] sm:$0xff]
  %v3377 = vld [vmem:[%s5 + $0x160] sm:$0xff]
  %v3378 = vld [vmem:[%s5 + $0x168] sm:$0xff]
  %v3379 = vld [vmem:[%s5 + $0x170] sm:$0xff]
  %v3380 = vld [vmem:[%s5 + $0x178] sm:$0xff]
  %v3381 = vld [vmem:[%s5 + $0x180] sm:$0xff]
  %v3382 = vld [vmem:[%s5 + $0x188] sm:$0xff]
  %v3383 = vld [vmem:[%s5 + $0x190] sm:$0xff]
  %v3384 = vld [vmem:[%s5 + $0x198] sm:$0xff]
  %v3385 = vld [vmem:[%s5 + $0x1a0] sm:$0xff]
  %v3386 = vld [vmem:[%s5 + $0x1a8] sm:$0xff]
  %v3387 = vld [vmem:[%s5 + $0x1b0] sm:$0xff]
  %v3388 = vld [vmem:[%s5 + $0x1b8] sm:$0xff]
  %v3389 = vld [vmem:[%s5 + $0x1c0] sm:$0xff]
  %v3390 = vld [vmem:[%s5 + $0x1c8] sm:$0xff]
  %v3391 = vld [vmem:[%s5 + $0x1d0] sm:$0xff]
  %v3392 = vld [vmem:[%s5 + $0x1d8] sm:$0xff]
  %v3393 = vld [vmem:[%s5 + $0x1e0] sm:$0xff]
  %v3394 = vld [vmem:[%s5 + $0x1e8] sm:$0xff]
  %v3395 = vld [vmem:[%s5 + $0x1f0] sm:$0xff]
  %v3396 = vld [vmem:[%s5 + $0x1f8] sm:$0xff]
  %v3397 = vld [vmem:[%s5 + $0x200] sm:$0xff]
  %v3398 = vld [vmem:[%s5 + $0x208] sm:$0xff]
  %v3399 = vld [vmem:[%s5 + $0x210] sm:$0xff]
  %v3400 = vld [vmem:[%s5 + $0x218] sm:$0xff]
  %v3401 = vld [vmem:[%s5 + $0x220] sm:$0xff]
  %v3402 = vld [vmem:[%s5 + $0x228] sm:$0xff]
  %v3403 = vld [vmem:[%s5 + $0x230] sm:$0xff]
  %v3404 = vld [vmem:[%s5 + $0x238] sm:$0xff]
  %v3405 = vld [vmem:[%s5 + $0x240] sm:$0xff]
  %v3406 = vld [vmem:[%s5 + $0x248] sm:$0xff]
  %v3407 = vld [vmem:[%s5 + $0x250] sm:$0xff]
  %v3408 = vld [vmem:[%s5 + $0x258] sm:$0xff]
  %v3409 = vld [vmem:[%s5 + $0x260] sm:$0xff]
  %v3410 = vld [vmem:[%s5 + $0x268] sm:$0xff]
  %v3411 = vld [vmem:[%s5 + $0x270] sm:$0xff]
  %v3412 = vld [vmem:[%s5 + $0x278] sm:$0xff]
  %v3413 = vld [vmem:[%s5 + $0x280] sm:$0xff]
  %v3414 = vld [vmem:[%s5 + $0x288] sm:$0xff]
  %v3415 = vld [vmem:[%s5 + $0x290] sm:$0xff]
  %v3416 = vld [vmem:[%s5 + $0x298] sm:$0xff]
  %v3417 = vld [vmem:[%s5 + $0x2a0] sm:$0xff]
  %v3418 = vld [vmem:[%s5 + $0x2a8] sm:$0xff]
  %v3419 = vld [vmem:[%s5 + $0x2b0] sm:$0xff]
  %v3420 = vld [vmem:[%s5 + $0x2b8] sm:$0xff]
  %v3421 = vld [vmem:[%s5 + $0x2c0] sm:$0xff]
  %v3422 = vld [vmem:[%s5 + $0x2c8] sm:$0xff]
  %v3423 = vld [vmem:[%s5 + $0x2d0] sm:$0xff]
  %v3424 = vld [vmem:[%s5 + $0x2d8] sm:$0xff]
  %v3425 = vld [vmem:[%s5 + $0x2e0] sm:$0xff]
  %v3426 = vld [vmem:[%s5 + $0x2e8] sm:$0xff]
  %v3427 = vld [vmem:[%s5 + $0x2f0] sm:$0xff]
  %v3428 = vld [vmem:[%s5 + $0x2f8] sm:$0xff]
  %v3429 = vld [vmem:[%s5 + $0x300] sm:$0xff]
  %v3430 = vld [vmem:[%s5 + $0x308] sm:$0xff]
  %v3431 = vld [vmem:[%s5 + $0x310] sm:$0xff]
  %v3432 = vld [vmem:[%s5 + $0x318] sm:$0xff]
  %v3433 = vld [vmem:[%s5 + $0x320] sm:$0xff]
  %v3434 = vld [vmem:[%s5 + $0x328] sm:$0xff]
  %v3435 = vld [vmem:[%s5 + $0x330] sm:$0xff]
  %v3436 = vld [vmem:[%s5 + $0x338] sm:$0xff]
  %v3437 = vld [vmem:[%s5 + $0x340] sm:$0xff]
  %v3438 = vld [vmem:[%s5 + $0x348] sm:$0xff]
  %v3439 = vld [vmem:[%s5 + $0x350] sm:$0xff]
  %v3440 = vld [vmem:[%s5 + $0x358] sm:$0xff]
  %v3441 = vld [vmem:[%s5 + $0x360] sm:$0xff]
  %v3442 = vld [vmem:[%s5 + $0x368] sm:$0xff]
  %v3443 = vld [vmem:[%s5 + $0x370] sm:$0xff]
  %v3444 = vld [vmem:[%s5 + $0x378] sm:$0xff]
  %v3445 = vld [vmem:[%s5 + $0x380] sm:$0xff]
  %v3446 = vld [vmem:[%s5 + $0x388] sm:$0xff]
  %v3447 = vld [vmem:[%s5 + $0x390] sm:$0xff]
  %v3448 = vld [vmem:[%s5 + $0x398] sm:$0xff]
  %v3449 = vld [vmem:[%s5 + $0x3a0] sm:$0xff]
  %v3450 = vld [vmem:[%s5 + $0x3a8] sm:$0xff]
  %v3451 = vld [vmem:[%s5 + $0x3b0] sm:$0xff]
  %v3452 = vld [vmem:[%s5 + $0x3b8] sm:$0xff]
  %v3453 = vld [vmem:[%s5 + $0x3c0] sm:$0xff]
  %v3454 = vld [vmem:[%s5 + $0x3c8] sm:$0xff]
  %v3455 = vld [vmem:[%s5 + $0x3d0] sm:$0xff]
  %v3456 = vld [vmem:[%s5 + $0x3d8] sm:$0xff]
  %v3457 = vld [vmem:[%s5 + $0x3e0] sm:$0xff]
  %v3458 = vld [vmem:[%s5 + $0x3e8] sm:$0xff]
  %v3459 = vld [vmem:[%s5 + $0x3f0] sm:$0xff]
  %v3460 = vld [vmem:[%s5 + $0x3f8] sm:$0xff]
  %v3461 = vld [vmem:[%s6] sm:$0xf]
  %v3463 = vlaneseq
  %v3464 = vshrl.u32 %v3463, 7
  %v3465 = vsub.s32 0, %v3464
  %v3466 = vrot.slane %v3461, %v3465
  %v3467 = vlaneseq
  %v3468 = vshrl.u32 %v3467, 7
  %v3469 = vsub.s32 1, %v3468
  %v3470 = vrot.slane %v3461, %v3469
  %v3471 = vlaneseq
  %v3472 = vshrl.u32 %v3471, 7
  %v3473 = vsub.s32 2, %v3472
  %v3474 = vrot.slane %v3461, %v3473
  %v3475 = vlaneseq
  %v3476 = vshrl.u32 %v3475, 7
  %v3477 = vsub.s32 3, %v3476
  %v3478 = vrot.slane %v3461, %v3477
  %v3611 = vunpack.c.l.b16 %v3333
  %v3612 = vunpack.c.h.b16 %v3333
  %v3613 = vunpack.c.l.b16 %v3334
  %v3614 = vunpack.c.h.b16 %v3334
  %v3615 = vunpack.c.l.b16 %v3335
  %v3616 = vunpack.c.h.b16 %v3335
  %v3617 = vunpack.c.l.b16 %v3336
  %v3618 = vunpack.c.h.b16 %v3336
  %v3619 = vunpack.c.l.b16 %v3337
  %v3620 = vunpack.c.h.b16 %v3337
  %v3621 = vunpack.c.l.b16 %v3338
  %v3622 = vunpack.c.h.b16 %v3338
  %v3623 = vunpack.c.l.b16 %v3339
  %v3624 = vunpack.c.h.b16 %v3339
  %v3625 = vunpack.c.l.b16 %v3340
  %v3626 = vunpack.c.h.b16 %v3340
  %v3627 = vunpack.c.l.b16 %v3341
  %v3628 = vunpack.c.h.b16 %v3341
  %v3629 = vunpack.c.l.b16 %v3342
  %v3630 = vunpack.c.h.b16 %v3342
  %v3631 = vunpack.c.l.b16 %v3343
  %v3632 = vunpack.c.h.b16 %v3343
  %v3633 = vunpack.c.l.b16 %v3344
  %v3634 = vunpack.c.h.b16 %v3344
  %v3635 = vunpack.c.l.b16 %v3345
  %v3636 = vunpack.c.h.b16 %v3345
  %v3637 = vunpack.c.l.b16 %v3346
  %v3638 = vunpack.c.h.b16 %v3346
  %v3639 = vunpack.c.l.b16 %v3347
  %v3640 = vunpack.c.h.b16 %v3347
  %v3641 = vunpack.c.l.b16 %v3348
  %v3642 = vunpack.c.h.b16 %v3348
  %v3643 = vunpack.c.l.b16 %v3349
  %v3644 = vunpack.c.h.b16 %v3349
  %v3645 = vunpack.c.l.b16 %v3350
  %v3646 = vunpack.c.h.b16 %v3350
  %v3647 = vunpack.c.l.b16 %v3351
  %v3648 = vunpack.c.h.b16 %v3351
  %v3649 = vunpack.c.l.b16 %v3352
  %v3650 = vunpack.c.h.b16 %v3352
  %v3651 = vunpack.c.l.b16 %v3353
  %v3652 = vunpack.c.h.b16 %v3353
  %v3653 = vunpack.c.l.b16 %v3354
  %v3654 = vunpack.c.h.b16 %v3354
  %v3655 = vunpack.c.l.b16 %v3355
  %v3656 = vunpack.c.h.b16 %v3355
  %v3657 = vunpack.c.l.b16 %v3356
  %v3658 = vunpack.c.h.b16 %v3356
  %v3659 = vunpack.c.l.b16 %v3357
  %v3660 = vunpack.c.h.b16 %v3357
  %v3661 = vunpack.c.l.b16 %v3358
  %v3662 = vunpack.c.h.b16 %v3358
  %v3663 = vunpack.c.l.b16 %v3359
  %v3664 = vunpack.c.h.b16 %v3359
  %v3665 = vunpack.c.l.b16 %v3360
  %v3666 = vunpack.c.h.b16 %v3360
  %v3667 = vunpack.c.l.b16 %v3361
  %v3668 = vunpack.c.h.b16 %v3361
  %v3669 = vunpack.c.l.b16 %v3362
  %v3670 = vunpack.c.h.b16 %v3362
  %v3671 = vunpack.c.l.b16 %v3363
  %v3672 = vunpack.c.h.b16 %v3363
  %v3673 = vunpack.c.l.b16 %v3364
  %v3674 = vunpack.c.h.b16 %v3364
  %v3675 = vunpack.c.l.b16 %v3365
  %v3676 = vunpack.c.h.b16 %v3365
  %v3677 = vunpack.c.l.b16 %v3366
  %v3678 = vunpack.c.h.b16 %v3366
  %v3679 = vunpack.c.l.b16 %v3367
  %v3680 = vunpack.c.h.b16 %v3367
  %v3681 = vunpack.c.l.b16 %v3368
  %v3682 = vunpack.c.h.b16 %v3368
  %v3683 = vunpack.c.l.b16 %v3369
  %v3684 = vunpack.c.h.b16 %v3369
  %v3685 = vunpack.c.l.b16 %v3370
  %v3686 = vunpack.c.h.b16 %v3370
  %v3687 = vunpack.c.l.b16 %v3371
  %v3688 = vunpack.c.h.b16 %v3371
  %v3689 = vunpack.c.l.b16 %v3372
  %v3690 = vunpack.c.h.b16 %v3372
  %v3691 = vunpack.c.l.b16 %v3373
  %v3692 = vunpack.c.h.b16 %v3373
  %v3693 = vunpack.c.l.b16 %v3374
  %v3694 = vunpack.c.h.b16 %v3374
  %v3695 = vunpack.c.l.b16 %v3375
  %v3696 = vunpack.c.h.b16 %v3375
  %v3697 = vunpack.c.l.b16 %v3376
  %v3698 = vunpack.c.h.b16 %v3376
  %v3699 = vunpack.c.l.b16 %v3377
  %v3700 = vunpack.c.h.b16 %v3377
  %v3701 = vunpack.c.l.b16 %v3378
  %v3702 = vunpack.c.h.b16 %v3378
  %v3703 = vunpack.c.l.b16 %v3379
  %v3704 = vunpack.c.h.b16 %v3379
  %v3705 = vunpack.c.l.b16 %v3380
  %v3706 = vunpack.c.h.b16 %v3380
  %v3707 = vunpack.c.l.b16 %v3381
  %v3708 = vunpack.c.h.b16 %v3381
  %v3709 = vunpack.c.l.b16 %v3382
  %v3710 = vunpack.c.h.b16 %v3382
  %v3711 = vunpack.c.l.b16 %v3383
  %v3712 = vunpack.c.h.b16 %v3383
  %v3713 = vunpack.c.l.b16 %v3384
  %v3714 = vunpack.c.h.b16 %v3384
  %v3715 = vunpack.c.l.b16 %v3385
  %v3716 = vunpack.c.h.b16 %v3385
  %v3717 = vunpack.c.l.b16 %v3386
  %v3718 = vunpack.c.h.b16 %v3386
  %v3719 = vunpack.c.l.b16 %v3387
  %v3720 = vunpack.c.h.b16 %v3387
  %v3721 = vunpack.c.l.b16 %v3388
  %v3722 = vunpack.c.h.b16 %v3388
  %v3723 = vunpack.c.l.b16 %v3389
  %v3724 = vunpack.c.h.b16 %v3389
  %v3725 = vunpack.c.l.b16 %v3390
  %v3726 = vunpack.c.h.b16 %v3390
  %v3727 = vunpack.c.l.b16 %v3391
  %v3728 = vunpack.c.h.b16 %v3391
  %v3729 = vunpack.c.l.b16 %v3392
  %v3730 = vunpack.c.h.b16 %v3392
  %v3731 = vunpack.c.l.b16 %v3393
  %v3732 = vunpack.c.h.b16 %v3393
  %v3733 = vunpack.c.l.b16 %v3394
  %v3734 = vunpack.c.h.b16 %v3394
  %v3735 = vunpack.c.l.b16 %v3395
  %v3736 = vunpack.c.h.b16 %v3395
  %v3737 = vunpack.c.l.b16 %v3396
  %v3738 = vunpack.c.h.b16 %v3396
  %v3739 = vunpack.c.l.b16 %v3397
  %v3740 = vunpack.c.h.b16 %v3397
  %v3741 = vunpack.c.l.b16 %v3398
  %v3742 = vunpack.c.h.b16 %v3398
  %v3743 = vunpack.c.l.b16 %v3399
  %v3744 = vunpack.c.h.b16 %v3399
  %v3745 = vunpack.c.l.b16 %v3400
  %v3746 = vunpack.c.h.b16 %v3400
  %v3747 = vunpack.c.l.b16 %v3401
  %v3748 = vunpack.c.h.b16 %v3401
  %v3749 = vunpack.c.l.b16 %v3402
  %v3750 = vunpack.c.h.b16 %v3402
  %v3751 = vunpack.c.l.b16 %v3403
  %v3752 = vunpack.c.h.b16 %v3403
  %v3753 = vunpack.c.l.b16 %v3404
  %v3754 = vunpack.c.h.b16 %v3404
  %v3755 = vunpack.c.l.b16 %v3405
  %v3756 = vunpack.c.h.b16 %v3405
  %v3757 = vunpack.c.l.b16 %v3406
  %v3758 = vunpack.c.h.b16 %v3406
  %v3759 = vunpack.c.l.b16 %v3407
  %v3760 = vunpack.c.h.b16 %v3407
  %v3761 = vunpack.c.l.b16 %v3408
  %v3762 = vunpack.c.h.b16 %v3408
  %v3763 = vunpack.c.l.b16 %v3409
  %v3764 = vunpack.c.h.b16 %v3409
  %v3765 = vunpack.c.l.b16 %v3410
  %v3766 = vunpack.c.h.b16 %v3410
  %v3767 = vunpack.c.l.b16 %v3411
  %v3768 = vunpack.c.h.b16 %v3411
  %v3769 = vunpack.c.l.b16 %v3412
  %v3770 = vunpack.c.h.b16 %v3412
  %v3771 = vunpack.c.l.b16 %v3413
  %v3772 = vunpack.c.h.b16 %v3413
  %v3773 = vunpack.c.l.b16 %v3414
  %v3774 = vunpack.c.h.b16 %v3414
  %v3775 = vunpack.c.l.b16 %v3415
  %v3776 = vunpack.c.h.b16 %v3415
  %v3777 = vunpack.c.l.b16 %v3416
  %v3778 = vunpack.c.h.b16 %v3416
  %v3779 = vunpack.c.l.b16 %v3417
  %v3780 = vunpack.c.h.b16 %v3417
  %v3781 = vunpack.c.l.b16 %v3418
  %v3782 = vunpack.c.h.b16 %v3418
  %v3783 = vunpack.c.l.b16 %v3419
  %v3784 = vunpack.c.h.b16 %v3419
  %v3785 = vunpack.c.l.b16 %v3420
  %v3786 = vunpack.c.h.b16 %v3420
  %v3787 = vunpack.c.l.b16 %v3421
  %v3788 = vunpack.c.h.b16 %v3421
  %v3789 = vunpack.c.l.b16 %v3422
  %v3790 = vunpack.c.h.b16 %v3422
  %v3791 = vunpack.c.l.b16 %v3423
  %v3792 = vunpack.c.h.b16 %v3423
  %v3793 = vunpack.c.l.b16 %v3424
  %v3794 = vunpack.c.h.b16 %v3424
  %v3795 = vunpack.c.l.b16 %v3425
  %v3796 = vunpack.c.h.b16 %v3425
  %v3797 = vunpack.c.l.b16 %v3426
  %v3798 = vunpack.c.h.b16 %v3426
  %v3799 = vunpack.c.l.b16 %v3427
  %v3800 = vunpack.c.h.b16 %v3427
  %v3801 = vunpack.c.l.b16 %v3428
  %v3802 = vunpack.c.h.b16 %v3428
  %v3803 = vunpack.c.l.b16 %v3429
  %v3804 = vunpack.c.h.b16 %v3429
  %v3805 = vunpack.c.l.b16 %v3430
  %v3806 = vunpack.c.h.b16 %v3430
  %v3807 = vunpack.c.l.b16 %v3431
  %v3808 = vunpack.c.h.b16 %v3431
  %v3809 = vunpack.c.l.b16 %v3432
  %v3810 = vunpack.c.h.b16 %v3432
  %v3811 = vunpack.c.l.b16 %v3433
  %v3812 = vunpack.c.h.b16 %v3433
  %v3813 = vunpack.c.l.b16 %v3434
  %v3814 = vunpack.c.h.b16 %v3434
  %v3815 = vunpack.c.l.b16 %v3435
  %v3816 = vunpack.c.h.b16 %v3435
  %v3817 = vunpack.c.l.b16 %v3436
  %v3818 = vunpack.c.h.b16 %v3436
  %v3819 = vunpack.c.l.b16 %v3437
  %v3820 = vunpack.c.h.b16 %v3437
  %v3821 = vunpack.c.l.b16 %v3438
  %v3822 = vunpack.c.h.b16 %v3438
  %v3823 = vunpack.c.l.b16 %v3439
  %v3824 = vunpack.c.h.b16 %v3439
  %v3825 = vunpack.c.l.b16 %v3440
  %v3826 = vunpack.c.h.b16 %v3440
  %v3827 = vunpack.c.l.b16 %v3441
  %v3828 = vunpack.c.h.b16 %v3441
  %v3829 = vunpack.c.l.b16 %v3442
  %v3830 = vunpack.c.h.b16 %v3442
  %v3831 = vunpack.c.l.b16 %v3443
  %v3832 = vunpack.c.h.b16 %v3443
  %v3833 = vunpack.c.l.b16 %v3444
  %v3834 = vunpack.c.h.b16 %v3444
  %v3835 = vunpack.c.l.b16 %v3445
  %v3836 = vunpack.c.h.b16 %v3445
  %v3837 = vunpack.c.l.b16 %v3446
  %v3838 = vunpack.c.h.b16 %v3446
  %v3839 = vunpack.c.l.b16 %v3447
  %v3840 = vunpack.c.h.b16 %v3447
  %v3841 = vunpack.c.l.b16 %v3448
  %v3842 = vunpack.c.h.b16 %v3448
  %v3843 = vunpack.c.l.b16 %v3449
  %v3844 = vunpack.c.h.b16 %v3449
  %v3845 = vunpack.c.l.b16 %v3450
  %v3846 = vunpack.c.h.b16 %v3450
  %v3847 = vunpack.c.l.b16 %v3451
  %v3848 = vunpack.c.h.b16 %v3451
  %v3849 = vunpack.c.l.b16 %v3452
  %v3850 = vunpack.c.h.b16 %v3452
  %v3851 = vunpack.c.l.b16 %v3453
  %v3852 = vunpack.c.h.b16 %v3453
  %v3853 = vunpack.c.l.b16 %v3454
  %v3854 = vunpack.c.h.b16 %v3454
  %v3855 = vunpack.c.l.b16 %v3455
  %v3856 = vunpack.c.h.b16 %v3455
  %v3857 = vunpack.c.l.b16 %v3456
  %v3858 = vunpack.c.h.b16 %v3456
  %v3859 = vunpack.c.l.b16 %v3457
  %v3860 = vunpack.c.h.b16 %v3457
  %v3861 = vunpack.c.l.b16 %v3458
  %v3862 = vunpack.c.h.b16 %v3458
  %v3863 = vunpack.c.l.b16 %v3459
  %v3864 = vunpack.c.h.b16 %v3459
  %v3865 = vunpack.c.l.b16 %v3460
  %v3866 = vunpack.c.h.b16 %v3460
  %v3867 = vpack.c.b16 %v3615, %v3611
  %v3868 = vpack.c.b16 %v3616, %v3612
  %v3869 = vpack.c.b16 %v3617, %v3613
  %v3870 = vpack.c.b16 %v3618, %v3614
  %v3871 = vpack.c.b16 %v3623, %v3619
  %v3872 = vpack.c.b16 %v3624, %v3620
  %v3873 = vpack.c.b16 %v3625, %v3621
  %v3874 = vpack.c.b16 %v3626, %v3622
  %v3875 = vpack.c.b16 %v3631, %v3627
  %v3876 = vpack.c.b16 %v3632, %v3628
  %v3877 = vpack.c.b16 %v3633, %v3629
  %v3878 = vpack.c.b16 %v3634, %v3630
  %v3879 = vpack.c.b16 %v3639, %v3635
  %v3880 = vpack.c.b16 %v3640, %v3636
  %v3881 = vpack.c.b16 %v3641, %v3637
  %v3882 = vpack.c.b16 %v3642, %v3638
  %v3883 = vpack.c.b16 %v3647, %v3643
  %v3884 = vpack.c.b16 %v3648, %v3644
  %v3885 = vpack.c.b16 %v3649, %v3645
  %v3886 = vpack.c.b16 %v3650, %v3646
  %v3887 = vpack.c.b16 %v3655, %v3651
  %v3888 = vpack.c.b16 %v3656, %v3652
  %v3889 = vpack.c.b16 %v3657, %v3653
  %v3890 = vpack.c.b16 %v3658, %v3654
  %v3891 = vpack.c.b16 %v3663, %v3659
  %v3892 = vpack.c.b16 %v3664, %v3660
  %v3893 = vpack.c.b16 %v3665, %v3661
  %v3894 = vpack.c.b16 %v3666, %v3662
  %v3895 = vpack.c.b16 %v3671, %v3667
  %v3896 = vpack.c.b16 %v3672, %v3668
  %v3897 = vpack.c.b16 %v3673, %v3669
  %v3898 = vpack.c.b16 %v3674, %v3670
  %v3899 = vpack.c.b16 %v3679, %v3675
  %v3900 = vpack.c.b16 %v3680, %v3676
  %v3901 = vpack.c.b16 %v3681, %v3677
  %v3902 = vpack.c.b16 %v3682, %v3678
  %v3903 = vpack.c.b16 %v3687, %v3683
  %v3904 = vpack.c.b16 %v3688, %v3684
  %v3905 = vpack.c.b16 %v3689, %v3685
  %v3906 = vpack.c.b16 %v3690, %v3686
  %v3907 = vpack.c.b16 %v3695, %v3691
  %v3908 = vpack.c.b16 %v3696, %v3692
  %v3909 = vpack.c.b16 %v3697, %v3693
  %v3910 = vpack.c.b16 %v3698, %v3694
  %v3911 = vpack.c.b16 %v3703, %v3699
  %v3912 = vpack.c.b16 %v3704, %v3700
  %v3913 = vpack.c.b16 %v3705, %v3701
  %v3914 = vpack.c.b16 %v3706, %v3702
  %v3915 = vpack.c.b16 %v3711, %v3707
  %v3916 = vpack.c.b16 %v3712, %v3708
  %v3917 = vpack.c.b16 %v3713, %v3709
  %v3918 = vpack.c.b16 %v3714, %v3710
  %v3919 = vpack.c.b16 %v3719, %v3715
  %v3920 = vpack.c.b16 %v3720, %v3716
  %v3921 = vpack.c.b16 %v3721, %v3717
  %v3922 = vpack.c.b16 %v3722, %v3718
  %v3923 = vpack.c.b16 %v3727, %v3723
  %v3924 = vpack.c.b16 %v3728, %v3724
  %v3925 = vpack.c.b16 %v3729, %v3725
  %v3926 = vpack.c.b16 %v3730, %v3726
  %v3927 = vpack.c.b16 %v3735, %v3731
  %v3928 = vpack.c.b16 %v3736, %v3732
  %v3929 = vpack.c.b16 %v3737, %v3733
  %v3930 = vpack.c.b16 %v3738, %v3734
  %v3931 = vpack.c.b16 %v3743, %v3739
  %v3932 = vpack.c.b16 %v3744, %v3740
  %v3933 = vpack.c.b16 %v3745, %v3741
  %v3934 = vpack.c.b16 %v3746, %v3742
  %v3935 = vpack.c.b16 %v3751, %v3747
  %v3936 = vpack.c.b16 %v3752, %v3748
  %v3937 = vpack.c.b16 %v3753, %v3749
  %v3938 = vpack.c.b16 %v3754, %v3750
  %v3939 = vpack.c.b16 %v3759, %v3755
  %v3940 = vpack.c.b16 %v3760, %v3756
  %v3941 = vpack.c.b16 %v3761, %v3757
  %v3942 = vpack.c.b16 %v3762, %v3758
  %v3943 = vpack.c.b16 %v3767, %v3763
  %v3944 = vpack.c.b16 %v3768, %v3764
  %v3945 = vpack.c.b16 %v3769, %v3765
  %v3946 = vpack.c.b16 %v3770, %v3766
  %v3947 = vpack.c.b16 %v3775, %v3771
  %v3948 = vpack.c.b16 %v3776, %v3772
  %v3949 = vpack.c.b16 %v3777, %v3773
  %v3950 = vpack.c.b16 %v3778, %v3774
  %v3951 = vpack.c.b16 %v3783, %v3779
  %v3952 = vpack.c.b16 %v3784, %v3780
  %v3953 = vpack.c.b16 %v3785, %v3781
  %v3954 = vpack.c.b16 %v3786, %v3782
  %v3955 = vpack.c.b16 %v3791, %v3787
  %v3956 = vpack.c.b16 %v3792, %v3788
  %v3957 = vpack.c.b16 %v3793, %v3789
  %v3958 = vpack.c.b16 %v3794, %v3790
  %v3959 = vpack.c.b16 %v3799, %v3795
  %v3960 = vpack.c.b16 %v3800, %v3796
  %v3961 = vpack.c.b16 %v3801, %v3797
  %v3962 = vpack.c.b16 %v3802, %v3798
  %v3963 = vpack.c.b16 %v3807, %v3803
  %v3964 = vpack.c.b16 %v3808, %v3804
  %v3965 = vpack.c.b16 %v3809, %v3805
  %v3966 = vpack.c.b16 %v3810, %v3806
  %v3967 = vpack.c.b16 %v3815, %v3811
  %v3968 = vpack.c.b16 %v3816, %v3812
  %v3969 = vpack.c.b16 %v3817, %v3813
  %v3970 = vpack.c.b16 %v3818, %v3814
  %v3971 = vpack.c.b16 %v3823, %v3819
  %v3972 = vpack.c.b16 %v3824, %v3820
  %v3973 = vpack.c.b16 %v3825, %v3821
  %v3974 = vpack.c.b16 %v3826, %v3822
  %v3975 = vpack.c.b16 %v3831, %v3827
  %v3976 = vpack.c.b16 %v3832, %v3828
  %v3977 = vpack.c.b16 %v3833, %v3829
  %v3978 = vpack.c.b16 %v3834, %v3830
  %v3979 = vpack.c.b16 %v3839, %v3835
  %v3980 = vpack.c.b16 %v3840, %v3836
  %v3981 = vpack.c.b16 %v3841, %v3837
  %v3982 = vpack.c.b16 %v3842, %v3838
  %v3983 = vpack.c.b16 %v3847, %v3843
  %v3984 = vpack.c.b16 %v3848, %v3844
  %v3985 = vpack.c.b16 %v3849, %v3845
  %v3986 = vpack.c.b16 %v3850, %v3846
  %v3987 = vpack.c.b16 %v3855, %v3851
  %v3988 = vpack.c.b16 %v3856, %v3852
  %v3989 = vpack.c.b16 %v3857, %v3853
  %v3990 = vpack.c.b16 %v3858, %v3854
  %v3991 = vpack.c.b16 %v3863, %v3859
  %v3992 = vpack.c.b16 %v3864, %v3860
  %v3993 = vpack.c.b16 %v3865, %v3861
  %v3994 = vpack.c.b16 %v3866, %v3862
  %4123 = vmatprep.subr.bf16.mxu0 %v3868
  %4124 = vmatpush1.bf16.msra.mxu0 %v3867
  %4125 = vmatprep.subr.bf16.mxu0 %v3872
  %4126 = vmatpush1.bf16.msra.mxu0 %v3871
  %4127 = vmatprep.subr.bf16.mxu0 %v3876
  %4128 = vmatpush1.bf16.msra.mxu0 %v3875
  %4129 = vmatprep.subr.bf16.mxu0 %v3880
  %4130 = vmatpush1.bf16.msra.mxu0 %v3879
  %4131 = vmatprep.subr.bf16.mxu0 %v3884
  %4132 = vmatpush1.bf16.msra.mxu0 %v3883
  %4133 = vmatprep.subr.bf16.mxu0 %v3888
  %4134 = vmatpush1.bf16.msra.mxu0 %v3887
  %4135 = vmatprep.subr.bf16.mxu0 %v3892
  %4136 = vmatpush1.bf16.msra.mxu0 %v3891
  %4137 = vmatprep.subr.bf16.mxu0 %v3896
  %4138 = vmatpush1.bf16.msra.mxu0 %v3895
  %4139 = vmatprep.subr.bf16.mxu0 %v3900
  %4140 = vmatpush1.bf16.msra.mxu0 %v3899
  %4141 = vmatprep.subr.bf16.mxu0 %v3904
  %4142 = vmatpush1.bf16.msra.mxu0 %v3903
  %4143 = vmatprep.subr.bf16.mxu0 %v3908
  %4144 = vmatpush1.bf16.msra.mxu0 %v3907
  %4145 = vmatprep.subr.bf16.mxu0 %v3912
  %4146 = vmatpush1.bf16.msra.mxu0 %v3911
  %4147 = vmatprep.subr.bf16.mxu0 %v3916
  %4148 = vmatpush1.bf16.msra.mxu0 %v3915
  %4149 = vmatprep.subr.bf16.mxu0 %v3920
  %4150 = vmatpush1.bf16.msra.mxu0 %v3919
  %4151 = vmatprep.subr.bf16.mxu0 %v3924
  %4152 = vmatpush1.bf16.msra.mxu0 %v3923
  %4153 = vmatprep.subr.bf16.mxu0 %v3928
  %4154 = vmatpush1.bf16.msra.mxu0 %v3927
  %4155 = vmatprep.mubr.bf16.mxu0 %v3238
  %4156 = vmatmul.mubr.bf16.gmra.mrb[0].mxu0 %v3237
  %v4157 = vpop.f32.mrb[0].mxu0
  %v4158 = vadd.f32 %v3466, %v4157
  %v4159 = vpop.f32.mrb[0].mxu0
  %v4160 = vadd.f32 %v3470, %v4159
  %v4161 = vpop.f32.mrb[0].mxu0
  %v4162 = vadd.f32 %v3466, %v4161
  %v4163 = vpop.f32.mrb[0].mxu0
  %v4164 = vadd.f32 %v3470, %v4163
  %4165 = vmatprep.mubr.bf16.mxu0 %v3242
  %4166 = vmatmul.mubr.bf16.gmra.mrb[0].mxu0 %v3241
  %v4167 = vpop.f32.mrb[0].mxu0
  %v4168 = vadd.f32 %v3466, %v4167
  %v4169 = vpop.f32.mrb[0].mxu0
  %v4170 = vadd.f32 %v3470, %v4169
  %v4171 = vpop.f32.mrb[0].mxu0
  %v4172 = vadd.f32 %v3466, %v4171
  %v4173 = vpop.f32.mrb[0].mxu0
  %v4174 = vadd.f32 %v3470, %v4173
  %4175 = vmatprep.mubr.bf16.mxu0 %v3246
  %4176 = vmatmul.mubr.bf16.gmra.mrb[0].mxu0 %v3245
  %v4177 = vpop.f32.mrb[0].mxu0
  %v4178 = vadd.f32 %v3466, %v4177
  %v4179 = vpop.f32.mrb[0].mxu0
  %v4180 = vadd.f32 %v3470, %v4179
  %v4181 = vpop.f32.mrb[0].mxu0
  %v4182 = vadd.f32 %v3466, %v4181
  %v4183 = vpop.f32.mrb[0].mxu0
  %v4184 = vadd.f32 %v3470, %v4183
  %4185 = vmatprep.mubr.bf16.mxu0 %v3250
  %4186 = vmatmul.mubr.bf16.gmra.mrb[0].mxu0 %v3249
  %v4187 = vpop.f32.mrb[0].mxu0
  %v4188 = vadd.f32 %v3466, %v4187
  %v4189 = vpop.f32.mrb[0].mxu0
  %v4190 = vadd.f32 %v3470, %v4189
  %v4191 = vpop.f32.mrb[0].mxu0
  %v4192 = vadd.f32 %v3466, %v4191
  %v4193 = vpop.f32.mrb[0].mxu0
  %v4194 = vadd.f32 %v3470, %v4193
  %4195 = vmatprep.mubr.bf16.mxu0 %v3254
  %4196 = vmatmul.mubr.bf16.gmra.mrb[0].mxu0 %v3253
  %v4197 = vpop.f32.mrb[0].mxu0
  %v4198 = vadd.f32 %v3466, %v4197
  %v4199 = vpop.f32.mrb[0].mxu0
  %v4200 = vadd.f32 %v3470, %v4199
  %v4201 = vpop.f32.mrb[0].mxu0
  %v4202 = vadd.f32 %v3466, %v4201
  %v4203 = vpop.f32.mrb[0].mxu0
  %v4204 = vadd.f32 %v3470, %v4203
  %4205 = vmatprep.mubr.bf16.mxu0 %v3258
  %4206 = vmatmul.mubr.bf16.gmra.mrb[0].mxu0 %v3257
  %v4207 = vpop.f32.mrb[0].mxu0
  %v4208 = vadd.f32 %v3466, %v4207
  %v4209 = vpop.f32.mrb[0].mxu0
  %v4210 = vadd.f32 %v3470, %v4209
  %v4211 = vpop.f32.mrb[0].mxu0
  %v4212 = vadd.f32 %v3466, %v4211
  %v4213 = vpop.f32.mrb[0].mxu0
  %v4214 = vadd.f32 %v3470, %v4213
  %4215 = vmatprep.mubr.bf16.mxu0 %v3262
  %4216 = vmatmul.mubr.bf16.gmra.mrb[0].mxu0 %v3261
  %v4217 = vpop.f32.mrb[0].mxu0
  %v4218 = vadd.f32 %v3466, %v4217
  %v4219 = vpop.f32.mrb[0].mxu0
  %v4220 = vadd.f32 %v3470, %v4219
  %v4221 = vpop.f32.mrb[0].mxu0
  %v4222 = vadd.f32 %v3466, %v4221
  %v4223 = vpop.f32.mrb[0].mxu0
  %v4224 = vadd.f32 %v3470, %v4223
  %4225 = vmatprep.mubr.bf16.mxu0 %v3266
  %4226 = vmatmul.mubr.bf16.gmra.mrb[0].mxu0 %v3265
  %v4227 = vpop.f32.mrb[0].mxu0
  %v4228 = vadd.f32 %v3466, %v4227
  %v4229 = vpop.f32.mrb[0].mxu0
  %v4230 = vadd.f32 %v3470, %v4229
  %v4231 = vpop.f32.mrb[0].mxu0
  %v4232 = vadd.f32 %v3466, %v4231
  %v4233 = vpop.f32.mrb[0].mxu0
  %v4234 = vadd.f32 %v3470, %v4233
  %4235 = vmatprep.mubr.bf16.mxu0 %v3270
  %4236 = vmatmul.mubr.bf16.gmra.mrb[0].mxu0 %v3269
  %v4237 = vpop.f32.mrb[0].mxu0
  %v4238 = vadd.f32 %v3466, %v4237
  %v4239 = vpop.f32.mrb[0].mxu0
  %v4240 = vadd.f32 %v3470, %v4239
  %v4241 = vpop.f32.mrb[0].mxu0
  %v4242 = vadd.f32 %v3466, %v4241
  %v4243 = vpop.f32.mrb[0].mxu0
  %v4244 = vadd.f32 %v3470, %v4243
  %4245 = vmatprep.mubr.bf16.mxu0 %v3274
  %4246 = vmatmul.mubr.bf16.gmra.mrb[0].mxu0 %v3273
  %v4247 = vpop.f32.mrb[0].mxu0
  %v4248 = vadd.f32 %v3466, %v4247
  %v4249 = vpop.f32.mrb[0].mxu0
  %v4250 = vadd.f32 %v3470, %v4249
  %v4251 = vpop.f32.mrb[0].mxu0
  %v4252 = vadd.f32 %v3466, %v4251
  %v4253 = vpop.f32.mrb[0].mxu0
  %v4254 = vadd.f32 %v3470, %v4253
  %4255 = vmatprep.mubr.bf16.mxu0 %v3278
  %4256 = vmatmul.mubr.bf16.gmra.mrb[0].mxu0 %v3277
  %v4257 = vpop.f32.mrb[0].mxu0
  %v4258 = vadd.f32 %v3466, %v4257
  %v4259 = vpop.f32.mrb[0].mxu0
  %v4260 = vadd.f32 %v3470, %v4259
  %v4261 = vpop.f32.mrb[0].mxu0
  %v4262 = vadd.f32 %v3466, %v4261
  %v4263 = vpop.f32.mrb[0].mxu0
  %v4264 = vadd.f32 %v3470, %v4263
  %4265 = vmatprep.mubr.bf16.mxu0 %v3282
  %4266 = vmatmul.mubr.bf16.gmra.mrb[0].mxu0 %v3281
  %v4267 = vpop.f32.mrb[0].mxu0
  %v4268 = vadd.f32 %v3466, %v4267
  %v4269 = vpop.f32.mrb[0].mxu0
  %v4270 = vadd.f32 %v3470, %v4269
  %v4271 = vpop.f32.mrb[0].mxu0
  %v4272 = vadd.f32 %v3466, %v4271
  %v4273 = vpop.f32.mrb[0].mxu0
  %v4274 = vadd.f32 %v3470, %v4273
  %4275 = vmatprep.mubr.bf16.mxu0 %v3286
  %4276 = vmatmul.mubr.bf16.gmra.mrb[0].mxu0 %v3285
  %v4277 = vpop.f32.mrb[0].mxu0
  %v4278 = vadd.f32 %v3466, %v4277
  %v4279 = vpop.f32.mrb[0].mxu0
  %v4280 = vadd.f32 %v3470, %v4279
  %v4281 = vpop.f32.mrb[0].mxu0
  %v4282 = vadd.f32 %v3466, %v4281
  %v4283 = vpop.f32.mrb[0].mxu0
  %v4284 = vadd.f32 %v3470, %v4283
  %4285 = vmatprep.mubr.bf16.mxu0 %v3290
  %4286 = vmatmul.mubr.bf16.gmra.mrb[0].mxu0 %v3289
  %v4287 = vpop.f32.mrb[0].mxu0
  %v4288 = vadd.f32 %v3466, %v4287
  %v4289 = vpop.f32.mrb[0].mxu0
  %v4290 = vadd.f32 %v3470, %v4289
  %v4291 = vpop.f32.mrb[0].mxu0
  %v4292 = vadd.f32 %v3466, %v4291
  %v4293 = vpop.f32.mrb[0].mxu0
  %v4294 = vadd.f32 %v3470, %v4293
  %4295 = vmatprep.mubr.bf16.mxu0 %v3294
  %4296 = vmatmul.mubr.bf16.gmra.mrb[0].mxu0 %v3293
  %v4297 = vpop.f32.mrb[0].mxu0
  %v4298 = vadd.f32 %v3466, %v4297
  %v4299 = vpop.f32.mrb[0].mxu0
  %v4300 = vadd.f32 %v3470, %v4299
  %v4301 = vpop.f32.mrb[0].mxu0
  %v4302 = vadd.f32 %v3466, %v4301
  %v4303 = vpop.f32.mrb[0].mxu0
  %v4304 = vadd.f32 %v3470, %v4303
  %4305 = vmatprep.mubr.bf16.mxu0 %v3298
  %4306 = vmatmul.mubr.bf16.gmra.mrb[0].mxu0 %v3297
  %v4307 = vpop.f32.mrb[0].mxu0
  %v4308 = vadd.f32 %v3466, %v4307
  %v4309 = vpop.f32.mrb[0].mxu0
  %v4310 = vadd.f32 %v3470, %v4309
  %v4311 = vpop.f32.mrb[0].mxu0
  %v4312 = vadd.f32 %v3466, %v4311
  %v4313 = vpop.f32.mrb[0].mxu0
  %v4314 = vadd.f32 %v3470, %v4313
  %4315 = vmatprep.mubr.bf16.mxu0 %v3302
  %4316 = vmatmul.mubr.bf16.gmra.mrb[0].mxu0 %v3301
  %v4317 = vpop.f32.mrb[0].mxu0
  %v4318 = vadd.f32 %v3466, %v4317
  %v4319 = vpop.f32.mrb[0].mxu0
  %v4320 = vadd.f32 %v3470, %v4319
  %v4321 = vpop.f32.mrb[0].mxu0
  %v4322 = vadd.f32 %v3466, %v4321
  %v4323 = vpop.f32.mrb[0].mxu0
  %v4324 = vadd.f32 %v3470, %v4323
  %4325 = vmatprep.mubr.bf16.mxu0 %v3306
  %4326 = vmatmul.mubr.bf16.gmra.mrb[0].mxu0 %v3305
  %v4327 = vpop.f32.mrb[0].mxu0
  %v4328 = vadd.f32 %v3466, %v4327
  %v4329 = vpop.f32.mrb[0].mxu0
  %v4330 = vadd.f32 %v3470, %v4329
  %v4331 = vpop.f32.mrb[0].mxu0
  %v4332 = vadd.f32 %v3466, %v4331
  %v4333 = vpop.f32.mrb[0].mxu0
  %v4334 = vadd.f32 %v3470, %v4333
  %4335 = vmatprep.mubr.bf16.mxu0 %v3310
  %4336 = vmatmul.mubr.bf16.gmra.mrb[0].mxu0 %v3309
  %v4337 = vpop.f32.mrb[0].mxu0
  %v4338 = vadd.f32 %v3466, %v4337
  %v4339 = vpop.f32.mrb[0].mxu0
  %v4340 = vadd.f32 %v3470, %v4339
  %v4341 = vpop.f32.mrb[0].mxu0
  %v4342 = vadd.f32 %v3466, %v4341
  %v4343 = vpop.f32.mrb[0].mxu0
  %v4344 = vadd.f32 %v3470, %v4343
  %4345 = vmatprep.mubr.bf16.mxu0 %v3314
  %4346 = vmatmul.mubr.bf16.gmra.mrb[0].mxu0 %v3313
  %v4347 = vpop.f32.mrb[0].mxu0
  %v4348 = vadd.f32 %v3466, %v4347
  %v4349 = vpop.f32.mrb[0].mxu0
  %v4350 = vadd.f32 %v3470, %v4349
  %v4351 = vpop.f32.mrb[0].mxu0
  %v4352 = vadd.f32 %v3466, %v4351
  %v4353 = vpop.f32.mrb[0].mxu0
  %v4354 = vadd.f32 %v3470, %v4353
  %4355 = vmatprep.mubr.bf16.mxu0 %v3318
  %4356 = vmatmul.mubr.bf16.gmra.mrb[0].mxu0 %v3317
  %v4357 = vpop.f32.mrb[0].mxu0
  %v4358 = vadd.f32 %v3466, %v4357
  %v4359 = vpop.f32.mrb[0].mxu0
  %v4360 = vadd.f32 %v3470, %v4359
  %v4361 = vpop.f32.mrb[0].mxu0
  %v4362 = vadd.f32 %v3466, %v4361
  %v4363 = vpop.f32.mrb[0].mxu0
  %v4364 = vadd.f32 %v3470, %v4363
  %4365 = vmatprep.mubr.bf16.mxu0 %v3322
  %4366 = vmatmul.mubr.bf16.gmra.mrb[0].mxu0 %v3321
  %v4367 = vpop.f32.mrb[0].mxu0
  %v4368 = vadd.f32 %v3466, %v4367
  %v4369 = vpop.f32.mrb[0].mxu0
  %v4370 = vadd.f32 %v3470, %v4369
  %v4371 = vpop.f32.mrb[0].mxu0
  %v4372 = vadd.f32 %v3466, %v4371
  %v4373 = vpop.f32.mrb[0].mxu0
  %v4374 = vadd.f32 %v3470, %v4373
  %4375 = vmatprep.mubr.bf16.mxu0 %v3326
  %4376 = vmatmul.mubr.bf16.gmra.mrb[0].mxu0 %v3325
  %v4377 = vpop.f32.mrb[0].mxu0
  %v4378 = vadd.f32 %v3466, %v4377
  %v4379 = vpop.f32.mrb[0].mxu0
  %v4380 = vadd.f32 %v3470, %v4379
  %v4381 = vpop.f32.mrb[0].mxu0
  %v4382 = vadd.f32 %v3466, %v4381
  %v4383 = vpop.f32.mrb[0].mxu0
  %v4384 = vadd.f32 %v3470, %v4383
  %4385 = vmatprep.mubr.bf16.mxu0 %v3330
  %4386 = vmatmul.mubr.bf16.gmra.mrb[0].mxu0 %v3329
  %v4387 = vpop.f32.mrb[0].mxu0
  %v4388 = vadd.f32 %v3466, %v4387
  %v4389 = vpop.f32.mrb[0].mxu0
  %v4390 = vadd.f32 %v3470, %v4389
  %v4391 = vpop.f32.mrb[0].mxu0
  %v4392 = vadd.f32 %v3466, %v4391
  %v4393 = vpop.f32.mrb[0].mxu0
  %v4394 = vadd.f32 %v3470, %v4393
  %4395 = vdwg.mxu0
  %4396 = vmatprep.subr.bf16.mxu0 %v3932
  %4397 = vmatpush1.bf16.msra.mxu0 %v3931
  %4398 = vmatprep.subr.bf16.mxu0 %v3936
  %4399 = vmatpush1.bf16.msra.mxu0 %v3935
  %4400 = vmatprep.subr.bf16.mxu0 %v3940
  %4401 = vmatpush1.bf16.msra.mxu0 %v3939
  %4402 = vmatprep.subr.bf16.mxu0 %v3944
  %4403 = vmatpush1.bf16.msra.mxu0 %v3943
  %4404 = vmatprep.subr.bf16.mxu0 %v3948
  %4405 = vmatpush1.bf16.msra.mxu0 %v3947
  %4406 = vmatprep.subr.bf16.mxu0 %v3952
  %4407 = vmatpush1.bf16.msra.mxu0 %v3951
  %4408 = vmatprep.subr.bf16.mxu0 %v3956
  %4409 = vmatpush1.bf16.msra.mxu0 %v3955
  %4410 = vmatprep.subr.bf16.mxu0 %v3960
  %4411 = vmatpush1.bf16.msra.mxu0 %v3959
  %4412 = vmatprep.subr.bf16.mxu0 %v3964
  %4413 = vmatpush1.bf16.msra.mxu0 %v3963
  %4414 = vmatprep.subr.bf16.mxu0 %v3968
  %4415 = vmatpush1.bf16.msra.mxu0 %v3967
  %4416 = vmatprep.subr.bf16.mxu0 %v3972
  %4417 = vmatpush1.bf16.msra.mxu0 %v3971
  %4418 = vmatprep.subr.bf16.mxu0 %v3976
  %4419 = vmatpush1.bf16.msra.mxu0 %v3975
  %4420 = vmatprep.subr.bf16.mxu0 %v3980
  %4421 = vmatpush1.bf16.msra.mxu0 %v3979
  %4422 = vmatprep.subr.bf16.mxu0 %v3984
  %4423 = vmatpush1.bf16.msra.mxu0 %v3983
  %4424 = vmatprep.subr.bf16.mxu0 %v3988
  %4425 = vmatpush1.bf16.msra.mxu0 %v3987
  %4426 = vmatprep.subr.bf16.mxu0 %v3992
  %4427 = vmatpush1.bf16.msra.mxu0 %v3991
  %4428 = vmatprep.mubr.bf16.mxu0 %v3240
  %4429 = vmatmul.mubr.bf16.gmra.mrb[0].mxu0 %v3239
  %v4430 = vpop.f32.mrb[0].mxu0
  %v4431 = vadd.f32 %v4158, %v4430
  %v4432 = vpop.f32.mrb[0].mxu0
  %v4433 = vadd.f32 %v4160, %v4432
  %v4434 = vpop.f32.mrb[0].mxu0
  %v4435 = vadd.f32 %v4162, %v4434
  %v4436 = vpop.f32.mrb[0].mxu0
  %v4437 = vadd.f32 %v4164, %v4436
  %4438 = vmatprep.mubr.bf16.mxu0 %v3244
  %4439 = vmatmul.mubr.bf16.gmra.mrb[0].mxu0 %v3243
  %v4440 = vpop.f32.mrb[0].mxu0
  %v4441 = vadd.f32 %v4168, %v4440
  %v4442 = vpop.f32.mrb[0].mxu0
  %v4443 = vadd.f32 %v4170, %v4442
  %v4444 = vpop.f32.mrb[0].mxu0
  %v4445 = vadd.f32 %v4172, %v4444
  %v4446 = vpop.f32.mrb[0].mxu0
  %v4447 = vadd.f32 %v4174, %v4446
  %4448 = vmatprep.mubr.bf16.mxu0 %v3248
  %4449 = vmatmul.mubr.bf16.gmra.mrb[0].mxu0 %v3247
  %v4450 = vpop.f32.mrb[0].mxu0
  %v4451 = vadd.f32 %v4178, %v4450
  %v4452 = vpop.f32.mrb[0].mxu0
  %v4453 = vadd.f32 %v4180, %v4452
  %v4454 = vpop.f32.mrb[0].mxu0
  %v4455 = vadd.f32 %v4182, %v4454
  %v4456 = vpop.f32.mrb[0].mxu0
  %v4457 = vadd.f32 %v4184, %v4456
  %4458 = vmatprep.mubr.bf16.mxu0 %v3252
  %4459 = vmatmul.mubr.bf16.gmra.mrb[0].mxu0 %v3251
  %v4460 = vpop.f32.mrb[0].mxu0
  %v4461 = vadd.f32 %v4188, %v4460
  %v4462 = vpop.f32.mrb[0].mxu0
  %v4463 = vadd.f32 %v4190, %v4462
  %v4464 = vpop.f32.mrb[0].mxu0
  %v4465 = vadd.f32 %v4192, %v4464
  %v4466 = vpop.f32.mrb[0].mxu0
  %v4467 = vadd.f32 %v4194, %v4466
  %4468 = vmatprep.mubr.bf16.mxu0 %v3256
  %4469 = vmatmul.mubr.bf16.gmra.mrb[0].mxu0 %v3255
  %v4470 = vpop.f32.mrb[0].mxu0
  %v4471 = vadd.f32 %v4198, %v4470
  %v4472 = vpop.f32.mrb[0].mxu0
  %v4473 = vadd.f32 %v4200, %v4472
  %v4474 = vpop.f32.mrb[0].mxu0
  %v4475 = vadd.f32 %v4202, %v4474
  %v4476 = vpop.f32.mrb[0].mxu0
  %v4477 = vadd.f32 %v4204, %v4476
  %4478 = vmatprep.mubr.bf16.mxu0 %v3260
  %4479 = vmatmul.mubr.bf16.gmra.mrb[0].mxu0 %v3259
  %v4480 = vpop.f32.mrb[0].mxu0
  %v4481 = vadd.f32 %v4208, %v4480
  %v4482 = vpop.f32.mrb[0].mxu0
  %v4483 = vadd.f32 %v4210, %v4482
  %v4484 = vpop.f32.mrb[0].mxu0
  %v4485 = vadd.f32 %v4212, %v4484
  %v4486 = vpop.f32.mrb[0].mxu0
  %v4487 = vadd.f32 %v4214, %v4486
  %4488 = vmatprep.mubr.bf16.mxu0 %v3264
  %4489 = vmatmul.mubr.bf16.gmra.mrb[0].mxu0 %v3263
  %v4490 = vpop.f32.mrb[0].mxu0
  %v4491 = vadd.f32 %v4218, %v4490
  %v4492 = vpop.f32.mrb[0].mxu0
  %v4493 = vadd.f32 %v4220, %v4492
  %v4494 = vpop.f32.mrb[0].mxu0
  %v4495 = vadd.f32 %v4222, %v4494
  %v4496 = vpop.f32.mrb[0].mxu0
  %v4497 = vadd.f32 %v4224, %v4496
  %4498 = vmatprep.mubr.bf16.mxu0 %v3268
  %4499 = vmatmul.mubr.bf16.gmra.mrb[0].mxu0 %v3267
  %v4500 = vpop.f32.mrb[0].mxu0
  %v4501 = vadd.f32 %v4228, %v4500
  %v4502 = vpop.f32.mrb[0].mxu0
  %v4503 = vadd.f32 %v4230, %v4502
  %v4504 = vpop.f32.mrb[0].mxu0
  %v4505 = vadd.f32 %v4232, %v4504
  %v4506 = vpop.f32.mrb[0].mxu0
  %v4507 = vadd.f32 %v4234, %v4506
  %4508 = vmatprep.mubr.bf16.mxu0 %v3272
  %4509 = vmatmul.mubr.bf16.gmra.mrb[0].mxu0 %v3271
  %v4510 = vpop.f32.mrb[0].mxu0
  %v4511 = vadd.f32 %v4238, %v4510
  %v4512 = vpop.f32.mrb[0].mxu0
  %v4513 = vadd.f32 %v4240, %v4512
  %v4514 = vpop.f32.mrb[0].mxu0
  %v4515 = vadd.f32 %v4242, %v4514
  %v4516 = vpop.f32.mrb[0].mxu0
  %v4517 = vadd.f32 %v4244, %v4516
  %4518 = vmatprep.mubr.bf16.mxu0 %v3276
  %4519 = vmatmul.mubr.bf16.gmra.mrb[0].mxu0 %v3275
  %v4520 = vpop.f32.mrb[0].mxu0
  %v4521 = vadd.f32 %v4248, %v4520
  %v4522 = vpop.f32.mrb[0].mxu0
  %v4523 = vadd.f32 %v4250, %v4522
  %v4524 = vpop.f32.mrb[0].mxu0
  %v4525 = vadd.f32 %v4252, %v4524
  %v4526 = vpop.f32.mrb[0].mxu0
  %v4527 = vadd.f32 %v4254, %v4526
  %4528 = vmatprep.mubr.bf16.mxu0 %v3280
  %4529 = vmatmul.mubr.bf16.gmra.mrb[0].mxu0 %v3279
  %v4530 = vpop.f32.mrb[0].mxu0
  %v4531 = vadd.f32 %v4258, %v4530
  %v4532 = vpop.f32.mrb[0].mxu0
  %v4533 = vadd.f32 %v4260, %v4532
  %v4534 = vpop.f32.mrb[0].mxu0
  %v4535 = vadd.f32 %v4262, %v4534
  %v4536 = vpop.f32.mrb[0].mxu0
  %v4537 = vadd.f32 %v4264, %v4536
  %4538 = vmatprep.mubr.bf16.mxu0 %v3284
  %4539 = vmatmul.mubr.bf16.gmra.mrb[0].mxu0 %v3283
  %v4540 = vpop.f32.mrb[0].mxu0
  %v4541 = vadd.f32 %v4268, %v4540
  %v4542 = vpop.f32.mrb[0].mxu0
  %v4543 = vadd.f32 %v4270, %v4542
  %v4544 = vpop.f32.mrb[0].mxu0
  %v4545 = vadd.f32 %v4272, %v4544
  %v4546 = vpop.f32.mrb[0].mxu0
  %v4547 = vadd.f32 %v4274, %v4546
  %4548 = vmatprep.mubr.bf16.mxu0 %v3288
  %4549 = vmatmul.mubr.bf16.gmra.mrb[0].mxu0 %v3287
  %v4550 = vpop.f32.mrb[0].mxu0
  %v4551 = vadd.f32 %v4278, %v4550
  %v4552 = vpop.f32.mrb[0].mxu0
  %v4553 = vadd.f32 %v4280, %v4552
  %v4554 = vpop.f32.mrb[0].mxu0
  %v4555 = vadd.f32 %v4282, %v4554
  %v4556 = vpop.f32.mrb[0].mxu0
  %v4557 = vadd.f32 %v4284, %v4556
  %4558 = vmatprep.mubr.bf16.mxu0 %v3292
  %4559 = vmatmul.mubr.bf16.gmra.mrb[0].mxu0 %v3291
  %v4560 = vpop.f32.mrb[0].mxu0
  %v4561 = vadd.f32 %v4288, %v4560
  %v4562 = vpop.f32.mrb[0].mxu0
  %v4563 = vadd.f32 %v4290, %v4562
  %v4564 = vpop.f32.mrb[0].mxu0
  %v4565 = vadd.f32 %v4292, %v4564
  %v4566 = vpop.f32.mrb[0].mxu0
  %v4567 = vadd.f32 %v4294, %v4566
  %4568 = vmatprep.mubr.bf16.mxu0 %v3296
  %4569 = vmatmul.mubr.bf16.gmra.mrb[0].mxu0 %v3295
  %v4570 = vpop.f32.mrb[0].mxu0
  %v4571 = vadd.f32 %v4298, %v4570
  %v4572 = vpop.f32.mrb[0].mxu0
  %v4573 = vadd.f32 %v4300, %v4572
  %v4574 = vpop.f32.mrb[0].mxu0
  %v4575 = vadd.f32 %v4302, %v4574
  %v4576 = vpop.f32.mrb[0].mxu0
  %v4577 = vadd.f32 %v4304, %v4576
  %4578 = vmatprep.mubr.bf16.mxu0 %v3300
  %4579 = vmatmul.mubr.bf16.gmra.mrb[0].mxu0 %v3299
  %v4580 = vpop.f32.mrb[0].mxu0
  %v4581 = vadd.f32 %v4308, %v4580
  %v4582 = vpop.f32.mrb[0].mxu0
  %v4583 = vadd.f32 %v4310, %v4582
  %v4584 = vpop.f32.mrb[0].mxu0
  %v4585 = vadd.f32 %v4312, %v4584
  %v4586 = vpop.f32.mrb[0].mxu0
  %v4587 = vadd.f32 %v4314, %v4586
  %4588 = vmatprep.mubr.bf16.mxu0 %v3304
  %4589 = vmatmul.mubr.bf16.gmra.mrb[0].mxu0 %v3303
  %v4590 = vpop.f32.mrb[0].mxu0
  %v4591 = vadd.f32 %v4318, %v4590
  %v4592 = vpop.f32.mrb[0].mxu0
  %v4593 = vadd.f32 %v4320, %v4592
  %v4594 = vpop.f32.mrb[0].mxu0
  %v4595 = vadd.f32 %v4322, %v4594
  %v4596 = vpop.f32.mrb[0].mxu0
  %v4597 = vadd.f32 %v4324, %v4596
  %4598 = vmatprep.mubr.bf16.mxu0 %v3308
  %4599 = vmatmul.mubr.bf16.gmra.mrb[0].mxu0 %v3307
  %v4600 = vpop.f32.mrb[0].mxu0
  %v4601 = vadd.f32 %v4328, %v4600
  %v4602 = vpop.f32.mrb[0].mxu0
  %v4603 = vadd.f32 %v4330, %v4602
  %v4604 = vpop.f32.mrb[0].mxu0
  %v4605 = vadd.f32 %v4332, %v4604
  %v4606 = vpop.f32.mrb[0].mxu0
  %v4607 = vadd.f32 %v4334, %v4606
  %4608 = vmatprep.mubr.bf16.mxu0 %v3312
  %4609 = vmatmul.mubr.bf16.gmra.mrb[0].mxu0 %v3311
  %v4610 = vpop.f32.mrb[0].mxu0
  %v4611 = vadd.f32 %v4338, %v4610
  %v4612 = vpop.f32.mrb[0].mxu0
  %v4613 = vadd.f32 %v4340, %v4612
  %v4614 = vpop.f32.mrb[0].mxu0
  %v4615 = vadd.f32 %v4342, %v4614
  %v4616 = vpop.f32.mrb[0].mxu0
  %v4617 = vadd.f32 %v4344, %v4616
  %4618 = vmatprep.mubr.bf16.mxu0 %v3316
  %4619 = vmatmul.mubr.bf16.gmra.mrb[0].mxu0 %v3315
  %v4620 = vpop.f32.mrb[0].mxu0
  %v4621 = vadd.f32 %v4348, %v4620
  %v4622 = vpop.f32.mrb[0].mxu0
  %v4623 = vadd.f32 %v4350, %v4622
  %v4624 = vpop.f32.mrb[0].mxu0
  %v4625 = vadd.f32 %v4352, %v4624
  %v4626 = vpop.f32.mrb[0].mxu0
  %v4627 = vadd.f32 %v4354, %v4626
  %4628 = vmatprep.mubr.bf16.mxu0 %v3320
  %4629 = vmatmul.mubr.bf16.gmra.mrb[0].mxu0 %v3319
  %v4630 = vpop.f32.mrb[0].mxu0
  %v4631 = vadd.f32 %v4358, %v4630
  %v4632 = vpop.f32.mrb[0].mxu0
  %v4633 = vadd.f32 %v4360, %v4632
  %v4634 = vpop.f32.mrb[0].mxu0
  %v4635 = vadd.f32 %v4362, %v4634
  %v4636 = vpop.f32.mrb[0].mxu0
  %v4637 = vadd.f32 %v4364, %v4636
  %4638 = vmatprep.mubr.bf16.mxu0 %v3324
  %4639 = vmatmul.mubr.bf16.gmra.mrb[0].mxu0 %v3323
  %v4640 = vpop.f32.mrb[0].mxu0
  %v4641 = vadd.f32 %v4368, %v4640
  %v4642 = vpop.f32.mrb[0].mxu0
  %v4643 = vadd.f32 %v4370, %v4642
  %v4644 = vpop.f32.mrb[0].mxu0
  %v4645 = vadd.f32 %v4372, %v4644
  %v4646 = vpop.f32.mrb[0].mxu0
  %v4647 = vadd.f32 %v4374, %v4646
  %4648 = vmatprep.mubr.bf16.mxu0 %v3328
  %4649 = vmatmul.mubr.bf16.gmra.mrb[0].mxu0 %v3327
  %v4650 = vpop.f32.mrb[0].mxu0
  %v4651 = vadd.f32 %v4378, %v4650
  %v4652 = vpop.f32.mrb[0].mxu0
  %v4653 = vadd.f32 %v4380, %v4652
  %v4654 = vpop.f32.mrb[0].mxu0
  %v4655 = vadd.f32 %v4382, %v4654
  %v4656 = vpop.f32.mrb[0].mxu0
  %v4657 = vadd.f32 %v4384, %v4656
  %4658 = vmatprep.mubr.bf16.mxu0 %v3332
  %4659 = vmatmul.mubr.bf16.gmra.mrb[0].mxu0 %v3331
  %v4660 = vpop.f32.mrb[0].mxu0
  %v4661 = vadd.f32 %v4388, %v4660
  %v4662 = vpop.f32.mrb[0].mxu0
  %v4663 = vadd.f32 %v4390, %v4662
  %v4664 = vpop.f32.mrb[0].mxu0
  %v4665 = vadd.f32 %v4392, %v4664
  %v4666 = vpop.f32.mrb[0].mxu0
  %v4667 = vadd.f32 %v4394, %v4666
  %4668 = vdwg.mxu0
  %4669 = vmatprep.subr.bf16.mxu0 %v3870
  %4670 = vmatpush1.bf16.msra.mxu0 %v3869
  %4671 = vmatprep.subr.bf16.mxu0 %v3874
  %4672 = vmatpush1.bf16.msra.mxu0 %v3873
  %4673 = vmatprep.subr.bf16.mxu0 %v3878
  %4674 = vmatpush1.bf16.msra.mxu0 %v3877
  %4675 = vmatprep.subr.bf16.mxu0 %v3882
  %4676 = vmatpush1.bf16.msra.mxu0 %v3881
  %4677 = vmatprep.subr.bf16.mxu0 %v3886
  %4678 = vmatpush1.bf16.msra.mxu0 %v3885
  %4679 = vmatprep.subr.bf16.mxu0 %v3890
  %4680 = vmatpush1.bf16.msra.mxu0 %v3889
  %4681 = vmatprep.subr.bf16.mxu0 %v3894
  %4682 = vmatpush1.bf16.msra.mxu0 %v3893
  %4683 = vmatprep.subr.bf16.mxu0 %v3898
  %4684 = vmatpush1.bf16.msra.mxu0 %v3897
  %4685 = vmatprep.subr.bf16.mxu0 %v3902
  %4686 = vmatpush1.bf16.msra.mxu0 %v3901
  %4687 = vmatprep.subr.bf16.mxu0 %v3906
  %4688 = vmatpush1.bf16.msra.mxu0 %v3905
  %4689 = vmatprep.subr.bf16.mxu0 %v3910
  %4690 = vmatpush1.bf16.msra.mxu0 %v3909
  %4691 = vmatprep.subr.bf16.mxu0 %v3914
  %4692 = vmatpush1.bf16.msra.mxu0 %v3913
  %4693 = vmatprep.subr.bf16.mxu0 %v3918
  %4694 = vmatpush1.bf16.msra.mxu0 %v3917
  %4695 = vmatprep.subr.bf16.mxu0 %v3922
  %4696 = vmatpush1.bf16.msra.mxu0 %v3921
  %4697 = vmatprep.subr.bf16.mxu0 %v3926
  %4698 = vmatpush1.bf16.msra.mxu0 %v3925
  %4699 = vmatprep.subr.bf16.mxu0 %v3930
  %4700 = vmatpush1.bf16.msra.mxu0 %v3929
  %4701 = vmatprep.mubr.bf16.mxu0 %v3238
  %4702 = vmatmul.mubr.bf16.gmra.mrb[0].mxu0 %v3237
  %v4703 = vpop.f32.mrb[0].mxu0
  %v4704 = vadd.f32 %v3474, %v4703
  %v4705 = vpop.f32.mrb[0].mxu0
  %v4706 = vadd.f32 %v3478, %v4705
  %v4707 = vpop.f32.mrb[0].mxu0
  %v4708 = vadd.f32 %v3474, %v4707
  %v4709 = vpop.f32.mrb[0].mxu0
  %v4710 = vadd.f32 %v3478, %v4709
  %4711 = vmatprep.mubr.bf16.mxu0 %v3242
  %4712 = vmatmul.mubr.bf16.gmra.mrb[0].mxu0 %v3241
  %v4713 = vpop.f32.mrb[0].mxu0
  %v4714 = vadd.f32 %v3474, %v4713
  %v4715 = vpop.f32.mrb[0].mxu0
  %v4716 = vadd.f32 %v3478, %v4715
  %v4717 = vpop.f32.mrb[0].mxu0
  %v4718 = vadd.f32 %v3474, %v4717
  %v4719 = vpop.f32.mrb[0].mxu0
  %v4720 = vadd.f32 %v3478, %v4719
  %4721 = vmatprep.mubr.bf16.mxu0 %v3246
  %4722 = vmatmul.mubr.bf16.gmra.mrb[0].mxu0 %v3245
  %v4723 = vpop.f32.mrb[0].mxu0
  %v4724 = vadd.f32 %v3474, %v4723
  %v4725 = vpop.f32.mrb[0].mxu0
  %v4726 = vadd.f32 %v3478, %v4725
  %v4727 = vpop.f32.mrb[0].mxu0
  %v4728 = vadd.f32 %v3474, %v4727
  %v4729 = vpop.f32.mrb[0].mxu0
  %v4730 = vadd.f32 %v3478, %v4729
  %4731 = vmatprep.mubr.bf16.mxu0 %v3250
  %4732 = vmatmul.mubr.bf16.gmra.mrb[0].mxu0 %v3249
  %v4733 = vpop.f32.mrb[0].mxu0
  %v4734 = vadd.f32 %v3474, %v4733
  %v4735 = vpop.f32.mrb[0].mxu0
  %v4736 = vadd.f32 %v3478, %v4735
  %v4737 = vpop.f32.mrb[0].mxu0
  %v4738 = vadd.f32 %v3474, %v4737
  %v4739 = vpop.f32.mrb[0].mxu0
  %v4740 = vadd.f32 %v3478, %v4739
  %4741 = vmatprep.mubr.bf16.mxu0 %v3254
  %4742 = vmatmul.mubr.bf16.gmra.mrb[0].mxu0 %v3253
  %v4743 = vpop.f32.mrb[0].mxu0
  %v4744 = vadd.f32 %v3474, %v4743
  %v4745 = vpop.f32.mrb[0].mxu0
  %v4746 = vadd.f32 %v3478, %v4745
  %v4747 = vpop.f32.mrb[0].mxu0
  %v4748 = vadd.f32 %v3474, %v4747
  %v4749 = vpop.f32.mrb[0].mxu0
  %v4750 = vadd.f32 %v3478, %v4749
  %4751 = vmatprep.mubr.bf16.mxu0 %v3258
  %4752 = vmatmul.mubr.bf16.gmra.mrb[0].mxu0 %v3257
  %v4753 = vpop.f32.mrb[0].mxu0
  %v4754 = vadd.f32 %v3474, %v4753
  %v4755 = vpop.f32.mrb[0].mxu0
  %v4756 = vadd.f32 %v3478, %v4755
  %v4757 = vpop.f32.mrb[0].mxu0
  %v4758 = vadd.f32 %v3474, %v4757
  %v4759 = vpop.f32.mrb[0].mxu0
  %v4760 = vadd.f32 %v3478, %v4759
  %4761 = vmatprep.mubr.bf16.mxu0 %v3262
  %4762 = vmatmul.mubr.bf16.gmra.mrb[0].mxu0 %v3261
  %v4763 = vpop.f32.mrb[0].mxu0
  %v4764 = vadd.f32 %v3474, %v4763
  %v4765 = vpop.f32.mrb[0].mxu0
  %v4766 = vadd.f32 %v3478, %v4765
  %v4767 = vpop.f32.mrb[0].mxu0
  %v4768 = vadd.f32 %v3474, %v4767
  %v4769 = vpop.f32.mrb[0].mxu0
  %v4770 = vadd.f32 %v3478, %v4769
  %4771 = vmatprep.mubr.bf16.mxu0 %v3266
  %4772 = vmatmul.mubr.bf16.gmra.mrb[0].mxu0 %v3265
  %v4773 = vpop.f32.mrb[0].mxu0
  %v4774 = vadd.f32 %v3474, %v4773
  %v4775 = vpop.f32.mrb[0].mxu0
  %v4776 = vadd.f32 %v3478, %v4775
  %v4777 = vpop.f32.mrb[0].mxu0
  %v4778 = vadd.f32 %v3474, %v4777
  %v4779 = vpop.f32.mrb[0].mxu0
  %v4780 = vadd.f32 %v3478, %v4779
  %4781 = vmatprep.mubr.bf16.mxu0 %v3270
  %4782 = vmatmul.mubr.bf16.gmra.mrb[0].mxu0 %v3269
  %v4783 = vpop.f32.mrb[0].mxu0
  %v4784 = vadd.f32 %v3474, %v4783
  %v4785 = vpop.f32.mrb[0].mxu0
  %v4786 = vadd.f32 %v3478, %v4785
  %v4787 = vpop.f32.mrb[0].mxu0
  %v4788 = vadd.f32 %v3474, %v4787
  %v4789 = vpop.f32.mrb[0].mxu0
  %v4790 = vadd.f32 %v3478, %v4789
  %4791 = vmatprep.mubr.bf16.mxu0 %v3274
  %4792 = vmatmul.mubr.bf16.gmra.mrb[0].mxu0 %v3273
  %v4793 = vpop.f32.mrb[0].mxu0
  %v4794 = vadd.f32 %v3474, %v4793
  %v4795 = vpop.f32.mrb[0].mxu0
  %v4796 = vadd.f32 %v3478, %v4795
  %v4797 = vpop.f32.mrb[0].mxu0
  %v4798 = vadd.f32 %v3474, %v4797
  %v4799 = vpop.f32.mrb[0].mxu0
  %v4800 = vadd.f32 %v3478, %v4799
  %4801 = vmatprep.mubr.bf16.mxu0 %v3278
  %4802 = vmatmul.mubr.bf16.gmra.mrb[0].mxu0 %v3277
  %v4803 = vpop.f32.mrb[0].mxu0
  %v4804 = vadd.f32 %v3474, %v4803
  %v4805 = vpop.f32.mrb[0].mxu0
  %v4806 = vadd.f32 %v3478, %v4805
  %v4807 = vpop.f32.mrb[0].mxu0
  %v4808 = vadd.f32 %v3474, %v4807
  %v4809 = vpop.f32.mrb[0].mxu0
  %v4810 = vadd.f32 %v3478, %v4809
  %4811 = vmatprep.mubr.bf16.mxu0 %v3282
  %4812 = vmatmul.mubr.bf16.gmra.mrb[0].mxu0 %v3281
  %v4813 = vpop.f32.mrb[0].mxu0
  %v4814 = vadd.f32 %v3474, %v4813
  %v4815 = vpop.f32.mrb[0].mxu0
  %v4816 = vadd.f32 %v3478, %v4815
  %v4817 = vpop.f32.mrb[0].mxu0
  %v4818 = vadd.f32 %v3474, %v4817
  %v4819 = vpop.f32.mrb[0].mxu0
  %v4820 = vadd.f32 %v3478, %v4819
  %4821 = vmatprep.mubr.bf16.mxu0 %v3286
  %4822 = vmatmul.mubr.bf16.gmra.mrb[0].mxu0 %v3285
  %v4823 = vpop.f32.mrb[0].mxu0
  %v4824 = vadd.f32 %v3474, %v4823
  %v4825 = vpop.f32.mrb[0].mxu0
  %v4826 = vadd.f32 %v3478, %v4825
  %v4827 = vpop.f32.mrb[0].mxu0
  %v4828 = vadd.f32 %v3474, %v4827
  %v4829 = vpop.f32.mrb[0].mxu0
  %v4830 = vadd.f32 %v3478, %v4829
  %4831 = vmatprep.mubr.bf16.mxu0 %v3290
  %4832 = vmatmul.mubr.bf16.gmra.mrb[0].mxu0 %v3289
  %v4833 = vpop.f32.mrb[0].mxu0
  %v4834 = vadd.f32 %v3474, %v4833
  %v4835 = vpop.f32.mrb[0].mxu0
  %v4836 = vadd.f32 %v3478, %v4835
  %v4837 = vpop.f32.mrb[0].mxu0
  %v4838 = vadd.f32 %v3474, %v4837
  %v4839 = vpop.f32.mrb[0].mxu0
  %v4840 = vadd.f32 %v3478, %v4839
  %4841 = vmatprep.mubr.bf16.mxu0 %v3294
  %4842 = vmatmul.mubr.bf16.gmra.mrb[0].mxu0 %v3293
  %v4843 = vpop.f32.mrb[0].mxu0
  %v4844 = vadd.f32 %v3474, %v4843
  %v4845 = vpop.f32.mrb[0].mxu0
  %v4846 = vadd.f32 %v3478, %v4845
  %v4847 = vpop.f32.mrb[0].mxu0
  %v4848 = vadd.f32 %v3474, %v4847
  %v4849 = vpop.f32.mrb[0].mxu0
  %v4850 = vadd.f32 %v3478, %v4849
  %4851 = vmatprep.mubr.bf16.mxu0 %v3298
  %4852 = vmatmul.mubr.bf16.gmra.mrb[0].mxu0 %v3297
  %v4853 = vpop.f32.mrb[0].mxu0
  %v4854 = vadd.f32 %v3474, %v4853
  %v4855 = vpop.f32.mrb[0].mxu0
  %v4856 = vadd.f32 %v3478, %v4855
  %v4857 = vpop.f32.mrb[0].mxu0
  %v4858 = vadd.f32 %v3474, %v4857
  %v4859 = vpop.f32.mrb[0].mxu0
  %v4860 = vadd.f32 %v3478, %v4859
  %4861 = vmatprep.mubr.bf16.mxu0 %v3302
  %4862 = vmatmul.mubr.bf16.gmra.mrb[0].mxu0 %v3301
  %v4863 = vpop.f32.mrb[0].mxu0
  %v4864 = vadd.f32 %v3474, %v4863
  %v4865 = vpop.f32.mrb[0].mxu0
  %v4866 = vadd.f32 %v3478, %v4865
  %v4867 = vpop.f32.mrb[0].mxu0
  %v4868 = vadd.f32 %v3474, %v4867
  %v4869 = vpop.f32.mrb[0].mxu0
  %v4870 = vadd.f32 %v3478, %v4869
  %4871 = vmatprep.mubr.bf16.mxu0 %v3306
  %4872 = vmatmul.mubr.bf16.gmra.mrb[0].mxu0 %v3305
  %v4873 = vpop.f32.mrb[0].mxu0
  %v4874 = vadd.f32 %v3474, %v4873
  %v4875 = vpop.f32.mrb[0].mxu0
  %v4876 = vadd.f32 %v3478, %v4875
  %v4877 = vpop.f32.mrb[0].mxu0
  %v4878 = vadd.f32 %v3474, %v4877
  %v4879 = vpop.f32.mrb[0].mxu0
  %v4880 = vadd.f32 %v3478, %v4879
  %4881 = vmatprep.mubr.bf16.mxu0 %v3310
  %4882 = vmatmul.mubr.bf16.gmra.mrb[0].mxu0 %v3309
  %v4883 = vpop.f32.mrb[0].mxu0
  %v4884 = vadd.f32 %v3474, %v4883
  %v4885 = vpop.f32.mrb[0].mxu0
  %v4886 = vadd.f32 %v3478, %v4885
  %v4887 = vpop.f32.mrb[0].mxu0
  %v4888 = vadd.f32 %v3474, %v4887
  %v4889 = vpop.f32.mrb[0].mxu0
  %v4890 = vadd.f32 %v3478, %v4889
  %4891 = vmatprep.mubr.bf16.mxu0 %v3314
  %4892 = vmatmul.mubr.bf16.gmra.mrb[0].mxu0 %v3313
  %v4893 = vpop.f32.mrb[0].mxu0
  %v4894 = vadd.f32 %v3474, %v4893
  %v4895 = vpop.f32.mrb[0].mxu0
  %v4896 = vadd.f32 %v3478, %v4895
  %v4897 = vpop.f32.mrb[0].mxu0
  %v4898 = vadd.f32 %v3474, %v4897
  %v4899 = vpop.f32.mrb[0].mxu0
  %v4900 = vadd.f32 %v3478, %v4899
  %4901 = vmatprep.mubr.bf16.mxu0 %v3318
  %4902 = vmatmul.mubr.bf16.gmra.mrb[0].mxu0 %v3317
  %v4903 = vpop.f32.mrb[0].mxu0
  %v4904 = vadd.f32 %v3474, %v4903
  %v4905 = vpop.f32.mrb[0].mxu0
  %v4906 = vadd.f32 %v3478, %v4905
  %v4907 = vpop.f32.mrb[0].mxu0
  %v4908 = vadd.f32 %v3474, %v4907
  %v4909 = vpop.f32.mrb[0].mxu0
  %v4910 = vadd.f32 %v3478, %v4909
  %4911 = vmatprep.mubr.bf16.mxu0 %v3322
  %4912 = vmatmul.mubr.bf16.gmra.mrb[0].mxu0 %v3321
  %v4913 = vpop.f32.mrb[0].mxu0
  %v4914 = vadd.f32 %v3474, %v4913
  %v4915 = vpop.f32.mrb[0].mxu0
  %v4916 = vadd.f32 %v3478, %v4915
  %v4917 = vpop.f32.mrb[0].mxu0
  %v4918 = vadd.f32 %v3474, %v4917
  %v4919 = vpop.f32.mrb[0].mxu0
  %v4920 = vadd.f32 %v3478, %v4919
  %4921 = vmatprep.mubr.bf16.mxu0 %v3326
  %4922 = vmatmul.mubr.bf16.gmra.mrb[0].mxu0 %v3325
  %v4923 = vpop.f32.mrb[0].mxu0
  %v4924 = vadd.f32 %v3474, %v4923
  %v4925 = vpop.f32.mrb[0].mxu0
  %v4926 = vadd.f32 %v3478, %v4925
  %v4927 = vpop.f32.mrb[0].mxu0
  %v4928 = vadd.f32 %v3474, %v4927
  %v4929 = vpop.f32.mrb[0].mxu0
  %v4930 = vadd.f32 %v3478, %v4929
  %4931 = vmatprep.mubr.bf16.mxu0 %v3330
  %4932 = vmatmul.mubr.bf16.gmra.mrb[0].mxu0 %v3329
  %v4933 = vpop.f32.mrb[0].mxu0
  %v4934 = vadd.f32 %v3474, %v4933
  %v4935 = vpop.f32.mrb[0].mxu0
  %v4936 = vadd.f32 %v3478, %v4935
  %v4937 = vpop.f32.mrb[0].mxu0
  %v4938 = vadd.f32 %v3474, %v4937
  %v4939 = vpop.f32.mrb[0].mxu0
  %v4940 = vadd.f32 %v3478, %v4939
  %4941 = vdwg.mxu0
  %4942 = vmatprep.subr.bf16.mxu0 %v3934
  %4943 = vmatpush1.bf16.msra.mxu0 %v3933
  %4944 = vmatprep.subr.bf16.mxu0 %v3938
  %4945 = vmatpush1.bf16.msra.mxu0 %v3937
  %4946 = vmatprep.subr.bf16.mxu0 %v3942
  %4947 = vmatpush1.bf16.msra.mxu0 %v3941
  %4948 = vmatprep.subr.bf16.mxu0 %v3946
  %4949 = vmatpush1.bf16.msra.mxu0 %v3945
  %4950 = vmatprep.subr.bf16.mxu0 %v3950
  %4951 = vmatpush1.bf16.msra.mxu0 %v3949
  %4952 = vmatprep.subr.bf16.mxu0 %v3954
  %4953 = vmatpush1.bf16.msra.mxu0 %v3953
  %4954 = vmatprep.subr.bf16.mxu0 %v3958
  %4955 = vmatpush1.bf16.msra.mxu0 %v3957
  %4956 = vmatprep.subr.bf16.mxu0 %v3962
  %4957 = vmatpush1.bf16.msra.mxu0 %v3961
  %4958 = vmatprep.subr.bf16.mxu0 %v3966
  %4959 = vmatpush1.bf16.msra.mxu0 %v3965
  %4960 = vmatprep.subr.bf16.mxu0 %v3970
  %4961 = vmatpush1.bf16.msra.mxu0 %v3969
  %4962 = vmatprep.subr.bf16.mxu0 %v3974
  %4963 = vmatpush1.bf16.msra.mxu0 %v3973
  %4964 = vmatprep.subr.bf16.mxu0 %v3978
  %4965 = vmatpush1.bf16.msra.mxu0 %v3977
  %4966 = vmatprep.subr.bf16.mxu0 %v3982
  %4967 = vmatpush1.bf16.msra.mxu0 %v3981
  %4968 = vmatprep.subr.bf16.mxu0 %v3986
  %4969 = vmatpush1.bf16.msra.mxu0 %v3985
  %4970 = vmatprep.subr.bf16.mxu0 %v3990
  %4971 = vmatpush1.bf16.msra.mxu0 %v3989
  %4972 = vmatprep.subr.bf16.mxu0 %v3994
  %4973 = vmatpush1.bf16.msra.mxu0 %v3993
  %4974 = vmatprep.mubr.bf16.mxu0 %v3240
  %4975 = vmatmul.mubr.bf16.gmra.mrb[0].mxu0 %v3239
  %v4976 = vpop.f32.mrb[0].mxu0
  %v4977 = vadd.f32 %v4704, %v4976
  %v4978 = vpop.f32.mrb[0].mxu0
  %v4979 = vadd.f32 %v4706, %v4978
  %v4980 = vpop.f32.mrb[0].mxu0
  %v4981 = vadd.f32 %v4708, %v4980
  %v4982 = vpop.f32.mrb[0].mxu0
  %v4983 = vadd.f32 %v4710, %v4982
  %4984 = vmatprep.mubr.bf16.mxu0 %v3244
  %4985 = vmatmul.mubr.bf16.gmra.mrb[0].mxu0 %v3243
  %v4986 = vpop.f32.mrb[0].mxu0
  %v4987 = vadd.f32 %v4714, %v4986
  %v4988 = vpop.f32.mrb[0].mxu0
  %v4989 = vadd.f32 %v4716, %v4988
  %v4990 = vpop.f32.mrb[0].mxu0
  %v4991 = vadd.f32 %v4718, %v4990
  %v4992 = vpop.f32.mrb[0].mxu0
  %v4993 = vadd.f32 %v4720, %v4992
  %4994 = vmatprep.mubr.bf16.mxu0 %v3248
  %4995 = vmatmul.mubr.bf16.gmra.mrb[0].mxu0 %v3247
  %v4996 = vpop.f32.mrb[0].mxu0
  %v4997 = vadd.f32 %v4724, %v4996
  %v4998 = vpop.f32.mrb[0].mxu0
  %v4999 = vadd.f32 %v4726, %v4998
  %v5000 = vpop.f32.mrb[0].mxu0
  %v5001 = vadd.f32 %v4728, %v5000
  %v5002 = vpop.f32.mrb[0].mxu0
  %v5003 = vadd.f32 %v4730, %v5002
  %5004 = vmatprep.mubr.bf16.mxu0 %v3252
  %5005 = vmatmul.mubr.bf16.gmra.mrb[0].mxu0 %v3251
  %v5006 = vpop.f32.mrb[0].mxu0
  %v5007 = vadd.f32 %v4734, %v5006
  %v5008 = vpop.f32.mrb[0].mxu0
  %v5009 = vadd.f32 %v4736, %v5008
  %v5010 = vpop.f32.mrb[0].mxu0
  %v5011 = vadd.f32 %v4738, %v5010
  %v5012 = vpop.f32.mrb[0].mxu0
  %v5013 = vadd.f32 %v4740, %v5012
  %5014 = vmatprep.mubr.bf16.mxu0 %v3256
  %5015 = vmatmul.mubr.bf16.gmra.mrb[0].mxu0 %v3255
  %v5016 = vpop.f32.mrb[0].mxu0
  %v5017 = vadd.f32 %v4744, %v5016
  %v5018 = vpop.f32.mrb[0].mxu0
  %v5019 = vadd.f32 %v4746, %v5018
  %v5020 = vpop.f32.mrb[0].mxu0
  %v5021 = vadd.f32 %v4748, %v5020
  %v5022 = vpop.f32.mrb[0].mxu0
  %v5023 = vadd.f32 %v4750, %v5022
  %5024 = vmatprep.mubr.bf16.mxu0 %v3260
  %5025 = vmatmul.mubr.bf16.gmra.mrb[0].mxu0 %v3259
  %v5026 = vpop.f32.mrb[0].mxu0
  %v5027 = vadd.f32 %v4754, %v5026
  %v5028 = vpop.f32.mrb[0].mxu0
  %v5029 = vadd.f32 %v4756, %v5028
  %v5030 = vpop.f32.mrb[0].mxu0
  %v5031 = vadd.f32 %v4758, %v5030
  %v5032 = vpop.f32.mrb[0].mxu0
  %v5033 = vadd.f32 %v4760, %v5032
  %5034 = vmatprep.mubr.bf16.mxu0 %v3264
  %5035 = vmatmul.mubr.bf16.gmra.mrb[0].mxu0 %v3263
  %v5036 = vpop.f32.mrb[0].mxu0
  %v5037 = vadd.f32 %v4764, %v5036
  %v5038 = vpop.f32.mrb[0].mxu0
  %v5039 = vadd.f32 %v4766, %v5038
  %v5040 = vpop.f32.mrb[0].mxu0
  %v5041 = vadd.f32 %v4768, %v5040
  %v5042 = vpop.f32.mrb[0].mxu0
  %v5043 = vadd.f32 %v4770, %v5042
  %5044 = vmatprep.mubr.bf16.mxu0 %v3268
  %5045 = vmatmul.mubr.bf16.gmra.mrb[0].mxu0 %v3267
  %v5046 = vpop.f32.mrb[0].mxu0
  %v5047 = vadd.f32 %v4774, %v5046
  %v5048 = vpop.f32.mrb[0].mxu0
  %v5049 = vadd.f32 %v4776, %v5048
  %v5050 = vpop.f32.mrb[0].mxu0
  %v5051 = vadd.f32 %v4778, %v5050
  %v5052 = vpop.f32.mrb[0].mxu0
  %v5053 = vadd.f32 %v4780, %v5052
  %5054 = vmatprep.mubr.bf16.mxu0 %v3272
  %5055 = vmatmul.mubr.bf16.gmra.mrb[0].mxu0 %v3271
  %v5056 = vpop.f32.mrb[0].mxu0
  %v5057 = vadd.f32 %v4784, %v5056
  %v5058 = vpop.f32.mrb[0].mxu0
  %v5059 = vadd.f32 %v4786, %v5058
  %v5060 = vpop.f32.mrb[0].mxu0
  %v5061 = vadd.f32 %v4788, %v5060
  %v5062 = vpop.f32.mrb[0].mxu0
  %v5063 = vadd.f32 %v4790, %v5062
  %5064 = vmatprep.mubr.bf16.mxu0 %v3276
  %5065 = vmatmul.mubr.bf16.gmra.mrb[0].mxu0 %v3275
  %v5066 = vpop.f32.mrb[0].mxu0
  %v5067 = vadd.f32 %v4794, %v5066
  %v5068 = vpop.f32.mrb[0].mxu0
  %v5069 = vadd.f32 %v4796, %v5068
  %v5070 = vpop.f32.mrb[0].mxu0
  %v5071 = vadd.f32 %v4798, %v5070
  %v5072 = vpop.f32.mrb[0].mxu0
  %v5073 = vadd.f32 %v4800, %v5072
  %5074 = vmatprep.mubr.bf16.mxu0 %v3280
  %5075 = vmatmul.mubr.bf16.gmra.mrb[0].mxu0 %v3279
  %v5076 = vpop.f32.mrb[0].mxu0
  %v5077 = vadd.f32 %v4804, %v5076
  %v5078 = vpop.f32.mrb[0].mxu0
  %v5079 = vadd.f32 %v4806, %v5078
  %v5080 = vpop.f32.mrb[0].mxu0
  %v5081 = vadd.f32 %v4808, %v5080
  %v5082 = vpop.f32.mrb[0].mxu0
  %v5083 = vadd.f32 %v4810, %v5082
  %5084 = vmatprep.mubr.bf16.mxu0 %v3284
  %5085 = vmatmul.mubr.bf16.gmra.mrb[0].mxu0 %v3283
  %v5086 = vpop.f32.mrb[0].mxu0
  %v5087 = vadd.f32 %v4814, %v5086
  %v5088 = vpop.f32.mrb[0].mxu0
  %v5089 = vadd.f32 %v4816, %v5088
  %v5090 = vpop.f32.mrb[0].mxu0
  %v5091 = vadd.f32 %v4818, %v5090
  %v5092 = vpop.f32.mrb[0].mxu0
  %v5093 = vadd.f32 %v4820, %v5092
  %5094 = vmatprep.mubr.bf16.mxu0 %v3288
  %5095 = vmatmul.mubr.bf16.gmra.mrb[0].mxu0 %v3287
  %v5096 = vpop.f32.mrb[0].mxu0
  %v5097 = vadd.f32 %v4824, %v5096
  %v5098 = vpop.f32.mrb[0].mxu0
  %v5099 = vadd.f32 %v4826, %v5098
  %v5100 = vpop.f32.mrb[0].mxu0
  %v5101 = vadd.f32 %v4828, %v5100
  %v5102 = vpop.f32.mrb[0].mxu0
  %v5103 = vadd.f32 %v4830, %v5102
  %5104 = vmatprep.mubr.bf16.mxu0 %v3292
  %5105 = vmatmul.mubr.bf16.gmra.mrb[0].mxu0 %v3291
  %v5106 = vpop.f32.mrb[0].mxu0
  %v5107 = vadd.f32 %v4834, %v5106
  %v5108 = vpop.f32.mrb[0].mxu0
  %v5109 = vadd.f32 %v4836, %v5108
  %v5110 = vpop.f32.mrb[0].mxu0
  %v5111 = vadd.f32 %v4838, %v5110
  %v5112 = vpop.f32.mrb[0].mxu0
  %v5113 = vadd.f32 %v4840, %v5112
  %5114 = vmatprep.mubr.bf16.mxu0 %v3296
  %5115 = vmatmul.mubr.bf16.gmra.mrb[0].mxu0 %v3295
  %v5116 = vpop.f32.mrb[0].mxu0
  %v5117 = vadd.f32 %v4844, %v5116
  %v5118 = vpop.f32.mrb[0].mxu0
  %v5119 = vadd.f32 %v4846, %v5118
  %v5120 = vpop.f32.mrb[0].mxu0
  %v5121 = vadd.f32 %v4848, %v5120
  %v5122 = vpop.f32.mrb[0].mxu0
  %v5123 = vadd.f32 %v4850, %v5122
  %5124 = vmatprep.mubr.bf16.mxu0 %v3300
  %5125 = vmatmul.mubr.bf16.gmra.mrb[0].mxu0 %v3299
  %v5126 = vpop.f32.mrb[0].mxu0
  %v5127 = vadd.f32 %v4854, %v5126
  %v5128 = vpop.f32.mrb[0].mxu0
  %v5129 = vadd.f32 %v4856, %v5128
  %v5130 = vpop.f32.mrb[0].mxu0
  %v5131 = vadd.f32 %v4858, %v5130
  %v5132 = vpop.f32.mrb[0].mxu0
  %v5133 = vadd.f32 %v4860, %v5132
  %5134 = vmatprep.mubr.bf16.mxu0 %v3304
  %5135 = vmatmul.mubr.bf16.gmra.mrb[0].mxu0 %v3303
  %v5136 = vpop.f32.mrb[0].mxu0
  %v5137 = vadd.f32 %v4864, %v5136
  %v5138 = vpop.f32.mrb[0].mxu0
  %v5139 = vadd.f32 %v4866, %v5138
  %v5140 = vpop.f32.mrb[0].mxu0
  %v5141 = vadd.f32 %v4868, %v5140
  %v5142 = vpop.f32.mrb[0].mxu0
  %v5143 = vadd.f32 %v4870, %v5142
  %5144 = vmatprep.mubr.bf16.mxu0 %v3308
  %5145 = vmatmul.mubr.bf16.gmra.mrb[0].mxu0 %v3307
  %v5146 = vpop.f32.mrb[0].mxu0
  %v5147 = vadd.f32 %v4874, %v5146
  %v5148 = vpop.f32.mrb[0].mxu0
  %v5149 = vadd.f32 %v4876, %v5148
  %v5150 = vpop.f32.mrb[0].mxu0
  %v5151 = vadd.f32 %v4878, %v5150
  %v5152 = vpop.f32.mrb[0].mxu0
  %v5153 = vadd.f32 %v4880, %v5152
  %5154 = vmatprep.mubr.bf16.mxu0 %v3312
  %5155 = vmatmul.mubr.bf16.gmra.mrb[0].mxu0 %v3311
  %v5156 = vpop.f32.mrb[0].mxu0
  %v5157 = vadd.f32 %v4884, %v5156
  %v5158 = vpop.f32.mrb[0].mxu0
  %v5159 = vadd.f32 %v4886, %v5158
  %v5160 = vpop.f32.mrb[0].mxu0
  %v5161 = vadd.f32 %v4888, %v5160
  %v5162 = vpop.f32.mrb[0].mxu0
  %v5163 = vadd.f32 %v4890, %v5162
  %5164 = vmatprep.mubr.bf16.mxu0 %v3316
  %5165 = vmatmul.mubr.bf16.gmra.mrb[0].mxu0 %v3315
  %v5166 = vpop.f32.mrb[0].mxu0
  %v5167 = vadd.f32 %v4894, %v5166
  %v5168 = vpop.f32.mrb[0].mxu0
  %v5169 = vadd.f32 %v4896, %v5168
  %v5170 = vpop.f32.mrb[0].mxu0
  %v5171 = vadd.f32 %v4898, %v5170
  %v5172 = vpop.f32.mrb[0].mxu0
  %v5173 = vadd.f32 %v4900, %v5172
  %5174 = vmatprep.mubr.bf16.mxu0 %v3320
  %5175 = vmatmul.mubr.bf16.gmra.mrb[0].mxu0 %v3319
  %v5176 = vpop.f32.mrb[0].mxu0
  %v5177 = vadd.f32 %v4904, %v5176
  %v5178 = vpop.f32.mrb[0].mxu0
  %v5179 = vadd.f32 %v4906, %v5178
  %v5180 = vpop.f32.mrb[0].mxu0
  %v5181 = vadd.f32 %v4908, %v5180
  %v5182 = vpop.f32.mrb[0].mxu0
  %v5183 = vadd.f32 %v4910, %v5182
  %5184 = vmatprep.mubr.bf16.mxu0 %v3324
  %5185 = vmatmul.mubr.bf16.gmra.mrb[0].mxu0 %v3323
  %v5186 = vpop.f32.mrb[0].mxu0
  %v5187 = vadd.f32 %v4914, %v5186
  %v5188 = vpop.f32.mrb[0].mxu0
  %v5189 = vadd.f32 %v4916, %v5188
  %v5190 = vpop.f32.mrb[0].mxu0
  %v5191 = vadd.f32 %v4918, %v5190
  %v5192 = vpop.f32.mrb[0].mxu0
  %v5193 = vadd.f32 %v4920, %v5192
  %5194 = vmatprep.mubr.bf16.mxu0 %v3328
  %5195 = vmatmul.mubr.bf16.gmra.mrb[0].mxu0 %v3327
  %v5196 = vpop.f32.mrb[0].mxu0
  %v5197 = vadd.f32 %v4924, %v5196
  %v5198 = vpop.f32.mrb[0].mxu0
  %v5199 = vadd.f32 %v4926, %v5198
  %v5200 = vpop.f32.mrb[0].mxu0
  %v5201 = vadd.f32 %v4928, %v5200
  %v5202 = vpop.f32.mrb[0].mxu0
  %v5203 = vadd.f32 %v4930, %v5202
  %5204 = vmatprep.mubr.bf16.mxu0 %v3332
  %5205 = vmatmul.mubr.bf16.gmra.mrb[0].mxu0 %v3331
  %v5206 = vpop.f32.mrb[0].mxu0
  %v5207 = vadd.f32 %v4934, %v5206
  %v5208 = vpop.f32.mrb[0].mxu0
  %v5209 = vadd.f32 %v4936, %v5208
  %v5210 = vpop.f32.mrb[0].mxu0
  %v5211 = vadd.f32 %v4938, %v5210
  %v5212 = vpop.f32.mrb[0].mxu0
  %v5213 = vadd.f32 %v4940, %v5212
  %5214 = vdwg.mxu0
  %v5215 = vmax.f32 %v4431, 0.0
  %v5216 = vmax.f32 %v4433, 0.0
  %v5217 = vmax.f32 %v4977, 0.0
  %v5218 = vmax.f32 %v4979, 0.0
  %v5219 = vmax.f32 %v4435, 0.0
  %v5220 = vmax.f32 %v4437, 0.0
  %v5221 = vmax.f32 %v4981, 0.0
  %v5222 = vmax.f32 %v4983, 0.0
  %v5223 = vmax.f32 %v4441, 0.0
  %v5224 = vmax.f32 %v4443, 0.0
  %v5225 = vmax.f32 %v4987, 0.0
  %v5226 = vmax.f32 %v4989, 0.0
  %v5227 = vmax.f32 %v4445, 0.0
  %v5228 = vmax.f32 %v4447, 0.0
  %v5229 = vmax.f32 %v4991, 0.0
  %v5230 = vmax.f32 %v4993, 0.0
  %v5231 = vmax.f32 %v4451, 0.0
  %v5232 = vmax.f32 %v4453, 0.0
  %v5233 = vmax.f32 %v4997, 0.0
  %v5234 = vmax.f32 %v4999, 0.0
  %v5235 = vmax.f32 %v4455, 0.0
  %v5236 = vmax.f32 %v4457, 0.0
  %v5237 = vmax.f32 %v5001, 0.0
  %v5238 = vmax.f32 %v5003, 0.0
  %v5239 = vmax.f32 %v4461, 0.0
  %v5240 = vmax.f32 %v4463, 0.0
  %v5241 = vmax.f32 %v5007, 0.0
  %v5242 = vmax.f32 %v5009, 0.0
  %v5243 = vmax.f32 %v4465, 0.0
  %v5244 = vmax.f32 %v4467, 0.0
  %v5245 = vmax.f32 %v5011, 0.0
  %v5246 = vmax.f32 %v5013, 0.0
  %v5247 = vmax.f32 %v4471, 0.0
  %v5248 = vmax.f32 %v4473, 0.0
  %v5249 = vmax.f32 %v5017, 0.0
  %v5250 = vmax.f32 %v5019, 0.0
  %v5251 = vmax.f32 %v4475, 0.0
  %v5252 = vmax.f32 %v4477, 0.0
  %v5253 = vmax.f32 %v5021, 0.0
  %v5254 = vmax.f32 %v5023, 0.0
  %v5255 = vmax.f32 %v4481, 0.0
  %v5256 = vmax.f32 %v4483, 0.0
  %v5257 = vmax.f32 %v5027, 0.0
  %v5258 = vmax.f32 %v5029, 0.0
  %v5259 = vmax.f32 %v4485, 0.0
  %v5260 = vmax.f32 %v4487, 0.0
  %v5261 = vmax.f32 %v5031, 0.0
  %v5262 = vmax.f32 %v5033, 0.0
  %v5263 = vmax.f32 %v4491, 0.0
  %v5264 = vmax.f32 %v4493, 0.0
  %v5265 = vmax.f32 %v5037, 0.0
  %v5266 = vmax.f32 %v5039, 0.0
  %v5267 = vmax.f32 %v4495, 0.0
  %v5268 = vmax.f32 %v4497, 0.0
  %v5269 = vmax.f32 %v5041, 0.0
  %v5270 = vmax.f32 %v5043, 0.0
  %v5271 = vmax.f32 %v4501, 0.0
  %v5272 = vmax.f32 %v4503, 0.0
  %v5273 = vmax.f32 %v5047, 0.0
  %v5274 = vmax.f32 %v5049, 0.0
  %v5275 = vmax.f32 %v4505, 0.0
  %v5276 = vmax.f32 %v4507, 0.0
  %v5277 = vmax.f32 %v5051, 0.0
  %v5278 = vmax.f32 %v5053, 0.0
  %v5279 = vmax.f32 %v4511, 0.0
  %v5280 = vmax.f32 %v4513, 0.0
  %v5281 = vmax.f32 %v5057, 0.0
  %v5282 = vmax.f32 %v5059, 0.0
  %v5283 = vmax.f32 %v4515, 0.0
  %v5284 = vmax.f32 %v4517, 0.0
  %v5285 = vmax.f32 %v5061, 0.0
  %v5286 = vmax.f32 %v5063, 0.0
  %v5287 = vmax.f32 %v4521, 0.0
  %v5288 = vmax.f32 %v4523, 0.0
  %v5289 = vmax.f32 %v5067, 0.0
  %v5290 = vmax.f32 %v5069, 0.0
  %v5291 = vmax.f32 %v4525, 0.0
  %v5292 = vmax.f32 %v4527, 0.0
  %v5293 = vmax.f32 %v5071, 0.0
  %v5294 = vmax.f32 %v5073, 0.0
  %v5295 = vmax.f32 %v4531, 0.0
  %v5296 = vmax.f32 %v4533, 0.0
  %v5297 = vmax.f32 %v5077, 0.0
  %v5298 = vmax.f32 %v5079, 0.0
  %v5299 = vmax.f32 %v4535, 0.0
  %v5300 = vmax.f32 %v4537, 0.0
  %v5301 = vmax.f32 %v5081, 0.0
  %v5302 = vmax.f32 %v5083, 0.0
  %v5303 = vmax.f32 %v4541, 0.0
  %v5304 = vmax.f32 %v4543, 0.0
  %v5305 = vmax.f32 %v5087, 0.0
  %v5306 = vmax.f32 %v5089, 0.0
  %v5307 = vmax.f32 %v4545, 0.0
  %v5308 = vmax.f32 %v4547, 0.0
  %v5309 = vmax.f32 %v5091, 0.0
  %v5310 = vmax.f32 %v5093, 0.0
  %v5311 = vmax.f32 %v4551, 0.0
  %v5312 = vmax.f32 %v4553, 0.0
  %v5313 = vmax.f32 %v5097, 0.0
  %v5314 = vmax.f32 %v5099, 0.0
  %v5315 = vmax.f32 %v4555, 0.0
  %v5316 = vmax.f32 %v4557, 0.0
  %v5317 = vmax.f32 %v5101, 0.0
  %v5318 = vmax.f32 %v5103, 0.0
  %v5319 = vmax.f32 %v4561, 0.0
  %v5320 = vmax.f32 %v4563, 0.0
  %v5321 = vmax.f32 %v5107, 0.0
  %v5322 = vmax.f32 %v5109, 0.0
  %v5323 = vmax.f32 %v4565, 0.0
  %v5324 = vmax.f32 %v4567, 0.0
  %v5325 = vmax.f32 %v5111, 0.0
  %v5326 = vmax.f32 %v5113, 0.0
  %v5327 = vmax.f32 %v4571, 0.0
  %v5328 = vmax.f32 %v4573, 0.0
  %v5329 = vmax.f32 %v5117, 0.0
  %v5330 = vmax.f32 %v5119, 0.0
  %v5331 = vmax.f32 %v4575, 0.0
  %v5332 = vmax.f32 %v4577, 0.0
  %v5333 = vmax.f32 %v5121, 0.0
  %v5334 = vmax.f32 %v5123, 0.0
  %v5335 = vmax.f32 %v4581, 0.0
  %v5336 = vmax.f32 %v4583, 0.0
  %v5337 = vmax.f32 %v5127, 0.0
  %v5338 = vmax.f32 %v5129, 0.0
  %v5339 = vmax.f32 %v4585, 0.0
  %v5340 = vmax.f32 %v4587, 0.0
  %v5341 = vmax.f32 %v5131, 0.0
  %v5342 = vmax.f32 %v5133, 0.0
  %v5343 = vmax.f32 %v4591, 0.0
  %v5344 = vmax.f32 %v4593, 0.0
  %v5345 = vmax.f32 %v5137, 0.0
  %v5346 = vmax.f32 %v5139, 0.0
  %v5347 = vmax.f32 %v4595, 0.0
  %v5348 = vmax.f32 %v4597, 0.0
  %v5349 = vmax.f32 %v5141, 0.0
  %v5350 = vmax.f32 %v5143, 0.0
  %v5351 = vmax.f32 %v4601, 0.0
  %v5352 = vmax.f32 %v4603, 0.0
  %v5353 = vmax.f32 %v5147, 0.0
  %v5354 = vmax.f32 %v5149, 0.0
  %v5355 = vmax.f32 %v4605, 0.0
  %v5356 = vmax.f32 %v4607, 0.0
  %v5357 = vmax.f32 %v5151, 0.0
  %v5358 = vmax.f32 %v5153, 0.0
  %v5359 = vmax.f32 %v4611, 0.0
  %v5360 = vmax.f32 %v4613, 0.0
  %v5361 = vmax.f32 %v5157, 0.0
  %v5362 = vmax.f32 %v5159, 0.0
  %v5363 = vmax.f32 %v4615, 0.0
  %v5364 = vmax.f32 %v4617, 0.0
  %v5365 = vmax.f32 %v5161, 0.0
  %v5366 = vmax.f32 %v5163, 0.0
  %v5367 = vmax.f32 %v4621, 0.0
  %v5368 = vmax.f32 %v4623, 0.0
  %v5369 = vmax.f32 %v5167, 0.0
  %v5370 = vmax.f32 %v5169, 0.0
  %v5371 = vmax.f32 %v4625, 0.0
  %v5372 = vmax.f32 %v4627, 0.0
  %v5373 = vmax.f32 %v5171, 0.0
  %v5374 = vmax.f32 %v5173, 0.0
  %v5375 = vmax.f32 %v4631, 0.0
  %v5376 = vmax.f32 %v4633, 0.0
  %v5377 = vmax.f32 %v5177, 0.0
  %v5378 = vmax.f32 %v5179, 0.0
  %v5379 = vmax.f32 %v4635, 0.0
  %v5380 = vmax.f32 %v4637, 0.0
  %v5381 = vmax.f32 %v5181, 0.0
  %v5382 = vmax.f32 %v5183, 0.0
  %v5383 = vmax.f32 %v4641, 0.0
  %v5384 = vmax.f32 %v4643, 0.0
  %v5385 = vmax.f32 %v5187, 0.0
  %v5386 = vmax.f32 %v5189, 0.0
  %v5387 = vmax.f32 %v4645, 0.0
  %v5388 = vmax.f32 %v4647, 0.0
  %v5389 = vmax.f32 %v5191, 0.0
  %v5390 = vmax.f32 %v5193, 0.0
  %v5391 = vmax.f32 %v4651, 0.0
  %v5392 = vmax.f32 %v4653, 0.0
  %v5393 = vmax.f32 %v5197, 0.0
  %v5394 = vmax.f32 %v5199, 0.0
  %v5395 = vmax.f32 %v4655, 0.0
  %v5396 = vmax.f32 %v4657, 0.0
  %v5397 = vmax.f32 %v5201, 0.0
  %v5398 = vmax.f32 %v5203, 0.0
  %v5399 = vmax.f32 %v4661, 0.0
  %v5400 = vmax.f32 %v4663, 0.0
  %v5401 = vmax.f32 %v5207, 0.0
  %v5402 = vmax.f32 %v5209, 0.0
  %v5403 = vmax.f32 %v4665, 0.0
  %v5404 = vmax.f32 %v4667, 0.0
  %v5405 = vmax.f32 %v5211, 0.0
  %v5406 = vmax.f32 %v5213, 0.0
  %v5407 = vpack.c.bf16 %v5219, %v5215
  %v5408 = vpack.c.bf16 %v5220, %v5216
  %v5409 = vpack.c.bf16 %v5221, %v5217
  %v5410 = vpack.c.bf16 %v5222, %v5218
  %v5411 = vpack.c.bf16 %v5227, %v5223
  %v5412 = vpack.c.bf16 %v5228, %v5224
  %v5413 = vpack.c.bf16 %v5229, %v5225
  %v5414 = vpack.c.bf16 %v5230, %v5226
  %v5415 = vpack.c.bf16 %v5235, %v5231
  %v5416 = vpack.c.bf16 %v5236, %v5232
  %v5417 = vpack.c.bf16 %v5237, %v5233
  %v5418 = vpack.c.bf16 %v5238, %v5234
  %v5419 = vpack.c.bf16 %v5243, %v5239
  %v5420 = vpack.c.bf16 %v5244, %v5240
  %v5421 = vpack.c.bf16 %v5245, %v5241
  %v5422 = vpack.c.bf16 %v5246, %v5242
  %v5423 = vpack.c.bf16 %v5251, %v5247
  %v5424 = vpack.c.bf16 %v5252, %v5248
  %v5425 = vpack.c.bf16 %v5253, %v5249
  %v5426 = vpack.c.bf16 %v5254, %v5250
  %v5427 = vpack.c.bf16 %v5259, %v5255
  %v5428 = vpack.c.bf16 %v5260, %v5256
  %v5429 = vpack.c.bf16 %v5261, %v5257
  %v5430 = vpack.c.bf16 %v5262, %v5258
  %v5431 = vpack.c.bf16 %v5267, %v5263
  %v5432 = vpack.c.bf16 %v5268, %v5264
  %v5433 = vpack.c.bf16 %v5269, %v5265
  %v5434 = vpack.c.bf16 %v5270, %v5266
  %v5435 = vpack.c.bf16 %v5275, %v5271
  %v5436 = vpack.c.bf16 %v5276, %v5272
  %v5437 = vpack.c.bf16 %v5277, %v5273
  %v5438 = vpack.c.bf16 %v5278, %v5274
  %v5439 = vpack.c.bf16 %v5283, %v5279
  %v5440 = vpack.c.bf16 %v5284, %v5280
  %v5441 = vpack.c.bf16 %v5285, %v5281
  %v5442 = vpack.c.bf16 %v5286, %v5282
  %v5443 = vpack.c.bf16 %v5291, %v5287
  %v5444 = vpack.c.bf16 %v5292, %v5288
  %v5445 = vpack.c.bf16 %v5293, %v5289
  %v5446 = vpack.c.bf16 %v5294, %v5290
  %v5447 = vpack.c.bf16 %v5299, %v5295
  %v5448 = vpack.c.bf16 %v5300, %v5296
  %v5449 = vpack.c.bf16 %v5301, %v5297
  %v5450 = vpack.c.bf16 %v5302, %v5298
  %v5451 = vpack.c.bf16 %v5307, %v5303
  %v5452 = vpack.c.bf16 %v5308, %v5304
  %v5453 = vpack.c.bf16 %v5309, %v5305
  %v5454 = vpack.c.bf16 %v5310, %v5306
  %v5455 = vpack.c.bf16 %v5315, %v5311
  %v5456 = vpack.c.bf16 %v5316, %v5312
  %v5457 = vpack.c.bf16 %v5317, %v5313
  %v5458 = vpack.c.bf16 %v5318, %v5314
  %v5459 = vpack.c.bf16 %v5323, %v5319
  %v5460 = vpack.c.bf16 %v5324, %v5320
  %v5461 = vpack.c.bf16 %v5325, %v5321
  %v5462 = vpack.c.bf16 %v5326, %v5322
  %v5463 = vpack.c.bf16 %v5331, %v5327
  %v5464 = vpack.c.bf16 %v5332, %v5328
  %v5465 = vpack.c.bf16 %v5333, %v5329
  %v5466 = vpack.c.bf16 %v5334, %v5330
  %v5467 = vpack.c.bf16 %v5339, %v5335
  %v5468 = vpack.c.bf16 %v5340, %v5336
  %v5469 = vpack.c.bf16 %v5341, %v5337
  %v5470 = vpack.c.bf16 %v5342, %v5338
  %v5471 = vpack.c.bf16 %v5347, %v5343
  %v5472 = vpack.c.bf16 %v5348, %v5344
  %v5473 = vpack.c.bf16 %v5349, %v5345
  %v5474 = vpack.c.bf16 %v5350, %v5346
  %v5475 = vpack.c.bf16 %v5355, %v5351
  %v5476 = vpack.c.bf16 %v5356, %v5352
  %v5477 = vpack.c.bf16 %v5357, %v5353
  %v5478 = vpack.c.bf16 %v5358, %v5354
  %v5479 = vpack.c.bf16 %v5363, %v5359
  %v5480 = vpack.c.bf16 %v5364, %v5360
  %v5481 = vpack.c.bf16 %v5365, %v5361
  %v5482 = vpack.c.bf16 %v5366, %v5362
  %v5483 = vpack.c.bf16 %v5371, %v5367
  %v5484 = vpack.c.bf16 %v5372, %v5368
  %v5485 = vpack.c.bf16 %v5373, %v5369
  %v5486 = vpack.c.bf16 %v5374, %v5370
  %v5487 = vpack.c.bf16 %v5379, %v5375
  %v5488 = vpack.c.bf16 %v5380, %v5376
  %v5489 = vpack.c.bf16 %v5381, %v5377
  %v5490 = vpack.c.bf16 %v5382, %v5378
  %v5491 = vpack.c.bf16 %v5387, %v5383
  %v5492 = vpack.c.bf16 %v5388, %v5384
  %v5493 = vpack.c.bf16 %v5389, %v5385
  %v5494 = vpack.c.bf16 %v5390, %v5386
  %v5495 = vpack.c.bf16 %v5395, %v5391
  %v5496 = vpack.c.bf16 %v5396, %v5392
  %v5497 = vpack.c.bf16 %v5397, %v5393
  %v5498 = vpack.c.bf16 %v5398, %v5394
  %v5499 = vpack.c.bf16 %v5403, %v5399
  %v5500 = vpack.c.bf16 %v5404, %v5400
  %v5501 = vpack.c.bf16 %v5405, %v5401
  %v5502 = vpack.c.bf16 %v5406, %v5402
  %v5503 = vld [vmem:[%s7] sm:$0xff]
  %v5504 = vld [vmem:[%s7 + $0x8] sm:$0xff]
  %v5505 = vld [vmem:[%s7 + $0x10] sm:$0xff]
  %v5506 = vld [vmem:[%s7 + $0x18] sm:$0xff]
  %v5507 = vld [vmem:[%s7 + $0x20] sm:$0xff]
  %v5508 = vld [vmem:[%s7 + $0x28] sm:$0xff]
  %v5509 = vld [vmem:[%s7 + $0x30] sm:$0xff]
  %v5510 = vld [vmem:[%s7 + $0x38] sm:$0xff]
  %v5511 = vld [vmem:[%s7 + $0x40] sm:$0xff]
  %v5512 = vld [vmem:[%s7 + $0x48] sm:$0xff]
  %v5513 = vld [vmem:[%s7 + $0x50] sm:$0xff]
  %v5514 = vld [vmem:[%s7 + $0x58] sm:$0xff]
  %v5515 = vld [vmem:[%s7 + $0x60] sm:$0xff]
  %v5516 = vld [vmem:[%s7 + $0x68] sm:$0xff]
  %v5517 = vld [vmem:[%s7 + $0x70] sm:$0xff]
  %v5518 = vld [vmem:[%s7 + $0x78] sm:$0xff]
  %v5519 = vld [vmem:[%s7 + $0x80] sm:$0xff]
  %v5520 = vld [vmem:[%s7 + $0x88] sm:$0xff]
  %v5521 = vld [vmem:[%s7 + $0x90] sm:$0xff]
  %v5522 = vld [vmem:[%s7 + $0x98] sm:$0xff]
  %v5523 = vld [vmem:[%s7 + $0xa0] sm:$0xff]
  %v5524 = vld [vmem:[%s7 + $0xa8] sm:$0xff]
  %v5525 = vld [vmem:[%s7 + $0xb0] sm:$0xff]
  %v5526 = vld [vmem:[%s7 + $0xb8] sm:$0xff]
  %v5527 = vld [vmem:[%s7 + $0xc0] sm:$0xff]
  %v5528 = vld [vmem:[%s7 + $0xc8] sm:$0xff]
  %v5529 = vld [vmem:[%s7 + $0xd0] sm:$0xff]
  %v5530 = vld [vmem:[%s7 + $0xd8] sm:$0xff]
  %v5531 = vld [vmem:[%s7 + $0xe0] sm:$0xff]
  %v5532 = vld [vmem:[%s7 + $0xe8] sm:$0xff]
  %v5533 = vld [vmem:[%s7 + $0xf0] sm:$0xff]
  %v5534 = vld [vmem:[%s7 + $0xf8] sm:$0xff]
  %v5535 = vld [vmem:[%s7 + $0x100] sm:$0xff]
  %v5536 = vld [vmem:[%s7 + $0x108] sm:$0xff]
  %v5537 = vld [vmem:[%s7 + $0x110] sm:$0xff]
  %v5538 = vld [vmem:[%s7 + $0x118] sm:$0xff]
  %v5539 = vld [vmem:[%s7 + $0x120] sm:$0xff]
  %v5540 = vld [vmem:[%s7 + $0x128] sm:$0xff]
  %v5541 = vld [vmem:[%s7 + $0x130] sm:$0xff]
  %v5542 = vld [vmem:[%s7 + $0x138] sm:$0xff]
  %v5543 = vld [vmem:[%s7 + $0x140] sm:$0xff]
  %v5544 = vld [vmem:[%s7 + $0x148] sm:$0xff]
  %v5545 = vld [vmem:[%s7 + $0x150] sm:$0xff]
  %v5546 = vld [vmem:[%s7 + $0x158] sm:$0xff]
  %v5547 = vld [vmem:[%s7 + $0x160] sm:$0xff]
  %v5548 = vld [vmem:[%s7 + $0x168] sm:$0xff]
  %v5549 = vld [vmem:[%s7 + $0x170] sm:$0xff]
  %v5550 = vld [vmem:[%s7 + $0x178] sm:$0xff]
  %v5551 = vld [vmem:[%s7 + $0x180] sm:$0xff]
  %v5552 = vld [vmem:[%s7 + $0x188] sm:$0xff]
  %v5553 = vld [vmem:[%s7 + $0x190] sm:$0xff]
  %v5554 = vld [vmem:[%s7 + $0x198] sm:$0xff]
  %v5555 = vld [vmem:[%s7 + $0x1a0] sm:$0xff]
  %v5556 = vld [vmem:[%s7 + $0x1a8] sm:$0xff]
  %v5557 = vld [vmem:[%s7 + $0x1b0] sm:$0xff]
  %v5558 = vld [vmem:[%s7 + $0x1b8] sm:$0xff]
  %v5559 = vld [vmem:[%s7 + $0x1c0] sm:$0xff]
  %v5560 = vld [vmem:[%s7 + $0x1c8] sm:$0xff]
  %v5561 = vld [vmem:[%s7 + $0x1d0] sm:$0xff]
  %v5562 = vld [vmem:[%s7 + $0x1d8] sm:$0xff]
  %v5563 = vld [vmem:[%s7 + $0x1e0] sm:$0xff]
  %v5564 = vld [vmem:[%s7 + $0x1e8] sm:$0xff]
  %v5565 = vld [vmem:[%s7 + $0x1f0] sm:$0xff]
  %v5566 = vld [vmem:[%s7 + $0x1f8] sm:$0xff]
  %v5567 = vld [vmem:[%s7 + $0x200] sm:$0xff]
  %v5568 = vld [vmem:[%s7 + $0x208] sm:$0xff]
  %v5569 = vld [vmem:[%s7 + $0x210] sm:$0xff]
  %v5570 = vld [vmem:[%s7 + $0x218] sm:$0xff]
  %v5571 = vld [vmem:[%s7 + $0x220] sm:$0xff]
  %v5572 = vld [vmem:[%s7 + $0x228] sm:$0xff]
  %v5573 = vld [vmem:[%s7 + $0x230] sm:$0xff]
  %v5574 = vld [vmem:[%s7 + $0x238] sm:$0xff]
  %v5575 = vld [vmem:[%s7 + $0x240] sm:$0xff]
  %v5576 = vld [vmem:[%s7 + $0x248] sm:$0xff]
  %v5577 = vld [vmem:[%s7 + $0x250] sm:$0xff]
  %v5578 = vld [vmem:[%s7 + $0x258] sm:$0xff]
  %v5579 = vld [vmem:[%s7 + $0x260] sm:$0xff]
  %v5580 = vld [vmem:[%s7 + $0x268] sm:$0xff]
  %v5581 = vld [vmem:[%s7 + $0x270] sm:$0xff]
  %v5582 = vld [vmem:[%s7 + $0x278] sm:$0xff]
  %v5583 = vld [vmem:[%s7 + $0x280] sm:$0xff]
  %v5584 = vld [vmem:[%s7 + $0x288] sm:$0xff]
  %v5585 = vld [vmem:[%s7 + $0x290] sm:$0xff]
  %v5586 = vld [vmem:[%s7 + $0x298] sm:$0xff]
  %v5587 = vld [vmem:[%s7 + $0x2a0] sm:$0xff]
  %v5588 = vld [vmem:[%s7 + $0x2a8] sm:$0xff]
  %v5589 = vld [vmem:[%s7 + $0x2b0] sm:$0xff]
  %v5590 = vld [vmem:[%s7 + $0x2b8] sm:$0xff]
  %v5591 = vld [vmem:[%s7 + $0x2c0] sm:$0xff]
  %v5592 = vld [vmem:[%s7 + $0x2c8] sm:$0xff]
  %v5593 = vld [vmem:[%s7 + $0x2d0] sm:$0xff]
  %v5594 = vld [vmem:[%s7 + $0x2d8] sm:$0xff]
  %v5595 = vld [vmem:[%s7 + $0x2e0] sm:$0xff]
  %v5596 = vld [vmem:[%s7 + $0x2e8] sm:$0xff]
  %v5597 = vld [vmem:[%s7 + $0x2f0] sm:$0xff]
  %v5598 = vld [vmem:[%s7 + $0x2f8] sm:$0xff]
  %v5599 = vld [vmem:[%s7 + $0x300] sm:$0xff]
  %v5600 = vld [vmem:[%s7 + $0x308] sm:$0xff]
  %v5601 = vld [vmem:[%s7 + $0x310] sm:$0xff]
  %v5602 = vld [vmem:[%s7 + $0x318] sm:$0xff]
  %v5603 = vld [vmem:[%s7 + $0x320] sm:$0xff]
  %v5604 = vld [vmem:[%s7 + $0x328] sm:$0xff]
  %v5605 = vld [vmem:[%s7 + $0x330] sm:$0xff]
  %v5606 = vld [vmem:[%s7 + $0x338] sm:$0xff]
  %v5607 = vld [vmem:[%s7 + $0x340] sm:$0xff]
  %v5608 = vld [vmem:[%s7 + $0x348] sm:$0xff]
  %v5609 = vld [vmem:[%s7 + $0x350] sm:$0xff]
  %v5610 = vld [vmem:[%s7 + $0x358] sm:$0xff]
  %v5611 = vld [vmem:[%s7 + $0x360] sm:$0xff]
  %v5612 = vld [vmem:[%s7 + $0x368] sm:$0xff]
  %v5613 = vld [vmem:[%s7 + $0x370] sm:$0xff]
  %v5614 = vld [vmem:[%s7 + $0x378] sm:$0xff]
  %v5615 = vld [vmem:[%s7 + $0x380] sm:$0xff]
  %v5616 = vld [vmem:[%s7 + $0x388] sm:$0xff]
  %v5617 = vld [vmem:[%s7 + $0x390] sm:$0xff]
  %v5618 = vld [vmem:[%s7 + $0x398] sm:$0xff]
  %v5619 = vld [vmem:[%s7 + $0x3a0] sm:$0xff]
  %v5620 = vld [vmem:[%s7 + $0x3a8] sm:$0xff]
  %v5621 = vld [vmem:[%s7 + $0x3b0] sm:$0xff]
  %v5622 = vld [vmem:[%s7 + $0x3b8] sm:$0xff]
  %v5623 = vld [vmem:[%s7 + $0x3c0] sm:$0xff]
  %v5624 = vld [vmem:[%s7 + $0x3c8] sm:$0xff]
  %v5625 = vld [vmem:[%s7 + $0x3d0] sm:$0xff]
  %v5626 = vld [vmem:[%s7 + $0x3d8] sm:$0xff]
  %v5627 = vld [vmem:[%s7 + $0x3e0] sm:$0xff]
  %v5628 = vld [vmem:[%s7 + $0x3e8] sm:$0xff]
  %v5629 = vld [vmem:[%s7 + $0x3f0] sm:$0xff]
  %v5630 = vld [vmem:[%s7 + $0x3f8] sm:$0xff]
  %v5631 = vld [vmem:[%s8] sm:$0xf]
  %v5633 = vlaneseq
  %v5634 = vshrl.u32 %v5633, 7
  %v5635 = vsub.s32 0, %v5634
  %v5636 = vrot.slane %v5631, %v5635
  %v5637 = vlaneseq
  %v5638 = vshrl.u32 %v5637, 7
  %v5639 = vsub.s32 1, %v5638
  %v5640 = vrot.slane %v5631, %v5639
  %v5641 = vlaneseq
  %v5642 = vshrl.u32 %v5641, 7
  %v5643 = vsub.s32 2, %v5642
  %v5644 = vrot.slane %v5631, %v5643
  %v5645 = vlaneseq
  %v5646 = vshrl.u32 %v5645, 7
  %v5647 = vsub.s32 3, %v5646
  %v5648 = vrot.slane %v5631, %v5647
  %v5781 = vunpack.c.l.b16 %v5503
  %v5782 = vunpack.c.h.b16 %v5503
  %v5783 = vunpack.c.l.b16 %v5504
  %v5784 = vunpack.c.h.b16 %v5504
  %v5785 = vunpack.c.l.b16 %v5505
  %v5786 = vunpack.c.h.b16 %v5505
  %v5787 = vunpack.c.l.b16 %v5506
  %v5788 = vunpack.c.h.b16 %v5506
  %v5789 = vunpack.c.l.b16 %v5507
  %v5790 = vunpack.c.h.b16 %v5507
  %v5791 = vunpack.c.l.b16 %v5508
  %v5792 = vunpack.c.h.b16 %v5508
  %v5793 = vunpack.c.l.b16 %v5509
  %v5794 = vunpack.c.h.b16 %v5509
  %v5795 = vunpack.c.l.b16 %v5510
  %v5796 = vunpack.c.h.b16 %v5510
  %v5797 = vunpack.c.l.b16 %v5511
  %v5798 = vunpack.c.h.b16 %v5511
  %v5799 = vunpack.c.l.b16 %v5512
  %v5800 = vunpack.c.h.b16 %v5512
  %v5801 = vunpack.c.l.b16 %v5513
  %v5802 = vunpack.c.h.b16 %v5513
  %v5803 = vunpack.c.l.b16 %v5514
  %v5804 = vunpack.c.h.b16 %v5514
  %v5805 = vunpack.c.l.b16 %v5515
  %v5806 = vunpack.c.h.b16 %v5515
  %v5807 = vunpack.c.l.b16 %v5516
  %v5808 = vunpack.c.h.b16 %v5516
  %v5809 = vunpack.c.l.b16 %v5517
  %v5810 = vunpack.c.h.b16 %v5517
  %v5811 = vunpack.c.l.b16 %v5518
  %v5812 = vunpack.c.h.b16 %v5518
  %v5813 = vunpack.c.l.b16 %v5519
  %v5814 = vunpack.c.h.b16 %v5519
  %v5815 = vunpack.c.l.b16 %v5520
  %v5816 = vunpack.c.h.b16 %v5520
  %v5817 = vunpack.c.l.b16 %v5521
  %v5818 = vunpack.c.h.b16 %v5521
  %v5819 = vunpack.c.l.b16 %v5522
  %v5820 = vunpack.c.h.b16 %v5522
  %v5821 = vunpack.c.l.b16 %v5523
  %v5822 = vunpack.c.h.b16 %v5523
  %v5823 = vunpack.c.l.b16 %v5524
  %v5824 = vunpack.c.h.b16 %v5524
  %v5825 = vunpack.c.l.b16 %v5525
  %v5826 = vunpack.c.h.b16 %v5525
  %v5827 = vunpack.c.l.b16 %v5526
  %v5828 = vunpack.c.h.b16 %v5526
  %v5829 = vunpack.c.l.b16 %v5527
  %v5830 = vunpack.c.h.b16 %v5527
  %v5831 = vunpack.c.l.b16 %v5528
  %v5832 = vunpack.c.h.b16 %v5528
  %v5833 = vunpack.c.l.b16 %v5529
  %v5834 = vunpack.c.h.b16 %v5529
  %v5835 = vunpack.c.l.b16 %v5530
  %v5836 = vunpack.c.h.b16 %v5530
  %v5837 = vunpack.c.l.b16 %v5531
  %v5838 = vunpack.c.h.b16 %v5531
  %v5839 = vunpack.c.l.b16 %v5532
  %v5840 = vunpack.c.h.b16 %v5532
  %v5841 = vunpack.c.l.b16 %v5533
  %v5842 = vunpack.c.h.b16 %v5533
  %v5843 = vunpack.c.l.b16 %v5534
  %v5844 = vunpack.c.h.b16 %v5534
  %v5845 = vunpack.c.l.b16 %v5535
  %v5846 = vunpack.c.h.b16 %v5535
  %v5847 = vunpack.c.l.b16 %v5536
  %v5848 = vunpack.c.h.b16 %v5536
  %v5849 = vunpack.c.l.b16 %v5537
  %v5850 = vunpack.c.h.b16 %v5537
  %v5851 = vunpack.c.l.b16 %v5538
  %v5852 = vunpack.c.h.b16 %v5538
  %v5853 = vunpack.c.l.b16 %v5539
  %v5854 = vunpack.c.h.b16 %v5539
  %v5855 = vunpack.c.l.b16 %v5540
  %v5856 = vunpack.c.h.b16 %v5540
  %v5857 = vunpack.c.l.b16 %v5541
  %v5858 = vunpack.c.h.b16 %v5541
  %v5859 = vunpack.c.l.b16 %v5542
  %v5860 = vunpack.c.h.b16 %v5542
  %v5861 = vunpack.c.l.b16 %v5543
  %v5862 = vunpack.c.h.b16 %v5543
  %v5863 = vunpack.c.l.b16 %v5544
  %v5864 = vunpack.c.h.b16 %v5544
  %v5865 = vunpack.c.l.b16 %v5545
  %v5866 = vunpack.c.h.b16 %v5545
  %v5867 = vunpack.c.l.b16 %v5546
  %v5868 = vunpack.c.h.b16 %v5546
  %v5869 = vunpack.c.l.b16 %v5547
  %v5870 = vunpack.c.h.b16 %v5547
  %v5871 = vunpack.c.l.b16 %v5548
  %v5872 = vunpack.c.h.b16 %v5548
  %v5873 = vunpack.c.l.b16 %v5549
  %v5874 = vunpack.c.h.b16 %v5549
  %v5875 = vunpack.c.l.b16 %v5550
  %v5876 = vunpack.c.h.b16 %v5550
  %v5877 = vunpack.c.l.b16 %v5551
  %v5878 = vunpack.c.h.b16 %v5551
  %v5879 = vunpack.c.l.b16 %v5552
  %v5880 = vunpack.c.h.b16 %v5552
  %v5881 = vunpack.c.l.b16 %v5553
  %v5882 = vunpack.c.h.b16 %v5553
  %v5883 = vunpack.c.l.b16 %v5554
  %v5884 = vunpack.c.h.b16 %v5554
  %v5885 = vunpack.c.l.b16 %v5555
  %v5886 = vunpack.c.h.b16 %v5555
  %v5887 = vunpack.c.l.b16 %v5556
  %v5888 = vunpack.c.h.b16 %v5556
  %v5889 = vunpack.c.l.b16 %v5557
  %v5890 = vunpack.c.h.b16 %v5557
  %v5891 = vunpack.c.l.b16 %v5558
  %v5892 = vunpack.c.h.b16 %v5558
  %v5893 = vunpack.c.l.b16 %v5559
  %v5894 = vunpack.c.h.b16 %v5559
  %v5895 = vunpack.c.l.b16 %v5560
  %v5896 = vunpack.c.h.b16 %v5560
  %v5897 = vunpack.c.l.b16 %v5561
  %v5898 = vunpack.c.h.b16 %v5561
  %v5899 = vunpack.c.l.b16 %v5562
  %v5900 = vunpack.c.h.b16 %v5562
  %v5901 = vunpack.c.l.b16 %v5563
  %v5902 = vunpack.c.h.b16 %v5563
  %v5903 = vunpack.c.l.b16 %v5564
  %v5904 = vunpack.c.h.b16 %v5564
  %v5905 = vunpack.c.l.b16 %v5565
  %v5906 = vunpack.c.h.b16 %v5565
  %v5907 = vunpack.c.l.b16 %v5566
  %v5908 = vunpack.c.h.b16 %v5566
  %v5909 = vunpack.c.l.b16 %v5567
  %v5910 = vunpack.c.h.b16 %v5567
  %v5911 = vunpack.c.l.b16 %v5568
  %v5912 = vunpack.c.h.b16 %v5568
  %v5913 = vunpack.c.l.b16 %v5569
  %v5914 = vunpack.c.h.b16 %v5569
  %v5915 = vunpack.c.l.b16 %v5570
  %v5916 = vunpack.c.h.b16 %v5570
  %v5917 = vunpack.c.l.b16 %v5571
  %v5918 = vunpack.c.h.b16 %v5571
  %v5919 = vunpack.c.l.b16 %v5572
  %v5920 = vunpack.c.h.b16 %v5572
  %v5921 = vunpack.c.l.b16 %v5573
  %v5922 = vunpack.c.h.b16 %v5573
  %v5923 = vunpack.c.l.b16 %v5574
  %v5924 = vunpack.c.h.b16 %v5574
  %v5925 = vunpack.c.l.b16 %v5575
  %v5926 = vunpack.c.h.b16 %v5575
  %v5927 = vunpack.c.l.b16 %v5576
  %v5928 = vunpack.c.h.b16 %v5576
  %v5929 = vunpack.c.l.b16 %v5577
  %v5930 = vunpack.c.h.b16 %v5577
  %v5931 = vunpack.c.l.b16 %v5578
  %v5932 = vunpack.c.h.b16 %v5578
  %v5933 = vunpack.c.l.b16 %v5579
  %v5934 = vunpack.c.h.b16 %v5579
  %v5935 = vunpack.c.l.b16 %v5580
  %v5936 = vunpack.c.h.b16 %v5580
  %v5937 = vunpack.c.l.b16 %v5581
  %v5938 = vunpack.c.h.b16 %v5581
  %v5939 = vunpack.c.l.b16 %v5582
  %v5940 = vunpack.c.h.b16 %v5582
  %v5941 = vunpack.c.l.b16 %v5583
  %v5942 = vunpack.c.h.b16 %v5583
  %v5943 = vunpack.c.l.b16 %v5584
  %v5944 = vunpack.c.h.b16 %v5584
  %v5945 = vunpack.c.l.b16 %v5585
  %v5946 = vunpack.c.h.b16 %v5585
  %v5947 = vunpack.c.l.b16 %v5586
  %v5948 = vunpack.c.h.b16 %v5586
  %v5949 = vunpack.c.l.b16 %v5587
  %v5950 = vunpack.c.h.b16 %v5587
  %v5951 = vunpack.c.l.b16 %v5588
  %v5952 = vunpack.c.h.b16 %v5588
  %v5953 = vunpack.c.l.b16 %v5589
  %v5954 = vunpack.c.h.b16 %v5589
  %v5955 = vunpack.c.l.b16 %v5590
  %v5956 = vunpack.c.h.b16 %v5590
  %v5957 = vunpack.c.l.b16 %v5591
  %v5958 = vunpack.c.h.b16 %v5591
  %v5959 = vunpack.c.l.b16 %v5592
  %v5960 = vunpack.c.h.b16 %v5592
  %v5961 = vunpack.c.l.b16 %v5593
  %v5962 = vunpack.c.h.b16 %v5593
  %v5963 = vunpack.c.l.b16 %v5594
  %v5964 = vunpack.c.h.b16 %v5594
  %v5965 = vunpack.c.l.b16 %v5595
  %v5966 = vunpack.c.h.b16 %v5595
  %v5967 = vunpack.c.l.b16 %v5596
  %v5968 = vunpack.c.h.b16 %v5596
  %v5969 = vunpack.c.l.b16 %v5597
  %v5970 = vunpack.c.h.b16 %v5597
  %v5971 = vunpack.c.l.b16 %v5598
  %v5972 = vunpack.c.h.b16 %v5598
  %v5973 = vunpack.c.l.b16 %v5599
  %v5974 = vunpack.c.h.b16 %v5599
  %v5975 = vunpack.c.l.b16 %v5600
  %v5976 = vunpack.c.h.b16 %v5600
  %v5977 = vunpack.c.l.b16 %v5601
  %v5978 = vunpack.c.h.b16 %v5601
  %v5979 = vunpack.c.l.b16 %v5602
  %v5980 = vunpack.c.h.b16 %v5602
  %v5981 = vunpack.c.l.b16 %v5603
  %v5982 = vunpack.c.h.b16 %v5603
  %v5983 = vunpack.c.l.b16 %v5604
  %v5984 = vunpack.c.h.b16 %v5604
  %v5985 = vunpack.c.l.b16 %v5605
  %v5986 = vunpack.c.h.b16 %v5605
  %v5987 = vunpack.c.l.b16 %v5606
  %v5988 = vunpack.c.h.b16 %v5606
  %v5989 = vunpack.c.l.b16 %v5607
  %v5990 = vunpack.c.h.b16 %v5607
  %v5991 = vunpack.c.l.b16 %v5608
  %v5992 = vunpack.c.h.b16 %v5608
  %v5993 = vunpack.c.l.b16 %v5609
  %v5994 = vunpack.c.h.b16 %v5609
  %v5995 = vunpack.c.l.b16 %v5610
  %v5996 = vunpack.c.h.b16 %v5610
  %v5997 = vunpack.c.l.b16 %v5611
  %v5998 = vunpack.c.h.b16 %v5611
  %v5999 = vunpack.c.l.b16 %v5612
  %v6000 = vunpack.c.h.b16 %v5612
  %v6001 = vunpack.c.l.b16 %v5613
  %v6002 = vunpack.c.h.b16 %v5613
  %v6003 = vunpack.c.l.b16 %v5614
  %v6004 = vunpack.c.h.b16 %v5614
  %v6005 = vunpack.c.l.b16 %v5615
  %v6006 = vunpack.c.h.b16 %v5615
  %v6007 = vunpack.c.l.b16 %v5616
  %v6008 = vunpack.c.h.b16 %v5616
  %v6009 = vunpack.c.l.b16 %v5617
  %v6010 = vunpack.c.h.b16 %v5617
  %v6011 = vunpack.c.l.b16 %v5618
  %v6012 = vunpack.c.h.b16 %v5618
  %v6013 = vunpack.c.l.b16 %v5619
  %v6014 = vunpack.c.h.b16 %v5619
  %v6015 = vunpack.c.l.b16 %v5620
  %v6016 = vunpack.c.h.b16 %v5620
  %v6017 = vunpack.c.l.b16 %v5621
  %v6018 = vunpack.c.h.b16 %v5621
  %v6019 = vunpack.c.l.b16 %v5622
  %v6020 = vunpack.c.h.b16 %v5622
  %v6021 = vunpack.c.l.b16 %v5623
  %v6022 = vunpack.c.h.b16 %v5623
  %v6023 = vunpack.c.l.b16 %v5624
  %v6024 = vunpack.c.h.b16 %v5624
  %v6025 = vunpack.c.l.b16 %v5625
  %v6026 = vunpack.c.h.b16 %v5625
  %v6027 = vunpack.c.l.b16 %v5626
  %v6028 = vunpack.c.h.b16 %v5626
  %v6029 = vunpack.c.l.b16 %v5627
  %v6030 = vunpack.c.h.b16 %v5627
  %v6031 = vunpack.c.l.b16 %v5628
  %v6032 = vunpack.c.h.b16 %v5628
  %v6033 = vunpack.c.l.b16 %v5629
  %v6034 = vunpack.c.h.b16 %v5629
  %v6035 = vunpack.c.l.b16 %v5630
  %v6036 = vunpack.c.h.b16 %v5630
  %v6037 = vpack.c.b16 %v5785, %v5781
  %v6038 = vpack.c.b16 %v5786, %v5782
  %v6039 = vpack.c.b16 %v5787, %v5783
  %v6040 = vpack.c.b16 %v5788, %v5784
  %v6041 = vpack.c.b16 %v5793, %v5789
  %v6042 = vpack.c.b16 %v5794, %v5790
  %v6043 = vpack.c.b16 %v5795, %v5791
  %v6044 = vpack.c.b16 %v5796, %v5792
  %v6045 = vpack.c.b16 %v5801, %v5797
  %v6046 = vpack.c.b16 %v5802, %v5798
  %v6047 = vpack.c.b16 %v5803, %v5799
  %v6048 = vpack.c.b16 %v5804, %v5800
  %v6049 = vpack.c.b16 %v5809, %v5805
  %v6050 = vpack.c.b16 %v5810, %v5806
  %v6051 = vpack.c.b16 %v5811, %v5807
  %v6052 = vpack.c.b16 %v5812, %v5808
  %v6053 = vpack.c.b16 %v5817, %v5813
  %v6054 = vpack.c.b16 %v5818, %v5814
  %v6055 = vpack.c.b16 %v5819, %v5815
  %v6056 = vpack.c.b16 %v5820, %v5816
  %v6057 = vpack.c.b16 %v5825, %v5821
  %v6058 = vpack.c.b16 %v5826, %v5822
  %v6059 = vpack.c.b16 %v5827, %v5823
  %v6060 = vpack.c.b16 %v5828, %v5824
  %v6061 = vpack.c.b16 %v5833, %v5829
  %v6062 = vpack.c.b16 %v5834, %v5830
  %v6063 = vpack.c.b16 %v5835, %v5831
  %v6064 = vpack.c.b16 %v5836, %v5832
  %v6065 = vpack.c.b16 %v5841, %v5837
  %v6066 = vpack.c.b16 %v5842, %v5838
  %v6067 = vpack.c.b16 %v5843, %v5839
  %v6068 = vpack.c.b16 %v5844, %v5840
  %v6069 = vpack.c.b16 %v5849, %v5845
  %v6070 = vpack.c.b16 %v5850, %v5846
  %v6071 = vpack.c.b16 %v5851, %v5847
  %v6072 = vpack.c.b16 %v5852, %v5848
  %v6073 = vpack.c.b16 %v5857, %v5853
  %v6074 = vpack.c.b16 %v5858, %v5854
  %v6075 = vpack.c.b16 %v5859, %v5855
  %v6076 = vpack.c.b16 %v5860, %v5856
  %v6077 = vpack.c.b16 %v5865, %v5861
  %v6078 = vpack.c.b16 %v5866, %v5862
  %v6079 = vpack.c.b16 %v5867, %v5863
  %v6080 = vpack.c.b16 %v5868, %v5864
  %v6081 = vpack.c.b16 %v5873, %v5869
  %v6082 = vpack.c.b16 %v5874, %v5870
  %v6083 = vpack.c.b16 %v5875, %v5871
  %v6084 = vpack.c.b16 %v5876, %v5872
  %v6085 = vpack.c.b16 %v5881, %v5877
  %v6086 = vpack.c.b16 %v5882, %v5878
  %v6087 = vpack.c.b16 %v5883, %v5879
  %v6088 = vpack.c.b16 %v5884, %v5880
  %v6089 = vpack.c.b16 %v5889, %v5885
  %v6090 = vpack.c.b16 %v5890, %v5886
  %v6091 = vpack.c.b16 %v5891, %v5887
  %v6092 = vpack.c.b16 %v5892, %v5888
  %v6093 = vpack.c.b16 %v5897, %v5893
  %v6094 = vpack.c.b16 %v5898, %v5894
  %v6095 = vpack.c.b16 %v5899, %v5895
  %v6096 = vpack.c.b16 %v5900, %v5896
  %v6097 = vpack.c.b16 %v5905, %v5901
  %v6098 = vpack.c.b16 %v5906, %v5902
  %v6099 = vpack.c.b16 %v5907, %v5903
  %v6100 = vpack.c.b16 %v5908, %v5904
  %v6101 = vpack.c.b16 %v5913, %v5909
  %v6102 = vpack.c.b16 %v5914, %v5910
  %v6103 = vpack.c.b16 %v5915, %v5911
  %v6104 = vpack.c.b16 %v5916, %v5912
  %v6105 = vpack.c.b16 %v5921, %v5917
  %v6106 = vpack.c.b16 %v5922, %v5918
  %v6107 = vpack.c.b16 %v5923, %v5919
  %v6108 = vpack.c.b16 %v5924, %v5920
  %v6109 = vpack.c.b16 %v5929, %v5925
  %v6110 = vpack.c.b16 %v5930, %v5926
  %v6111 = vpack.c.b16 %v5931, %v5927
  %v6112 = vpack.c.b16 %v5932, %v5928
  %v6113 = vpack.c.b16 %v5937, %v5933
  %v6114 = vpack.c.b16 %v5938, %v5934
  %v6115 = vpack.c.b16 %v5939, %v5935
  %v6116 = vpack.c.b16 %v5940, %v5936
  %v6117 = vpack.c.b16 %v5945, %v5941
  %v6118 = vpack.c.b16 %v5946, %v5942
  %v6119 = vpack.c.b16 %v5947, %v5943
  %v6120 = vpack.c.b16 %v5948, %v5944
  %v6121 = vpack.c.b16 %v5953, %v5949
  %v6122 = vpack.c.b16 %v5954, %v5950
  %v6123 = vpack.c.b16 %v5955, %v5951
  %v6124 = vpack.c.b16 %v5956, %v5952
  %v6125 = vpack.c.b16 %v5961, %v5957
  %v6126 = vpack.c.b16 %v5962, %v5958
  %v6127 = vpack.c.b16 %v5963, %v5959
  %v6128 = vpack.c.b16 %v5964, %v5960
  %v6129 = vpack.c.b16 %v5969, %v5965
  %v6130 = vpack.c.b16 %v5970, %v5966
  %v6131 = vpack.c.b16 %v5971, %v5967
  %v6132 = vpack.c.b16 %v5972, %v5968
  %v6133 = vpack.c.b16 %v5977, %v5973
  %v6134 = vpack.c.b16 %v5978, %v5974
  %v6135 = vpack.c.b16 %v5979, %v5975
  %v6136 = vpack.c.b16 %v5980, %v5976
  %v6137 = vpack.c.b16 %v5985, %v5981
  %v6138 = vpack.c.b16 %v5986, %v5982
  %v6139 = vpack.c.b16 %v5987, %v5983
  %v6140 = vpack.c.b16 %v5988, %v5984
  %v6141 = vpack.c.b16 %v5993, %v5989
  %v6142 = vpack.c.b16 %v5994, %v5990
  %v6143 = vpack.c.b16 %v5995, %v5991
  %v6144 = vpack.c.b16 %v5996, %v5992
  %v6145 = vpack.c.b16 %v6001, %v5997
  %v6146 = vpack.c.b16 %v6002, %v5998
  %v6147 = vpack.c.b16 %v6003, %v5999
  %v6148 = vpack.c.b16 %v6004, %v6000
  %v6149 = vpack.c.b16 %v6009, %v6005
  %v6150 = vpack.c.b16 %v6010, %v6006
  %v6151 = vpack.c.b16 %v6011, %v6007
  %v6152 = vpack.c.b16 %v6012, %v6008
  %v6153 = vpack.c.b16 %v6017, %v6013
  %v6154 = vpack.c.b16 %v6018, %v6014
  %v6155 = vpack.c.b16 %v6019, %v6015
  %v6156 = vpack.c.b16 %v6020, %v6016
  %v6157 = vpack.c.b16 %v6025, %v6021
  %v6158 = vpack.c.b16 %v6026, %v6022
  %v6159 = vpack.c.b16 %v6027, %v6023
  %v6160 = vpack.c.b16 %v6028, %v6024
  %v6161 = vpack.c.b16 %v6033, %v6029
  %v6162 = vpack.c.b16 %v6034, %v6030
  %v6163 = vpack.c.b16 %v6035, %v6031
  %v6164 = vpack.c.b16 %v6036, %v6032
  %6293 = vmatprep.subr.bf16.mxu0 %v6038
  %6294 = vmatpush1.bf16.msra.mxu0 %v6037
  %6295 = vmatprep.subr.bf16.mxu0 %v6042
  %6296 = vmatpush1.bf16.msra.mxu0 %v6041
  %6297 = vmatprep.subr.bf16.mxu0 %v6046
  %6298 = vmatpush1.bf16.msra.mxu0 %v6045
  %6299 = vmatprep.subr.bf16.mxu0 %v6050
  %6300 = vmatpush1.bf16.msra.mxu0 %v6049
  %6301 = vmatprep.subr.bf16.mxu0 %v6054
  %6302 = vmatpush1.bf16.msra.mxu0 %v6053
  %6303 = vmatprep.subr.bf16.mxu0 %v6058
  %6304 = vmatpush1.bf16.msra.mxu0 %v6057
  %6305 = vmatprep.subr.bf16.mxu0 %v6062
  %6306 = vmatpush1.bf16.msra.mxu0 %v6061
  %6307 = vmatprep.subr.bf16.mxu0 %v6066
  %6308 = vmatpush1.bf16.msra.mxu0 %v6065
  %6309 = vmatprep.subr.bf16.mxu0 %v6070
  %6310 = vmatpush1.bf16.msra.mxu0 %v6069
  %6311 = vmatprep.subr.bf16.mxu0 %v6074
  %6312 = vmatpush1.bf16.msra.mxu0 %v6073
  %6313 = vmatprep.subr.bf16.mxu0 %v6078
  %6314 = vmatpush1.bf16.msra.mxu0 %v6077
  %6315 = vmatprep.subr.bf16.mxu0 %v6082
  %6316 = vmatpush1.bf16.msra.mxu0 %v6081
  %6317 = vmatprep.subr.bf16.mxu0 %v6086
  %6318 = vmatpush1.bf16.msra.mxu0 %v6085
  %6319 = vmatprep.subr.bf16.mxu0 %v6090
  %6320 = vmatpush1.bf16.msra.mxu0 %v6089
  %6321 = vmatprep.subr.bf16.mxu0 %v6094
  %6322 = vmatpush1.bf16.msra.mxu0 %v6093
  %6323 = vmatprep.subr.bf16.mxu0 %v6098
  %6324 = vmatpush1.bf16.msra.mxu0 %v6097
  %6325 = vmatprep.mubr.bf16.mxu0 %v5408
  %6326 = vmatmul.mubr.bf16.gmra.mrb[0].mxu0 %v5407
  %v6327 = vpop.f32.mrb[0].mxu0
  %v6328 = vadd.f32 %v5636, %v6327
  %v6329 = vpop.f32.mrb[0].mxu0
  %v6330 = vadd.f32 %v5640, %v6329
  %v6331 = vpop.f32.mrb[0].mxu0
  %v6332 = vadd.f32 %v5636, %v6331
  %v6333 = vpop.f32.mrb[0].mxu0
  %v6334 = vadd.f32 %v5640, %v6333
  %6335 = vmatprep.mubr.bf16.mxu0 %v5412
  %6336 = vmatmul.mubr.bf16.gmra.mrb[0].mxu0 %v5411
  %v6337 = vpop.f32.mrb[0].mxu0
  %v6338 = vadd.f32 %v5636, %v6337
  %v6339 = vpop.f32.mrb[0].mxu0
  %v6340 = vadd.f32 %v5640, %v6339
  %v6341 = vpop.f32.mrb[0].mxu0
  %v6342 = vadd.f32 %v5636, %v6341
  %v6343 = vpop.f32.mrb[0].mxu0
  %v6344 = vadd.f32 %v5640, %v6343
  %6345 = vmatprep.mubr.bf16.mxu0 %v5416
  %6346 = vmatmul.mubr.bf16.gmra.mrb[0].mxu0 %v5415
  %v6347 = vpop.f32.mrb[0].mxu0
  %v6348 = vadd.f32 %v5636, %v6347
  %v6349 = vpop.f32.mrb[0].mxu0
  %v6350 = vadd.f32 %v5640, %v6349
  %v6351 = vpop.f32.mrb[0].mxu0
  %v6352 = vadd.f32 %v5636, %v6351
  %v6353 = vpop.f32.mrb[0].mxu0
  %v6354 = vadd.f32 %v5640, %v6353
  %6355 = vmatprep.mubr.bf16.mxu0 %v5420
  %6356 = vmatmul.mubr.bf16.gmra.mrb[0].mxu0 %v5419
  %v6357 = vpop.f32.mrb[0].mxu0
  %v6358 = vadd.f32 %v5636, %v6357
  %v6359 = vpop.f32.mrb[0].mxu0
  %v6360 = vadd.f32 %v5640, %v6359
  %v6361 = vpop.f32.mrb[0].mxu0
  %v6362 = vadd.f32 %v5636, %v6361
  %v6363 = vpop.f32.mrb[0].mxu0
  %v6364 = vadd.f32 %v5640, %v6363
  %6365 = vmatprep.mubr.bf16.mxu0 %v5424
  %6366 = vmatmul.mubr.bf16.gmra.mrb[0].mxu0 %v5423
  %v6367 = vpop.f32.mrb[0].mxu0
  %v6368 = vadd.f32 %v5636, %v6367
  %v6369 = vpop.f32.mrb[0].mxu0
  %v6370 = vadd.f32 %v5640, %v6369
  %v6371 = vpop.f32.mrb[0].mxu0
  %v6372 = vadd.f32 %v5636, %v6371
  %v6373 = vpop.f32.mrb[0].mxu0
  %v6374 = vadd.f32 %v5640, %v6373
  %6375 = vmatprep.mubr.bf16.mxu0 %v5428
  %6376 = vmatmul.mubr.bf16.gmra.mrb[0].mxu0 %v5427
  %v6377 = vpop.f32.mrb[0].mxu0
  %v6378 = vadd.f32 %v5636, %v6377
  %v6379 = vpop.f32.mrb[0].mxu0
  %v6380 = vadd.f32 %v5640, %v6379
  %v6381 = vpop.f32.mrb[0].mxu0
  %v6382 = vadd.f32 %v5636, %v6381
  %v6383 = vpop.f32.mrb[0].mxu0
  %v6384 = vadd.f32 %v5640, %v6383
  %6385 = vmatprep.mubr.bf16.mxu0 %v5432
  %6386 = vmatmul.mubr.bf16.gmra.mrb[0].mxu0 %v5431
  %v6387 = vpop.f32.mrb[0].mxu0
  %v6388 = vadd.f32 %v5636, %v6387
  %v6389 = vpop.f32.mrb[0].mxu0
  %v6390 = vadd.f32 %v5640, %v6389
  %v6391 = vpop.f32.mrb[0].mxu0
  %v6392 = vadd.f32 %v5636, %v6391
  %v6393 = vpop.f32.mrb[0].mxu0
  %v6394 = vadd.f32 %v5640, %v6393
  %6395 = vmatprep.mubr.bf16.mxu0 %v5436
  %6396 = vmatmul.mubr.bf16.gmra.mrb[0].mxu0 %v5435
  %v6397 = vpop.f32.mrb[0].mxu0
  %v6398 = vadd.f32 %v5636, %v6397
  %v6399 = vpop.f32.mrb[0].mxu0
  %v6400 = vadd.f32 %v5640, %v6399
  %v6401 = vpop.f32.mrb[0].mxu0
  %v6402 = vadd.f32 %v5636, %v6401
  %v6403 = vpop.f32.mrb[0].mxu0
  %v6404 = vadd.f32 %v5640, %v6403
  %6405 = vmatprep.mubr.bf16.mxu0 %v5440
  %6406 = vmatmul.mubr.bf16.gmra.mrb[0].mxu0 %v5439
  %v6407 = vpop.f32.mrb[0].mxu0
  %v6408 = vadd.f32 %v5636, %v6407
  %v6409 = vpop.f32.mrb[0].mxu0
  %v6410 = vadd.f32 %v5640, %v6409
  %v6411 = vpop.f32.mrb[0].mxu0
  %v6412 = vadd.f32 %v5636, %v6411
  %v6413 = vpop.f32.mrb[0].mxu0
  %v6414 = vadd.f32 %v5640, %v6413
  %6415 = vmatprep.mubr.bf16.mxu0 %v5444
  %6416 = vmatmul.mubr.bf16.gmra.mrb[0].mxu0 %v5443
  %v6417 = vpop.f32.mrb[0].mxu0
  %v6418 = vadd.f32 %v5636, %v6417
  %v6419 = vpop.f32.mrb[0].mxu0
  %v6420 = vadd.f32 %v5640, %v6419
  %v6421 = vpop.f32.mrb[0].mxu0
  %v6422 = vadd.f32 %v5636, %v6421
  %v6423 = vpop.f32.mrb[0].mxu0
  %v6424 = vadd.f32 %v5640, %v6423
  %6425 = vmatprep.mubr.bf16.mxu0 %v5448
  %6426 = vmatmul.mubr.bf16.gmra.mrb[0].mxu0 %v5447
  %v6427 = vpop.f32.mrb[0].mxu0
  %v6428 = vadd.f32 %v5636, %v6427
  %v6429 = vpop.f32.mrb[0].mxu0
  %v6430 = vadd.f32 %v5640, %v6429
  %v6431 = vpop.f32.mrb[0].mxu0
  %v6432 = vadd.f32 %v5636, %v6431
  %v6433 = vpop.f32.mrb[0].mxu0
  %v6434 = vadd.f32 %v5640, %v6433
  %6435 = vmatprep.mubr.bf16.mxu0 %v5452
  %6436 = vmatmul.mubr.bf16.gmra.mrb[0].mxu0 %v5451
  %v6437 = vpop.f32.mrb[0].mxu0
  %v6438 = vadd.f32 %v5636, %v6437
  %v6439 = vpop.f32.mrb[0].mxu0
  %v6440 = vadd.f32 %v5640, %v6439
  %v6441 = vpop.f32.mrb[0].mxu0
  %v6442 = vadd.f32 %v5636, %v6441
  %v6443 = vpop.f32.mrb[0].mxu0
  %v6444 = vadd.f32 %v5640, %v6443
  %6445 = vmatprep.mubr.bf16.mxu0 %v5456
  %6446 = vmatmul.mubr.bf16.gmra.mrb[0].mxu0 %v5455
  %v6447 = vpop.f32.mrb[0].mxu0
  %v6448 = vadd.f32 %v5636, %v6447
  %v6449 = vpop.f32.mrb[0].mxu0
  %v6450 = vadd.f32 %v5640, %v6449
  %v6451 = vpop.f32.mrb[0].mxu0
  %v6452 = vadd.f32 %v5636, %v6451
  %v6453 = vpop.f32.mrb[0].mxu0
  %v6454 = vadd.f32 %v5640, %v6453
  %6455 = vmatprep.mubr.bf16.mxu0 %v5460
  %6456 = vmatmul.mubr.bf16.gmra.mrb[0].mxu0 %v5459
  %v6457 = vpop.f32.mrb[0].mxu0
  %v6458 = vadd.f32 %v5636, %v6457
  %v6459 = vpop.f32.mrb[0].mxu0
  %v6460 = vadd.f32 %v5640, %v6459
  %v6461 = vpop.f32.mrb[0].mxu0
  %v6462 = vadd.f32 %v5636, %v6461
  %v6463 = vpop.f32.mrb[0].mxu0
  %v6464 = vadd.f32 %v5640, %v6463
  %6465 = vmatprep.mubr.bf16.mxu0 %v5464
  %6466 = vmatmul.mubr.bf16.gmra.mrb[0].mxu0 %v5463
  %v6467 = vpop.f32.mrb[0].mxu0
  %v6468 = vadd.f32 %v5636, %v6467
  %v6469 = vpop.f32.mrb[0].mxu0
  %v6470 = vadd.f32 %v5640, %v6469
  %v6471 = vpop.f32.mrb[0].mxu0
  %v6472 = vadd.f32 %v5636, %v6471
  %v6473 = vpop.f32.mrb[0].mxu0
  %v6474 = vadd.f32 %v5640, %v6473
  %6475 = vmatprep.mubr.bf16.mxu0 %v5468
  %6476 = vmatmul.mubr.bf16.gmra.mrb[0].mxu0 %v5467
  %v6477 = vpop.f32.mrb[0].mxu0
  %v6478 = vadd.f32 %v5636, %v6477
  %v6479 = vpop.f32.mrb[0].mxu0
  %v6480 = vadd.f32 %v5640, %v6479
  %v6481 = vpop.f32.mrb[0].mxu0
  %v6482 = vadd.f32 %v5636, %v6481
  %v6483 = vpop.f32.mrb[0].mxu0
  %v6484 = vadd.f32 %v5640, %v6483
  %6485 = vmatprep.mubr.bf16.mxu0 %v5472
  %6486 = vmatmul.mubr.bf16.gmra.mrb[0].mxu0 %v5471
  %v6487 = vpop.f32.mrb[0].mxu0
  %v6488 = vadd.f32 %v5636, %v6487
  %v6489 = vpop.f32.mrb[0].mxu0
  %v6490 = vadd.f32 %v5640, %v6489
  %v6491 = vpop.f32.mrb[0].mxu0
  %v6492 = vadd.f32 %v5636, %v6491
  %v6493 = vpop.f32.mrb[0].mxu0
  %v6494 = vadd.f32 %v5640, %v6493
  %6495 = vmatprep.mubr.bf16.mxu0 %v5476
  %6496 = vmatmul.mubr.bf16.gmra.mrb[0].mxu0 %v5475
  %v6497 = vpop.f32.mrb[0].mxu0
  %v6498 = vadd.f32 %v5636, %v6497
  %v6499 = vpop.f32.mrb[0].mxu0
  %v6500 = vadd.f32 %v5640, %v6499
  %v6501 = vpop.f32.mrb[0].mxu0
  %v6502 = vadd.f32 %v5636, %v6501
  %v6503 = vpop.f32.mrb[0].mxu0
  %v6504 = vadd.f32 %v5640, %v6503
  %6505 = vmatprep.mubr.bf16.mxu0 %v5480
  %6506 = vmatmul.mubr.bf16.gmra.mrb[0].mxu0 %v5479
  %v6507 = vpop.f32.mrb[0].mxu0
  %v6508 = vadd.f32 %v5636, %v6507
  %v6509 = vpop.f32.mrb[0].mxu0
  %v6510 = vadd.f32 %v5640, %v6509
  %v6511 = vpop.f32.mrb[0].mxu0
  %v6512 = vadd.f32 %v5636, %v6511
  %v6513 = vpop.f32.mrb[0].mxu0
  %v6514 = vadd.f32 %v5640, %v6513
  %6515 = vmatprep.mubr.bf16.mxu0 %v5484
  %6516 = vmatmul.mubr.bf16.gmra.mrb[0].mxu0 %v5483
  %v6517 = vpop.f32.mrb[0].mxu0
  %v6518 = vadd.f32 %v5636, %v6517
  %v6519 = vpop.f32.mrb[0].mxu0
  %v6520 = vadd.f32 %v5640, %v6519
  %v6521 = vpop.f32.mrb[0].mxu0
  %v6522 = vadd.f32 %v5636, %v6521
  %v6523 = vpop.f32.mrb[0].mxu0
  %v6524 = vadd.f32 %v5640, %v6523
  %6525 = vmatprep.mubr.bf16.mxu0 %v5488
  %6526 = vmatmul.mubr.bf16.gmra.mrb[0].mxu0 %v5487
  %v6527 = vpop.f32.mrb[0].mxu0
  %v6528 = vadd.f32 %v5636, %v6527
  %v6529 = vpop.f32.mrb[0].mxu0
  %v6530 = vadd.f32 %v5640, %v6529
  %v6531 = vpop.f32.mrb[0].mxu0
  %v6532 = vadd.f32 %v5636, %v6531
  %v6533 = vpop.f32.mrb[0].mxu0
  %v6534 = vadd.f32 %v5640, %v6533
  %6535 = vmatprep.mubr.bf16.mxu0 %v5492
  %6536 = vmatmul.mubr.bf16.gmra.mrb[0].mxu0 %v5491
  %v6537 = vpop.f32.mrb[0].mxu0
  %v6538 = vadd.f32 %v5636, %v6537
  %v6539 = vpop.f32.mrb[0].mxu0
  %v6540 = vadd.f32 %v5640, %v6539
  %v6541 = vpop.f32.mrb[0].mxu0
  %v6542 = vadd.f32 %v5636, %v6541
  %v6543 = vpop.f32.mrb[0].mxu0
  %v6544 = vadd.f32 %v5640, %v6543
  %6545 = vmatprep.mubr.bf16.mxu0 %v5496
  %6546 = vmatmul.mubr.bf16.gmra.mrb[0].mxu0 %v5495
  %v6547 = vpop.f32.mrb[0].mxu0
  %v6548 = vadd.f32 %v5636, %v6547
  %v6549 = vpop.f32.mrb[0].mxu0
  %v6550 = vadd.f32 %v5640, %v6549
  %v6551 = vpop.f32.mrb[0].mxu0
  %v6552 = vadd.f32 %v5636, %v6551
  %v6553 = vpop.f32.mrb[0].mxu0
  %v6554 = vadd.f32 %v5640, %v6553
  %6555 = vmatprep.mubr.bf16.mxu0 %v5500
  %6556 = vmatmul.mubr.bf16.gmra.mrb[0].mxu0 %v5499
  %v6557 = vpop.f32.mrb[0].mxu0
  %v6558 = vadd.f32 %v5636, %v6557
  %v6559 = vpop.f32.mrb[0].mxu0
  %v6560 = vadd.f32 %v5640, %v6559
  %v6561 = vpop.f32.mrb[0].mxu0
  %v6562 = vadd.f32 %v5636, %v6561
  %v6563 = vpop.f32.mrb[0].mxu0
  %v6564 = vadd.f32 %v5640, %v6563
  %6565 = vdwg.mxu0
  %6566 = vmatprep.subr.bf16.mxu0 %v6102
  %6567 = vmatpush1.bf16.msra.mxu0 %v6101
  %6568 = vmatprep.subr.bf16.mxu0 %v6106
  %6569 = vmatpush1.bf16.msra.mxu0 %v6105
  %6570 = vmatprep.subr.bf16.mxu0 %v6110
  %6571 = vmatpush1.bf16.msra.mxu0 %v6109
  %6572 = vmatprep.subr.bf16.mxu0 %v6114
  %6573 = vmatpush1.bf16.msra.mxu0 %v6113
  %6574 = vmatprep.subr.bf16.mxu0 %v6118
  %6575 = vmatpush1.bf16.msra.mxu0 %v6117
  %6576 = vmatprep.subr.bf16.mxu0 %v6122
  %6577 = vmatpush1.bf16.msra.mxu0 %v6121
  %6578 = vmatprep.subr.bf16.mxu0 %v6126
  %6579 = vmatpush1.bf16.msra.mxu0 %v6125
  %6580 = vmatprep.subr.bf16.mxu0 %v6130
  %6581 = vmatpush1.bf16.msra.mxu0 %v6129
  %6582 = vmatprep.subr.bf16.mxu0 %v6134
  %6583 = vmatpush1.bf16.msra.mxu0 %v6133
  %6584 = vmatprep.subr.bf16.mxu0 %v6138
  %6585 = vmatpush1.bf16.msra.mxu0 %v6137
  %6586 = vmatprep.subr.bf16.mxu0 %v6142
  %6587 = vmatpush1.bf16.msra.mxu0 %v6141
  %6588 = vmatprep.subr.bf16.mxu0 %v6146
  %6589 = vmatpush1.bf16.msra.mxu0 %v6145
  %6590 = vmatprep.subr.bf16.mxu0 %v6150
  %6591 = vmatpush1.bf16.msra.mxu0 %v6149
  %6592 = vmatprep.subr.bf16.mxu0 %v6154
  %6593 = vmatpush1.bf16.msra.mxu0 %v6153
  %6594 = vmatprep.subr.bf16.mxu0 %v6158
  %6595 = vmatpush1.bf16.msra.mxu0 %v6157
  %6596 = vmatprep.subr.bf16.mxu0 %v6162
  %6597 = vmatpush1.bf16.msra.mxu0 %v6161
  %6598 = vmatprep.mubr.bf16.mxu0 %v5410
  %6599 = vmatmul.mubr.bf16.gmra.mrb[0].mxu0 %v5409
  %v6600 = vpop.f32.mrb[0].mxu0
  %v6601 = vadd.f32 %v6328, %v6600
  %v6602 = vpop.f32.mrb[0].mxu0
  %v6603 = vadd.f32 %v6330, %v6602
  %v6604 = vpop.f32.mrb[0].mxu0
  %v6605 = vadd.f32 %v6332, %v6604
  %v6606 = vpop.f32.mrb[0].mxu0
  %v6607 = vadd.f32 %v6334, %v6606
  %6608 = vmatprep.mubr.bf16.mxu0 %v5414
  %6609 = vmatmul.mubr.bf16.gmra.mrb[0].mxu0 %v5413
  %v6610 = vpop.f32.mrb[0].mxu0
  %v6611 = vadd.f32 %v6338, %v6610
  %v6612 = vpop.f32.mrb[0].mxu0
  %v6613 = vadd.f32 %v6340, %v6612
  %v6614 = vpop.f32.mrb[0].mxu0
  %v6615 = vadd.f32 %v6342, %v6614
  %v6616 = vpop.f32.mrb[0].mxu0
  %v6617 = vadd.f32 %v6344, %v6616
  %6618 = vmatprep.mubr.bf16.mxu0 %v5418
  %6619 = vmatmul.mubr.bf16.gmra.mrb[0].mxu0 %v5417
  %v6620 = vpop.f32.mrb[0].mxu0
  %v6621 = vadd.f32 %v6348, %v6620
  %v6622 = vpop.f32.mrb[0].mxu0
  %v6623 = vadd.f32 %v6350, %v6622
  %v6624 = vpop.f32.mrb[0].mxu0
  %v6625 = vadd.f32 %v6352, %v6624
  %v6626 = vpop.f32.mrb[0].mxu0
  %v6627 = vadd.f32 %v6354, %v6626
  %6628 = vmatprep.mubr.bf16.mxu0 %v5422
  %6629 = vmatmul.mubr.bf16.gmra.mrb[0].mxu0 %v5421
  %v6630 = vpop.f32.mrb[0].mxu0
  %v6631 = vadd.f32 %v6358, %v6630
  %v6632 = vpop.f32.mrb[0].mxu0
  %v6633 = vadd.f32 %v6360, %v6632
  %v6634 = vpop.f32.mrb[0].mxu0
  %v6635 = vadd.f32 %v6362, %v6634
  %v6636 = vpop.f32.mrb[0].mxu0
  %v6637 = vadd.f32 %v6364, %v6636
  %6638 = vmatprep.mubr.bf16.mxu0 %v5426
  %6639 = vmatmul.mubr.bf16.gmra.mrb[0].mxu0 %v5425
  %v6640 = vpop.f32.mrb[0].mxu0
  %v6641 = vadd.f32 %v6368, %v6640
  %v6642 = vpop.f32.mrb[0].mxu0
  %v6643 = vadd.f32 %v6370, %v6642
  %v6644 = vpop.f32.mrb[0].mxu0
  %v6645 = vadd.f32 %v6372, %v6644
  %v6646 = vpop.f32.mrb[0].mxu0
  %v6647 = vadd.f32 %v6374, %v6646
  %6648 = vmatprep.mubr.bf16.mxu0 %v5430
  %6649 = vmatmul.mubr.bf16.gmra.mrb[0].mxu0 %v5429
  %v6650 = vpop.f32.mrb[0].mxu0
  %v6651 = vadd.f32 %v6378, %v6650
  %v6652 = vpop.f32.mrb[0].mxu0
  %v6653 = vadd.f32 %v6380, %v6652
  %v6654 = vpop.f32.mrb[0].mxu0
  %v6655 = vadd.f32 %v6382, %v6654
  %v6656 = vpop.f32.mrb[0].mxu0
  %v6657 = vadd.f32 %v6384, %v6656
  %6658 = vmatprep.mubr.bf16.mxu0 %v5434
  %6659 = vmatmul.mubr.bf16.gmra.mrb[0].mxu0 %v5433
  %v6660 = vpop.f32.mrb[0].mxu0
  %v6661 = vadd.f32 %v6388, %v6660
  %v6662 = vpop.f32.mrb[0].mxu0
  %v6663 = vadd.f32 %v6390, %v6662
  %v6664 = vpop.f32.mrb[0].mxu0
  %v6665 = vadd.f32 %v6392, %v6664
  %v6666 = vpop.f32.mrb[0].mxu0
  %v6667 = vadd.f32 %v6394, %v6666
  %6668 = vmatprep.mubr.bf16.mxu0 %v5438
  %6669 = vmatmul.mubr.bf16.gmra.mrb[0].mxu0 %v5437
  %v6670 = vpop.f32.mrb[0].mxu0
  %v6671 = vadd.f32 %v6398, %v6670
  %v6672 = vpop.f32.mrb[0].mxu0
  %v6673 = vadd.f32 %v6400, %v6672
  %v6674 = vpop.f32.mrb[0].mxu0
  %v6675 = vadd.f32 %v6402, %v6674
  %v6676 = vpop.f32.mrb[0].mxu0
  %v6677 = vadd.f32 %v6404, %v6676
  %6678 = vmatprep.mubr.bf16.mxu0 %v5442
  %6679 = vmatmul.mubr.bf16.gmra.mrb[0].mxu0 %v5441
  %v6680 = vpop.f32.mrb[0].mxu0
  %v6681 = vadd.f32 %v6408, %v6680
  %v6682 = vpop.f32.mrb[0].mxu0
  %v6683 = vadd.f32 %v6410, %v6682
  %v6684 = vpop.f32.mrb[0].mxu0
  %v6685 = vadd.f32 %v6412, %v6684
  %v6686 = vpop.f32.mrb[0].mxu0
  %v6687 = vadd.f32 %v6414, %v6686
  %6688 = vmatprep.mubr.bf16.mxu0 %v5446
  %6689 = vmatmul.mubr.bf16.gmra.mrb[0].mxu0 %v5445
  %v6690 = vpop.f32.mrb[0].mxu0
  %v6691 = vadd.f32 %v6418, %v6690
  %v6692 = vpop.f32.mrb[0].mxu0
  %v6693 = vadd.f32 %v6420, %v6692
  %v6694 = vpop.f32.mrb[0].mxu0
  %v6695 = vadd.f32 %v6422, %v6694
  %v6696 = vpop.f32.mrb[0].mxu0
  %v6697 = vadd.f32 %v6424, %v6696
  %6698 = vmatprep.mubr.bf16.mxu0 %v5450
  %6699 = vmatmul.mubr.bf16.gmra.mrb[0].mxu0 %v5449
  %v6700 = vpop.f32.mrb[0].mxu0
  %v6701 = vadd.f32 %v6428, %v6700
  %v6702 = vpop.f32.mrb[0].mxu0
  %v6703 = vadd.f32 %v6430, %v6702
  %v6704 = vpop.f32.mrb[0].mxu0
  %v6705 = vadd.f32 %v6432, %v6704
  %v6706 = vpop.f32.mrb[0].mxu0
  %v6707 = vadd.f32 %v6434, %v6706
  %6708 = vmatprep.mubr.bf16.mxu0 %v5454
  %6709 = vmatmul.mubr.bf16.gmra.mrb[0].mxu0 %v5453
  %v6710 = vpop.f32.mrb[0].mxu0
  %v6711 = vadd.f32 %v6438, %v6710
  %v6712 = vpop.f32.mrb[0].mxu0
  %v6713 = vadd.f32 %v6440, %v6712
  %v6714 = vpop.f32.mrb[0].mxu0
  %v6715 = vadd.f32 %v6442, %v6714
  %v6716 = vpop.f32.mrb[0].mxu0
  %v6717 = vadd.f32 %v6444, %v6716
  %6718 = vmatprep.mubr.bf16.mxu0 %v5458
  %6719 = vmatmul.mubr.bf16.gmra.mrb[0].mxu0 %v5457
  %v6720 = vpop.f32.mrb[0].mxu0
  %v6721 = vadd.f32 %v6448, %v6720
  %v6722 = vpop.f32.mrb[0].mxu0
  %v6723 = vadd.f32 %v6450, %v6722
  %v6724 = vpop.f32.mrb[0].mxu0
  %v6725 = vadd.f32 %v6452, %v6724
  %v6726 = vpop.f32.mrb[0].mxu0
  %v6727 = vadd.f32 %v6454, %v6726
  %6728 = vmatprep.mubr.bf16.mxu0 %v5462
  %6729 = vmatmul.mubr.bf16.gmra.mrb[0].mxu0 %v5461
  %v6730 = vpop.f32.mrb[0].mxu0
  %v6731 = vadd.f32 %v6458, %v6730
  %v6732 = vpop.f32.mrb[0].mxu0
  %v6733 = vadd.f32 %v6460, %v6732
  %v6734 = vpop.f32.mrb[0].mxu0
  %v6735 = vadd.f32 %v6462, %v6734
  %v6736 = vpop.f32.mrb[0].mxu0
  %v6737 = vadd.f32 %v6464, %v6736
  %6738 = vmatprep.mubr.bf16.mxu0 %v5466
  %6739 = vmatmul.mubr.bf16.gmra.mrb[0].mxu0 %v5465
  %v6740 = vpop.f32.mrb[0].mxu0
  %v6741 = vadd.f32 %v6468, %v6740
  %v6742 = vpop.f32.mrb[0].mxu0
  %v6743 = vadd.f32 %v6470, %v6742
  %v6744 = vpop.f32.mrb[0].mxu0
  %v6745 = vadd.f32 %v6472, %v6744
  %v6746 = vpop.f32.mrb[0].mxu0
  %v6747 = vadd.f32 %v6474, %v6746
  %6748 = vmatprep.mubr.bf16.mxu0 %v5470
  %6749 = vmatmul.mubr.bf16.gmra.mrb[0].mxu0 %v5469
  %v6750 = vpop.f32.mrb[0].mxu0
  %v6751 = vadd.f32 %v6478, %v6750
  %v6752 = vpop.f32.mrb[0].mxu0
  %v6753 = vadd.f32 %v6480, %v6752
  %v6754 = vpop.f32.mrb[0].mxu0
  %v6755 = vadd.f32 %v6482, %v6754
  %v6756 = vpop.f32.mrb[0].mxu0
  %v6757 = vadd.f32 %v6484, %v6756
  %6758 = vmatprep.mubr.bf16.mxu0 %v5474
  %6759 = vmatmul.mubr.bf16.gmra.mrb[0].mxu0 %v5473
  %v6760 = vpop.f32.mrb[0].mxu0
  %v6761 = vadd.f32 %v6488, %v6760
  %v6762 = vpop.f32.mrb[0].mxu0
  %v6763 = vadd.f32 %v6490, %v6762
  %v6764 = vpop.f32.mrb[0].mxu0
  %v6765 = vadd.f32 %v6492, %v6764
  %v6766 = vpop.f32.mrb[0].mxu0
  %v6767 = vadd.f32 %v6494, %v6766
  %6768 = vmatprep.mubr.bf16.mxu0 %v5478
  %6769 = vmatmul.mubr.bf16.gmra.mrb[0].mxu0 %v5477
  %v6770 = vpop.f32.mrb[0].mxu0
  %v6771 = vadd.f32 %v6498, %v6770
  %v6772 = vpop.f32.mrb[0].mxu0
  %v6773 = vadd.f32 %v6500, %v6772
  %v6774 = vpop.f32.mrb[0].mxu0
  %v6775 = vadd.f32 %v6502, %v6774
  %v6776 = vpop.f32.mrb[0].mxu0
  %v6777 = vadd.f32 %v6504, %v6776
  %6778 = vmatprep.mubr.bf16.mxu0 %v5482
  %6779 = vmatmul.mubr.bf16.gmra.mrb[0].mxu0 %v5481
  %v6780 = vpop.f32.mrb[0].mxu0
  %v6781 = vadd.f32 %v6508, %v6780
  %v6782 = vpop.f32.mrb[0].mxu0
  %v6783 = vadd.f32 %v6510, %v6782
  %v6784 = vpop.f32.mrb[0].mxu0
  %v6785 = vadd.f32 %v6512, %v6784
  %v6786 = vpop.f32.mrb[0].mxu0
  %v6787 = vadd.f32 %v6514, %v6786
  %6788 = vmatprep.mubr.bf16.mxu0 %v5486
  %6789 = vmatmul.mubr.bf16.gmra.mrb[0].mxu0 %v5485
  %v6790 = vpop.f32.mrb[0].mxu0
  %v6791 = vadd.f32 %v6518, %v6790
  %v6792 = vpop.f32.mrb[0].mxu0
  %v6793 = vadd.f32 %v6520, %v6792
  %v6794 = vpop.f32.mrb[0].mxu0
  %v6795 = vadd.f32 %v6522, %v6794
  %v6796 = vpop.f32.mrb[0].mxu0
  %v6797 = vadd.f32 %v6524, %v6796
  %6798 = vmatprep.mubr.bf16.mxu0 %v5490
  %6799 = vmatmul.mubr.bf16.gmra.mrb[0].mxu0 %v5489
  %v6800 = vpop.f32.mrb[0].mxu0
  %v6801 = vadd.f32 %v6528, %v6800
  %v6802 = vpop.f32.mrb[0].mxu0
  %v6803 = vadd.f32 %v6530, %v6802
  %v6804 = vpop.f32.mrb[0].mxu0
  %v6805 = vadd.f32 %v6532, %v6804
  %v6806 = vpop.f32.mrb[0].mxu0
  %v6807 = vadd.f32 %v6534, %v6806
  %6808 = vmatprep.mubr.bf16.mxu0 %v5494
  %6809 = vmatmul.mubr.bf16.gmra.mrb[0].mxu0 %v5493
  %v6810 = vpop.f32.mrb[0].mxu0
  %v6811 = vadd.f32 %v6538, %v6810
  %v6812 = vpop.f32.mrb[0].mxu0
  %v6813 = vadd.f32 %v6540, %v6812
  %v6814 = vpop.f32.mrb[0].mxu0
  %v6815 = vadd.f32 %v6542, %v6814
  %v6816 = vpop.f32.mrb[0].mxu0
  %v6817 = vadd.f32 %v6544, %v6816
  %6818 = vmatprep.mubr.bf16.mxu0 %v5498
  %6819 = vmatmul.mubr.bf16.gmra.mrb[0].mxu0 %v5497
  %v6820 = vpop.f32.mrb[0].mxu0
  %v6821 = vadd.f32 %v6548, %v6820
  %v6822 = vpop.f32.mrb[0].mxu0
  %v6823 = vadd.f32 %v6550, %v6822
  %v6824 = vpop.f32.mrb[0].mxu0
  %v6825 = vadd.f32 %v6552, %v6824
  %v6826 = vpop.f32.mrb[0].mxu0
  %v6827 = vadd.f32 %v6554, %v6826
  %6828 = vmatprep.mubr.bf16.mxu0 %v5502
  %6829 = vmatmul.mubr.bf16.gmra.mrb[0].mxu0 %v5501
  %v6830 = vpop.f32.mrb[0].mxu0
  %v6831 = vadd.f32 %v6558, %v6830
  %v6832 = vpop.f32.mrb[0].mxu0
  %v6833 = vadd.f32 %v6560, %v6832
  %v6834 = vpop.f32.mrb[0].mxu0
  %v6835 = vadd.f32 %v6562, %v6834
  %v6836 = vpop.f32.mrb[0].mxu0
  %v6837 = vadd.f32 %v6564, %v6836
  %6838 = vdwg.mxu0
  %6839 = vmatprep.subr.bf16.mxu0 %v6040
  %6840 = vmatpush1.bf16.msra.mxu0 %v6039
  %6841 = vmatprep.subr.bf16.mxu0 %v6044
  %6842 = vmatpush1.bf16.msra.mxu0 %v6043
  %6843 = vmatprep.subr.bf16.mxu0 %v6048
  %6844 = vmatpush1.bf16.msra.mxu0 %v6047
  %6845 = vmatprep.subr.bf16.mxu0 %v6052
  %6846 = vmatpush1.bf16.msra.mxu0 %v6051
  %6847 = vmatprep.subr.bf16.mxu0 %v6056
  %6848 = vmatpush1.bf16.msra.mxu0 %v6055
  %6849 = vmatprep.subr.bf16.mxu0 %v6060
  %6850 = vmatpush1.bf16.msra.mxu0 %v6059
  %6851 = vmatprep.subr.bf16.mxu0 %v6064
  %6852 = vmatpush1.bf16.msra.mxu0 %v6063
  %6853 = vmatprep.subr.bf16.mxu0 %v6068
  %6854 = vmatpush1.bf16.msra.mxu0 %v6067
  %6855 = vmatprep.subr.bf16.mxu0 %v6072
  %6856 = vmatpush1.bf16.msra.mxu0 %v6071
  %6857 = vmatprep.subr.bf16.mxu0 %v6076
  %6858 = vmatpush1.bf16.msra.mxu0 %v6075
  %6859 = vmatprep.subr.bf16.mxu0 %v6080
  %6860 = vmatpush1.bf16.msra.mxu0 %v6079
  %6861 = vmatprep.subr.bf16.mxu0 %v6084
  %6862 = vmatpush1.bf16.msra.mxu0 %v6083
  %6863 = vmatprep.subr.bf16.mxu0 %v6088
  %6864 = vmatpush1.bf16.msra.mxu0 %v6087
  %6865 = vmatprep.subr.bf16.mxu0 %v6092
  %6866 = vmatpush1.bf16.msra.mxu0 %v6091
  %6867 = vmatprep.subr.bf16.mxu0 %v6096
  %6868 = vmatpush1.bf16.msra.mxu0 %v6095
  %6869 = vmatprep.subr.bf16.mxu0 %v6100
  %6870 = vmatpush1.bf16.msra.mxu0 %v6099
  %6871 = vmatprep.mubr.bf16.mxu0 %v5408
  %6872 = vmatmul.mubr.bf16.gmra.mrb[0].mxu0 %v5407
  %v6873 = vpop.f32.mrb[0].mxu0
  %v6874 = vadd.f32 %v5644, %v6873
  %v6875 = vpop.f32.mrb[0].mxu0
  %v6876 = vadd.f32 %v5648, %v6875
  %v6877 = vpop.f32.mrb[0].mxu0
  %v6878 = vadd.f32 %v5644, %v6877
  %v6879 = vpop.f32.mrb[0].mxu0
  %v6880 = vadd.f32 %v5648, %v6879
  %6881 = vmatprep.mubr.bf16.mxu0 %v5412
  %6882 = vmatmul.mubr.bf16.gmra.mrb[0].mxu0 %v5411
  %v6883 = vpop.f32.mrb[0].mxu0
  %v6884 = vadd.f32 %v5644, %v6883
  %v6885 = vpop.f32.mrb[0].mxu0
  %v6886 = vadd.f32 %v5648, %v6885
  %v6887 = vpop.f32.mrb[0].mxu0
  %v6888 = vadd.f32 %v5644, %v6887
  %v6889 = vpop.f32.mrb[0].mxu0
  %v6890 = vadd.f32 %v5648, %v6889
  %6891 = vmatprep.mubr.bf16.mxu0 %v5416
  %6892 = vmatmul.mubr.bf16.gmra.mrb[0].mxu0 %v5415
  %v6893 = vpop.f32.mrb[0].mxu0
  %v6894 = vadd.f32 %v5644, %v6893
  %v6895 = vpop.f32.mrb[0].mxu0
  %v6896 = vadd.f32 %v5648, %v6895
  %v6897 = vpop.f32.mrb[0].mxu0
  %v6898 = vadd.f32 %v5644, %v6897
  %v6899 = vpop.f32.mrb[0].mxu0
  %v6900 = vadd.f32 %v5648, %v6899
  %6901 = vmatprep.mubr.bf16.mxu0 %v5420
  %6902 = vmatmul.mubr.bf16.gmra.mrb[0].mxu0 %v5419
  %v6903 = vpop.f32.mrb[0].mxu0
  %v6904 = vadd.f32 %v5644, %v6903
  %v6905 = vpop.f32.mrb[0].mxu0
  %v6906 = vadd.f32 %v5648, %v6905
  %v6907 = vpop.f32.mrb[0].mxu0
  %v6908 = vadd.f32 %v5644, %v6907
  %v6909 = vpop.f32.mrb[0].mxu0
  %v6910 = vadd.f32 %v5648, %v6909
  %6911 = vmatprep.mubr.bf16.mxu0 %v5424
  %6912 = vmatmul.mubr.bf16.gmra.mrb[0].mxu0 %v5423
  %v6913 = vpop.f32.mrb[0].mxu0
  %v6914 = vadd.f32 %v5644, %v6913
  %v6915 = vpop.f32.mrb[0].mxu0
  %v6916 = vadd.f32 %v5648, %v6915
  %v6917 = vpop.f32.mrb[0].mxu0
  %v6918 = vadd.f32 %v5644, %v6917
  %v6919 = vpop.f32.mrb[0].mxu0
  %v6920 = vadd.f32 %v5648, %v6919
  %6921 = vmatprep.mubr.bf16.mxu0 %v5428
  %6922 = vmatmul.mubr.bf16.gmra.mrb[0].mxu0 %v5427
  %v6923 = vpop.f32.mrb[0].mxu0
  %v6924 = vadd.f32 %v5644, %v6923
  %v6925 = vpop.f32.mrb[0].mxu0
  %v6926 = vadd.f32 %v5648, %v6925
  %v6927 = vpop.f32.mrb[0].mxu0
  %v6928 = vadd.f32 %v5644, %v6927
  %v6929 = vpop.f32.mrb[0].mxu0
  %v6930 = vadd.f32 %v5648, %v6929
  %6931 = vmatprep.mubr.bf16.mxu0 %v5432
  %6932 = vmatmul.mubr.bf16.gmra.mrb[0].mxu0 %v5431
  %v6933 = vpop.f32.mrb[0].mxu0
  %v6934 = vadd.f32 %v5644, %v6933
  %v6935 = vpop.f32.mrb[0].mxu0
  %v6936 = vadd.f32 %v5648, %v6935
  %v6937 = vpop.f32.mrb[0].mxu0
  %v6938 = vadd.f32 %v5644, %v6937
  %v6939 = vpop.f32.mrb[0].mxu0
  %v6940 = vadd.f32 %v5648, %v6939
  %6941 = vmatprep.mubr.bf16.mxu0 %v5436
  %6942 = vmatmul.mubr.bf16.gmra.mrb[0].mxu0 %v5435
  %v6943 = vpop.f32.mrb[0].mxu0
  %v6944 = vadd.f32 %v5644, %v6943
  %v6945 = vpop.f32.mrb[0].mxu0
  %v6946 = vadd.f32 %v5648, %v6945
  %v6947 = vpop.f32.mrb[0].mxu0
  %v6948 = vadd.f32 %v5644, %v6947
  %v6949 = vpop.f32.mrb[0].mxu0
  %v6950 = vadd.f32 %v5648, %v6949
  %6951 = vmatprep.mubr.bf16.mxu0 %v5440
  %6952 = vmatmul.mubr.bf16.gmra.mrb[0].mxu0 %v5439
  %v6953 = vpop.f32.mrb[0].mxu0
  %v6954 = vadd.f32 %v5644, %v6953
  %v6955 = vpop.f32.mrb[0].mxu0
  %v6956 = vadd.f32 %v5648, %v6955
  %v6957 = vpop.f32.mrb[0].mxu0
  %v6958 = vadd.f32 %v5644, %v6957
  %v6959 = vpop.f32.mrb[0].mxu0
  %v6960 = vadd.f32 %v5648, %v6959
  %6961 = vmatprep.mubr.bf16.mxu0 %v5444
  %6962 = vmatmul.mubr.bf16.gmra.mrb[0].mxu0 %v5443
  %v6963 = vpop.f32.mrb[0].mxu0
  %v6964 = vadd.f32 %v5644, %v6963
  %v6965 = vpop.f32.mrb[0].mxu0
  %v6966 = vadd.f32 %v5648, %v6965
  %v6967 = vpop.f32.mrb[0].mxu0
  %v6968 = vadd.f32 %v5644, %v6967
  %v6969 = vpop.f32.mrb[0].mxu0
  %v6970 = vadd.f32 %v5648, %v6969
  %6971 = vmatprep.mubr.bf16.mxu0 %v5448
  %6972 = vmatmul.mubr.bf16.gmra.mrb[0].mxu0 %v5447
  %v6973 = vpop.f32.mrb[0].mxu0
  %v6974 = vadd.f32 %v5644, %v6973
  %v6975 = vpop.f32.mrb[0].mxu0
  %v6976 = vadd.f32 %v5648, %v6975
  %v6977 = vpop.f32.mrb[0].mxu0
  %v6978 = vadd.f32 %v5644, %v6977
  %v6979 = vpop.f32.mrb[0].mxu0
  %v6980 = vadd.f32 %v5648, %v6979
  %6981 = vmatprep.mubr.bf16.mxu0 %v5452
  %6982 = vmatmul.mubr.bf16.gmra.mrb[0].mxu0 %v5451
  %v6983 = vpop.f32.mrb[0].mxu0
  %v6984 = vadd.f32 %v5644, %v6983
  %v6985 = vpop.f32.mrb[0].mxu0
  %v6986 = vadd.f32 %v5648, %v6985
  %v6987 = vpop.f32.mrb[0].mxu0
  %v6988 = vadd.f32 %v5644, %v6987
  %v6989 = vpop.f32.mrb[0].mxu0
  %v6990 = vadd.f32 %v5648, %v6989
  %6991 = vmatprep.mubr.bf16.mxu0 %v5456
  %6992 = vmatmul.mubr.bf16.gmra.mrb[0].mxu0 %v5455
  %v6993 = vpop.f32.mrb[0].mxu0
  %v6994 = vadd.f32 %v5644, %v6993
  %v6995 = vpop.f32.mrb[0].mxu0
  %v6996 = vadd.f32 %v5648, %v6995
  %v6997 = vpop.f32.mrb[0].mxu0
  %v6998 = vadd.f32 %v5644, %v6997
  %v6999 = vpop.f32.mrb[0].mxu0
  %v7000 = vadd.f32 %v5648, %v6999
  %7001 = vmatprep.mubr.bf16.mxu0 %v5460
  %7002 = vmatmul.mubr.bf16.gmra.mrb[0].mxu0 %v5459
  %v7003 = vpop.f32.mrb[0].mxu0
  %v7004 = vadd.f32 %v5644, %v7003
  %v7005 = vpop.f32.mrb[0].mxu0
  %v7006 = vadd.f32 %v5648, %v7005
  %v7007 = vpop.f32.mrb[0].mxu0
  %v7008 = vadd.f32 %v5644, %v7007
  %v7009 = vpop.f32.mrb[0].mxu0
  %v7010 = vadd.f32 %v5648, %v7009
  %7011 = vmatprep.mubr.bf16.mxu0 %v5464
  %7012 = vmatmul.mubr.bf16.gmra.mrb[0].mxu0 %v5463
  %v7013 = vpop.f32.mrb[0].mxu0
  %v7014 = vadd.f32 %v5644, %v7013
  %v7015 = vpop.f32.mrb[0].mxu0
  %v7016 = vadd.f32 %v5648, %v7015
  %v7017 = vpop.f32.mrb[0].mxu0
  %v7018 = vadd.f32 %v5644, %v7017
  %v7019 = vpop.f32.mrb[0].mxu0
  %v7020 = vadd.f32 %v5648, %v7019
  %7021 = vmatprep.mubr.bf16.mxu0 %v5468
  %7022 = vmatmul.mubr.bf16.gmra.mrb[0].mxu0 %v5467
  %v7023 = vpop.f32.mrb[0].mxu0
  %v7024 = vadd.f32 %v5644, %v7023
  %v7025 = vpop.f32.mrb[0].mxu0
  %v7026 = vadd.f32 %v5648, %v7025
  %v7027 = vpop.f32.mrb[0].mxu0
  %v7028 = vadd.f32 %v5644, %v7027
  %v7029 = vpop.f32.mrb[0].mxu0
  %v7030 = vadd.f32 %v5648, %v7029
  %7031 = vmatprep.mubr.bf16.mxu0 %v5472
  %7032 = vmatmul.mubr.bf16.gmra.mrb[0].mxu0 %v5471
  %v7033 = vpop.f32.mrb[0].mxu0
  %v7034 = vadd.f32 %v5644, %v7033
  %v7035 = vpop.f32.mrb[0].mxu0
  %v7036 = vadd.f32 %v5648, %v7035
  %v7037 = vpop.f32.mrb[0].mxu0
  %v7038 = vadd.f32 %v5644, %v7037
  %v7039 = vpop.f32.mrb[0].mxu0
  %v7040 = vadd.f32 %v5648, %v7039
  %7041 = vmatprep.mubr.bf16.mxu0 %v5476
  %7042 = vmatmul.mubr.bf16.gmra.mrb[0].mxu0 %v5475
  %v7043 = vpop.f32.mrb[0].mxu0
  %v7044 = vadd.f32 %v5644, %v7043
  %v7045 = vpop.f32.mrb[0].mxu0
  %v7046 = vadd.f32 %v5648, %v7045
  %v7047 = vpop.f32.mrb[0].mxu0
  %v7048 = vadd.f32 %v5644, %v7047
  %v7049 = vpop.f32.mrb[0].mxu0
  %v7050 = vadd.f32 %v5648, %v7049
  %7051 = vmatprep.mubr.bf16.mxu0 %v5480
  %7052 = vmatmul.mubr.bf16.gmra.mrb[0].mxu0 %v5479
  %v7053 = vpop.f32.mrb[0].mxu0
  %v7054 = vadd.f32 %v5644, %v7053
  %v7055 = vpop.f32.mrb[0].mxu0
  %v7056 = vadd.f32 %v5648, %v7055
  %v7057 = vpop.f32.mrb[0].mxu0
  %v7058 = vadd.f32 %v5644, %v7057
  %v7059 = vpop.f32.mrb[0].mxu0
  %v7060 = vadd.f32 %v5648, %v7059
  %7061 = vmatprep.mubr.bf16.mxu0 %v5484
  %7062 = vmatmul.mubr.bf16.gmra.mrb[0].mxu0 %v5483
  %v7063 = vpop.f32.mrb[0].mxu0
  %v7064 = vadd.f32 %v5644, %v7063
  %v7065 = vpop.f32.mrb[0].mxu0
  %v7066 = vadd.f32 %v5648, %v7065
  %v7067 = vpop.f32.mrb[0].mxu0
  %v7068 = vadd.f32 %v5644, %v7067
  %v7069 = vpop.f32.mrb[0].mxu0
  %v7070 = vadd.f32 %v5648, %v7069
  %7071 = vmatprep.mubr.bf16.mxu0 %v5488
  %7072 = vmatmul.mubr.bf16.gmra.mrb[0].mxu0 %v5487
  %v7073 = vpop.f32.mrb[0].mxu0
  %v7074 = vadd.f32 %v5644, %v7073
  %v7075 = vpop.f32.mrb[0].mxu0
  %v7076 = vadd.f32 %v5648, %v7075
  %v7077 = vpop.f32.mrb[0].mxu0
  %v7078 = vadd.f32 %v5644, %v7077
  %v7079 = vpop.f32.mrb[0].mxu0
  %v7080 = vadd.f32 %v5648, %v7079
  %7081 = vmatprep.mubr.bf16.mxu0 %v5492
  %7082 = vmatmul.mubr.bf16.gmra.mrb[0].mxu0 %v5491
  %v7083 = vpop.f32.mrb[0].mxu0
  %v7084 = vadd.f32 %v5644, %v7083
  %v7085 = vpop.f32.mrb[0].mxu0
  %v7086 = vadd.f32 %v5648, %v7085
  %v7087 = vpop.f32.mrb[0].mxu0
  %v7088 = vadd.f32 %v5644, %v7087
  %v7089 = vpop.f32.mrb[0].mxu0
  %v7090 = vadd.f32 %v5648, %v7089
  %7091 = vmatprep.mubr.bf16.mxu0 %v5496
  %7092 = vmatmul.mubr.bf16.gmra.mrb[0].mxu0 %v5495
  %v7093 = vpop.f32.mrb[0].mxu0
  %v7094 = vadd.f32 %v5644, %v7093
  %v7095 = vpop.f32.mrb[0].mxu0
  %v7096 = vadd.f32 %v5648, %v7095
  %v7097 = vpop.f32.mrb[0].mxu0
  %v7098 = vadd.f32 %v5644, %v7097
  %v7099 = vpop.f32.mrb[0].mxu0
  %v7100 = vadd.f32 %v5648, %v7099
  %7101 = vmatprep.mubr.bf16.mxu0 %v5500
  %7102 = vmatmul.mubr.bf16.gmra.mrb[0].mxu0 %v5499
  %v7103 = vpop.f32.mrb[0].mxu0
  %v7104 = vadd.f32 %v5644, %v7103
  %v7105 = vpop.f32.mrb[0].mxu0
  %v7106 = vadd.f32 %v5648, %v7105
  %v7107 = vpop.f32.mrb[0].mxu0
  %v7108 = vadd.f32 %v5644, %v7107
  %v7109 = vpop.f32.mrb[0].mxu0
  %v7110 = vadd.f32 %v5648, %v7109
  %7111 = vdwg.mxu0
  %7112 = vmatprep.subr.bf16.mxu0 %v6104
  %7113 = vmatpush1.bf16.msra.mxu0 %v6103
  %7114 = vmatprep.subr.bf16.mxu0 %v6108
  %7115 = vmatpush1.bf16.msra.mxu0 %v6107
  %7116 = vmatprep.subr.bf16.mxu0 %v6112
  %7117 = vmatpush1.bf16.msra.mxu0 %v6111
  %7118 = vmatprep.subr.bf16.mxu0 %v6116
  %7119 = vmatpush1.bf16.msra.mxu0 %v6115
  %7120 = vmatprep.subr.bf16.mxu0 %v6120
  %7121 = vmatpush1.bf16.msra.mxu0 %v6119
  %7122 = vmatprep.subr.bf16.mxu0 %v6124
  %7123 = vmatpush1.bf16.msra.mxu0 %v6123
  %7124 = vmatprep.subr.bf16.mxu0 %v6128
  %7125 = vmatpush1.bf16.msra.mxu0 %v6127
  %7126 = vmatprep.subr.bf16.mxu0 %v6132
  %7127 = vmatpush1.bf16.msra.mxu0 %v6131
  %7128 = vmatprep.subr.bf16.mxu0 %v6136
  %7129 = vmatpush1.bf16.msra.mxu0 %v6135
  %7130 = vmatprep.subr.bf16.mxu0 %v6140
  %7131 = vmatpush1.bf16.msra.mxu0 %v6139
  %7132 = vmatprep.subr.bf16.mxu0 %v6144
  %7133 = vmatpush1.bf16.msra.mxu0 %v6143
  %7134 = vmatprep.subr.bf16.mxu0 %v6148
  %7135 = vmatpush1.bf16.msra.mxu0 %v6147
  %7136 = vmatprep.subr.bf16.mxu0 %v6152
  %7137 = vmatpush1.bf16.msra.mxu0 %v6151
  %7138 = vmatprep.subr.bf16.mxu0 %v6156
  %7139 = vmatpush1.bf16.msra.mxu0 %v6155
  %7140 = vmatprep.subr.bf16.mxu0 %v6160
  %7141 = vmatpush1.bf16.msra.mxu0 %v6159
  %7142 = vmatprep.subr.bf16.mxu0 %v6164
  %7143 = vmatpush1.bf16.msra.mxu0 %v6163
  %7144 = vmatprep.mubr.bf16.mxu0 %v5410
  %7145 = vmatmul.mubr.bf16.gmra.mrb[0].mxu0 %v5409
  %v7146 = vpop.f32.mrb[0].mxu0
  %v7147 = vadd.f32 %v6874, %v7146
  %v7148 = vpop.f32.mrb[0].mxu0
  %v7149 = vadd.f32 %v6876, %v7148
  %v7150 = vpop.f32.mrb[0].mxu0
  %v7151 = vadd.f32 %v6878, %v7150
  %v7152 = vpop.f32.mrb[0].mxu0
  %v7153 = vadd.f32 %v6880, %v7152
  %7154 = vmatprep.mubr.bf16.mxu0 %v5414
  %7155 = vmatmul.mubr.bf16.gmra.mrb[0].mxu0 %v5413
  %v7156 = vpop.f32.mrb[0].mxu0
  %v7157 = vadd.f32 %v6884, %v7156
  %v7158 = vpop.f32.mrb[0].mxu0
  %v7159 = vadd.f32 %v6886, %v7158
  %v7160 = vpop.f32.mrb[0].mxu0
  %v7161 = vadd.f32 %v6888, %v7160
  %v7162 = vpop.f32.mrb[0].mxu0
  %v7163 = vadd.f32 %v6890, %v7162
  %7164 = vmatprep.mubr.bf16.mxu0 %v5418
  %7165 = vmatmul.mubr.bf16.gmra.mrb[0].mxu0 %v5417
  %v7166 = vpop.f32.mrb[0].mxu0
  %v7167 = vadd.f32 %v6894, %v7166
  %v7168 = vpop.f32.mrb[0].mxu0
  %v7169 = vadd.f32 %v6896, %v7168
  %v7170 = vpop.f32.mrb[0].mxu0
  %v7171 = vadd.f32 %v6898, %v7170
  %v7172 = vpop.f32.mrb[0].mxu0
  %v7173 = vadd.f32 %v6900, %v7172
  %7174 = vmatprep.mubr.bf16.mxu0 %v5422
  %7175 = vmatmul.mubr.bf16.gmra.mrb[0].mxu0 %v5421
  %v7176 = vpop.f32.mrb[0].mxu0
  %v7177 = vadd.f32 %v6904, %v7176
  %v7178 = vpop.f32.mrb[0].mxu0
  %v7179 = vadd.f32 %v6906, %v7178
  %v7180 = vpop.f32.mrb[0].mxu0
  %v7181 = vadd.f32 %v6908, %v7180
  %v7182 = vpop.f32.mrb[0].mxu0
  %v7183 = vadd.f32 %v6910, %v7182
  %7184 = vmatprep.mubr.bf16.mxu0 %v5426
  %7185 = vmatmul.mubr.bf16.gmra.mrb[0].mxu0 %v5425
  %v7186 = vpop.f32.mrb[0].mxu0
  %v7187 = vadd.f32 %v6914, %v7186
  %v7188 = vpop.f32.mrb[0].mxu0
  %v7189 = vadd.f32 %v6916, %v7188
  %v7190 = vpop.f32.mrb[0].mxu0
  %v7191 = vadd.f32 %v6918, %v7190
  %v7192 = vpop.f32.mrb[0].mxu0
  %v7193 = vadd.f32 %v6920, %v7192
  %7194 = vmatprep.mubr.bf16.mxu0 %v5430
  %7195 = vmatmul.mubr.bf16.gmra.mrb[0].mxu0 %v5429
  %v7196 = vpop.f32.mrb[0].mxu0
  %v7197 = vadd.f32 %v6924, %v7196
  %v7198 = vpop.f32.mrb[0].mxu0
  %v7199 = vadd.f32 %v6926, %v7198
  %v7200 = vpop.f32.mrb[0].mxu0
  %v7201 = vadd.f32 %v6928, %v7200
  %v7202 = vpop.f32.mrb[0].mxu0
  %v7203 = vadd.f32 %v6930, %v7202
  %7204 = vmatprep.mubr.bf16.mxu0 %v5434
  %7205 = vmatmul.mubr.bf16.gmra.mrb[0].mxu0 %v5433
  %v7206 = vpop.f32.mrb[0].mxu0
  %v7207 = vadd.f32 %v6934, %v7206
  %v7208 = vpop.f32.mrb[0].mxu0
  %v7209 = vadd.f32 %v6936, %v7208
  %v7210 = vpop.f32.mrb[0].mxu0
  %v7211 = vadd.f32 %v6938, %v7210
  %v7212 = vpop.f32.mrb[0].mxu0
  %v7213 = vadd.f32 %v6940, %v7212
  %7214 = vmatprep.mubr.bf16.mxu0 %v5438
  %7215 = vmatmul.mubr.bf16.gmra.mrb[0].mxu0 %v5437
  %v7216 = vpop.f32.mrb[0].mxu0
  %v7217 = vadd.f32 %v6944, %v7216
  %v7218 = vpop.f32.mrb[0].mxu0
  %v7219 = vadd.f32 %v6946, %v7218
  %v7220 = vpop.f32.mrb[0].mxu0
  %v7221 = vadd.f32 %v6948, %v7220
  %v7222 = vpop.f32.mrb[0].mxu0
  %v7223 = vadd.f32 %v6950, %v7222
  %7224 = vmatprep.mubr.bf16.mxu0 %v5442
  %7225 = vmatmul.mubr.bf16.gmra.mrb[0].mxu0 %v5441
  %v7226 = vpop.f32.mrb[0].mxu0
  %v7227 = vadd.f32 %v6954, %v7226
  %v7228 = vpop.f32.mrb[0].mxu0
  %v7229 = vadd.f32 %v6956, %v7228
  %v7230 = vpop.f32.mrb[0].mxu0
  %v7231 = vadd.f32 %v6958, %v7230
  %v7232 = vpop.f32.mrb[0].mxu0
  %v7233 = vadd.f32 %v6960, %v7232
  %7234 = vmatprep.mubr.bf16.mxu0 %v5446
  %7235 = vmatmul.mubr.bf16.gmra.mrb[0].mxu0 %v5445
  %v7236 = vpop.f32.mrb[0].mxu0
  %v7237 = vadd.f32 %v6964, %v7236
  %v7238 = vpop.f32.mrb[0].mxu0
  %v7239 = vadd.f32 %v6966, %v7238
  %v7240 = vpop.f32.mrb[0].mxu0
  %v7241 = vadd.f32 %v6968, %v7240
  %v7242 = vpop.f32.mrb[0].mxu0
  %v7243 = vadd.f32 %v6970, %v7242
  %7244 = vmatprep.mubr.bf16.mxu0 %v5450
  %7245 = vmatmul.mubr.bf16.gmra.mrb[0].mxu0 %v5449
  %v7246 = vpop.f32.mrb[0].mxu0
  %v7247 = vadd.f32 %v6974, %v7246
  %v7248 = vpop.f32.mrb[0].mxu0
  %v7249 = vadd.f32 %v6976, %v7248
  %v7250 = vpop.f32.mrb[0].mxu0
  %v7251 = vadd.f32 %v6978, %v7250
  %v7252 = vpop.f32.mrb[0].mxu0
  %v7253 = vadd.f32 %v6980, %v7252
  %7254 = vmatprep.mubr.bf16.mxu0 %v5454
  %7255 = vmatmul.mubr.bf16.gmra.mrb[0].mxu0 %v5453
  %v7256 = vpop.f32.mrb[0].mxu0
  %v7257 = vadd.f32 %v6984, %v7256
  %v7258 = vpop.f32.mrb[0].mxu0
  %v7259 = vadd.f32 %v6986, %v7258
  %v7260 = vpop.f32.mrb[0].mxu0
  %v7261 = vadd.f32 %v6988, %v7260
  %v7262 = vpop.f32.mrb[0].mxu0
  %v7263 = vadd.f32 %v6990, %v7262
  %7264 = vmatprep.mubr.bf16.mxu0 %v5458
  %7265 = vmatmul.mubr.bf16.gmra.mrb[0].mxu0 %v5457
  %v7266 = vpop.f32.mrb[0].mxu0
  %v7267 = vadd.f32 %v6994, %v7266
  %v7268 = vpop.f32.mrb[0].mxu0
  %v7269 = vadd.f32 %v6996, %v7268
  %v7270 = vpop.f32.mrb[0].mxu0
  %v7271 = vadd.f32 %v6998, %v7270
  %v7272 = vpop.f32.mrb[0].mxu0
  %v7273 = vadd.f32 %v7000, %v7272
  %7274 = vmatprep.mubr.bf16.mxu0 %v5462
  %7275 = vmatmul.mubr.bf16.gmra.mrb[0].mxu0 %v5461
  %v7276 = vpop.f32.mrb[0].mxu0
  %v7277 = vadd.f32 %v7004, %v7276
  %v7278 = vpop.f32.mrb[0].mxu0
  %v7279 = vadd.f32 %v7006, %v7278
  %v7280 = vpop.f32.mrb[0].mxu0
  %v7281 = vadd.f32 %v7008, %v7280
  %v7282 = vpop.f32.mrb[0].mxu0
  %v7283 = vadd.f32 %v7010, %v7282
  %7284 = vmatprep.mubr.bf16.mxu0 %v5466
  %7285 = vmatmul.mubr.bf16.gmra.mrb[0].mxu0 %v5465
  %v7286 = vpop.f32.mrb[0].mxu0
  %v7287 = vadd.f32 %v7014, %v7286
  %v7288 = vpop.f32.mrb[0].mxu0
  %v7289 = vadd.f32 %v7016, %v7288
  %v7290 = vpop.f32.mrb[0].mxu0
  %v7291 = vadd.f32 %v7018, %v7290
  %v7292 = vpop.f32.mrb[0].mxu0
  %v7293 = vadd.f32 %v7020, %v7292
  %7294 = vmatprep.mubr.bf16.mxu0 %v5470
  %7295 = vmatmul.mubr.bf16.gmra.mrb[0].mxu0 %v5469
  %v7296 = vpop.f32.mrb[0].mxu0
  %v7297 = vadd.f32 %v7024, %v7296
  %v7298 = vpop.f32.mrb[0].mxu0
  %v7299 = vadd.f32 %v7026, %v7298
  %v7300 = vpop.f32.mrb[0].mxu0
  %v7301 = vadd.f32 %v7028, %v7300
  %v7302 = vpop.f32.mrb[0].mxu0
  %v7303 = vadd.f32 %v7030, %v7302
  %7304 = vmatprep.mubr.bf16.mxu0 %v5474
  %7305 = vmatmul.mubr.bf16.gmra.mrb[0].mxu0 %v5473
  %v7306 = vpop.f32.mrb[0].mxu0
  %v7307 = vadd.f32 %v7034, %v7306
  %v7308 = vpop.f32.mrb[0].mxu0
  %v7309 = vadd.f32 %v7036, %v7308
  %v7310 = vpop.f32.mrb[0].mxu0
  %v7311 = vadd.f32 %v7038, %v7310
  %v7312 = vpop.f32.mrb[0].mxu0
  %v7313 = vadd.f32 %v7040, %v7312
  %7314 = vmatprep.mubr.bf16.mxu0 %v5478
  %7315 = vmatmul.mubr.bf16.gmra.mrb[0].mxu0 %v5477
  %v7316 = vpop.f32.mrb[0].mxu0
  %v7317 = vadd.f32 %v7044, %v7316
  %v7318 = vpop.f32.mrb[0].mxu0
  %v7319 = vadd.f32 %v7046, %v7318
  %v7320 = vpop.f32.mrb[0].mxu0
  %v7321 = vadd.f32 %v7048, %v7320
  %v7322 = vpop.f32.mrb[0].mxu0
  %v7323 = vadd.f32 %v7050, %v7322
  %7324 = vmatprep.mubr.bf16.mxu0 %v5482
  %7325 = vmatmul.mubr.bf16.gmra.mrb[0].mxu0 %v5481
  %v7326 = vpop.f32.mrb[0].mxu0
  %v7327 = vadd.f32 %v7054, %v7326
  %v7328 = vpop.f32.mrb[0].mxu0
  %v7329 = vadd.f32 %v7056, %v7328
  %v7330 = vpop.f32.mrb[0].mxu0
  %v7331 = vadd.f32 %v7058, %v7330
  %v7332 = vpop.f32.mrb[0].mxu0
  %v7333 = vadd.f32 %v7060, %v7332
  %7334 = vmatprep.mubr.bf16.mxu0 %v5486
  %7335 = vmatmul.mubr.bf16.gmra.mrb[0].mxu0 %v5485
  %v7336 = vpop.f32.mrb[0].mxu0
  %v7337 = vadd.f32 %v7064, %v7336
  %v7338 = vpop.f32.mrb[0].mxu0
  %v7339 = vadd.f32 %v7066, %v7338
  %v7340 = vpop.f32.mrb[0].mxu0
  %v7341 = vadd.f32 %v7068, %v7340
  %v7342 = vpop.f32.mrb[0].mxu0
  %v7343 = vadd.f32 %v7070, %v7342
  %7344 = vmatprep.mubr.bf16.mxu0 %v5490
  %7345 = vmatmul.mubr.bf16.gmra.mrb[0].mxu0 %v5489
  %v7346 = vpop.f32.mrb[0].mxu0
  %v7347 = vadd.f32 %v7074, %v7346
  %v7348 = vpop.f32.mrb[0].mxu0
  %v7349 = vadd.f32 %v7076, %v7348
  %v7350 = vpop.f32.mrb[0].mxu0
  %v7351 = vadd.f32 %v7078, %v7350
  %v7352 = vpop.f32.mrb[0].mxu0
  %v7353 = vadd.f32 %v7080, %v7352
  %7354 = vmatprep.mubr.bf16.mxu0 %v5494
  %7355 = vmatmul.mubr.bf16.gmra.mrb[0].mxu0 %v5493
  %v7356 = vpop.f32.mrb[0].mxu0
  %v7357 = vadd.f32 %v7084, %v7356
  %v7358 = vpop.f32.mrb[0].mxu0
  %v7359 = vadd.f32 %v7086, %v7358
  %v7360 = vpop.f32.mrb[0].mxu0
  %v7361 = vadd.f32 %v7088, %v7360
  %v7362 = vpop.f32.mrb[0].mxu0
  %v7363 = vadd.f32 %v7090, %v7362
  %7364 = vmatprep.mubr.bf16.mxu0 %v5498
  %7365 = vmatmul.mubr.bf16.gmra.mrb[0].mxu0 %v5497
  %v7366 = vpop.f32.mrb[0].mxu0
  %v7367 = vadd.f32 %v7094, %v7366
  %v7368 = vpop.f32.mrb[0].mxu0
  %v7369 = vadd.f32 %v7096, %v7368
  %v7370 = vpop.f32.mrb[0].mxu0
  %v7371 = vadd.f32 %v7098, %v7370
  %v7372 = vpop.f32.mrb[0].mxu0
  %v7373 = vadd.f32 %v7100, %v7372
  %7374 = vmatprep.mubr.bf16.mxu0 %v5502
  %7375 = vmatmul.mubr.bf16.gmra.mrb[0].mxu0 %v5501
  %v7376 = vpop.f32.mrb[0].mxu0
  %v7377 = vadd.f32 %v7104, %v7376
  %v7378 = vpop.f32.mrb[0].mxu0
  %v7379 = vadd.f32 %v7106, %v7378
  %v7380 = vpop.f32.mrb[0].mxu0
  %v7381 = vadd.f32 %v7108, %v7380
  %v7382 = vpop.f32.mrb[0].mxu0
  %v7383 = vadd.f32 %v7110, %v7382
  %7384 = vdwg.mxu0
  %v7385 = vmax.f32 %v6601, 0.0
  %v7386 = vmax.f32 %v6603, 0.0
  %v7387 = vmax.f32 %v7147, 0.0
  %v7388 = vmax.f32 %v7149, 0.0
  %v7389 = vmax.f32 %v6605, 0.0
  %v7390 = vmax.f32 %v6607, 0.0
  %v7391 = vmax.f32 %v7151, 0.0
  %v7392 = vmax.f32 %v7153, 0.0
  %v7393 = vmax.f32 %v6611, 0.0
  %v7394 = vmax.f32 %v6613, 0.0
  %v7395 = vmax.f32 %v7157, 0.0
  %v7396 = vmax.f32 %v7159, 0.0
  %v7397 = vmax.f32 %v6615, 0.0
  %v7398 = vmax.f32 %v6617, 0.0
  %v7399 = vmax.f32 %v7161, 0.0
  %v7400 = vmax.f32 %v7163, 0.0
  %v7401 = vmax.f32 %v6621, 0.0
  %v7402 = vmax.f32 %v6623, 0.0
  %v7403 = vmax.f32 %v7167, 0.0
  %v7404 = vmax.f32 %v7169, 0.0
  %v7405 = vmax.f32 %v6625, 0.0
  %v7406 = vmax.f32 %v6627, 0.0
  %v7407 = vmax.f32 %v7171, 0.0
  %v7408 = vmax.f32 %v7173, 0.0
  %v7409 = vmax.f32 %v6631, 0.0
  %v7410 = vmax.f32 %v6633, 0.0
  %v7411 = vmax.f32 %v7177, 0.0
  %v7412 = vmax.f32 %v7179, 0.0
  %v7413 = vmax.f32 %v6635, 0.0
  %v7414 = vmax.f32 %v6637, 0.0
  %v7415 = vmax.f32 %v7181, 0.0
  %v7416 = vmax.f32 %v7183, 0.0
  %v7417 = vmax.f32 %v6641, 0.0
  %v7418 = vmax.f32 %v6643, 0.0
  %v7419 = vmax.f32 %v7187, 0.0
  %v7420 = vmax.f32 %v7189, 0.0
  %v7421 = vmax.f32 %v6645, 0.0
  %v7422 = vmax.f32 %v6647, 0.0
  %v7423 = vmax.f32 %v7191, 0.0
  %v7424 = vmax.f32 %v7193, 0.0
  %v7425 = vmax.f32 %v6651, 0.0
  %v7426 = vmax.f32 %v6653, 0.0
  %v7427 = vmax.f32 %v7197, 0.0
  %v7428 = vmax.f32 %v7199, 0.0
  %v7429 = vmax.f32 %v6655, 0.0
  %v7430 = vmax.f32 %v6657, 0.0
  %v7431 = vmax.f32 %v7201, 0.0
  %v7432 = vmax.f32 %v7203, 0.0
  %v7433 = vmax.f32 %v6661, 0.0
  %v7434 = vmax.f32 %v6663, 0.0
  %v7435 = vmax.f32 %v7207, 0.0
  %v7436 = vmax.f32 %v7209, 0.0
  %v7437 = vmax.f32 %v6665, 0.0
  %v7438 = vmax.f32 %v6667, 0.0
  %v7439 = vmax.f32 %v7211, 0.0
  %v7440 = vmax.f32 %v7213, 0.0
  %v7441 = vmax.f32 %v6671, 0.0
  %v7442 = vmax.f32 %v6673, 0.0
  %v7443 = vmax.f32 %v7217, 0.0
  %v7444 = vmax.f32 %v7219, 0.0
  %v7445 = vmax.f32 %v6675, 0.0
  %v7446 = vmax.f32 %v6677, 0.0
  %v7447 = vmax.f32 %v7221, 0.0
  %v7448 = vmax.f32 %v7223, 0.0
  %v7449 = vmax.f32 %v6681, 0.0
  %v7450 = vmax.f32 %v6683, 0.0
  %v7451 = vmax.f32 %v7227, 0.0
  %v7452 = vmax.f32 %v7229, 0.0
  %v7453 = vmax.f32 %v6685, 0.0
  %v7454 = vmax.f32 %v6687, 0.0
  %v7455 = vmax.f32 %v7231, 0.0
  %v7456 = vmax.f32 %v7233, 0.0
  %v7457 = vmax.f32 %v6691, 0.0
  %v7458 = vmax.f32 %v6693, 0.0
  %v7459 = vmax.f32 %v7237, 0.0
  %v7460 = vmax.f32 %v7239, 0.0
  %v7461 = vmax.f32 %v6695, 0.0
  %v7462 = vmax.f32 %v6697, 0.0
  %v7463 = vmax.f32 %v7241, 0.0
  %v7464 = vmax.f32 %v7243, 0.0
  %v7465 = vmax.f32 %v6701, 0.0
  %v7466 = vmax.f32 %v6703, 0.0
  %v7467 = vmax.f32 %v7247, 0.0
  %v7468 = vmax.f32 %v7249, 0.0
  %v7469 = vmax.f32 %v6705, 0.0
  %v7470 = vmax.f32 %v6707, 0.0
  %v7471 = vmax.f32 %v7251, 0.0
  %v7472 = vmax.f32 %v7253, 0.0
  %v7473 = vmax.f32 %v6711, 0.0
  %v7474 = vmax.f32 %v6713, 0.0
  %v7475 = vmax.f32 %v7257, 0.0
  %v7476 = vmax.f32 %v7259, 0.0
  %v7477 = vmax.f32 %v6715, 0.0
  %v7478 = vmax.f32 %v6717, 0.0
  %v7479 = vmax.f32 %v7261, 0.0
  %v7480 = vmax.f32 %v7263, 0.0
  %v7481 = vmax.f32 %v6721, 0.0
  %v7482 = vmax.f32 %v6723, 0.0
  %v7483 = vmax.f32 %v7267, 0.0
  %v7484 = vmax.f32 %v7269, 0.0
  %v7485 = vmax.f32 %v6725, 0.0
  %v7486 = vmax.f32 %v6727, 0.0
  %v7487 = vmax.f32 %v7271, 0.0
  %v7488 = vmax.f32 %v7273, 0.0
  %v7489 = vmax.f32 %v6731, 0.0
  %v7490 = vmax.f32 %v6733, 0.0
  %v7491 = vmax.f32 %v7277, 0.0
  %v7492 = vmax.f32 %v7279, 0.0
  %v7493 = vmax.f32 %v6735, 0.0
  %v7494 = vmax.f32 %v6737, 0.0
  %v7495 = vmax.f32 %v7281, 0.0
  %v7496 = vmax.f32 %v7283, 0.0
  %v7497 = vmax.f32 %v6741, 0.0
  %v7498 = vmax.f32 %v6743, 0.0
  %v7499 = vmax.f32 %v7287, 0.0
  %v7500 = vmax.f32 %v7289, 0.0
  %v7501 = vmax.f32 %v6745, 0.0
  %v7502 = vmax.f32 %v6747, 0.0
  %v7503 = vmax.f32 %v7291, 0.0
  %v7504 = vmax.f32 %v7293, 0.0
  %v7505 = vmax.f32 %v6751, 0.0
  %v7506 = vmax.f32 %v6753, 0.0
  %v7507 = vmax.f32 %v7297, 0.0
  %v7508 = vmax.f32 %v7299, 0.0
  %v7509 = vmax.f32 %v6755, 0.0
  %v7510 = vmax.f32 %v6757, 0.0
  %v7511 = vmax.f32 %v7301, 0.0
  %v7512 = vmax.f32 %v7303, 0.0
  %v7513 = vmax.f32 %v6761, 0.0
  %v7514 = vmax.f32 %v6763, 0.0
  %v7515 = vmax.f32 %v7307, 0.0
  %v7516 = vmax.f32 %v7309, 0.0
  %v7517 = vmax.f32 %v6765, 0.0
  %v7518 = vmax.f32 %v6767, 0.0
  %v7519 = vmax.f32 %v7311, 0.0
  %v7520 = vmax.f32 %v7313, 0.0
  %v7521 = vmax.f32 %v6771, 0.0
  %v7522 = vmax.f32 %v6773, 0.0
  %v7523 = vmax.f32 %v7317, 0.0
  %v7524 = vmax.f32 %v7319, 0.0
  %v7525 = vmax.f32 %v6775, 0.0
  %v7526 = vmax.f32 %v6777, 0.0
  %v7527 = vmax.f32 %v7321, 0.0
  %v7528 = vmax.f32 %v7323, 0.0
  %v7529 = vmax.f32 %v6781, 0.0
  %v7530 = vmax.f32 %v6783, 0.0
  %v7531 = vmax.f32 %v7327, 0.0
  %v7532 = vmax.f32 %v7329, 0.0
  %v7533 = vmax.f32 %v6785, 0.0
  %v7534 = vmax.f32 %v6787, 0.0
  %v7535 = vmax.f32 %v7331, 0.0
  %v7536 = vmax.f32 %v7333, 0.0
  %v7537 = vmax.f32 %v6791, 0.0
  %v7538 = vmax.f32 %v6793, 0.0
  %v7539 = vmax.f32 %v7337, 0.0
  %v7540 = vmax.f32 %v7339, 0.0
  %v7541 = vmax.f32 %v6795, 0.0
  %v7542 = vmax.f32 %v6797, 0.0
  %v7543 = vmax.f32 %v7341, 0.0
  %v7544 = vmax.f32 %v7343, 0.0
  %v7545 = vmax.f32 %v6801, 0.0
  %v7546 = vmax.f32 %v6803, 0.0
  %v7547 = vmax.f32 %v7347, 0.0
  %v7548 = vmax.f32 %v7349, 0.0
  %v7549 = vmax.f32 %v6805, 0.0
  %v7550 = vmax.f32 %v6807, 0.0
  %v7551 = vmax.f32 %v7351, 0.0
  %v7552 = vmax.f32 %v7353, 0.0
  %v7553 = vmax.f32 %v6811, 0.0
  %v7554 = vmax.f32 %v6813, 0.0
  %v7555 = vmax.f32 %v7357, 0.0
  %v7556 = vmax.f32 %v7359, 0.0
  %v7557 = vmax.f32 %v6815, 0.0
  %v7558 = vmax.f32 %v6817, 0.0
  %v7559 = vmax.f32 %v7361, 0.0
  %v7560 = vmax.f32 %v7363, 0.0
  %v7561 = vmax.f32 %v6821, 0.0
  %v7562 = vmax.f32 %v6823, 0.0
  %v7563 = vmax.f32 %v7367, 0.0
  %v7564 = vmax.f32 %v7369, 0.0
  %v7565 = vmax.f32 %v6825, 0.0
  %v7566 = vmax.f32 %v6827, 0.0
  %v7567 = vmax.f32 %v7371, 0.0
  %v7568 = vmax.f32 %v7373, 0.0
  %v7569 = vmax.f32 %v6831, 0.0
  %v7570 = vmax.f32 %v6833, 0.0
  %v7571 = vmax.f32 %v7377, 0.0
  %v7572 = vmax.f32 %v7379, 0.0
  %v7573 = vmax.f32 %v6835, 0.0
  %v7574 = vmax.f32 %v6837, 0.0
  %v7575 = vmax.f32 %v7381, 0.0
  %v7576 = vmax.f32 %v7383, 0.0
  %v7577 = vpack.c.bf16 %v7389, %v7385
  %v7578 = vpack.c.bf16 %v7390, %v7386
  %v7579 = vpack.c.bf16 %v7391, %v7387
  %v7580 = vpack.c.bf16 %v7392, %v7388
  %v7581 = vpack.c.bf16 %v7397, %v7393
  %v7582 = vpack.c.bf16 %v7398, %v7394
  %v7583 = vpack.c.bf16 %v7399, %v7395
  %v7584 = vpack.c.bf16 %v7400, %v7396
  %v7585 = vpack.c.bf16 %v7405, %v7401
  %v7586 = vpack.c.bf16 %v7406, %v7402
  %v7587 = vpack.c.bf16 %v7407, %v7403
  %v7588 = vpack.c.bf16 %v7408, %v7404
  %v7589 = vpack.c.bf16 %v7413, %v7409
  %v7590 = vpack.c.bf16 %v7414, %v7410
  %v7591 = vpack.c.bf16 %v7415, %v7411
  %v7592 = vpack.c.bf16 %v7416, %v7412
  %v7593 = vpack.c.bf16 %v7421, %v7417
  %v7594 = vpack.c.bf16 %v7422, %v7418
  %v7595 = vpack.c.bf16 %v7423, %v7419
  %v7596 = vpack.c.bf16 %v7424, %v7420
  %v7597 = vpack.c.bf16 %v7429, %v7425
  %v7598 = vpack.c.bf16 %v7430, %v7426
  %v7599 = vpack.c.bf16 %v7431, %v7427
  %v7600 = vpack.c.bf16 %v7432, %v7428
  %v7601 = vpack.c.bf16 %v7437, %v7433
  %v7602 = vpack.c.bf16 %v7438, %v7434
  %v7603 = vpack.c.bf16 %v7439, %v7435
  %v7604 = vpack.c.bf16 %v7440, %v7436
  %v7605 = vpack.c.bf16 %v7445, %v7441
  %v7606 = vpack.c.bf16 %v7446, %v7442
  %v7607 = vpack.c.bf16 %v7447, %v7443
  %v7608 = vpack.c.bf16 %v7448, %v7444
  %v7609 = vpack.c.bf16 %v7453, %v7449
  %v7610 = vpack.c.bf16 %v7454, %v7450
  %v7611 = vpack.c.bf16 %v7455, %v7451
  %v7612 = vpack.c.bf16 %v7456, %v7452
  %v7613 = vpack.c.bf16 %v7461, %v7457
  %v7614 = vpack.c.bf16 %v7462, %v7458
  %v7615 = vpack.c.bf16 %v7463, %v7459
  %v7616 = vpack.c.bf16 %v7464, %v7460
  %v7617 = vpack.c.bf16 %v7469, %v7465
  %v7618 = vpack.c.bf16 %v7470, %v7466
  %v7619 = vpack.c.bf16 %v7471, %v7467
  %v7620 = vpack.c.bf16 %v7472, %v7468
  %v7621 = vpack.c.bf16 %v7477, %v7473
  %v7622 = vpack.c.bf16 %v7478, %v7474
  %v7623 = vpack.c.bf16 %v7479, %v7475
  %v7624 = vpack.c.bf16 %v7480, %v7476
  %v7625 = vpack.c.bf16 %v7485, %v7481
  %v7626 = vpack.c.bf16 %v7486, %v7482
  %v7627 = vpack.c.bf16 %v7487, %v7483
  %v7628 = vpack.c.bf16 %v7488, %v7484
  %v7629 = vpack.c.bf16 %v7493, %v7489
  %v7630 = vpack.c.bf16 %v7494, %v7490
  %v7631 = vpack.c.bf16 %v7495, %v7491
  %v7632 = vpack.c.bf16 %v7496, %v7492
  %v7633 = vpack.c.bf16 %v7501, %v7497
  %v7634 = vpack.c.bf16 %v7502, %v7498
  %v7635 = vpack.c.bf16 %v7503, %v7499
  %v7636 = vpack.c.bf16 %v7504, %v7500
  %v7637 = vpack.c.bf16 %v7509, %v7505
  %v7638 = vpack.c.bf16 %v7510, %v7506
  %v7639 = vpack.c.bf16 %v7511, %v7507
  %v7640 = vpack.c.bf16 %v7512, %v7508
  %v7641 = vpack.c.bf16 %v7517, %v7513
  %v7642 = vpack.c.bf16 %v7518, %v7514
  %v7643 = vpack.c.bf16 %v7519, %v7515
  %v7644 = vpack.c.bf16 %v7520, %v7516
  %v7645 = vpack.c.bf16 %v7525, %v7521
  %v7646 = vpack.c.bf16 %v7526, %v7522
  %v7647 = vpack.c.bf16 %v7527, %v7523
  %v7648 = vpack.c.bf16 %v7528, %v7524
  %v7649 = vpack.c.bf16 %v7533, %v7529
  %v7650 = vpack.c.bf16 %v7534, %v7530
  %v7651 = vpack.c.bf16 %v7535, %v7531
  %v7652 = vpack.c.bf16 %v7536, %v7532
  %v7653 = vpack.c.bf16 %v7541, %v7537
  %v7654 = vpack.c.bf16 %v7542, %v7538
  %v7655 = vpack.c.bf16 %v7543, %v7539
  %v7656 = vpack.c.bf16 %v7544, %v7540
  %v7657 = vpack.c.bf16 %v7549, %v7545
  %v7658 = vpack.c.bf16 %v7550, %v7546
  %v7659 = vpack.c.bf16 %v7551, %v7547
  %v7660 = vpack.c.bf16 %v7552, %v7548
  %v7661 = vpack.c.bf16 %v7557, %v7553
  %v7662 = vpack.c.bf16 %v7558, %v7554
  %v7663 = vpack.c.bf16 %v7559, %v7555
  %v7664 = vpack.c.bf16 %v7560, %v7556
  %v7665 = vpack.c.bf16 %v7565, %v7561
  %v7666 = vpack.c.bf16 %v7566, %v7562
  %v7667 = vpack.c.bf16 %v7567, %v7563
  %v7668 = vpack.c.bf16 %v7568, %v7564
  %v7669 = vpack.c.bf16 %v7573, %v7569
  %v7670 = vpack.c.bf16 %v7574, %v7570
  %v7671 = vpack.c.bf16 %v7575, %v7571
  %v7672 = vpack.c.bf16 %v7576, %v7572
  %v7673 = vunpack.c.l.bf16 %v7577
  %v7674 = vunpack.c.l.bf16 %v7578
  %v7675 = vunpack.c.l.bf16 %v7579
  %v7676 = vunpack.c.l.bf16 %v7580
  %v7677 = vunpack.c.h.bf16 %v7577
  %v7678 = vunpack.c.h.bf16 %v7578
  %v7679 = vunpack.c.h.bf16 %v7579
  %v7680 = vunpack.c.h.bf16 %v7580
  %v7681 = vunpack.c.l.bf16 %v7581
  %v7682 = vunpack.c.l.bf16 %v7582
  %v7683 = vunpack.c.l.bf16 %v7583
  %v7684 = vunpack.c.l.bf16 %v7584
  %v7685 = vunpack.c.h.bf16 %v7581
  %v7686 = vunpack.c.h.bf16 %v7582
  %v7687 = vunpack.c.h.bf16 %v7583
  %v7688 = vunpack.c.h.bf16 %v7584
  %v7689 = vunpack.c.l.bf16 %v7585
  %v7690 = vunpack.c.l.bf16 %v7586
  %v7691 = vunpack.c.l.bf16 %v7587
  %v7692 = vunpack.c.l.bf16 %v7588
  %v7693 = vunpack.c.h.bf16 %v7585
  %v7694 = vunpack.c.h.bf16 %v7586
  %v7695 = vunpack.c.h.bf16 %v7587
  %v7696 = vunpack.c.h.bf16 %v7588
  %v7697 = vunpack.c.l.bf16 %v7589
  %v7698 = vunpack.c.l.bf16 %v7590
  %v7699 = vunpack.c.l.bf16 %v7591
  %v7700 = vunpack.c.l.bf16 %v7592
  %v7701 = vunpack.c.h.bf16 %v7589
  %v7702 = vunpack.c.h.bf16 %v7590
  %v7703 = vunpack.c.h.bf16 %v7591
  %v7704 = vunpack.c.h.bf16 %v7592
  %v7705 = vunpack.c.l.bf16 %v7593
  %v7706 = vunpack.c.l.bf16 %v7594
  %v7707 = vunpack.c.l.bf16 %v7595
  %v7708 = vunpack.c.l.bf16 %v7596
  %v7709 = vunpack.c.h.bf16 %v7593
  %v7710 = vunpack.c.h.bf16 %v7594
  %v7711 = vunpack.c.h.bf16 %v7595
  %v7712 = vunpack.c.h.bf16 %v7596
  %v7713 = vunpack.c.l.bf16 %v7597
  %v7714 = vunpack.c.l.bf16 %v7598
  %v7715 = vunpack.c.l.bf16 %v7599
  %v7716 = vunpack.c.l.bf16 %v7600
  %v7717 = vunpack.c.h.bf16 %v7597
  %v7718 = vunpack.c.h.bf16 %v7598
  %v7719 = vunpack.c.h.bf16 %v7599
  %v7720 = vunpack.c.h.bf16 %v7600
  %v7721 = vunpack.c.l.bf16 %v7601
  %v7722 = vunpack.c.l.bf16 %v7602
  %v7723 = vunpack.c.l.bf16 %v7603
  %v7724 = vunpack.c.l.bf16 %v7604
  %v7725 = vunpack.c.h.bf16 %v7601
  %v7726 = vunpack.c.h.bf16 %v7602
  %v7727 = vunpack.c.h.bf16 %v7603
  %v7728 = vunpack.c.h.bf16 %v7604
  %v7729 = vunpack.c.l.bf16 %v7605
  %v7730 = vunpack.c.l.bf16 %v7606
  %v7731 = vunpack.c.l.bf16 %v7607
  %v7732 = vunpack.c.l.bf16 %v7608
  %v7733 = vunpack.c.h.bf16 %v7605
  %v7734 = vunpack.c.h.bf16 %v7606
  %v7735 = vunpack.c.h.bf16 %v7607
  %v7736 = vunpack.c.h.bf16 %v7608
  %v7737 = vunpack.c.l.bf16 %v7609
  %v7738 = vunpack.c.l.bf16 %v7610
  %v7739 = vunpack.c.l.bf16 %v7611
  %v7740 = vunpack.c.l.bf16 %v7612
  %v7741 = vunpack.c.h.bf16 %v7609
  %v7742 = vunpack.c.h.bf16 %v7610
  %v7743 = vunpack.c.h.bf16 %v7611
  %v7744 = vunpack.c.h.bf16 %v7612
  %v7745 = vunpack.c.l.bf16 %v7613
  %v7746 = vunpack.c.l.bf16 %v7614
  %v7747 = vunpack.c.l.bf16 %v7615
  %v7748 = vunpack.c.l.bf16 %v7616
  %v7749 = vunpack.c.h.bf16 %v7613
  %v7750 = vunpack.c.h.bf16 %v7614
  %v7751 = vunpack.c.h.bf16 %v7615
  %v7752 = vunpack.c.h.bf16 %v7616
  %v7753 = vunpack.c.l.bf16 %v7617
  %v7754 = vunpack.c.l.bf16 %v7618
  %v7755 = vunpack.c.l.bf16 %v7619
  %v7756 = vunpack.c.l.bf16 %v7620
  %v7757 = vunpack.c.h.bf16 %v7617
  %v7758 = vunpack.c.h.bf16 %v7618
  %v7759 = vunpack.c.h.bf16 %v7619
  %v7760 = vunpack.c.h.bf16 %v7620
  %v7761 = vunpack.c.l.bf16 %v7621
  %v7762 = vunpack.c.l.bf16 %v7622
  %v7763 = vunpack.c.l.bf16 %v7623
  %v7764 = vunpack.c.l.bf16 %v7624
  %v7765 = vunpack.c.h.bf16 %v7621
  %v7766 = vunpack.c.h.bf16 %v7622
  %v7767 = vunpack.c.h.bf16 %v7623
  %v7768 = vunpack.c.h.bf16 %v7624
  %v7769 = vunpack.c.l.bf16 %v7625
  %v7770 = vunpack.c.l.bf16 %v7626
  %v7771 = vunpack.c.l.bf16 %v7627
  %v7772 = vunpack.c.l.bf16 %v7628
  %v7773 = vunpack.c.h.bf16 %v7625
  %v7774 = vunpack.c.h.bf16 %v7626
  %v7775 = vunpack.c.h.bf16 %v7627
  %v7776 = vunpack.c.h.bf16 %v7628
  %v7777 = vunpack.c.l.bf16 %v7629
  %v7778 = vunpack.c.l.bf16 %v7630
  %v7779 = vunpack.c.l.bf16 %v7631
  %v7780 = vunpack.c.l.bf16 %v7632
  %v7781 = vunpack.c.h.bf16 %v7629
  %v7782 = vunpack.c.h.bf16 %v7630
  %v7783 = vunpack.c.h.bf16 %v7631
  %v7784 = vunpack.c.h.bf16 %v7632
  %v7785 = vunpack.c.l.bf16 %v7633
  %v7786 = vunpack.c.l.bf16 %v7634
  %v7787 = vunpack.c.l.bf16 %v7635
  %v7788 = vunpack.c.l.bf16 %v7636
  %v7789 = vunpack.c.h.bf16 %v7633
  %v7790 = vunpack.c.h.bf16 %v7634
  %v7791 = vunpack.c.h.bf16 %v7635
  %v7792 = vunpack.c.h.bf16 %v7636
  %v7793 = vunpack.c.l.bf16 %v7637
  %v7794 = vunpack.c.l.bf16 %v7638
  %v7795 = vunpack.c.l.bf16 %v7639
  %v7796 = vunpack.c.l.bf16 %v7640
  %v7797 = vunpack.c.h.bf16 %v7637
  %v7798 = vunpack.c.h.bf16 %v7638
  %v7799 = vunpack.c.h.bf16 %v7639
  %v7800 = vunpack.c.h.bf16 %v7640
  %v7801 = vunpack.c.l.bf16 %v7641
  %v7802 = vunpack.c.l.bf16 %v7642
  %v7803 = vunpack.c.l.bf16 %v7643
  %v7804 = vunpack.c.l.bf16 %v7644
  %v7805 = vunpack.c.h.bf16 %v7641
  %v7806 = vunpack.c.h.bf16 %v7642
  %v7807 = vunpack.c.h.bf16 %v7643
  %v7808 = vunpack.c.h.bf16 %v7644
  %v7809 = vunpack.c.l.bf16 %v7645
  %v7810 = vunpack.c.l.bf16 %v7646
  %v7811 = vunpack.c.l.bf16 %v7647
  %v7812 = vunpack.c.l.bf16 %v7648
  %v7813 = vunpack.c.h.bf16 %v7645
  %v7814 = vunpack.c.h.bf16 %v7646
  %v7815 = vunpack.c.h.bf16 %v7647
  %v7816 = vunpack.c.h.bf16 %v7648
  %v7817 = vunpack.c.l.bf16 %v7649
  %v7818 = vunpack.c.l.bf16 %v7650
  %v7819 = vunpack.c.l.bf16 %v7651
  %v7820 = vunpack.c.l.bf16 %v7652
  %v7821 = vunpack.c.h.bf16 %v7649
  %v7822 = vunpack.c.h.bf16 %v7650
  %v7823 = vunpack.c.h.bf16 %v7651
  %v7824 = vunpack.c.h.bf16 %v7652
  %v7825 = vunpack.c.l.bf16 %v7653
  %v7826 = vunpack.c.l.bf16 %v7654
  %v7827 = vunpack.c.l.bf16 %v7655
  %v7828 = vunpack.c.l.bf16 %v7656
  %v7829 = vunpack.c.h.bf16 %v7653
  %v7830 = vunpack.c.h.bf16 %v7654
  %v7831 = vunpack.c.h.bf16 %v7655
  %v7832 = vunpack.c.h.bf16 %v7656
  %v7833 = vunpack.c.l.bf16 %v7657
  %v7834 = vunpack.c.l.bf16 %v7658
  %v7835 = vunpack.c.l.bf16 %v7659
  %v7836 = vunpack.c.l.bf16 %v7660
  %v7837 = vunpack.c.h.bf16 %v7657
  %v7838 = vunpack.c.h.bf16 %v7658
  %v7839 = vunpack.c.h.bf16 %v7659
  %v7840 = vunpack.c.h.bf16 %v7660
  %v7841 = vunpack.c.l.bf16 %v7661
  %v7842 = vunpack.c.l.bf16 %v7662
  %v7843 = vunpack.c.l.bf16 %v7663
  %v7844 = vunpack.c.l.bf16 %v7664
  %v7845 = vunpack.c.h.bf16 %v7661
  %v7846 = vunpack.c.h.bf16 %v7662
  %v7847 = vunpack.c.h.bf16 %v7663
  %v7848 = vunpack.c.h.bf16 %v7664
  %v7849 = vunpack.c.l.bf16 %v7665
  %v7850 = vunpack.c.l.bf16 %v7666
  %v7851 = vunpack.c.l.bf16 %v7667
  %v7852 = vunpack.c.l.bf16 %v7668
  %v7853 = vunpack.c.h.bf16 %v7665
  %v7854 = vunpack.c.h.bf16 %v7666
  %v7855 = vunpack.c.h.bf16 %v7667
  %v7856 = vunpack.c.h.bf16 %v7668
  %v7857 = vunpack.c.l.bf16 %v7669
  %v7858 = vunpack.c.l.bf16 %v7670
  %v7859 = vunpack.c.l.bf16 %v7671
  %v7860 = vunpack.c.l.bf16 %v7672
  %v7861 = vunpack.c.h.bf16 %v7669
  %v7862 = vunpack.c.h.bf16 %v7670
  %v7863 = vunpack.c.h.bf16 %v7671
  %v7864 = vunpack.c.h.bf16 %v7672
  %v7865 = vld [vmem:[%s9] sm:$0xf]
  %v7867 = vlaneseq
  %v7868 = vshrl.u32 %v7867, 7
  %v7869 = vsub.s32 0, %v7868
  %v7870 = vrot.slane %v7865, %v7869
  %v7871 = vlaneseq
  %v7872 = vshrl.u32 %v7871, 7
  %v7873 = vsub.s32 1, %v7872
  %v7874 = vrot.slane %v7865, %v7873
  %v7875 = vlaneseq
  %v7876 = vshrl.u32 %v7875, 7
  %v7877 = vsub.s32 2, %v7876
  %v7878 = vrot.slane %v7865, %v7877
  %v7879 = vlaneseq
  %v7880 = vshrl.u32 %v7879, 7
  %v7881 = vsub.s32 3, %v7880
  %v7882 = vrot.slane %v7865, %v7881
  %v7887 = vmul.f32 %v7673, %v7870
  %v7888 = vmul.f32 %v7674, %v7874
  %v7889 = vmul.f32 %v7675, %v7878
  %v7890 = vmul.f32 %v7676, %v7882
  %v7891 = vmul.f32 %v7677, %v7870
  %v7892 = vmul.f32 %v7678, %v7874
  %v7893 = vmul.f32 %v7679, %v7878
  %v7894 = vmul.f32 %v7680, %v7882
  %v7895 = vmul.f32 %v7681, %v7870
  %v7896 = vmul.f32 %v7682, %v7874
  %v7897 = vmul.f32 %v7683, %v7878
  %v7898 = vmul.f32 %v7684, %v7882
  %v7899 = vmul.f32 %v7685, %v7870
  %v7900 = vmul.f32 %v7686, %v7874
  %v7901 = vmul.f32 %v7687, %v7878
  %v7902 = vmul.f32 %v7688, %v7882
  %v7903 = vmul.f32 %v7689, %v7870
  %v7904 = vmul.f32 %v7690, %v7874
  %v7905 = vmul.f32 %v7691, %v7878
  %v7906 = vmul.f32 %v7692, %v7882
  %v7907 = vmul.f32 %v7693, %v7870
  %v7908 = vmul.f32 %v7694, %v7874
  %v7909 = vmul.f32 %v7695, %v7878
  %v7910 = vmul.f32 %v7696, %v7882
  %v7911 = vmul.f32 %v7697, %v7870
  %v7912 = vmul.f32 %v7698, %v7874
  %v7913 = vmul.f32 %v7699, %v7878
  %v7914 = vmul.f32 %v7700, %v7882
  %v7915 = vmul.f32 %v7701, %v7870
  %v7916 = vmul.f32 %v7702, %v7874
  %v7917 = vmul.f32 %v7703, %v7878
  %v7918 = vmul.f32 %v7704, %v7882
  %v7919 = vmul.f32 %v7705, %v7870
  %v7920 = vmul.f32 %v7706, %v7874
  %v7921 = vmul.f32 %v7707, %v7878
  %v7922 = vmul.f32 %v7708, %v7882
  %v7923 = vmul.f32 %v7709, %v7870
  %v7924 = vmul.f32 %v7710, %v7874
  %v7925 = vmul.f32 %v7711, %v7878
  %v7926 = vmul.f32 %v7712, %v7882
  %v7927 = vmul.f32 %v7713, %v7870
  %v7928 = vmul.f32 %v7714, %v7874
  %v7929 = vmul.f32 %v7715, %v7878
  %v7930 = vmul.f32 %v7716, %v7882
  %v7931 = vmul.f32 %v7717, %v7870
  %v7932 = vmul.f32 %v7718, %v7874
  %v7933 = vmul.f32 %v7719, %v7878
  %v7934 = vmul.f32 %v7720, %v7882
  %v7935 = vmul.f32 %v7721, %v7870
  %v7936 = vmul.f32 %v7722, %v7874
  %v7937 = vmul.f32 %v7723, %v7878
  %v7938 = vmul.f32 %v7724, %v7882
  %v7939 = vmul.f32 %v7725, %v7870
  %v7940 = vmul.f32 %v7726, %v7874
  %v7941 = vmul.f32 %v7727, %v7878
  %v7942 = vmul.f32 %v7728, %v7882
  %v7943 = vmul.f32 %v7729, %v7870
  %v7944 = vmul.f32 %v7730, %v7874
  %v7945 = vmul.f32 %v7731, %v7878
  %v7946 = vmul.f32 %v7732, %v7882
  %v7947 = vmul.f32 %v7733, %v7870
  %v7948 = vmul.f32 %v7734, %v7874
  %v7949 = vmul.f32 %v7735, %v7878
  %v7950 = vmul.f32 %v7736, %v7882
  %v7951 = vmul.f32 %v7737, %v7870
  %v7952 = vmul.f32 %v7738, %v7874
  %v7953 = vmul.f32 %v7739, %v7878
  %v7954 = vmul.f32 %v7740, %v7882
  %v7955 = vmul.f32 %v7741, %v7870
  %v7956 = vmul.f32 %v7742, %v7874
  %v7957 = vmul.f32 %v7743, %v7878
  %v7958 = vmul.f32 %v7744, %v7882
  %v7959 = vmul.f32 %v7745, %v7870
  %v7960 = vmul.f32 %v7746, %v7874
  %v7961 = vmul.f32 %v7747, %v7878
  %v7962 = vmul.f32 %v7748, %v7882
  %v7963 = vmul.f32 %v7749, %v7870
  %v7964 = vmul.f32 %v7750, %v7874
  %v7965 = vmul.f32 %v7751, %v7878
  %v7966 = vmul.f32 %v7752, %v7882
  %v7967 = vmul.f32 %v7753, %v7870
  %v7968 = vmul.f32 %v7754, %v7874
  %v7969 = vmul.f32 %v7755, %v7878
  %v7970 = vmul.f32 %v7756, %v7882
  %v7971 = vmul.f32 %v7757, %v7870
  %v7972 = vmul.f32 %v7758, %v7874
  %v7973 = vmul.f32 %v7759, %v7878
  %v7974 = vmul.f32 %v7760, %v7882
  %v7975 = vmul.f32 %v7761, %v7870
  %v7976 = vmul.f32 %v7762, %v7874
  %v7977 = vmul.f32 %v7763, %v7878
  %v7978 = vmul.f32 %v7764, %v7882
  %v7979 = vmul.f32 %v7765, %v7870
  %v7980 = vmul.f32 %v7766, %v7874
  %v7981 = vmul.f32 %v7767, %v7878
  %v7982 = vmul.f32 %v7768, %v7882
  %v7983 = vmul.f32 %v7769, %v7870
  %v7984 = vmul.f32 %v7770, %v7874
  %v7985 = vmul.f32 %v7771, %v7878
  %v7986 = vmul.f32 %v7772, %v7882
  %v7987 = vmul.f32 %v7773, %v7870
  %v7988 = vmul.f32 %v7774, %v7874
  %v7989 = vmul.f32 %v7775, %v7878
  %v7990 = vmul.f32 %v7776, %v7882
  %v7991 = vmul.f32 %v7777, %v7870
  %v7992 = vmul.f32 %v7778, %v7874
  %v7993 = vmul.f32 %v7779, %v7878
  %v7994 = vmul.f32 %v7780, %v7882
  %v7995 = vmul.f32 %v7781, %v7870
  %v7996 = vmul.f32 %v7782, %v7874
  %v7997 = vmul.f32 %v7783, %v7878
  %v7998 = vmul.f32 %v7784, %v7882
  %v7999 = vmul.f32 %v7785, %v7870
  %v8000 = vmul.f32 %v7786, %v7874
  %v8001 = vmul.f32 %v7787, %v7878
  %v8002 = vmul.f32 %v7788, %v7882
  %v8003 = vmul.f32 %v7789, %v7870
  %v8004 = vmul.f32 %v7790, %v7874
  %v8005 = vmul.f32 %v7791, %v7878
  %v8006 = vmul.f32 %v7792, %v7882
  %v8007 = vmul.f32 %v7793, %v7870
  %v8008 = vmul.f32 %v7794, %v7874
  %v8009 = vmul.f32 %v7795, %v7878
  %v8010 = vmul.f32 %v7796, %v7882
  %v8011 = vmul.f32 %v7797, %v7870
  %v8012 = vmul.f32 %v7798, %v7874
  %v8013 = vmul.f32 %v7799, %v7878
  %v8014 = vmul.f32 %v7800, %v7882
  %v8015 = vmul.f32 %v7801, %v7870
  %v8016 = vmul.f32 %v7802, %v7874
  %v8017 = vmul.f32 %v7803, %v7878
  %v8018 = vmul.f32 %v7804, %v7882
  %v8019 = vmul.f32 %v7805, %v7870
  %v8020 = vmul.f32 %v7806, %v7874
  %v8021 = vmul.f32 %v7807, %v7878
  %v8022 = vmul.f32 %v7808, %v7882
  %v8023 = vmul.f32 %v7809, %v7870
  %v8024 = vmul.f32 %v7810, %v7874
  %v8025 = vmul.f32 %v7811, %v7878
  %v8026 = vmul.f32 %v7812, %v7882
  %v8027 = vmul.f32 %v7813, %v7870
  %v8028 = vmul.f32 %v7814, %v7874
  %v8029 = vmul.f32 %v7815, %v7878
  %v8030 = vmul.f32 %v7816, %v7882
  %v8031 = vmul.f32 %v7817, %v7870
  %v8032 = vmul.f32 %v7818, %v7874
  %v8033 = vmul.f32 %v7819, %v7878
  %v8034 = vmul.f32 %v7820, %v7882
  %v8035 = vmul.f32 %v7821, %v7870
  %v8036 = vmul.f32 %v7822, %v7874
  %v8037 = vmul.f32 %v7823, %v7878
  %v8038 = vmul.f32 %v7824, %v7882
  %v8039 = vmul.f32 %v7825, %v7870
  %v8040 = vmul.f32 %v7826, %v7874
  %v8041 = vmul.f32 %v7827, %v7878
  %v8042 = vmul.f32 %v7828, %v7882
  %v8043 = vmul.f32 %v7829, %v7870
  %v8044 = vmul.f32 %v7830, %v7874
  %v8045 = vmul.f32 %v7831, %v7878
  %v8046 = vmul.f32 %v7832, %v7882
  %v8047 = vmul.f32 %v7833, %v7870
  %v8048 = vmul.f32 %v7834, %v7874
  %v8049 = vmul.f32 %v7835, %v7878
  %v8050 = vmul.f32 %v7836, %v7882
  %v8051 = vmul.f32 %v7837, %v7870
  %v8052 = vmul.f32 %v7838, %v7874
  %v8053 = vmul.f32 %v7839, %v7878
  %v8054 = vmul.f32 %v7840, %v7882
  %v8055 = vmul.f32 %v7841, %v7870
  %v8056 = vmul.f32 %v7842, %v7874
  %v8057 = vmul.f32 %v7843, %v7878
  %v8058 = vmul.f32 %v7844, %v7882
  %v8059 = vmul.f32 %v7845, %v7870
  %v8060 = vmul.f32 %v7846, %v7874
  %v8061 = vmul.f32 %v7847, %v7878
  %v8062 = vmul.f32 %v7848, %v7882
  %v8063 = vmul.f32 %v7849, %v7870
  %v8064 = vmul.f32 %v7850, %v7874
  %v8065 = vmul.f32 %v7851, %v7878
  %v8066 = vmul.f32 %v7852, %v7882
  %v8067 = vmul.f32 %v7853, %v7870
  %v8068 = vmul.f32 %v7854, %v7874
  %v8069 = vmul.f32 %v7855, %v7878
  %v8070 = vmul.f32 %v7856, %v7882
  %v8071 = vmul.f32 %v7857, %v7870
  %v8072 = vmul.f32 %v7858, %v7874
  %v8073 = vmul.f32 %v7859, %v7878
  %v8074 = vmul.f32 %v7860, %v7882
  %v8075 = vmul.f32 %v7861, %v7870
  %v8076 = vmul.f32 %v7862, %v7874
  %v8077 = vmul.f32 %v7863, %v7878
  %v8078 = vmul.f32 %v7864, %v7882
  %v8079 = vadd.f32 %v7887, %v7888
  %v8080 = vadd.f32 %v8079, %v7889
  %v8081 = vadd.f32 %v8080, %v7890
  %8082 = vadd.xlane.f32.xlu0 %v8081
  %v8083 = vpop.xlane.xlu0 %8082
  %v8084 = vadd.f32 %v7891, %v7892
  %v8085 = vadd.f32 %v8084, %v7893
  %v8086 = vadd.f32 %v8085, %v7894
  %8087 = vadd.xlane.f32.xlu0 %v8086
  %v8088 = vpop.xlane.xlu0 %8087
  %v8089 = vadd.f32 %v7895, %v7896
  %v8090 = vadd.f32 %v8089, %v7897
  %v8091 = vadd.f32 %v8090, %v7898
  %8092 = vadd.xlane.f32.xlu0 %v8091
  %v8093 = vpop.xlane.xlu0 %8092
  %v8094 = vadd.f32 %v7899, %v7900
  %v8095 = vadd.f32 %v8094, %v7901
  %v8096 = vadd.f32 %v8095, %v7902
  %8097 = vadd.xlane.f32.xlu0 %v8096
  %v8098 = vpop.xlane.xlu0 %8097
  %v8099 = vadd.f32 %v7903, %v7904
  %v8100 = vadd.f32 %v8099, %v7905
  %v8101 = vadd.f32 %v8100, %v7906
  %8102 = vadd.xlane.f32.xlu0 %v8101
  %v8103 = vpop.xlane.xlu0 %8102
  %v8104 = vadd.f32 %v7907, %v7908
  %v8105 = vadd.f32 %v8104, %v7909
  %v8106 = vadd.f32 %v8105, %v7910
  %8107 = vadd.xlane.f32.xlu0 %v8106
  %v8108 = vpop.xlane.xlu0 %8107
  %v8109 = vadd.f32 %v7911, %v7912
  %v8110 = vadd.f32 %v8109, %v7913
  %v8111 = vadd.f32 %v8110, %v7914
  %8112 = vadd.xlane.f32.xlu0 %v8111
  %v8113 = vpop.xlane.xlu0 %8112
  %v8114 = vadd.f32 %v7915, %v7916
  %v8115 = vadd.f32 %v8114, %v7917
  %v8116 = vadd.f32 %v8115, %v7918
  %8117 = vadd.xlane.f32.xlu0 %v8116
  %v8118 = vpop.xlane.xlu0 %8117
  %v8119 = vadd.f32 %v7919, %v7920
  %v8120 = vadd.f32 %v8119, %v7921
  %v8121 = vadd.f32 %v8120, %v7922
  %8122 = vadd.xlane.f32.xlu0 %v8121
  %v8123 = vpop.xlane.xlu0 %8122
  %v8124 = vadd.f32 %v7923, %v7924
  %v8125 = vadd.f32 %v8124, %v7925
  %v8126 = vadd.f32 %v8125, %v7926
  %8127 = vadd.xlane.f32.xlu0 %v8126
  %v8128 = vpop.xlane.xlu0 %8127
  %v8129 = vadd.f32 %v7927, %v7928
  %v8130 = vadd.f32 %v8129, %v7929
  %v8131 = vadd.f32 %v8130, %v7930
  %8132 = vadd.xlane.f32.xlu0 %v8131
  %v8133 = vpop.xlane.xlu0 %8132
  %v8134 = vadd.f32 %v7931, %v7932
  %v8135 = vadd.f32 %v8134, %v7933
  %v8136 = vadd.f32 %v8135, %v7934
  %8137 = vadd.xlane.f32.xlu0 %v8136
  %v8138 = vpop.xlane.xlu0 %8137
  %v8139 = vadd.f32 %v7935, %v7936
  %v8140 = vadd.f32 %v8139, %v7937
  %v8141 = vadd.f32 %v8140, %v7938
  %8142 = vadd.xlane.f32.xlu0 %v8141
  %v8143 = vpop.xlane.xlu0 %8142
  %v8144 = vadd.f32 %v7939, %v7940
  %v8145 = vadd.f32 %v8144, %v7941
  %v8146 = vadd.f32 %v8145, %v7942
  %8147 = vadd.xlane.f32.xlu0 %v8146
  %v8148 = vpop.xlane.xlu0 %8147
  %v8149 = vadd.f32 %v7943, %v7944
  %v8150 = vadd.f32 %v8149, %v7945
  %v8151 = vadd.f32 %v8150, %v7946
  %8152 = vadd.xlane.f32.xlu0 %v8151
  %v8153 = vpop.xlane.xlu0 %8152
  %v8154 = vadd.f32 %v7947, %v7948
  %v8155 = vadd.f32 %v8154, %v7949
  %v8156 = vadd.f32 %v8155, %v7950
  %8157 = vadd.xlane.f32.xlu0 %v8156
  %v8158 = vpop.xlane.xlu0 %8157
  %v8159 = vadd.f32 %v7951, %v7952
  %v8160 = vadd.f32 %v8159, %v7953
  %v8161 = vadd.f32 %v8160, %v7954
  %8162 = vadd.xlane.f32.xlu0 %v8161
  %v8163 = vpop.xlane.xlu0 %8162
  %v8164 = vadd.f32 %v7955, %v7956
  %v8165 = vadd.f32 %v8164, %v7957
  %v8166 = vadd.f32 %v8165, %v7958
  %8167 = vadd.xlane.f32.xlu0 %v8166
  %v8168 = vpop.xlane.xlu0 %8167
  %v8169 = vadd.f32 %v7959, %v7960
  %v8170 = vadd.f32 %v8169, %v7961
  %v8171 = vadd.f32 %v8170, %v7962
  %8172 = vadd.xlane.f32.xlu0 %v8171
  %v8173 = vpop.xlane.xlu0 %8172
  %v8174 = vadd.f32 %v7963, %v7964
  %v8175 = vadd.f32 %v8174, %v7965
  %v8176 = vadd.f32 %v8175, %v7966
  %8177 = vadd.xlane.f32.xlu0 %v8176
  %v8178 = vpop.xlane.xlu0 %8177
  %v8179 = vadd.f32 %v7967, %v7968
  %v8180 = vadd.f32 %v8179, %v7969
  %v8181 = vadd.f32 %v8180, %v7970
  %8182 = vadd.xlane.f32.xlu0 %v8181
  %v8183 = vpop.xlane.xlu0 %8182
  %v8184 = vadd.f32 %v7971, %v7972
  %v8185 = vadd.f32 %v8184, %v7973
  %v8186 = vadd.f32 %v8185, %v7974
  %8187 = vadd.xlane.f32.xlu0 %v8186
  %v8188 = vpop.xlane.xlu0 %8187
  %v8189 = vadd.f32 %v7975, %v7976
  %v8190 = vadd.f32 %v8189, %v7977
  %v8191 = vadd.f32 %v8190, %v7978
  %8192 = vadd.xlane.f32.xlu0 %v8191
  %v8193 = vpop.xlane.xlu0 %8192
  %v8194 = vadd.f32 %v7979, %v7980
  %v8195 = vadd.f32 %v8194, %v7981
  %v8196 = vadd.f32 %v8195, %v7982
  %8197 = vadd.xlane.f32.xlu0 %v8196
  %v8198 = vpop.xlane.xlu0 %8197
  %v8199 = vadd.f32 %v7983, %v7984
  %v8200 = vadd.f32 %v8199, %v7985
  %v8201 = vadd.f32 %v8200, %v7986
  %8202 = vadd.xlane.f32.xlu0 %v8201
  %v8203 = vpop.xlane.xlu0 %8202
  %v8204 = vadd.f32 %v7987, %v7988
  %v8205 = vadd.f32 %v8204, %v7989
  %v8206 = vadd.f32 %v8205, %v7990
  %8207 = vadd.xlane.f32.xlu0 %v8206
  %v8208 = vpop.xlane.xlu0 %8207
  %v8209 = vadd.f32 %v7991, %v7992
  %v8210 = vadd.f32 %v8209, %v7993
  %v8211 = vadd.f32 %v8210, %v7994
  %8212 = vadd.xlane.f32.xlu0 %v8211
  %v8213 = vpop.xlane.xlu0 %8212
  %v8214 = vadd.f32 %v7995, %v7996
  %v8215 = vadd.f32 %v8214, %v7997
  %v8216 = vadd.f32 %v8215, %v7998
  %8217 = vadd.xlane.f32.xlu0 %v8216
  %v8218 = vpop.xlane.xlu0 %8217
  %v8219 = vadd.f32 %v7999, %v8000
  %v8220 = vadd.f32 %v8219, %v8001
  %v8221 = vadd.f32 %v8220, %v8002
  %8222 = vadd.xlane.f32.xlu0 %v8221
  %v8223 = vpop.xlane.xlu0 %8222
  %v8224 = vadd.f32 %v8003, %v8004
  %v8225 = vadd.f32 %v8224, %v8005
  %v8226 = vadd.f32 %v8225, %v8006
  %8227 = vadd.xlane.f32.xlu0 %v8226
  %v8228 = vpop.xlane.xlu0 %8227
  %v8229 = vadd.f32 %v8007, %v8008
  %v8230 = vadd.f32 %v8229, %v8009
  %v8231 = vadd.f32 %v8230, %v8010
  %8232 = vadd.xlane.f32.xlu0 %v8231
  %v8233 = vpop.xlane.xlu0 %8232
  %v8234 = vadd.f32 %v8011, %v8012
  %v8235 = vadd.f32 %v8234, %v8013
  %v8236 = vadd.f32 %v8235, %v8014
  %8237 = vadd.xlane.f32.xlu0 %v8236
  %v8238 = vpop.xlane.xlu0 %8237
  %v8239 = vadd.f32 %v8015, %v8016
  %v8240 = vadd.f32 %v8239, %v8017
  %v8241 = vadd.f32 %v8240, %v8018
  %8242 = vadd.xlane.f32.xlu0 %v8241
  %v8243 = vpop.xlane.xlu0 %8242
  %v8244 = vadd.f32 %v8019, %v8020
  %v8245 = vadd.f32 %v8244, %v8021
  %v8246 = vadd.f32 %v8245, %v8022
  %8247 = vadd.xlane.f32.xlu0 %v8246
  %v8248 = vpop.xlane.xlu0 %8247
  %v8249 = vadd.f32 %v8023, %v8024
  %v8250 = vadd.f32 %v8249, %v8025
  %v8251 = vadd.f32 %v8250, %v8026
  %8252 = vadd.xlane.f32.xlu0 %v8251
  %v8253 = vpop.xlane.xlu0 %8252
  %v8254 = vadd.f32 %v8027, %v8028
  %v8255 = vadd.f32 %v8254, %v8029
  %v8256 = vadd.f32 %v8255, %v8030
  %8257 = vadd.xlane.f32.xlu0 %v8256
  %v8258 = vpop.xlane.xlu0 %8257
  %v8259 = vadd.f32 %v8031, %v8032
  %v8260 = vadd.f32 %v8259, %v8033
  %v8261 = vadd.f32 %v8260, %v8034
  %8262 = vadd.xlane.f32.xlu0 %v8261
  %v8263 = vpop.xlane.xlu0 %8262
  %v8264 = vadd.f32 %v8035, %v8036
  %v8265 = vadd.f32 %v8264, %v8037
  %v8266 = vadd.f32 %v8265, %v8038
  %8267 = vadd.xlane.f32.xlu0 %v8266
  %v8268 = vpop.xlane.xlu0 %8267
  %v8269 = vadd.f32 %v8039, %v8040
  %v8270 = vadd.f32 %v8269, %v8041
  %v8271 = vadd.f32 %v8270, %v8042
  %8272 = vadd.xlane.f32.xlu0 %v8271
  %v8273 = vpop.xlane.xlu0 %8272
  %v8274 = vadd.f32 %v8043, %v8044
  %v8275 = vadd.f32 %v8274, %v8045
  %v8276 = vadd.f32 %v8275, %v8046
  %8277 = vadd.xlane.f32.xlu0 %v8276
  %v8278 = vpop.xlane.xlu0 %8277
  %v8279 = vadd.f32 %v8047, %v8048
  %v8280 = vadd.f32 %v8279, %v8049
  %v8281 = vadd.f32 %v8280, %v8050
  %8282 = vadd.xlane.f32.xlu0 %v8281
  %v8283 = vpop.xlane.xlu0 %8282
  %v8284 = vadd.f32 %v8051, %v8052
  %v8285 = vadd.f32 %v8284, %v8053
  %v8286 = vadd.f32 %v8285, %v8054
  %8287 = vadd.xlane.f32.xlu0 %v8286
  %v8288 = vpop.xlane.xlu0 %8287
  %v8289 = vadd.f32 %v8055, %v8056
  %v8290 = vadd.f32 %v8289, %v8057
  %v8291 = vadd.f32 %v8290, %v8058
  %8292 = vadd.xlane.f32.xlu0 %v8291
  %v8293 = vpop.xlane.xlu0 %8292
  %v8294 = vadd.f32 %v8059, %v8060
  %v8295 = vadd.f32 %v8294, %v8061
  %v8296 = vadd.f32 %v8295, %v8062
  %8297 = vadd.xlane.f32.xlu0 %v8296
  %v8298 = vpop.xlane.xlu0 %8297
  %v8299 = vadd.f32 %v8063, %v8064
  %v8300 = vadd.f32 %v8299, %v8065
  %v8301 = vadd.f32 %v8300, %v8066
  %8302 = vadd.xlane.f32.xlu0 %v8301
  %v8303 = vpop.xlane.xlu0 %8302
  %v8304 = vadd.f32 %v8067, %v8068
  %v8305 = vadd.f32 %v8304, %v8069
  %v8306 = vadd.f32 %v8305, %v8070
  %8307 = vadd.xlane.f32.xlu0 %v8306
  %v8308 = vpop.xlane.xlu0 %8307
  %v8309 = vadd.f32 %v8071, %v8072
  %v8310 = vadd.f32 %v8309, %v8073
  %v8311 = vadd.f32 %v8310, %v8074
  %8312 = vadd.xlane.f32.xlu0 %v8311
  %v8313 = vpop.xlane.xlu0 %8312
  %v8314 = vadd.f32 %v8075, %v8076
  %v8315 = vadd.f32 %v8314, %v8077
  %v8316 = vadd.f32 %v8315, %v8078
  %8317 = vadd.xlane.f32.xlu0 %v8316
  %v8318 = vpop.xlane.xlu0 %8317
  %v8319 = vld [vmem:[#allocation2] sm:$0x1]
  %v8321 = vlaneseq
  %v8322 = vshrl.u32 %v8321, 7
  %v8323 = vsub.s32 0, %v8322
  %v8324 = vrot.slane %v8319, %v8323
  %v8326 = vadd.f32 %v8083, %v8324
  %v8327 = vadd.f32 %v8088, %v8324
  %v8328 = vadd.f32 %v8093, %v8324
  %v8329 = vadd.f32 %v8098, %v8324
  %v8330 = vadd.f32 %v8103, %v8324
  %v8331 = vadd.f32 %v8108, %v8324
  %v8332 = vadd.f32 %v8113, %v8324
  %v8333 = vadd.f32 %v8118, %v8324
  %v8334 = vadd.f32 %v8123, %v8324
  %v8335 = vadd.f32 %v8128, %v8324
  %v8336 = vadd.f32 %v8133, %v8324
  %v8337 = vadd.f32 %v8138, %v8324
  %v8338 = vadd.f32 %v8143, %v8324
  %v8339 = vadd.f32 %v8148, %v8324
  %v8340 = vadd.f32 %v8153, %v8324
  %v8341 = vadd.f32 %v8158, %v8324
  %v8342 = vadd.f32 %v8163, %v8324
  %v8343 = vadd.f32 %v8168, %v8324
  %v8344 = vadd.f32 %v8173, %v8324
  %v8345 = vadd.f32 %v8178, %v8324
  %v8346 = vadd.f32 %v8183, %v8324
  %v8347 = vadd.f32 %v8188, %v8324
  %v8348 = vadd.f32 %v8193, %v8324
  %v8349 = vadd.f32 %v8198, %v8324
  %v8350 = vadd.f32 %v8203, %v8324
  %v8351 = vadd.f32 %v8208, %v8324
  %v8352 = vadd.f32 %v8213, %v8324
  %v8353 = vadd.f32 %v8218, %v8324
  %v8354 = vadd.f32 %v8223, %v8324
  %v8355 = vadd.f32 %v8228, %v8324
  %v8356 = vadd.f32 %v8233, %v8324
  %v8357 = vadd.f32 %v8238, %v8324
  %v8358 = vadd.f32 %v8243, %v8324
  %v8359 = vadd.f32 %v8248, %v8324
  %v8360 = vadd.f32 %v8253, %v8324
  %v8361 = vadd.f32 %v8258, %v8324
  %v8362 = vadd.f32 %v8263, %v8324
  %v8363 = vadd.f32 %v8268, %v8324
  %v8364 = vadd.f32 %v8273, %v8324
  %v8365 = vadd.f32 %v8278, %v8324
  %v8366 = vadd.f32 %v8283, %v8324
  %v8367 = vadd.f32 %v8288, %v8324
  %v8368 = vadd.f32 %v8293, %v8324
  %v8369 = vadd.f32 %v8298, %v8324
  %v8370 = vadd.f32 %v8303, %v8324
  %v8371 = vadd.f32 %v8308, %v8324
  %v8372 = vadd.f32 %v8313, %v8324
  %v8373 = vadd.f32 %v8318, %v8324
  %v8374 = vxor.u32 %v8326, 2147483648
  %v8375 = vxor.u32 %v8327, 2147483648
  %v8376 = vxor.u32 %v8328, 2147483648
  %v8377 = vxor.u32 %v8329, 2147483648
  %v8378 = vxor.u32 %v8330, 2147483648
  %v8379 = vxor.u32 %v8331, 2147483648
  %v8380 = vxor.u32 %v8332, 2147483648
  %v8381 = vxor.u32 %v8333, 2147483648
  %v8382 = vxor.u32 %v8334, 2147483648
  %v8383 = vxor.u32 %v8335, 2147483648
  %v8384 = vxor.u32 %v8336, 2147483648
  %v8385 = vxor.u32 %v8337, 2147483648
  %v8386 = vxor.u32 %v8338, 2147483648
  %v8387 = vxor.u32 %v8339, 2147483648
  %v8388 = vxor.u32 %v8340, 2147483648
  %v8389 = vxor.u32 %v8341, 2147483648
  %v8390 = vxor.u32 %v8342, 2147483648
  %v8391 = vxor.u32 %v8343, 2147483648
  %v8392 = vxor.u32 %v8344, 2147483648
  %v8393 = vxor.u32 %v8345, 2147483648
  %v8394 = vxor.u32 %v8346, 2147483648
  %v8395 = vxor.u32 %v8347, 2147483648
  %v8396 = vxor.u32 %v8348, 2147483648
  %v8397 = vxor.u32 %v8349, 2147483648
  %v8398 = vxor.u32 %v8350, 2147483648
  %v8399 = vxor.u32 %v8351, 2147483648
  %v8400 = vxor.u32 %v8352, 2147483648
  %v8401 = vxor.u32 %v8353, 2147483648
  %v8402 = vxor.u32 %v8354, 2147483648
  %v8403 = vxor.u32 %v8355, 2147483648
  %v8404 = vxor.u32 %v8356, 2147483648
  %v8405 = vxor.u32 %v8357, 2147483648
  %v8406 = vxor.u32 %v8358, 2147483648
  %v8407 = vxor.u32 %v8359, 2147483648
  %v8408 = vxor.u32 %v8360, 2147483648
  %v8409 = vxor.u32 %v8361, 2147483648
  %v8410 = vxor.u32 %v8362, 2147483648
  %v8411 = vxor.u32 %v8363, 2147483648
  %v8412 = vxor.u32 %v8364, 2147483648
  %v8413 = vxor.u32 %v8365, 2147483648
  %v8414 = vxor.u32 %v8366, 2147483648
  %v8415 = vxor.u32 %v8367, 2147483648
  %v8416 = vxor.u32 %v8368, 2147483648
  %v8417 = vxor.u32 %v8369, 2147483648
  %v8418 = vxor.u32 %v8370, 2147483648
  %v8419 = vxor.u32 %v8371, 2147483648
  %v8420 = vxor.u32 %v8372, 2147483648
  %v8421 = vxor.u32 %v8373, 2147483648
  %v8422 = vmul.f32 %v8374, 1.442695
  %v8423 = vpow.pop %v8422
  %v8424 = vmul.f32 %v8375, 1.442695
  %v8425 = vpow.pop %v8424
  %v8426 = vmul.f32 %v8376, 1.442695
  %v8427 = vpow.pop %v8426
  %v8428 = vmul.f32 %v8377, 1.442695
  %v8429 = vpow.pop %v8428
  %v8430 = vmul.f32 %v8378, 1.442695
  %v8431 = vpow.pop %v8430
  %v8432 = vmul.f32 %v8379, 1.442695
  %v8433 = vpow.pop %v8432
  %v8434 = vmul.f32 %v8380, 1.442695
  %v8435 = vpow.pop %v8434
  %v8436 = vmul.f32 %v8381, 1.442695
  %v8437 = vpow.pop %v8436
  %v8438 = vmul.f32 %v8382, 1.442695
  %v8439 = vpow.pop %v8438
  %v8440 = vmul.f32 %v8383, 1.442695
  %v8441 = vpow.pop %v8440
  %v8442 = vmul.f32 %v8384, 1.442695
  %v8443 = vpow.pop %v8442
  %v8444 = vmul.f32 %v8385, 1.442695
  %v8445 = vpow.pop %v8444
  %v8446 = vmul.f32 %v8386, 1.442695
  %v8447 = vpow.pop %v8446
  %v8448 = vmul.f32 %v8387, 1.442695
  %v8449 = vpow.pop %v8448
  %v8450 = vmul.f32 %v8388, 1.442695
  %v8451 = vpow.pop %v8450
  %v8452 = vmul.f32 %v8389, 1.442695
  %v8453 = vpow.pop %v8452
  %v8454 = vmul.f32 %v8390, 1.442695
  %v8455 = vpow.pop %v8454
  %v8456 = vmul.f32 %v8391, 1.442695
  %v8457 = vpow.pop %v8456
  %v8458 = vmul.f32 %v8392, 1.442695
  %v8459 = vpow.pop %v8458
  %v8460 = vmul.f32 %v8393, 1.442695
  %v8461 = vpow.pop %v8460
  %v8462 = vmul.f32 %v8394, 1.442695
  %v8463 = vpow.pop %v8462
  %v8464 = vmul.f32 %v8395, 1.442695
  %v8465 = vpow.pop %v8464
  %v8466 = vmul.f32 %v8396, 1.442695
  %v8467 = vpow.pop %v8466
  %v8468 = vmul.f32 %v8397, 1.442695
  %v8469 = vpow.pop %v8468
  %v8470 = vmul.f32 %v8398, 1.442695
  %v8471 = vpow.pop %v8470
  %v8472 = vmul.f32 %v8399, 1.442695
  %v8473 = vpow.pop %v8472
  %v8474 = vmul.f32 %v8400, 1.442695
  %v8475 = vpow.pop %v8474
  %v8476 = vmul.f32 %v8401, 1.442695
  %v8477 = vpow.pop %v8476
  %v8478 = vmul.f32 %v8402, 1.442695
  %v8479 = vpow.pop %v8478
  %v8480 = vmul.f32 %v8403, 1.442695
  %v8481 = vpow.pop %v8480
  %v8482 = vmul.f32 %v8404, 1.442695
  %v8483 = vpow.pop %v8482
  %v8484 = vmul.f32 %v8405, 1.442695
  %v8485 = vpow.pop %v8484
  %v8486 = vmul.f32 %v8406, 1.442695
  %v8487 = vpow.pop %v8486
  %v8488 = vmul.f32 %v8407, 1.442695
  %v8489 = vpow.pop %v8488
  %v8490 = vmul.f32 %v8408, 1.442695
  %v8491 = vpow.pop %v8490
  %v8492 = vmul.f32 %v8409, 1.442695
  %v8493 = vpow.pop %v8492
  %v8494 = vmul.f32 %v8410, 1.442695
  %v8495 = vpow.pop %v8494
  %v8496 = vmul.f32 %v8411, 1.442695
  %v8497 = vpow.pop %v8496
  %v8498 = vmul.f32 %v8412, 1.442695
  %v8499 = vpow.pop %v8498
  %v8500 = vmul.f32 %v8413, 1.442695
  %v8501 = vpow.pop %v8500
  %v8502 = vmul.f32 %v8414, 1.442695
  %v8503 = vpow.pop %v8502
  %v8504 = vmul.f32 %v8415, 1.442695
  %v8505 = vpow.pop %v8504
  %v8506 = vmul.f32 %v8416, 1.442695
  %v8507 = vpow.pop %v8506
  %v8508 = vmul.f32 %v8417, 1.442695
  %v8509 = vpow.pop %v8508
  %v8510 = vmul.f32 %v8418, 1.442695
  %v8511 = vpow.pop %v8510
  %v8512 = vmul.f32 %v8419, 1.442695
  %v8513 = vpow.pop %v8512
  %v8514 = vmul.f32 %v8420, 1.442695
  %v8515 = vpow.pop %v8514
  %v8516 = vmul.f32 %v8421, 1.442695
  %v8517 = vpow.pop %v8516
  %v8518 = vadd.f32 %v8423, 1.0
  %v8519 = vadd.f32 %v8425, 1.0
  %v8520 = vadd.f32 %v8427, 1.0
  %v8521 = vadd.f32 %v8429, 1.0
  %v8522 = vadd.f32 %v8431, 1.0
  %v8523 = vadd.f32 %v8433, 1.0
  %v8524 = vadd.f32 %v8435, 1.0
  %v8525 = vadd.f32 %v8437, 1.0
  %v8526 = vadd.f32 %v8439, 1.0
  %v8527 = vadd.f32 %v8441, 1.0
  %v8528 = vadd.f32 %v8443, 1.0
  %v8529 = vadd.f32 %v8445, 1.0
  %v8530 = vadd.f32 %v8447, 1.0
  %v8531 = vadd.f32 %v8449, 1.0
  %v8532 = vadd.f32 %v8451, 1.0
  %v8533 = vadd.f32 %v8453, 1.0
  %v8534 = vadd.f32 %v8455, 1.0
  %v8535 = vadd.f32 %v8457, 1.0
  %v8536 = vadd.f32 %v8459, 1.0
  %v8537 = vadd.f32 %v8461, 1.0
  %v8538 = vadd.f32 %v8463, 1.0
  %v8539 = vadd.f32 %v8465, 1.0
  %v8540 = vadd.f32 %v8467, 1.0
  %v8541 = vadd.f32 %v8469, 1.0
  %v8542 = vadd.f32 %v8471, 1.0
  %v8543 = vadd.f32 %v8473, 1.0
  %v8544 = vadd.f32 %v8475, 1.0
  %v8545 = vadd.f32 %v8477, 1.0
  %v8546 = vadd.f32 %v8479, 1.0
  %v8547 = vadd.f32 %v8481, 1.0
  %v8548 = vadd.f32 %v8483, 1.0
  %v8549 = vadd.f32 %v8485, 1.0
  %v8550 = vadd.f32 %v8487, 1.0
  %v8551 = vadd.f32 %v8489, 1.0
  %v8552 = vadd.f32 %v8491, 1.0
  %v8553 = vadd.f32 %v8493, 1.0
  %v8554 = vadd.f32 %v8495, 1.0
  %v8555 = vadd.f32 %v8497, 1.0
  %v8556 = vadd.f32 %v8499, 1.0
  %v8557 = vadd.f32 %v8501, 1.0
  %v8558 = vadd.f32 %v8503, 1.0
  %v8559 = vadd.f32 %v8505, 1.0
  %v8560 = vadd.f32 %v8507, 1.0
  %v8561 = vadd.f32 %v8509, 1.0
  %v8562 = vadd.f32 %v8511, 1.0
  %v8563 = vadd.f32 %v8513, 1.0
  %v8564 = vadd.f32 %v8515, 1.0
  %v8565 = vadd.f32 %v8517, 1.0
  %v8566 = vrcp.pop %v8518
  %v8567 = vmul.f32 1.0, %v8566
  %v8568 = vrcp.pop %v8519
  %v8569 = vmul.f32 1.0, %v8568
  %v8570 = vrcp.pop %v8520
  %v8571 = vmul.f32 1.0, %v8570
  %v8572 = vrcp.pop %v8521
  %v8573 = vmul.f32 1.0, %v8572
  %v8574 = vrcp.pop %v8522
  %v8575 = vmul.f32 1.0, %v8574
  %v8576 = vrcp.pop %v8523
  %v8577 = vmul.f32 1.0, %v8576
  %v8578 = vrcp.pop %v8524
  %v8579 = vmul.f32 1.0, %v8578
  %v8580 = vrcp.pop %v8525
  %v8581 = vmul.f32 1.0, %v8580
  %v8582 = vrcp.pop %v8526
  %v8583 = vmul.f32 1.0, %v8582
  %v8584 = vrcp.pop %v8527
  %v8585 = vmul.f32 1.0, %v8584
  %v8586 = vrcp.pop %v8528
  %v8587 = vmul.f32 1.0, %v8586
  %v8588 = vrcp.pop %v8529
  %v8589 = vmul.f32 1.0, %v8588
  %v8590 = vrcp.pop %v8530
  %v8591 = vmul.f32 1.0, %v8590
  %v8592 = vrcp.pop %v8531
  %v8593 = vmul.f32 1.0, %v8592
  %v8594 = vrcp.pop %v8532
  %v8595 = vmul.f32 1.0, %v8594
  %v8596 = vrcp.pop %v8533
  %v8597 = vmul.f32 1.0, %v8596
  %v8598 = vrcp.pop %v8534
  %v8599 = vmul.f32 1.0, %v8598
  %v8600 = vrcp.pop %v8535
  %v8601 = vmul.f32 1.0, %v8600
  %v8602 = vrcp.pop %v8536
  %v8603 = vmul.f32 1.0, %v8602
  %v8604 = vrcp.pop %v8537
  %v8605 = vmul.f32 1.0, %v8604
  %v8606 = vrcp.pop %v8538
  %v8607 = vmul.f32 1.0, %v8606
  %v8608 = vrcp.pop %v8539
  %v8609 = vmul.f32 1.0, %v8608
  %v8610 = vrcp.pop %v8540
  %v8611 = vmul.f32 1.0, %v8610
  %v8612 = vrcp.pop %v8541
  %v8613 = vmul.f32 1.0, %v8612
  %v8614 = vrcp.pop %v8542
  %v8615 = vmul.f32 1.0, %v8614
  %v8616 = vrcp.pop %v8543
  %v8617 = vmul.f32 1.0, %v8616
  %v8618 = vrcp.pop %v8544
  %v8619 = vmul.f32 1.0, %v8618
  %v8620 = vrcp.pop %v8545
  %v8621 = vmul.f32 1.0, %v8620
  %v8622 = vrcp.pop %v8546
  %v8623 = vmul.f32 1.0, %v8622
  %v8624 = vrcp.pop %v8547
  %v8625 = vmul.f32 1.0, %v8624
  %v8626 = vrcp.pop %v8548
  %v8627 = vmul.f32 1.0, %v8626
  %v8628 = vrcp.pop %v8549
  %v8629 = vmul.f32 1.0, %v8628
  %v8630 = vrcp.pop %v8550
  %v8631 = vmul.f32 1.0, %v8630
  %v8632 = vrcp.pop %v8551
  %v8633 = vmul.f32 1.0, %v8632
  %v8634 = vrcp.pop %v8552
  %v8635 = vmul.f32 1.0, %v8634
  %v8636 = vrcp.pop %v8553
  %v8637 = vmul.f32 1.0, %v8636
  %v8638 = vrcp.pop %v8554
  %v8639 = vmul.f32 1.0, %v8638
  %v8640 = vrcp.pop %v8555
  %v8641 = vmul.f32 1.0, %v8640
  %v8642 = vrcp.pop %v8556
  %v8643 = vmul.f32 1.0, %v8642
  %v8644 = vrcp.pop %v8557
  %v8645 = vmul.f32 1.0, %v8644
  %v8646 = vrcp.pop %v8558
  %v8647 = vmul.f32 1.0, %v8646
  %v8648 = vrcp.pop %v8559
  %v8649 = vmul.f32 1.0, %v8648
  %v8650 = vrcp.pop %v8560
  %v8651 = vmul.f32 1.0, %v8650
  %v8652 = vrcp.pop %v8561
  %v8653 = vmul.f32 1.0, %v8652
  %v8654 = vrcp.pop %v8562
  %v8655 = vmul.f32 1.0, %v8654
  %v8656 = vrcp.pop %v8563
  %v8657 = vmul.f32 1.0, %v8656
  %v8658 = vrcp.pop %v8564
  %v8659 = vmul.f32 1.0, %v8658
  %v8660 = vrcp.pop %v8565
  %v8661 = vmul.f32 1.0, %v8660
  %vm8662 = vcmask 7168
  %8663 = vst.msk [vmem:[%s11] sm:$0xff] %vm8662, %v8567
  %8664 = vst.msk [vmem:[%s11 + $0x8] sm:$0xff] %vm8662, %v8569
  %8665 = vst.msk [vmem:[%s11 + $0x10] sm:$0xff] %vm8662, %v8571
  %8666 = vst.msk [vmem:[%s11 + $0x18] sm:$0xff] %vm8662, %v8573
  %8667 = vst.msk [vmem:[%s11 + $0x20] sm:$0xff] %vm8662, %v8575
  %8668 = vst.msk [vmem:[%s11 + $0x28] sm:$0xff] %vm8662, %v8577
  %8669 = vst.msk [vmem:[%s11 + $0x30] sm:$0xff] %vm8662, %v8579
  %8670 = vst.msk [vmem:[%s11 + $0x38] sm:$0xff] %vm8662, %v8581
  %8671 = vst.msk [vmem:[%s11 + $0x40] sm:$0xff] %vm8662, %v8583
  %8672 = vst.msk [vmem:[%s11 + $0x48] sm:$0xff] %vm8662, %v8585
  %8673 = vst.msk [vmem:[%s11 + $0x50] sm:$0xff] %vm8662, %v8587
  %8674 = vst.msk [vmem:[%s11 + $0x58] sm:$0xff] %vm8662, %v8589
  %8675 = vst.msk [vmem:[%s11 + $0x60] sm:$0xff] %vm8662, %v8591
  %8676 = vst.msk [vmem:[%s11 + $0x68] sm:$0xff] %vm8662, %v8593
  %8677 = vst.msk [vmem:[%s11 + $0x70] sm:$0xff] %vm8662, %v8595
  %8678 = vst.msk [vmem:[%s11 + $0x78] sm:$0xff] %vm8662, %v8597
  %8679 = vst.msk [vmem:[%s11 + $0x80] sm:$0xff] %vm8662, %v8599
  %8680 = vst.msk [vmem:[%s11 + $0x88] sm:$0xff] %vm8662, %v8601
  %8681 = vst.msk [vmem:[%s11 + $0x90] sm:$0xff] %vm8662, %v8603
  %8682 = vst.msk [vmem:[%s11 + $0x98] sm:$0xff] %vm8662, %v8605
  %8683 = vst.msk [vmem:[%s11 + $0xa0] sm:$0xff] %vm8662, %v8607
  %8684 = vst.msk [vmem:[%s11 + $0xa8] sm:$0xff] %vm8662, %v8609
  %8685 = vst.msk [vmem:[%s11 + $0xb0] sm:$0xff] %vm8662, %v8611
  %8686 = vst.msk [vmem:[%s11 + $0xb8] sm:$0xff] %vm8662, %v8613
  %8687 = vst.msk [vmem:[%s11 + $0xc0] sm:$0xff] %vm8662, %v8615
  %8688 = vst.msk [vmem:[%s11 + $0xc8] sm:$0xff] %vm8662, %v8617
  %8689 = vst.msk [vmem:[%s11 + $0xd0] sm:$0xff] %vm8662, %v8619
  %8690 = vst.msk [vmem:[%s11 + $0xd8] sm:$0xff] %vm8662, %v8621
  %8691 = vst.msk [vmem:[%s11 + $0xe0] sm:$0xff] %vm8662, %v8623
  %8692 = vst.msk [vmem:[%s11 + $0xe8] sm:$0xff] %vm8662, %v8625
  %8693 = vst.msk [vmem:[%s11 + $0xf0] sm:$0xff] %vm8662, %v8627
  %8694 = vst.msk [vmem:[%s11 + $0xf8] sm:$0xff] %vm8662, %v8629
  %8695 = vst.msk [vmem:[%s11 + $0x100] sm:$0xff] %vm8662, %v8631
  %8696 = vst.msk [vmem:[%s11 + $0x108] sm:$0xff] %vm8662, %v8633
  %8697 = vst.msk [vmem:[%s11 + $0x110] sm:$0xff] %vm8662, %v8635
  %8698 = vst.msk [vmem:[%s11 + $0x118] sm:$0xff] %vm8662, %v8637
  %8699 = vst.msk [vmem:[%s11 + $0x120] sm:$0xff] %vm8662, %v8639
  %8700 = vst.msk [vmem:[%s11 + $0x128] sm:$0xff] %vm8662, %v8641
  %8701 = vst.msk [vmem:[%s11 + $0x130] sm:$0xff] %vm8662, %v8643
  %8702 = vst.msk [vmem:[%s11 + $0x138] sm:$0xff] %vm8662, %v8645
  %8703 = vst.msk [vmem:[%s11 + $0x140] sm:$0xff] %vm8662, %v8647
  %8704 = vst.msk [vmem:[%s11 + $0x148] sm:$0xff] %vm8662, %v8649
  %8705 = vst.msk [vmem:[%s11 + $0x150] sm:$0xff] %vm8662, %v8651
  %8706 = vst.msk [vmem:[%s11 + $0x158] sm:$0xff] %vm8662, %v8653
  %8707 = vst.msk [vmem:[%s11 + $0x160] sm:$0xff] %vm8662, %v8655
  %8708 = vst.msk [vmem:[%s11 + $0x168] sm:$0xff] %vm8662, %v8657
  %8709 = vst.msk [vmem:[%s11 + $0x170] sm:$0xff] %vm8662, %v8659
  %8710 = vst.msk [vmem:[%s11 + $0x178] sm:$0xff] %vm8662, %v8661
  // Predicated region
  $region46: #{discriminator_forward.1} parent=0 // pred_check
    _
  $region47: #{discriminator_forward.1} parent=0 // pred_check_branch
    %8712 = sbr.rel (0) target = $region49
  $region48: #{discriminator_forward.1} parent=0 // pred_region
    _
  $region49: #{discriminator_forward.1} parent=0 // pred_fallthru
    _
  // Predicated region
  $region50: #{discriminator_forward.1} parent=0 // pred_check
    _
  $region51: #{discriminator_forward.1} parent=0 // pred_check_branch
    %8714 = sbr.rel (0) target = $region53
  $region52: #{discriminator_forward.1} parent=0 // pred_region
    _
  $region53: #{discriminator_forward.1} parent=0 // pred_fallthru
    _

</llo_original>
